<compile_context>
chip_gen: v7x
topology: tpu7x:2x2x1
jax: 0.10.0
libtpu: 0.0.40
codegen_flags: <defaults>
</compile_context>

<pallas_src>
import jax
import jax.numpy as jnp
from jax.experimental import pallas as pl
from jax.experimental.pallas import tpu as pltpu


_VMEM_LIMIT = 32 * 1024 * 1024


def _cparams(n_parallel):
    return pltpu.CompilerParams(
        dimension_semantics=("parallel",) * n_parallel,
        vmem_limit_bytes=_VMEM_LIMIT,
    )


def _pick_rows(m, target=1024):
    """Row tile for the stem matmul: big, but keep >= 2 grid steps."""
    if m >= 2 * target:
        return target
    return max(16, ((m + 1) // 2 + 15) // 16 * 16)


def _pick_hw_tile(hw, target=512):
    """Tile of the flattened H*W axis, multiple of 16, evenly split."""
    if hw <= target:
        return ((hw + 15) // 16) * 16
    n = pl.cdiv(hw, target)
    return ((pl.cdiv(hw, n) + 15) // 16) * 16


def _pick_frames(nf, rows_per_frame, target_rows=512):
    """Frames batched per grid step; divisor of nf; keeps >= 2 grid steps."""
    if nf <= 1:
        return 1
    cap = max(1, target_rows // max(rows_per_frame, 1))
    cap = min(cap, nf // 2)
    best = 1
    for f in range(1, cap + 1):
        if nf % f == 0:
            best = f
    return best


# ----------------------------------------------------------------------------
# Pallas kernels
# ----------------------------------------------------------------------------
def _stem_kernel(a_ref, w0_ref, w1_ref, sh0_ref, sh1_ref, o0_ref, o1_ref):
    # Fused input-side 1x1x1 convs (+folded BN + ReLU), two lane-aligned outputs:
    #   o0: branch0 (192 ch), o1: [branch1-stem | branch2-stem | zero-pad] (128 ch)
    a = a_ref[...]
    y0 = jnp.dot(a, w0_ref[...], preferred_element_type=jnp.float32) + sh0_ref[...]
    o0_ref[...] = jnp.maximum(y0, 0.0).astype(o0_ref.dtype)
    y1 = jnp.dot(a, w1_ref[...], preferred_element_type=jnp.float32) + sh1_ref[...]
    o1_ref[...] = jnp.maximum(y1, 0.0).astype(o1_ref.dtype)


def _spatial_conv_kernel(x_ref, w_ref, shift_ref, o_ref):
    # (1,3,3) conv, stride 1, padding (0,1,1), folded BN + ReLU.
    #   x: (F, H+2, W+2, Cin) bf16 (zero-padded frames)
    #   w: (3, 3*Cin, Cout) bf16  -- per kh, the (kw, cin) taps packed into K
    #   shift: (1, Cout) f32
    #   o: (F, H*W, Cout) bf16   (exactly H*W rows: no wasted columns)
    f, hp, wp, cin = x_ref.shape
    h, wd = hp - 2, wp - 2
    cout = o_ref.shape[-1]
    m = h * wd

    x = x_ref[...]
    # Pack the 3 kw taps along channels: (F, H+2, W, 3*Cin)
    pk = jnp.concatenate(
        [x[:, :, 0:wd, :], x[:, :, 1:wd + 1, :], x[:, :, 2:wd + 2, :]], axis=-1)
    pk = pk.reshape(f, hp * wd, 3 * cin)

    acc = jnp.zeros((f * m, cout), jnp.float32)
    for kh in range(3):
        a = pk[:, kh * wd:kh * wd + m, :].reshape(f * m, 3 * cin)
        acc = acc + jnp.dot(a, w_ref[kh], preferred_element_type=jnp.float32)
    y = jnp.maximum(acc + shift_ref[...], 0.0)
    o_ref[...] = y.reshape(f, m, cout).astype(o_ref.dtype)


def _temporal_conv_kernel(x_ref, w_ref, shift_ref, o_ref):
    # (3,1,1) conv, stride 1, padding (1,0,0), folded BN + ReLU.
    # D is flattened into the matmul M dimension (M = D*hw_tile).
    #   x: (1, D+2, hw_t, Cin) bf16 (zero-padded along D)
    #   w: (3, Cin, Cout) bf16, shift: (1, Cout) f32
    #   o: (1, D, hw_t, Cout) bf16
    _, dp2, hwt, cin = x_ref.shape
    d = dp2 - 2
    cout = o_ref.shape[-1]
    m = d * hwt

    xf = x_ref[0].reshape(dp2 * hwt, cin)
    acc = jnp.dot(xf[0:m], w_ref[0], preferred_element_type=jnp.float32)
    acc = acc + jnp.dot(xf[hwt:hwt + m], w_ref[1],
                        preferred_element_type=jnp.float32)
    acc = acc + jnp.dot(xf[2 * hwt:2 * hwt + m], w_ref[2],
                        preferred_element_type=jnp.float32)
    y = jnp.maximum(acc + shift_ref[...], 0.0)
    o_ref[0] = y.reshape(d, hwt, cout).astype(o_ref.dtype)


def _maxpool3d_conv_kernel(x_ref, w_ref, shift_ref, o_ref):
    # Full 3x3x3 max-pool (stride 1, pad 1, -inf padded) fused with the
    # following 1x1x1 conv + folded BN + ReLU (branch3). One HBM pass over x.
    #   x: (1, D+2, H+2, W+2, C) bf16, w: (C, Cout) bf16, shift: (1, Cout) f32
    #   o: (1, D, H, W, Cout) bf16
    _, dp, hp, wp, c = x_ref.shape
    d, h, wd = dp - 2, hp - 2, wp - 2
    cout = o_ref.shape[-1]

    x = x_ref[0]
    mw = jnp.maximum(jnp.maximum(x[:, :, 0:wd, :], x[:, :, 1:wd + 1, :]),
                     x[:, :, 2:wd + 2, :])
    mh = jnp.maximum(jnp.maximum(mw[:, 0:h, :, :], mw[:, 1:h + 1, :, :]),
                     mw[:, 2:h + 2, :, :])
    md = jnp.maximum(jnp.maximum(mh[0:d], mh[1:d + 1]), mh[2:d + 2])

    flat = md.reshape(d * h * wd, c)
    y = jnp.dot(flat, w_ref[...], preferred_element_type=jnp.float32)
    y = jnp.maximum(y + shift_ref[...], 0.0)
    o_ref[0] = y.reshape(d, h, wd, cout).astype(o_ref.dtype)


# ----------------------------------------------------------------------------
# Wrappers (layout plumbing only)
# ----------------------------------------------------------------------------
def stem_pointwise(a, w0, sh0, w1, sh1, tm_target=1024):
    """relu(a @ w0 + sh0), relu(a @ w1 + sh1); a read once, two aligned outputs."""
    m, k = a.shape
    c0 = w0.shape[1]
    c1 = w1.shape[1]
    tm = _pick_rows(m, tm_target)
    mp = pl.cdiv(m, tm) * tm
    if mp != m:
        a = jnp.pad(a, ((0, mp - m), (0, 0)))
    out0, out1 = pl.pallas_call(
        _stem_kernel,
        out_shape=(jax.ShapeDtypeStruct((mp, c0), jnp.bfloat16),
                   jax.ShapeDtypeStruct((mp, c1), jnp.bfloat16)),
        grid_spec=pltpu.PrefetchScalarGridSpec(
            num_scalar_prefetch=0,
            grid=(mp // tm,),
            in_specs=[
                pl.BlockSpec((tm, k), lambda i: (i, 0)),
                pl.BlockSpec((k, c0), lambda i: (0, 0)),
                pl.BlockSpec((k, c1), lambda i: (0, 0)),
                pl.BlockSpec((1, c0), lambda i: (0, 0)),
                pl.BlockSpec((1, c1), lambda i: (0, 0)),
            ],
            out_specs=(pl.BlockSpec((tm, c0), lambda i: (i, 0)),
                       pl.BlockSpec((tm, c1), lambda i: (i, 0))),
        ),
        compiler_params=_cparams(1),
    )(a, w0, w1, sh0, sh1)
    if mp != m:
        out0, out1 = out0[:m], out1[:m]
    return out0, out1


def spatial_conv3x3_bias_relu(x, w3k, shift):
    """(1,3,3) conv, stride 1, padding (0,1,1), + folded BN + ReLU.

    x: (N, D, H, W, Cin) bf16; w3k: (3, 3*Cin, Cout) bf16 (kw taps packed in K);
    shift: (1, Cout) f32.
    """
    n, d, h, wd, cin = x.shape
    cout = w3k.shape[-1]
    nf = n * d
    fpb = _pick_frames(nf, h * wd)

    xp = jnp.pad(x, ((0, 0), (0, 0), (1, 1), (1, 1), (0, 0)))
    xf = xp.reshape(nf, h + 2, wd + 2, cin)
    out = pl.pallas_call(
        _spatial_conv_kernel,
        out_shape=jax.ShapeDtypeStruct((nf, h * wd, cout), jnp.bfloat16),
        grid_spec=pltpu.PrefetchScalarGridSpec(
            num_scalar_prefetch=0,
            grid=(nf // fpb,),
            in_specs=[
                pl.BlockSpec((fpb, h + 2, wd + 2, cin), lambda i: (i, 0, 0, 0)),
                pl.BlockSpec((3, 3 * cin, cout), lambda i: (0, 0, 0)),
                pl.BlockSpec((1, cout), lambda i: (0, 0)),
            ],
            out_specs=pl.BlockSpec((fpb, h * wd, cout), lambda i: (i, 0, 0)),
        ),
        compiler_params=_cparams(1),
    )(xf, w3k, shift)
    return out.reshape(n, d, h, wd, cout)


def temporal_conv3_bias_relu(x, w, shift):
    """(3,1,1) conv, stride 1, padding (1,0,0), + folded BN + ReLU.

    x: (N, D, H, W, Cin) bf16, w: (3, Cin, Cout) bf16, shift: (1, Cout) f32.
    """
    n, d, h, wd, cin = x.shape
    cout = w.shape[-1]
    hw = h * wd
    hw_t = _pick_hw_tile(hw)
    hwp = pl.cdiv(hw, hw_t) * hw_t
    xr = x.reshape(n, d, hw, cin)
    xr = jnp.pad(xr, ((0, 0), (1, 1), (0, hwp - hw), (0, 0)))
    out = pl.pallas_call(
        _temporal_conv_kernel,
        out_shape=jax.ShapeDtypeStruct((n, d, hwp, cout), jnp.bfloat16),
        grid_spec=pltpu.PrefetchScalarGridSpec(
            num_scalar_prefetch=0,
            grid=(n, hwp // hw_t),
            in_specs=[
                pl.BlockSpec((1, d + 2, hw_t, cin), lambda i, j: (i, 0, j, 0)),
                pl.BlockSpec((3, cin, cout), lambda i, j: (0, 0, 0)),
                pl.BlockSpec((1, cout), lambda i, j: (0, 0)),
            ],
            out_specs=pl.BlockSpec((1, d, hw_t, cout), lambda i, j: (i, 0, j, 0)),
        ),
        compiler_params=_cparams(2),
    )(xr, w, shift)
    if hwp != hw:
        out = out[:, :, :hw, :]
    return out.reshape(n, d, h, wd, cout)


def maxpool3d_conv_bias_relu(x, w, shift):
    """MaxPool3d(3, stride=1, pad=1) fused with 1x1x1 conv + folded BN + ReLU.

    x: (N, D, H, W, C) bf16, w: (C, Cout) bf16, shift: (1, Cout) f32.
    The pooled 480-channel intermediate stays in VMEM (never written to HBM).
    """
    n, d, h, wd, c = x.shape
    cout = w.shape[-1]
    xp = jnp.pad(x, ((0, 0), (1, 1), (1, 1), (1, 1), (0, 0)),
                 constant_values=-jnp.inf)
    # TODO(synk): for very large D*H*W a per-sample block may exceed VMEM;
    #             tile D with a 3-deep halo in that regime.
    return pl.pallas_call(
        _maxpool3d_conv_kernel,
        out_shape=jax.ShapeDtypeStruct((n, d, h, wd, cout), jnp.bfloat16),
        grid_spec=pltpu.PrefetchScalarGridSpec(
            num_scalar_prefetch=0,
            grid=(n,),
            in_specs=[
                pl.BlockSpec((1, d + 2, h + 2, wd + 2, c),
                             lambda i: (i, 0, 0, 0, 0)),
                pl.BlockSpec((c, cout), lambda i: (0, 0)),
                pl.BlockSpec((1, cout), lambda i: (0, 0)),
            ],
            out_specs=pl.BlockSpec((1, d, h, wd, cout),
                                   lambda i: (i, 0, 0, 0, 0)),
        ),
        compiler_params=_cparams(1),
    )(xp, w, shift)


# ----------------------------------------------------------------------------
# Deterministic synthetic parameters (BN folded, scale absorbed into weights)
# ----------------------------------------------------------------------------
def _bn_fold(key, c, bias=None, eps=1e-3):
    k1, k2, k3, k4 = jax.random.split(key, 4)
    gamma = jax.random.uniform(k1, (c,), jnp.float32, 0.5, 1.5)
    beta = jax.random.normal(k2, (c,), jnp.float32) * 0.1
    mean = jax.random.normal(k3, (c,), jnp.float32) * 0.1
    var = jax.random.uniform(k4, (c,), jnp.float32, 0.5, 1.5)
    scale = gamma / jnp.sqrt(var + eps)
    b = jnp.zeros((c,), jnp.float32) if bias is None else bias
    shift = scale * (b - mean) + beta
    return scale, shift


def _make_basic_conv(key, cin, cout):
    # BasicConv3d: Conv3d(bias=False) + BN + ReLU; BN scale folded into weight.
    kw, kb = jax.random.split(key)
    w = jax.random.normal(kw, (cin, cout), jnp.float32) * 0.05
    scale, shift = _bn_fold(kb, cout)
    return (w * scale[None, :]).astype(jnp.bfloat16), shift.reshape(1, cout)


def _make_stconv_raw(key, cin, cout):
    # STConv3d: (1,3,3) conv (with bias) + BN + ReLU, then (3,1,1) conv
    # (weight~N(0,0.01), bias=0) + BN + ReLU.  BN scales folded into weights.
    k1, k2, k3, k4, k5 = jax.random.split(key, 5)
    w1 = jax.random.normal(k1, (3, 3, cin, cout), jnp.float32) * 0.05
    b1 = jax.random.normal(k2, (cout,), jnp.float32) * 0.01
    s1, sh1 = _bn_fold(k3, cout, bias=b1)
    w2 = jax.random.normal(k4, (3, cout, cout), jnp.float32) * 0.01
    s2, sh2 = _bn_fold(k5, cout, bias=jnp.zeros((cout,), jnp.float32))
    return (w1 * s1, sh1), (w2 * s2, sh2)       # f32; fused & cast later


# Static channel splits (Python constants; never traced).
C0, C1, C2, C3 = 192, 96, 16, 64            # branch0 / b1-stem / b2-stem / b3
CO1, CO2 = 208, 48                          # branch1 / branch2 STConv outputs
CIN_F = 128                                 # fused b1|b2 stem (96+16 pad to 128)
COUT_F = CO1 + CO2                          # 256


def init_mixed_4b_params(key):
    ks = jax.random.split(key, 6)
    w0, sh0 = _make_basic_conv(ks[0], 480, C0)          # branch0
    w10, sh10 = _make_basic_conv(ks[1], 480, C1)        # branch1 stem
    w20, sh20 = _make_basic_conv(ks[2], 480, C2)        # branch2 stem
    w3, sh3 = _make_basic_conv(ks[3], 480, C3)          # branch3 conv
    (ws1, shs1), (wt1, sht1) = _make_stconv_raw(ks[4], C1, CO1)
    (ws2, shs2), (wt2, sht2) = _make_stconv_raw(ks[5], C2, CO2)

    # Fused [branch1 | branch2 | zero-pad] stem weight (lane-dense 128 cols).
    w_pw1 = jnp.concatenate(
        [w10, w20, jnp.zeros((480, CIN_F - C1 - C2), jnp.bfloat16)], axis=1)
    shift_pw1 = jnp.concatenate(
        [sh10, sh20, jnp.zeros((1, CIN_F - C1 - C2), jnp.float32)], axis=1)

    # Block-diagonal fused spatial conv: (3, 3, 128, 256) -> (3, 3*128, 256),
    # contraction index packed as (kw, cin) to match the in-kernel tap packing.
    ws = jnp.zeros((3, 3, CIN_F, COUT_F), jnp.float32)
    ws = ws.at[:, :, 0:C1, 0:CO1].set(ws1)
    ws = ws.at[:, :, C1:C1 + C2, CO1:COUT_F].set(ws2)
    w_s12 = ws.reshape(3, 3 * CIN_F, COUT_F).astype(jnp.bfloat16)
    shift_s12 = jnp.concatenate([shs1, shs2]).reshape(1, COUT_F)

    # Block-diagonal fused temporal conv: (3, 256, 256).
    wt = jnp.zeros((3, COUT_F, COUT_F), jnp.float32)
    wt = wt.at[:, 0:CO1, 0:CO1].set(wt1)
    wt = wt.at[:, CO1:COUT_F, CO1:COUT_F].set(wt2)
    w_t12 = wt.astype(jnp.bfloat16)
    shift_t12 = jnp.concatenate([sht1, sht2]).reshape(1, COUT_F)

    return dict(
        w_pw0=w0, shift_pw0=sh0,
        w_pw1=w_pw1, shift_pw1=shift_pw1,
        w_s12=w_s12, shift_s12=shift_s12,
        w_t12=w_t12, shift_t12=shift_t12,
        w3=w3, shift3=sh3,
    )


# ----------------------------------------------------------------------------
# Mixed_4b forward
# ----------------------------------------------------------------------------
def mixed_4b(params, x_ncdhw):
    # Cast to bf16 BEFORE the big relayout transposes (halves HBM traffic).
    xb = x_ncdhw.astype(jnp.bfloat16)
    x = jnp.transpose(xb, (0, 2, 3, 4, 1))               # NDHWC bf16
    n, d, h, w, c = x.shape

    # Fused 1x1x1 stems -> branch0 output + [branch1|branch2|pad] stem.
    x0, b12 = stem_pointwise(x.reshape(n * d * h * w, c),
                             params["w_pw0"], params["shift_pw0"],
                             params["w_pw1"], params["shift_pw1"])
    x0 = x0.reshape(n, d, h, w, C0)
    b12 = b12.reshape(n, d, h, w, CIN_F)

    # branch1 + branch2 fused block-diagonal STConv3d (128 -> 256 channels).
    x12 = spatial_conv3x3_bias_relu(b12, params["w_s12"], params["shift_s12"])
    x12 = temporal_conv3_bias_relu(x12, params["w_t12"], params["shift_t12"])

    # branch3: fused 3x3x3 max-pool + 1x1x1 conv (480 -> 64).
    x3 = maxpool3d_conv_bias_relu(x, params["w3"], params["shift3"])

    # [x0 | x1 | x2 | x3] -- x12 already holds [x1 | x2] contiguously.
    out = jnp.concatenate([x0, x12, x3], axis=-1)         # (N,D,H,W,512) bf16
    return jnp.transpose(out, (0, 4, 1, 2, 3)).astype(jnp.float32)


# ----------------------------------------------------------------------------
# Pure-JAX reference (same folded bf16 weights) for a tolerance check
# ----------------------------------------------------------------------------
def _reference(params, x_ncdhw):
    f32 = jnp.float32
    xb = x_ncdhw.astype(jnp.bfloat16)
    x = jnp.transpose(xb, (0, 2, 3, 4, 1))
    n, d, h, w, c = x.shape

    def pw(a, wmat, shift):
        y = jnp.einsum("ndhwc,co->ndhwo", a, wmat,
                       preferred_element_type=f32) + shift.reshape(-1)
        return jnp.maximum(y, 0.0).astype(jnp.bfloat16)

    x0 = pw(x, params["w_pw0"], params["shift_pw0"])
    b12 = pw(x, params["w_pw1"], params["shift_pw1"])

    def sconv(a, w3k, shift):
        cin = a.shape[-1]
        cout = w3k.shape[-1]
        wk = w3k.reshape(3, 3, cin, cout)
        ap = jnp.pad(a, ((0, 0), (0, 0), (1, 1), (1, 1), (0, 0)))
        acc = jnp.zeros(a.shape[:-1] + (cout,), f32)
        for kh in range(3):
            for kw in range(3):
                acc = acc + jnp.einsum("ndhwc,co->ndhwo",
                                       ap[:, :, kh:kh + h, kw:kw + w, :],
                                       wk[kh, kw], preferred_element_type=f32)
        return jnp.maximum(acc + shift.reshape(-1), 0.0).astype(jnp.bfloat16)

    def tconv(a, wt, shift):
        cout = wt.shape[-1]
        ap = jnp.pad(a, ((0, 0), (1, 1), (0, 0), (0, 0), (0, 0)))
        acc = jnp.zeros(a.shape[:-1] + (cout,), f32)
        for kt in range(3):
            acc = acc + jnp.einsum("ndhwc,co->ndhwo", ap[:, kt:kt + d],
                                   wt[kt], preferred_element_type=f32)
        return jnp.maximum(acc + shift.reshape(-1), 0.0).astype(jnp.bfloat16)

    x12 = tconv(sconv(b12, params["w_s12"], params["shift_s12"]),
                params["w_t12"], params["shift_t12"])

    xp = jnp.pad(x, ((0, 0), (1, 1), (1, 1), (1, 1), (0, 0)),
                 constant_values=-jnp.inf)
    m = jnp.full(x.shape, -jnp.inf, x.dtype)
    for kd in range(3):
        for kh in range(3):
            for kw in range(3):
                m = jnp.maximum(m, xp[:, kd:kd + d, kh:kh + h, kw:kw + w, :])
    x3 = pw(m, params["w3"], params["shift3"])

    out = jnp.concatenate([x0, x12, x3], axis=-1)
    return jnp.transpose(out, (0, 4, 1, 2, 3)).astype(jnp.float32)


# ----------------------------------------------------------------------------
if __name__ == "__main__":
    key = jax.random.PRNGKey(0)
    k_par, k_in = jax.random.split(key)

    params = init_mixed_4b_params(k_par)

    # Mixed_4b requires 480 input channels; keep temporal/spatial dims small.
    N, C, D, H, W = 2, 480, 4, 8, 8
    x = jax.random.normal(k_in, (N, C, D, H, W), jnp.float32)

    out = jax.jit(mixed_4b)(params, x)
    out = jax.block_until_ready(out)

    assert out.shape == (N, 512, D, H, W), out.shape
    assert bool(jnp.all(jnp.isfinite(out)))

    ref = jax.block_until_ready(jax.jit(_reference)(params, x))
    max_err = float(jnp.max(jnp.abs(out - ref)))
    assert max_err < 5e-2, f"max abs error vs reference: {max_err}"

    print("KERNEL_OK")
</pallas_src>

<mosaic_0001>
module attributes {stable_mosaic.version = 11 : i64} {
  func.func @_maxpool3d_conv_kernel(%arg0: i32, %arg1: memref<1x6x10x10x480xbf16, #tpu.memory_space<vmem>>, %arg2: memref<480x64xbf16, #tpu.memory_space<vmem>>, %arg3: memref<1x64xf32, #tpu.memory_space<vmem>>, %arg4: memref<1x4x8x8x64xbf16, #tpu.memory_space<vmem>>) attributes {dimension_semantics = [#tpu.dimension_semantics<parallel>], iteration_bounds = array<i64: 2>, scalar_prefetch = 0 : i64, scratch_operands = 0 : i64, tpu.core_type = #tpu.core_type<tc>, window_params = [{transform_indices = @transform_0, window_bounds = array<i64: 1, 6, 10, 10, 480>}, {pipeline_mode = #tpu.pipeline_mode<synchronous>, transform_indices = @transform_1, window_bounds = array<i64: 480, 64>}, {pipeline_mode = #tpu.pipeline_mode<synchronous>, transform_indices = @transform_2, window_bounds = array<i64: 1, 64>}, {transform_indices = @transform_3, window_bounds = array<i64: 1, 4, 8, 8, 64>}]} {
    %c0 = arith.constant 0 : index
    %c0_0 = arith.constant 0 : index
    %c0_1 = arith.constant 0 : index
    %c0_2 = arith.constant 0 : index
    %c0_3 = arith.constant 0 : index
    %0 = vector.load %arg1[%c0, %c0_0, %c0_1, %c0_2, %c0_3] : memref<1x6x10x10x480xbf16, #tpu.memory_space<vmem>>, vector<1x6x10x10x480xbf16>
    %1 = vector.shape_cast %0 : vector<1x6x10x10x480xbf16> to vector<6x10x10x480xbf16>
    %2 = vector.extract_strided_slice %1 {offsets = [0, 0, 0, 0], sizes = [6, 10, 8, 480], strides = [1, 1, 1, 1]} : vector<6x10x10x480xbf16> to vector<6x10x8x480xbf16>
    %3 = vector.extract_strided_slice %1 {offsets = [0, 0, 1, 0], sizes = [6, 10, 8, 480], strides = [1, 1, 1, 1]} : vector<6x10x10x480xbf16> to vector<6x10x8x480xbf16>
    %4 = arith.maximumf %2, %3 : vector<6x10x8x480xbf16>
    %5 = vector.extract_strided_slice %1 {offsets = [0, 0, 2, 0], sizes = [6, 10, 8, 480], strides = [1, 1, 1, 1]} : vector<6x10x10x480xbf16> to vector<6x10x8x480xbf16>
    %6 = arith.maximumf %4, %5 : vector<6x10x8x480xbf16>
    %7 = vector.extract_strided_slice %6 {offsets = [0, 0, 0, 0], sizes = [6, 8, 8, 480], strides = [1, 1, 1, 1]} : vector<6x10x8x480xbf16> to vector<6x8x8x480xbf16>
    %8 = vector.extract_strided_slice %6 {offsets = [0, 1, 0, 0], sizes = [6, 8, 8, 480], strides = [1, 1, 1, 1]} : vector<6x10x8x480xbf16> to vector<6x8x8x480xbf16>
    %9 = arith.maximumf %7, %8 : vector<6x8x8x480xbf16>
    %10 = vector.extract_strided_slice %6 {offsets = [0, 2, 0, 0], sizes = [6, 8, 8, 480], strides = [1, 1, 1, 1]} : vector<6x10x8x480xbf16> to vector<6x8x8x480xbf16>
    %11 = arith.maximumf %9, %10 : vector<6x8x8x480xbf16>
    %12 = vector.extract_strided_slice %11 {offsets = [0, 0, 0, 0], sizes = [4, 8, 8, 480], strides = [1, 1, 1, 1]} : vector<6x8x8x480xbf16> to vector<4x8x8x480xbf16>
    %13 = vector.extract_strided_slice %11 {offsets = [1, 0, 0, 0], sizes = [4, 8, 8, 480], strides = [1, 1, 1, 1]} : vector<6x8x8x480xbf16> to vector<4x8x8x480xbf16>
    %14 = arith.maximumf %12, %13 : vector<4x8x8x480xbf16>
    %15 = vector.extract_strided_slice %11 {offsets = [2, 0, 0, 0], sizes = [4, 8, 8, 480], strides = [1, 1, 1, 1]} : vector<6x8x8x480xbf16> to vector<4x8x8x480xbf16>
    %16 = arith.maximumf %14, %15 : vector<4x8x8x480xbf16>
    %17 = vector.shape_cast %16 : vector<4x8x8x480xbf16> to vector<256x480xbf16>
    %c0_4 = arith.constant 0 : index
    %c0_5 = arith.constant 0 : index
    %18 = vector.load %arg2[%c0_4, %c0_5] : memref<480x64xbf16, #tpu.memory_space<vmem>>, vector<480x64xbf16>
    %cst = arith.constant dense<0.000000e+00> : vector<256x64xf32>
    %19 = tpu.matmul %17, %18, %cst {dimension_numbers = #tpu.dot_dimension_numbers<[1], [0], [0], [1], [0, 0, 1, 1], [], []>} : vector<256x480xbf16>, vector<480x64xbf16>, vector<256x64xf32> -> vector<256x64xf32>
    %c0_6 = arith.constant 0 : index
    %c0_7 = arith.constant 0 : index
    %20 = vector.load %arg3[%c0_6, %c0_7] : memref<1x64xf32, #tpu.memory_space<vmem>>, vector<1x64xf32>
    %21 = vector.broadcast %20 : vector<1x64xf32> to vector<256x64xf32>
    %22 = arith.addf %19, %21 : vector<256x64xf32>
    %cst_8 = arith.constant 0.000000e+00 : f32
    %23 = vector.broadcast %cst_8 : f32 to vector<256x64xf32>
    %24 = arith.maximumf %22, %23 : vector<256x64xf32>
    %25 = vector.shape_cast %24 : vector<256x64xf32> to vector<4x8x8x64xf32>
    %26 = arith.truncf %25 : vector<4x8x8x64xf32> to vector<4x8x8x64xbf16>
    %c0_9 = arith.constant 0 : index
    %c0_10 = arith.constant 0 : index
    %c0_11 = arith.constant 0 : index
    %c0_12 = arith.constant 0 : index
    %c0_13 = arith.constant 0 : index
    %27 = vector.load %arg4[%c0_9, %c0_10, %c0_11, %c0_12, %c0_13] : memref<1x4x8x8x64xbf16, #tpu.memory_space<vmem>>, vector<1x4x8x8x64xbf16>
    %28 = vector.shape_cast %27 : vector<1x4x8x8x64xbf16> to vector<4x8x8x64xbf16>
    %29 = vector.shape_cast %26 : vector<4x8x8x64xbf16> to vector<1x4x8x8x64xbf16>
    tpu.vector_store %arg4[%c0_9, %c0_10, %c0_11, %c0_12, %c0_13], %29 {strides = array<i32>} : memref<1x4x8x8x64xbf16, #tpu.memory_space<vmem>>, vector<1x4x8x8x64xbf16>,
    return
  }
  func.func @transform_0(%arg0: i32) -> (i32, i32, i32, i32, i32) {
    %c0_i32 = arith.constant 0 : i32
    %c0_i32_0 = arith.constant 0 : i32
    %c0_i32_1 = arith.constant 0 : i32
    %c0_i32_2 = arith.constant 0 : i32
    %c0_i32_3 = arith.constant 0 : i32
    return %arg0, %c0_i32, %c0_i32_0, %c0_i32_1, %c0_i32_2 : i32, i32, i32, i32, i32
  }
  func.func @transform_1(%arg0: i32) -> (i32, i32) {
    %c0_i32 = arith.constant 0 : i32
    %c0_i32_0 = arith.constant 0 : i32
    %c0_i32_1 = arith.constant 0 : i32
    return %c0_i32, %c0_i32_0 : i32, i32
  }
  func.func @transform_2(%arg0: i32) -> (i32, i32) {
    %c0_i32 = arith.constant 0 : i32
    %c0_i32_0 = arith.constant 0 : i32
    %c0_i32_1 = arith.constant 0 : i32
    return %c0_i32, %c0_i32_0 : i32, i32
  }
  func.func @transform_3(%arg0: i32) -> (i32, i32, i32, i32, i32) {
    %c0_i32 = arith.constant 0 : i32
    %c0_i32_0 = arith.constant 0 : i32
    %c0_i32_1 = arith.constant 0 : i32
    %c0_i32_2 = arith.constant 0 : i32
    %c0_i32_3 = arith.constant 0 : i32
    return %arg0, %c0_i32, %c0_i32_0, %c0_i32_1, %c0_i32_2 : i32, i32, i32, i32, i32
  }
}

module attributes {stable_mosaic.version = 11 : i64} {
  func.func @_stem_kernel(%arg0: i32, %arg1: memref<256x480xbf16, #tpu.memory_space<vmem>>, %arg2: memref<480x192xbf16, #tpu.memory_space<vmem>>, %arg3: memref<480x128xbf16, #tpu.memory_space<vmem>>, %arg4: memref<1x192xf32, #tpu.memory_space<vmem>>, %arg5: memref<1x128xf32, #tpu.memory_space<vmem>>, %arg6: memref<256x192xbf16, #tpu.memory_space<vmem>>, %arg7: memref<256x128xbf16, #tpu.memory_space<vmem>>) attributes {dimension_semantics = [#tpu.dimension_semantics<parallel>], iteration_bounds = array<i64: 2>, scalar_prefetch = 0 : i64, scratch_operands = 0 : i64, tpu.core_type = #tpu.core_type<tc>, window_params = [{transform_indices = @transform_0, window_bounds = array<i64: 256, 480>}, {pipeline_mode = #tpu.pipeline_mode<synchronous>, transform_indices = @transform_1, window_bounds = array<i64: 480, 192>}, {pipeline_mode = #tpu.pipeline_mode<synchronous>, transform_indices = @transform_2, window_bounds = array<i64: 480, 128>}, {pipeline_mode = #tpu.pipeline_mode<synchronous>, transform_indices = @transform_3, window_bounds = array<i64: 1, 192>}, {pipeline_mode = #tpu.pipeline_mode<synchronous>, transform_indices = @transform_4, window_bounds = array<i64: 1, 128>}, {transform_indices = @transform_5, window_bounds = array<i64: 256, 192>}, {transform_indices = @transform_6, window_bounds = array<i64: 256, 128>}]} {
    %c0 = arith.constant 0 : index
    %c0_0 = arith.constant 0 : index
    %0 = vector.load %arg1[%c0, %c0_0] : memref<256x480xbf16, #tpu.memory_space<vmem>>, vector<256x480xbf16>
    %c0_1 = arith.constant 0 : index
    %c0_2 = arith.constant 0 : index
    %1 = vector.load %arg2[%c0_1, %c0_2] : memref<480x192xbf16, #tpu.memory_space<vmem>>, vector<480x192xbf16>
    %cst = arith.constant dense<0.000000e+00> : vector<256x192xf32>
    %2 = tpu.matmul %0, %1, %cst {dimension_numbers = #tpu.dot_dimension_numbers<[1], [0], [0], [1], [0, 0, 1, 1], [], []>} : vector<256x480xbf16>, vector<480x192xbf16>, vector<256x192xf32> -> vector<256x192xf32>
    %c0_3 = arith.constant 0 : index
    %c0_4 = arith.constant 0 : index
    %3 = vector.load %arg4[%c0_3, %c0_4] : memref<1x192xf32, #tpu.memory_space<vmem>>, vector<1x192xf32>
    %4 = vector.broadcast %3 : vector<1x192xf32> to vector<256x192xf32>
    %5 = arith.addf %2, %4 : vector<256x192xf32>
    %cst_5 = arith.constant 0.000000e+00 : f32
    %6 = vector.broadcast %cst_5 : f32 to vector<256x192xf32>
    %7 = arith.maximumf %5, %6 : vector<256x192xf32>
    %8 = arith.truncf %7 : vector<256x192xf32> to vector<256x192xbf16>
    %c0_6 = arith.constant 0 : index
    %c0_7 = arith.constant 0 : index
    %9 = vector.load %arg6[%c0_6, %c0_7] : memref<256x192xbf16, #tpu.memory_space<vmem>>, vector<256x192xbf16>
    tpu.vector_store %arg6[%c0_6, %c0_7], %8 {strides = array<i32>} : memref<256x192xbf16, #tpu.memory_space<vmem>>, vector<256x192xbf16>,
    %c0_8 = arith.constant 0 : index
    %c0_9 = arith.constant 0 : index
    %10 = vector.load %arg3[%c0_8, %c0_9] : memref<480x128xbf16, #tpu.memory_space<vmem>>, vector<480x128xbf16>
    %cst_10 = arith.constant dense<0.000000e+00> : vector<256x128xf32>
    %11 = tpu.matmul %0, %10, %cst_10 {dimension_numbers = #tpu.dot_dimension_numbers<[1], [0], [0], [1], [0, 0, 1, 1], [], []>} : vector<256x480xbf16>, vector<480x128xbf16>, vector<256x128xf32> -> vector<256x128xf32>
    %c0_11 = arith.constant 0 : index
    %c0_12 = arith.constant 0 : index
    %12 = vector.load %arg5[%c0_11, %c0_12] : memref<1x128xf32, #tpu.memory_space<vmem>>, vector<1x128xf32>
    %13 = vector.broadcast %12 : vector<1x128xf32> to vector<256x128xf32>
    %14 = arith.addf %11, %13 : vector<256x128xf32>
    %cst_13 = arith.constant 0.000000e+00 : f32
    %15 = vector.broadcast %cst_13 : f32 to vector<256x128xf32>
    %16 = arith.maximumf %14, %15 : vector<256x128xf32>
    %17 = arith.truncf %16 : vector<256x128xf32> to vector<256x128xbf16>
    %c0_14 = arith.constant 0 : index
    %c0_15 = arith.constant 0 : index
    %18 = vector.load %arg7[%c0_14, %c0_15] : memref<256x128xbf16, #tpu.memory_space<vmem>>, vector<256x128xbf16>
    tpu.vector_store %arg7[%c0_14, %c0_15], %17 {strides = array<i32>} : memref<256x128xbf16, #tpu.memory_space<vmem>>, vector<256x128xbf16>,
    return
  }
  func.func @transform_0(%arg0: i32) -> (i32, i32) {
    %c0_i32 = arith.constant 0 : i32
    %c0_i32_0 = arith.constant 0 : i32
    return %arg0, %c0_i32 : i32, i32
  }
  func.func @transform_1(%arg0: i32) -> (i32, i32) {
    %c0_i32 = arith.constant 0 : i32
    %c0_i32_0 = arith.constant 0 : i32
    %c0_i32_1 = arith.constant 0 : i32
    return %c0_i32, %c0_i32_0 : i32, i32
  }
  func.func @transform_2(%arg0: i32) -> (i32, i32) {
    %c0_i32 = arith.constant 0 : i32
    %c0_i32_0 = arith.constant 0 : i32
    %c0_i32_1 = arith.constant 0 : i32
    return %c0_i32, %c0_i32_0 : i32, i32
  }
  func.func @transform_3(%arg0: i32) -> (i32, i32) {
    %c0_i32 = arith.constant 0 : i32
    %c0_i32_0 = arith.constant 0 : i32
    %c0_i32_1 = arith.constant 0 : i32
    return %c0_i32, %c0_i32_0 : i32, i32
  }
  func.func @transform_4(%arg0: i32) -> (i32, i32) {
    %c0_i32 = arith.constant 0 : i32
    %c0_i32_0 = arith.constant 0 : i32
    %c0_i32_1 = arith.constant 0 : i32
    return %c0_i32, %c0_i32_0 : i32, i32
  }
  func.func @transform_5(%arg0: i32) -> (i32, i32) {
    %c0_i32 = arith.constant 0 : i32
    %c0_i32_0 = arith.constant 0 : i32
    return %arg0, %c0_i32 : i32, i32
  }
  func.func @transform_6(%arg0: i32) -> (i32, i32) {
    %c0_i32 = arith.constant 0 : i32
    %c0_i32_0 = arith.constant 0 : i32
    return %arg0, %c0_i32 : i32, i32
  }
}

module attributes {stable_mosaic.version = 11 : i64} {
  func.func @_spatial_conv_kernel(%arg0: i32, %arg1: memref<4x10x10x128xbf16, #tpu.memory_space<vmem>>, %arg2: memref<3x384x256xbf16, #tpu.memory_space<vmem>>, %arg3: memref<1x256xf32, #tpu.memory_space<vmem>>, %arg4: memref<4x64x256xbf16, #tpu.memory_space<vmem>>) attributes {dimension_semantics = [#tpu.dimension_semantics<parallel>], iteration_bounds = array<i64: 2>, scalar_prefetch = 0 : i64, scratch_operands = 0 : i64, tpu.core_type = #tpu.core_type<tc>, window_params = [{transform_indices = @transform_0, window_bounds = array<i64: 4, 10, 10, 128>}, {pipeline_mode = #tpu.pipeline_mode<synchronous>, transform_indices = @transform_1, window_bounds = array<i64: 3, 384, 256>}, {pipeline_mode = #tpu.pipeline_mode<synchronous>, transform_indices = @transform_2, window_bounds = array<i64: 1, 256>}, {transform_indices = @transform_3, window_bounds = array<i64: 4, 64, 256>}]} {
    %c0 = arith.constant 0 : index
    %c0_0 = arith.constant 0 : index
    %c0_1 = arith.constant 0 : index
    %c0_2 = arith.constant 0 : index
    %0 = vector.load %arg1[%c0, %c0_0, %c0_1, %c0_2] : memref<4x10x10x128xbf16, #tpu.memory_space<vmem>>, vector<4x10x10x128xbf16>
    %1 = vector.extract_strided_slice %0 {offsets = [0, 0, 0, 0], sizes = [4, 10, 8, 128], strides = [1, 1, 1, 1]} : vector<4x10x10x128xbf16> to vector<4x10x8x128xbf16>
    %2 = vector.extract_strided_slice %0 {offsets = [0, 0, 1, 0], sizes = [4, 10, 8, 128], strides = [1, 1, 1, 1]} : vector<4x10x10x128xbf16> to vector<4x10x8x128xbf16>
    %3 = vector.extract_strided_slice %0 {offsets = [0, 0, 2, 0], sizes = [4, 10, 8, 128], strides = [1, 1, 1, 1]} : vector<4x10x10x128xbf16> to vector<4x10x8x128xbf16>
    %4 = tpu.concatenate %1, %2, %3 in 3 : vector<4x10x8x128xbf16>, vector<4x10x8x128xbf16>, vector<4x10x8x128xbf16> -> vector<4x10x8x384xbf16>
    %5 = vector.shape_cast %4 : vector<4x10x8x384xbf16> to vector<4x80x384xbf16>
    %cst = arith.constant 0.000000e+00 : f32
    %6 = vector.broadcast %cst : f32 to vector<256x256xf32>
    %7 = vector.extract_strided_slice %5 {offsets = [0, 0, 0], sizes = [4, 64, 384], strides = [1, 1, 1]} : vector<4x80x384xbf16> to vector<4x64x384xbf16>
    %8 = vector.shape_cast %7 : vector<4x64x384xbf16> to vector<256x384xbf16>
    %c0_3 = arith.constant 0 : index
    %c0_4 = arith.constant 0 : index
    %c0_5 = arith.constant 0 : index
    %9 = vector.load %arg2[%c0_3, %c0_4, %c0_5] : memref<3x384x256xbf16, #tpu.memory_space<vmem>>, vector<1x384x256xbf16>
    %10 = vector.shape_cast %9 : vector<1x384x256xbf16> to vector<384x256xbf16>
    %cst_6 = arith.constant dense<0.000000e+00> : vector<256x256xf32>
    %11 = tpu.matmul %8, %10, %cst_6 {dimension_numbers = #tpu.dot_dimension_numbers<[1], [0], [0], [1], [0, 0, 1, 1], [], []>} : vector<256x384xbf16>, vector<384x256xbf16>, vector<256x256xf32> -> vector<256x256xf32>
    %12 = arith.addf %6, %11 : vector<256x256xf32>
    %13 = vector.extract_strided_slice %5 {offsets = [0, 8, 0], sizes = [4, 64, 384], strides = [1, 1, 1]} : vector<4x80x384xbf16> to vector<4x64x384xbf16>
    %14 = vector.shape_cast %13 : vector<4x64x384xbf16> to vector<256x384xbf16>
    %c1 = arith.constant 1 : index
    %c0_7 = arith.constant 0 : index
    %c0_8 = arith.constant 0 : index
    %15 = vector.load %arg2[%c1, %c0_7, %c0_8] : memref<3x384x256xbf16, #tpu.memory_space<vmem>>, vector<1x384x256xbf16>
    %16 = vector.shape_cast %15 : vector<1x384x256xbf16> to vector<384x256xbf16>
    %cst_9 = arith.constant dense<0.000000e+00> : vector<256x256xf32>
    %17 = tpu.matmul %14, %16, %cst_9 {dimension_numbers = #tpu.dot_dimension_numbers<[1], [0], [0], [1], [0, 0, 1, 1], [], []>} : vector<256x384xbf16>, vector<384x256xbf16>, vector<256x256xf32> -> vector<256x256xf32>
    %18 = arith.addf %12, %17 : vector<256x256xf32>
    %19 = vector.extract_strided_slice %5 {offsets = [0, 16, 0], sizes = [4, 64, 384], strides = [1, 1, 1]} : vector<4x80x384xbf16> to vector<4x64x384xbf16>
    %20 = vector.shape_cast %19 : vector<4x64x384xbf16> to vector<256x384xbf16>
    %c2 = arith.constant 2 : index
    %c0_10 = arith.constant 0 : index
    %c0_11 = arith.constant 0 : index
    %21 = vector.load %arg2[%c2, %c0_10, %c0_11] : memref<3x384x256xbf16, #tpu.memory_space<vmem>>, vector<1x384x256xbf16>
    %22 = vector.shape_cast %21 : vector<1x384x256xbf16> to vector<384x256xbf16>
    %cst_12 = arith.constant dense<0.000000e+00> : vector<256x256xf32>
    %23 = tpu.matmul %20, %22, %cst_12 {dimension_numbers = #tpu.dot_dimension_numbers<[1], [0], [0], [1], [0, 0, 1, 1], [], []>} : vector<256x384xbf16>, vector<384x256xbf16>, vector<256x256xf32> -> vector<256x256xf32>
    %24 = arith.addf %18, %23 : vector<256x256xf32>
    %c0_13 = arith.constant 0 : index
    %c0_14 = arith.constant 0 : index
    %25 = vector.load %arg3[%c0_13, %c0_14] : memref<1x256xf32, #tpu.memory_space<vmem>>, vector<1x256xf32>
    %26 = vector.broadcast %25 : vector<1x256xf32> to vector<256x256xf32>
    %27 = arith.addf %24, %26 : vector<256x256xf32>
    %cst_15 = arith.constant 0.000000e+00 : f32
    %28 = vector.broadcast %cst_15 : f32 to vector<256x256xf32>
    %29 = arith.maximumf %27, %28 : vector<256x256xf32>
    %30 = vector.shape_cast %29 : vector<256x256xf32> to vector<4x64x256xf32>
    %31 = arith.truncf %30 : vector<4x64x256xf32> to vector<4x64x256xbf16>
    %c0_16 = arith.constant 0 : index
    %c0_17 = arith.constant 0 : index
    %c0_18 = arith.constant 0 : index
    %32 = vector.load %arg4[%c0_16, %c0_17, %c0_18] : memref<4x64x256xbf16, #tpu.memory_space<vmem>>, vector<4x64x256xbf16>
    tpu.vector_store %arg4[%c0_16, %c0_17, %c0_18], %31 {strides = array<i32>} : memref<4x64x256xbf16, #tpu.memory_space<vmem>>, vector<4x64x256xbf16>,
    return
  }
  func.func @transform_0(%arg0: i32) -> (i32, i32, i32, i32) {
    %c0_i32 = arith.constant 0 : i32
    %c0_i32_0 = arith.constant 0 : i32
    %c0_i32_1 = arith.constant 0 : i32
    %c0_i32_2 = arith.constant 0 : i32
    return %arg0, %c0_i32, %c0_i32_0, %c0_i32_1 : i32, i32, i32, i32
  }
  func.func @transform_1(%arg0: i32) -> (i32, i32, i32) {
    %c0_i32 = arith.constant 0 : i32
    %c0_i32_0 = arith.constant 0 : i32
    %c0_i32_1 = arith.constant 0 : i32
    %c0_i32_2 = arith.constant 0 : i32
    return %c0_i32, %c0_i32_0, %c0_i32_1 : i32, i32, i32
  }
  func.func @transform_2(%arg0: i32) -> (i32, i32) {
    %c0_i32 = arith.constant 0 : i32
    %c0_i32_0 = arith.constant 0 : i32
    %c0_i32_1 = arith.constant 0 : i32
    return %c0_i32, %c0_i32_0 : i32, i32
  }
  func.func @transform_3(%arg0: i32) -> (i32, i32, i32) {
    %c0_i32 = arith.constant 0 : i32
    %c0_i32_0 = arith.constant 0 : i32
    %c0_i32_1 = arith.constant 0 : i32
    return %arg0, %c0_i32, %c0_i32_0 : i32, i32, i32
  }
}

module attributes {stable_mosaic.version = 11 : i64} {
  func.func @_temporal_conv_kernel(%arg0: i32, %arg1: i32, %arg2: memref<1x6x64x256xbf16, #tpu.memory_space<vmem>>, %arg3: memref<3x256x256xbf16, #tpu.memory_space<vmem>>, %arg4: memref<1x256xf32, #tpu.memory_space<vmem>>, %arg5: memref<1x4x64x256xbf16, #tpu.memory_space<vmem>>) attributes {dimension_semantics = [#tpu.dimension_semantics<parallel>, #tpu.dimension_semantics<parallel>], iteration_bounds = array<i64: 2, 1>, scalar_prefetch = 0 : i64, scratch_operands = 0 : i64, tpu.core_type = #tpu.core_type<tc>, window_params = [{transform_indices = @transform_0, window_bounds = array<i64: 1, 6, 64, 256>}, {pipeline_mode = #tpu.pipeline_mode<synchronous>, transform_indices = @transform_1, window_bounds = array<i64: 3, 256, 256>}, {pipeline_mode = #tpu.pipeline_mode<synchronous>, transform_indices = @transform_2, window_bounds = array<i64: 1, 256>}, {transform_indices = @transform_3, window_bounds = array<i64: 1, 4, 64, 256>}]} {
    %c0 = arith.constant 0 : index
    %c0_0 = arith.constant 0 : index
    %c0_1 = arith.constant 0 : index
    %c0_2 = arith.constant 0 : index
    %0 = vector.load %arg2[%c0, %c0_0, %c0_1, %c0_2] : memref<1x6x64x256xbf16, #tpu.memory_space<vmem>>, vector<1x6x64x256xbf16>
    %1 = vector.shape_cast %0 : vector<1x6x64x256xbf16> to vector<6x64x256xbf16>
    %2 = vector.shape_cast %1 : vector<6x64x256xbf16> to vector<384x256xbf16>
    %3 = vector.extract_strided_slice %2 {offsets = [0, 0], sizes = [256, 256], strides = [1, 1]} : vector<384x256xbf16> to vector<256x256xbf16>
    %c0_3 = arith.constant 0 : index
    %c0_4 = arith.constant 0 : index
    %c0_5 = arith.constant 0 : index
    %4 = vector.load %arg3[%c0_3, %c0_4, %c0_5] : memref<3x256x256xbf16, #tpu.memory_space<vmem>>, vector<1x256x256xbf16>
    %5 = vector.shape_cast %4 : vector<1x256x256xbf16> to vector<256x256xbf16>
    %cst = arith.constant dense<0.000000e+00> : vector<256x256xf32>
    %6 = tpu.matmul %3, %5, %cst {dimension_numbers = #tpu.dot_dimension_numbers<[1], [0], [0], [1], [0, 0, 1, 1], [], []>} : vector<256x256xbf16>, vector<256x256xbf16>, vector<256x256xf32> -> vector<256x256xf32>
    %7 = vector.extract_strided_slice %2 {offsets = [64, 0], sizes = [256, 256], strides = [1, 1]} : vector<384x256xbf16> to vector<256x256xbf16>
    %c1 = arith.constant 1 : index
    %c0_6 = arith.constant 0 : index
    %c0_7 = arith.constant 0 : index
    %8 = vector.load %arg3[%c1, %c0_6, %c0_7] : memref<3x256x256xbf16, #tpu.memory_space<vmem>>, vector<1x256x256xbf16>
    %9 = vector.shape_cast %8 : vector<1x256x256xbf16> to vector<256x256xbf16>
    %cst_8 = arith.constant dense<0.000000e+00> : vector<256x256xf32>
    %10 = tpu.matmul %7, %9, %cst_8 {dimension_numbers = #tpu.dot_dimension_numbers<[1], [0], [0], [1], [0, 0, 1, 1], [], []>} : vector<256x256xbf16>, vector<256x256xbf16>, vector<256x256xf32> -> vector<256x256xf32>
    %11 = arith.addf %6, %10 : vector<256x256xf32>
    %12 = vector.extract_strided_slice %2 {offsets = [128, 0], sizes = [256, 256], strides = [1, 1]} : vector<384x256xbf16> to vector<256x256xbf16>
    %c2 = arith.constant 2 : index
    %c0_9 = arith.constant 0 : index
    %c0_10 = arith.constant 0 : index
    %13 = vector.load %arg3[%c2, %c0_9, %c0_10] : memref<3x256x256xbf16, #tpu.memory_space<vmem>>, vector<1x256x256xbf16>
    %14 = vector.shape_cast %13 : vector<1x256x256xbf16> to vector<256x256xbf16>
    %cst_11 = arith.constant dense<0.000000e+00> : vector<256x256xf32>
    %15 = tpu.matmul %12, %14, %cst_11 {dimension_numbers = #tpu.dot_dimension_numbers<[1], [0], [0], [1], [0, 0, 1, 1], [], []>} : vector<256x256xbf16>, vector<256x256xbf16>, vector<256x256xf32> -> vector<256x256xf32>
    %16 = arith.addf %11, %15 : vector<256x256xf32>
    %c0_12 = arith.constant 0 : index
    %c0_13 = arith.constant 0 : index
    %17 = vector.load %arg4[%c0_12, %c0_13] : memref<1x256xf32, #tpu.memory_space<vmem>>, vector<1x256xf32>
    %18 = vector.broadcast %17 : vector<1x256xf32> to vector<256x256xf32>
    %19 = arith.addf %16, %18 : vector<256x256xf32>
    %cst_14 = arith.constant 0.000000e+00 : f32
    %20 = vector.broadcast %cst_14 : f32 to vector<256x256xf32>
    %21 = arith.maximumf %19, %20 : vector<256x256xf32>
    %22 = vector.shape_cast %21 : vector<256x256xf32> to vector<4x64x256xf32>
    %23 = arith.truncf %22 : vector<4x64x256xf32> to vector<4x64x256xbf16>
    %c0_15 = arith.constant 0 : index
    %c0_16 = arith.constant 0 : index
    %c0_17 = arith.constant 0 : index
    %c0_18 = arith.constant 0 : index
    %24 = vector.load %arg5[%c0_15, %c0_16, %c0_17, %c0_18] : memref<1x4x64x256xbf16, #tpu.memory_space<vmem>>, vector<1x4x64x256xbf16>
    %25 = vector.shape_cast %24 : vector<1x4x64x256xbf16> to vector<4x64x256xbf16>
    %26 = vector.shape_cast %23 : vector<4x64x256xbf16> to vector<1x4x64x256xbf16>
    tpu.vector_store %arg5[%c0_15, %c0_16, %c0_17, %c0_18], %26 {strides = array<i32>} : memref<1x4x64x256xbf16, #tpu.memory_space<vmem>>, vector<1x4x64x256xbf16>,
    return
  }
  func.func @transform_0(%arg0: i32, %arg1: i32) -> (i32, i32, i32, i32) {
    %c0_i32 = arith.constant 0 : i32
    %c0_i32_0 = arith.constant 0 : i32
    %c0_i32_1 = arith.constant 0 : i32
    return %arg0, %c0_i32, %arg1, %c0_i32_0 : i32, i32, i32, i32
  }
  func.func @transform_1(%arg0: i32, %arg1: i32) -> (i32, i32, i32) {
    %c0_i32 = arith.constant 0 : i32
    %c0_i32_0 = arith.constant 0 : i32
    %c0_i32_1 = arith.constant 0 : i32
    %c0_i32_2 = arith.constant 0 : i32
    return %c0_i32, %c0_i32_0, %c0_i32_1 : i32, i32, i32
  }
  func.func @transform_2(%arg0: i32, %arg1: i32) -> (i32, i32) {
    %c0_i32 = arith.constant 0 : i32
    %c0_i32_0 = arith.constant 0 : i32
    %c0_i32_1 = arith.constant 0 : i32
    return %c0_i32, %c0_i32_0 : i32, i32
  }
  func.func @transform_3(%arg0: i32, %arg1: i32) -> (i32, i32, i32, i32) {
    %c0_i32 = arith.constant 0 : i32
    %c0_i32_0 = arith.constant 0 : i32
    %c0_i32_1 = arith.constant 0 : i32
    return %arg0, %c0_i32, %arg1, %c0_i32_0 : i32, i32, i32, i32
  }
}

</mosaic_0001>

<llo_original>
// kernel: mixed_4b.4
$region0: #{mixed_4b.4}
  #allocation0 [shape = 'u32[]', space=smem, size = 0x4, offset = 0x4, fixed_abs, tag = 'smem constant byte address 0x4 - core index']
  #allocation1 [shape = 'u32[144,128]{1,0:T(1,128)}', space=vmem, size = 0x12000, scoped, tag = 'internal scratch']
  %s0 = inlined_call_operand.vmem [shape: bf16[512,480], index: 0, kind: input, shape index: {}]
  %s1 = inlined_call_operand.vmem [shape: bf16[480,192], index: 1, kind: input, shape index: {}]
  %s2 = inlined_call_operand.vmem [shape: bf16[480,128], index: 2, kind: input, shape index: {}]
  %s3 = inlined_call_operand.vmem [shape: f32[1,192], index: 3, kind: input, shape index: {}]
  %s4 = inlined_call_operand.vmem [shape: f32[1,128], index: 4, kind: input, shape index: {}]
  %s5 = inlined_call_operand.vmem [shape: bf16[512,192], index: 5, kind: output, shape index: {0}]
  %s6 = inlined_call_operand.vmem [shape: bf16[512,128], index: 6, kind: output, shape index: {1}]
  %7 = xla_tuple %s5, %s6
  %s8 = sld [smem:[#allocation0]]
  $region61: #{mixed_4b.4} parent=0
    _
  %s10 = ssub.s32 1, %s8
  %s11 = scalar_select 0, %s10, %s8
  loop: start=0, step=1, limit=4
  $region2: #{mixed_4b.4} parent=0 // loop_pre_header
    _
  $region3: #{mixed_4b.4} parent=0 // loop_header
    %s13 = sphi 0, %s17
    %p14 = scmp.ge.s32.totalorder %s13, 4
    %s23 = sphi 0, %s25
    %s26 = sphi 0, %s23
    %s27 = sphi 0, %s26
    %s43 = sphi 0, %s27
    %s47 = sphi 0, %s47
    %s49 = sphi 0, %s47
    %s50 = sphi 0, %s49
    %s64 = sphi 0, %s50
    %s68 = sphi 0, %s68
    %s70 = sphi 0, %s68
    %s71 = sphi 0, %s70
    %s85 = sphi 0, %s71
    %s89 = sphi 0, %s89
    %s91 = sphi 0, %s89
    %s92 = sphi 0, %s91
    %s106 = sphi 0, %s92
    %s110 = sphi 0, %s110
    %s112 = sphi 0, %s110
    %s113 = sphi 0, %s112
    %s127 = sphi 0, %s113
    %s133 = sphi 0, %s135
    %s136 = sphi 0, %s133
    %s137 = sphi 0, %s136
    %s153 = sphi 0, %s137
    %s159 = sphi 0, %s161
    %s162 = sphi 0, %s159
    %s163 = sphi 0, %s162
    %s179 = sphi 0, %s163
  $region4: #{mixed_4b.4} parent=0 // loop_header_branch
    %16 = sbr.rel (%p14) target = $region8
  $region5: #{mixed_4b.4} parent=0 // loop_body
    %s18 = ssub.s32 %s13, 1
    %s19 = ssub.s32 %s13, 2
    %s20 = sadd.s32 %s13, 1
    %s21 = ssub.s32 %s13, %s20
    %p22 = scmp.eq.s32.totalorder %s21, 0
    %s24 = sadd.s32 %s23, 1
    %s25 = scalar_select %p22, %s23, %s24
    %p28 = pneg %p22
    %p29 = scmp.eq.s32.totalorder %s13, 1
    %p30 = por %p28, %p29
    %p31 = scmp.ne.s32.totalorder %s23, %s26
    %p32 = scmp.eq.s32.totalorder %s13, 0
    %p33 = por %p31, %p32
    %p34 = scmp.ne.s32.totalorder %s23, %s26
    %p35 = scmp.eq.s32.totalorder %s18, 1
    %p36 = por %p34, %p35
    %p37 = scmp.ne.s32.totalorder %s26, %s27
    %p38 = scmp.eq.s32.totalorder %s18, 0
    %p39 = por %p37, %p38
    %p40 = scmp.ne.s32.totalorder %s26, %s27
    %p41 = scmp.eq.s32.totalorder %s19, 1
    %p42 = por %p40, %p41
    %p44 = scmp.ne.s32.totalorder %s27, %s43
    %p45 = scmp.eq.s32.totalorder %s19, 0
    %p46 = por %p44, %p45
    %s48 = sadd.s32 %s47, 1
    %p51 = scmp.eq.s32.totalorder %s13, 1
    %p52 = scmp.ne.s32.totalorder %s47, %s49
    %p53 = scmp.eq.s32.totalorder %s13, 0
    %p54 = por %p52, %p53
    %p55 = scmp.ne.s32.totalorder %s47, %s49
    %p56 = scmp.eq.s32.totalorder %s18, 1
    %p57 = por %p55, %p56
    %p58 = scmp.ne.s32.totalorder %s49, %s50
    %p59 = scmp.eq.s32.totalorder %s18, 0
    %p60 = por %p58, %p59
    %p61 = scmp.ne.s32.totalorder %s49, %s50
    %p62 = scmp.eq.s32.totalorder %s19, 1
    %p63 = por %p61, %p62
    %p65 = scmp.ne.s32.totalorder %s50, %s64
    %p66 = scmp.eq.s32.totalorder %s19, 0
    %p67 = por %p65, %p66
    %s69 = sadd.s32 %s68, 1
    %p72 = scmp.eq.s32.totalorder %s13, 1
    %p73 = scmp.ne.s32.totalorder %s68, %s70
    %p74 = scmp.eq.s32.totalorder %s13, 0
    %p75 = por %p73, %p74
    %p76 = scmp.ne.s32.totalorder %s68, %s70
    %p77 = scmp.eq.s32.totalorder %s18, 1
    %p78 = por %p76, %p77
    %p79 = scmp.ne.s32.totalorder %s70, %s71
    %p80 = scmp.eq.s32.totalorder %s18, 0
    %p81 = por %p79, %p80
    %p82 = scmp.ne.s32.totalorder %s70, %s71
    %p83 = scmp.eq.s32.totalorder %s19, 1
    %p84 = por %p82, %p83
    %p86 = scmp.ne.s32.totalorder %s71, %s85
    %p87 = scmp.eq.s32.totalorder %s19, 0
    %p88 = por %p86, %p87
    %s90 = sadd.s32 %s89, 1
    %p93 = scmp.eq.s32.totalorder %s13, 1
    %p94 = scmp.ne.s32.totalorder %s89, %s91
    %p95 = scmp.eq.s32.totalorder %s13, 0
    %p96 = por %p94, %p95
    %p97 = scmp.ne.s32.totalorder %s89, %s91
    %p98 = scmp.eq.s32.totalorder %s18, 1
    %p99 = por %p97, %p98
    %p100 = scmp.ne.s32.totalorder %s91, %s92
    %p101 = scmp.eq.s32.totalorder %s18, 0
    %p102 = por %p100, %p101
    %p103 = scmp.ne.s32.totalorder %s91, %s92
    %p104 = scmp.eq.s32.totalorder %s19, 1
    %p105 = por %p103, %p104
    %p107 = scmp.ne.s32.totalorder %s92, %s106
    %p108 = scmp.eq.s32.totalorder %s19, 0
    %p109 = por %p107, %p108
    %s111 = sadd.s32 %s110, 1
    %p114 = scmp.eq.s32.totalorder %s13, 1
    %p115 = scmp.ne.s32.totalorder %s110, %s112
    %p116 = scmp.eq.s32.totalorder %s13, 0
    %p117 = por %p115, %p116
    %p118 = scmp.ne.s32.totalorder %s110, %s112
    %p119 = scmp.eq.s32.totalorder %s18, 1
    %p120 = por %p118, %p119
    %p121 = scmp.ne.s32.totalorder %s112, %s113
    %p122 = scmp.eq.s32.totalorder %s18, 0
    %p123 = por %p121, %p122
    %p124 = scmp.ne.s32.totalorder %s112, %s113
    %p125 = scmp.eq.s32.totalorder %s19, 1
    %p126 = por %p124, %p125
    %p128 = scmp.ne.s32.totalorder %s113, %s127
    %p129 = scmp.eq.s32.totalorder %s19, 0
    %p130 = por %p128, %p129
    %s131 = ssub.s32 %s13, %s20
    %p132 = scmp.eq.s32.totalorder %s131, 0
    %s134 = sadd.s32 %s133, 1
    %s135 = scalar_select %p132, %s133, %s134
    %p138 = pneg %p132
    %p139 = scmp.eq.s32.totalorder %s13, 1
    %p140 = por %p138, %p139
    %p141 = scmp.ne.s32.totalorder %s133, %s136
    %p142 = scmp.eq.s32.totalorder %s13, 0
    %p143 = por %p141, %p142
    %p144 = scmp.ne.s32.totalorder %s133, %s136
    %p145 = scmp.eq.s32.totalorder %s18, 1
    %p146 = por %p144, %p145
    %p147 = scmp.ne.s32.totalorder %s136, %s137
    %p148 = scmp.eq.s32.totalorder %s18, 0
    %p149 = por %p147, %p148
    %p150 = scmp.ne.s32.totalorder %s136, %s137
    %p151 = scmp.eq.s32.totalorder %s19, 1
    %p152 = por %p150, %p151
    %p154 = scmp.ne.s32.totalorder %s137, %s153
    %p155 = scmp.eq.s32.totalorder %s19, 0
    %p156 = por %p154, %p155
    %s157 = ssub.s32 %s13, %s20
    %p158 = scmp.eq.s32.totalorder %s157, 0
    %s160 = sadd.s32 %s159, 1
    %s161 = scalar_select %p158, %s159, %s160
    %p164 = pneg %p158
    %p165 = scmp.eq.s32.totalorder %s13, 1
    %p166 = por %p164, %p165
    %p167 = scmp.ne.s32.totalorder %s159, %s162
    %p168 = scmp.eq.s32.totalorder %s13, 0
    %p169 = por %p167, %p168
    %p170 = scmp.ne.s32.totalorder %s159, %s162
    %p171 = scmp.eq.s32.totalorder %s18, 1
    %p172 = por %p170, %p171
    %p173 = scmp.ne.s32.totalorder %s162, %s163
    %p174 = scmp.eq.s32.totalorder %s18, 0
    %p175 = por %p173, %p174
    %p176 = scmp.ne.s32.totalorder %s162, %s163
    %p177 = scmp.eq.s32.totalorder %s19, 1
    %p178 = por %p176, %p177
    %p180 = scmp.ne.s32.totalorder %s163, %s179
    %p181 = scmp.eq.s32.totalorder %s19, 0
    %p182 = por %p180, %p181
    %p183 = scmp.le.s32.totalorder 1, %s13
    %p184 = scmp.lt.s32.totalorder %s13, 3
    %p185 = pnand %p183, %p184
    %p186 = pneg %p185
    // Predicated region
    $region9: #{mixed_4b.4} parent=5 // pred_check
      _
    $region10: #{mixed_4b.4} parent=5 // pred_check_branch
      %188 = sbr.rel (%p185) target = $region12
    $region11: #{mixed_4b.4} parent=5 // pred_region
      %s189 = ssub.s32 %s13, 1
      // Predicated region
      $region13: #{mixed_4b.4} parent=11 // pred_check
        %p190 = pneg %p60
      $region14: #{mixed_4b.4} parent=11 // pred_check_branch
        %192 = sbr.rel (%p190) target = $region16
      $region15: #{mixed_4b.4} parent=11 // pred_region
        _
      $region16: #{mixed_4b.4} parent=11 // pred_fallthru
        _
      // Predicated region
      $region17: #{mixed_4b.4} parent=11 // pred_check
        %p193 = pneg %p81
      $region18: #{mixed_4b.4} parent=11 // pred_check_branch
        %195 = sbr.rel (%p193) target = $region20
      $region19: #{mixed_4b.4} parent=11 // pred_region
        _
      $region20: #{mixed_4b.4} parent=11 // pred_fallthru
        _
      // Predicated region
      $region21: #{mixed_4b.4} parent=11 // pred_check
        %p196 = pneg %p102
      $region22: #{mixed_4b.4} parent=11 // pred_check_branch
        %198 = sbr.rel (%p196) target = $region24
      $region23: #{mixed_4b.4} parent=11 // pred_region
        _
      $region24: #{mixed_4b.4} parent=11 // pred_fallthru
        _
      // Predicated region
      $region25: #{mixed_4b.4} parent=11 // pred_check
        %p199 = pneg %p123
      $region26: #{mixed_4b.4} parent=11 // pred_check_branch
        %201 = sbr.rel (%p199) target = $region28
      $region27: #{mixed_4b.4} parent=11 // pred_region
        _
      $region28: #{mixed_4b.4} parent=11 // pred_fallthru
        _
    $region12: #{mixed_4b.4} parent=5 // pred_fallthru
      _
    %p202 = scmp.lt.s32.totalorder %s13, 2
    // Predicated region
    $region29: #{mixed_4b.4} parent=5 // pred_check
      %p203 = pneg %p202
    $region30: #{mixed_4b.4} parent=5 // pred_check_branch
      %205 = sbr.rel (%p203) target = $region32
    $region31: #{mixed_4b.4} parent=5 // pred_region
      // Predicated region
      $region33: #{mixed_4b.4} parent=31 // pred_check
        %p206 = pneg %p33
      $region34: #{mixed_4b.4} parent=31 // pred_check_branch
        %208 = sbr.rel (%p206) target = $region36
      $region35: #{mixed_4b.4} parent=31 // pred_region
        %s209 = smul.u32 32, %s13
        %p210 = scmp.lt.s32.totalorder %s209, 63
        %s211 = scalar_select %p210, %s209, 63
        %s212 = smul.addr %s211, 4
        %s213 = smul.addr %s212, 4
        %s214 = scalar_lea.vmem %s0, %s213
        %s215 = smul.u32 32, %s13
      $region36: #{mixed_4b.4} parent=31 // pred_fallthru
        _
    $region32: #{mixed_4b.4} parent=5 // pred_fallthru
      _
    %p216 = scmp.le.s32.totalorder 1, %s13
    %p217 = scmp.lt.s32.totalorder %s13, 3
    %p218 = pnand %p216, %p217
    %p219 = pneg %p218
    // Predicated region
    $region37: #{mixed_4b.4} parent=5 // pred_check
      _
    $region38: #{mixed_4b.4} parent=5 // pred_check_branch
      %221 = sbr.rel (%p218) target = $region40
    $region39: #{mixed_4b.4} parent=5 // pred_region
      %s222 = ssub.s32 %s13, 1
      %s223 = smul.u32 32, %s18
      %p224 = scmp.lt.s32.totalorder %s223, 63
      %s225 = scalar_select %p224, %s223, 63
      %s226 = smul.addr %s225, 4
      %s227 = smul.addr %s226, 4
      %s228 = scalar_lea.vmem %s0, %s227
      %p229 = pneg %p39
      %p230 = pneg %p36
      %p231 = pneg %p60
      %p232 = pneg %p57
      %p233 = pneg %p81
      %p234 = pneg %p78
      %p235 = pneg %p102
      %p236 = pneg %p99
      %p237 = pneg %p123
      %p238 = pneg %p120
      %p239 = pneg %p149
      %p240 = pneg %p146
      %s241 = smul.u32 32, %s18
      %p242 = scmp.lt.s32.totalorder %s241, 63
      %s243 = scalar_select %p242, %s241, 63
      %s244 = smul.addr %s243, 2
      %s245 = smul.addr %s244, 4
      %s246 = scalar_lea.vmem %s5, %s245
      %p247 = pneg %p175
      %p248 = pneg %p172
      %s249 = smul.u32 32, %s18
      %p250 = scmp.lt.s32.totalorder %s249, 63
      %s251 = scalar_select %p250, %s249, 63
      %s252 = smul.addr %s251, 4
      %s253 = scalar_lea.vmem %s6, %s252
      %s254 = smul.u32 32, %s18
      %p255 = scmp.lt.s32.totalorder %s254, 63
      %s256 = scalar_select %p255, %s254, 63
      %s257 = smul.addr %s256, 4
      %s258 = smul.addr %s257, 4
      %s259 = scalar_lea.vmem %s0, %s258
      %s260 = smul.u32 32, %s18
      %s261 = smul.u32 32, %s18
      %p262 = scmp.lt.s32.totalorder %s261, 63
      %s263 = scalar_select %p262, %s261, 63
      %s264 = smul.addr %s263, 2
      %s265 = smul.addr %s264, 4
      %s266 = scalar_lea.vmem %s5, %s265
      %s267 = smul.u32 32, %s18
      %s268 = smul.u32 32, %s18
      %p269 = scmp.lt.s32.totalorder %s268, 63
      %s270 = scalar_select %p269, %s268, 63
      %s271 = smul.addr %s270, 4
      %s272 = scalar_lea.vmem %s6, %s271
      %s273 = smul.u32 32, %s18
      %v275 = vld [vmem:[%s259] sm:$0xff]
      %v276 = vld [vmem:[%s259 + $0x8] sm:$0xff]
      %v277 = vld [vmem:[%s259 + $0x10] sm:$0xff]
      %v278 = vld [vmem:[%s259 + $0x18] sm:$0xff]
      %v279 = vld [vmem:[%s259 + $0x20] sm:$0xff]
      %v280 = vld [vmem:[%s259 + $0x28] sm:$0xff]
      %v281 = vld [vmem:[%s259 + $0x30] sm:$0xff]
      %v282 = vld [vmem:[%s259 + $0x38] sm:$0xff]
      %v283 = vld [vmem:[%s259 + $0x40] sm:$0xff]
      %v284 = vld [vmem:[%s259 + $0x48] sm:$0xff]
      %v285 = vld [vmem:[%s259 + $0x50] sm:$0xff]
      %v286 = vld [vmem:[%s259 + $0x58] sm:$0xff]
      %v287 = vld [vmem:[%s259 + $0x60] sm:$0xff]
      %v288 = vld [vmem:[%s259 + $0x68] sm:$0xff]
      %v289 = vld [vmem:[%s259 + $0x70] sm:$0xff]
      %v290 = vld [vmem:[%s259 + $0x78] sm:$0xff]
      %v291 = vld [vmem:[%s259 + $0x80] sm:$0xff]
      %v292 = vld [vmem:[%s259 + $0x88] sm:$0xff]
      %v293 = vld [vmem:[%s259 + $0x90] sm:$0xff]
      %v294 = vld [vmem:[%s259 + $0x98] sm:$0xff]
      %v295 = vld [vmem:[%s259 + $0xa0] sm:$0xff]
      %v296 = vld [vmem:[%s259 + $0xa8] sm:$0xff]
      %v297 = vld [vmem:[%s259 + $0xb0] sm:$0xff]
      %v298 = vld [vmem:[%s259 + $0xb8] sm:$0xff]
      %v299 = vld [vmem:[%s259 + $0xc0] sm:$0xff]
      %v300 = vld [vmem:[%s259 + $0xc8] sm:$0xff]
      %v301 = vld [vmem:[%s259 + $0xd0] sm:$0xff]
      %v302 = vld [vmem:[%s259 + $0xd8] sm:$0xff]
      %v303 = vld [vmem:[%s259 + $0xe0] sm:$0xff]
      %v304 = vld [vmem:[%s259 + $0xe8] sm:$0xff]
      %v305 = vld [vmem:[%s259 + $0xf0] sm:$0xff]
      %v306 = vld [vmem:[%s259 + $0xf8] sm:$0xff]
      %v307 = vld [vmem:[%s259 + $0x100] sm:$0xff]
      %v308 = vld [vmem:[%s259 + $0x108] sm:$0xff]
      %v309 = vld [vmem:[%s259 + $0x110] sm:$0xff]
      %v310 = vld [vmem:[%s259 + $0x118] sm:$0xff]
      %v311 = vld [vmem:[%s259 + $0x120] sm:$0xff]
      %v312 = vld [vmem:[%s259 + $0x128] sm:$0xff]
      %v313 = vld [vmem:[%s259 + $0x130] sm:$0xff]
      %v314 = vld [vmem:[%s259 + $0x138] sm:$0xff]
      %v315 = vld [vmem:[%s259 + $0x140] sm:$0xff]
      %v316 = vld [vmem:[%s259 + $0x148] sm:$0xff]
      %v317 = vld [vmem:[%s259 + $0x150] sm:$0xff]
      %v318 = vld [vmem:[%s259 + $0x158] sm:$0xff]
      %v319 = vld [vmem:[%s259 + $0x160] sm:$0xff]
      %v320 = vld [vmem:[%s259 + $0x168] sm:$0xff]
      %v321 = vld [vmem:[%s259 + $0x170] sm:$0xff]
      %v322 = vld [vmem:[%s259 + $0x178] sm:$0xff]
      %v323 = vld [vmem:[%s259 + $0x180] sm:$0xff]
      %v324 = vld [vmem:[%s259 + $0x188] sm:$0xff]
      %v325 = vld [vmem:[%s259 + $0x190] sm:$0xff]
      %v326 = vld [vmem:[%s259 + $0x198] sm:$0xff]
      %v327 = vld [vmem:[%s259 + $0x1a0] sm:$0xff]
      %v328 = vld [vmem:[%s259 + $0x1a8] sm:$0xff]
      %v329 = vld [vmem:[%s259 + $0x1b0] sm:$0xff]
      %v330 = vld [vmem:[%s259 + $0x1b8] sm:$0xff]
      %v331 = vld [vmem:[%s259 + $0x1c0] sm:$0xff]
      %v332 = vld [vmem:[%s259 + $0x1c8] sm:$0xff]
      %v333 = vld [vmem:[%s259 + $0x1d0] sm:$0xff]
      %v334 = vld [vmem:[%s259 + $0x1d8] sm:$0xff]
      %v335 = vld [vmem:[%s259 + $0x1e0] sm:$0xff]
      %v336 = vld [vmem:[%s259 + $0x1e8] sm:$0xff]
      %v337 = vld [vmem:[%s259 + $0x1f0] sm:$0xff]
      %v338 = vld [vmem:[%s259 + $0x1f8] sm:$0xff]
      %v339 = vld [vmem:[%s1] sm:$0xff]
      %v340 = vld [vmem:[%s1 + $0x8] sm:$0xff]
      %v341 = vld [vmem:[%s1 + $0x10] sm:$0xff]
      %v342 = vld [vmem:[%s1 + $0x18] sm:$0xff]
      %v343 = vld [vmem:[%s1 + $0x20] sm:$0xff]
      %v344 = vld [vmem:[%s1 + $0x28] sm:$0xff]
      %v345 = vld [vmem:[%s1 + $0x30] sm:$0xff]
      %v346 = vld [vmem:[%s1 + $0x38] sm:$0xff]
      %v347 = vld [vmem:[%s1 + $0x40] sm:$0xff]
      %v348 = vld [vmem:[%s1 + $0x48] sm:$0xff]
      %v349 = vld [vmem:[%s1 + $0x50] sm:$0xff]
      %v350 = vld [vmem:[%s1 + $0x58] sm:$0xff]
      %v351 = vld [vmem:[%s1 + $0x60] sm:$0xff]
      %v352 = vld [vmem:[%s1 + $0x68] sm:$0xff]
      %v353 = vld [vmem:[%s1 + $0x70] sm:$0xff]
      %v354 = vld [vmem:[%s1 + $0x78] sm:$0xff]
      %v355 = vld [vmem:[%s1 + $0x80] sm:$0xff]
      %v356 = vld [vmem:[%s1 + $0x88] sm:$0xff]
      %v357 = vld [vmem:[%s1 + $0x90] sm:$0xff]
      %v358 = vld [vmem:[%s1 + $0x98] sm:$0xff]
      %v359 = vld [vmem:[%s1 + $0xa0] sm:$0xff]
      %v360 = vld [vmem:[%s1 + $0xa8] sm:$0xff]
      %v361 = vld [vmem:[%s1 + $0xb0] sm:$0xff]
      %v362 = vld [vmem:[%s1 + $0xb8] sm:$0xff]
      %v363 = vld [vmem:[%s1 + $0xc0] sm:$0xff]
      %v364 = vld [vmem:[%s1 + $0xc8] sm:$0xff]
      %v365 = vld [vmem:[%s1 + $0xd0] sm:$0xff]
      %v366 = vld [vmem:[%s1 + $0xd8] sm:$0xff]
      %v367 = vld [vmem:[%s1 + $0xe0] sm:$0xff]
      %v368 = vld [vmem:[%s1 + $0xe8] sm:$0xff]
      %v369 = vld [vmem:[%s1 + $0xf0] sm:$0xff]
      %v370 = vld [vmem:[%s1 + $0xf8] sm:$0xff]
      %v371 = vld [vmem:[%s1 + $0x100] sm:$0xff]
      %v372 = vld [vmem:[%s1 + $0x108] sm:$0xff]
      %v373 = vld [vmem:[%s1 + $0x110] sm:$0xff]
      %v374 = vld [vmem:[%s1 + $0x118] sm:$0xff]
      %v375 = vld [vmem:[%s1 + $0x120] sm:$0xff]
      %v376 = vld [vmem:[%s1 + $0x128] sm:$0xff]
      %v377 = vld [vmem:[%s1 + $0x130] sm:$0xff]
      %v378 = vld [vmem:[%s1 + $0x138] sm:$0xff]
      %v379 = vld [vmem:[%s1 + $0x140] sm:$0xff]
      %v380 = vld [vmem:[%s1 + $0x148] sm:$0xff]
      %v381 = vld [vmem:[%s1 + $0x150] sm:$0xff]
      %v382 = vld [vmem:[%s1 + $0x158] sm:$0xff]
      %v383 = vld [vmem:[%s1 + $0x160] sm:$0xff]
      %v384 = vld [vmem:[%s1 + $0x168] sm:$0xff]
      %v385 = vld [vmem:[%s1 + $0x170] sm:$0xff]
      %v386 = vld [vmem:[%s1 + $0x178] sm:$0xff]
      %v387 = vld [vmem:[%s1 + $0x180] sm:$0xff]
      %v388 = vld [vmem:[%s1 + $0x188] sm:$0xff]
      %v389 = vld [vmem:[%s1 + $0x190] sm:$0xff]
      %v390 = vld [vmem:[%s1 + $0x198] sm:$0xff]
      %v391 = vld [vmem:[%s1 + $0x1a0] sm:$0xff]
      %v392 = vld [vmem:[%s1 + $0x1a8] sm:$0xff]
      %v393 = vld [vmem:[%s1 + $0x1b0] sm:$0xff]
      %v394 = vld [vmem:[%s1 + $0x1b8] sm:$0xff]
      %v395 = vld [vmem:[%s1 + $0x1c0] sm:$0xff]
      %v396 = vld [vmem:[%s1 + $0x1c8] sm:$0xff]
      %v397 = vld [vmem:[%s1 + $0x1d0] sm:$0xff]
      %v398 = vld [vmem:[%s1 + $0x1d8] sm:$0xff]
      %v399 = vld [vmem:[%s3] sm:$0x3]
      %v401 = vlaneseq
      %v402 = vshrl.u32 %v401, 7
      %v403 = vsub.s32 0, %v402
      %v404 = vrot.slane %v399, %v403
      %v405 = vlaneseq
      %v406 = vshrl.u32 %v405, 7
      %v407 = vsub.s32 1, %v406
      %v408 = vrot.slane %v399, %v407
      %v475 = vunpack.c.l.b16 %v275
      %v476 = vunpack.c.h.b16 %v275
      %v477 = vunpack.c.l.b16 %v276
      %v478 = vunpack.c.h.b16 %v276
      %v479 = vunpack.c.l.b16 %v277
      %v480 = vunpack.c.h.b16 %v277
      %v481 = vunpack.c.l.b16 %v278
      %v482 = vunpack.c.h.b16 %v278
      %v483 = vunpack.c.l.b16 %v279
      %v484 = vunpack.c.h.b16 %v279
      %v485 = vunpack.c.l.b16 %v280
      %v486 = vunpack.c.h.b16 %v280
      %v487 = vunpack.c.l.b16 %v281
      %v488 = vunpack.c.h.b16 %v281
      %v489 = vunpack.c.l.b16 %v282
      %v490 = vunpack.c.h.b16 %v282
      %v491 = vunpack.c.l.b16 %v283
      %v492 = vunpack.c.h.b16 %v283
      %v493 = vunpack.c.l.b16 %v284
      %v494 = vunpack.c.h.b16 %v284
      %v495 = vunpack.c.l.b16 %v285
      %v496 = vunpack.c.h.b16 %v285
      %v497 = vunpack.c.l.b16 %v286
      %v498 = vunpack.c.h.b16 %v286
      %v499 = vunpack.c.l.b16 %v287
      %v500 = vunpack.c.h.b16 %v287
      %v501 = vunpack.c.l.b16 %v288
      %v502 = vunpack.c.h.b16 %v288
      %v503 = vunpack.c.l.b16 %v289
      %v504 = vunpack.c.h.b16 %v289
      %v505 = vunpack.c.l.b16 %v290
      %v506 = vunpack.c.h.b16 %v290
      %v507 = vunpack.c.l.b16 %v291
      %v508 = vunpack.c.h.b16 %v291
      %v509 = vunpack.c.l.b16 %v292
      %v510 = vunpack.c.h.b16 %v292
      %v511 = vunpack.c.l.b16 %v293
      %v512 = vunpack.c.h.b16 %v293
      %v513 = vunpack.c.l.b16 %v294
      %v514 = vunpack.c.h.b16 %v294
      %v515 = vunpack.c.l.b16 %v295
      %v516 = vunpack.c.h.b16 %v295
      %v517 = vunpack.c.l.b16 %v296
      %v518 = vunpack.c.h.b16 %v296
      %v519 = vunpack.c.l.b16 %v297
      %v520 = vunpack.c.h.b16 %v297
      %v521 = vunpack.c.l.b16 %v298
      %v522 = vunpack.c.h.b16 %v298
      %v523 = vunpack.c.l.b16 %v299
      %v524 = vunpack.c.h.b16 %v299
      %v525 = vunpack.c.l.b16 %v300
      %v526 = vunpack.c.h.b16 %v300
      %v527 = vunpack.c.l.b16 %v301
      %v528 = vunpack.c.h.b16 %v301
      %v529 = vunpack.c.l.b16 %v302
      %v530 = vunpack.c.h.b16 %v302
      %v531 = vunpack.c.l.b16 %v303
      %v532 = vunpack.c.h.b16 %v303
      %v533 = vunpack.c.l.b16 %v304
      %v534 = vunpack.c.h.b16 %v304
      %v535 = vunpack.c.l.b16 %v305
      %v536 = vunpack.c.h.b16 %v305
      %v537 = vunpack.c.l.b16 %v306
      %v538 = vunpack.c.h.b16 %v306
      %v539 = vunpack.c.l.b16 %v307
      %v540 = vunpack.c.h.b16 %v307
      %v541 = vunpack.c.l.b16 %v308
      %v542 = vunpack.c.h.b16 %v308
      %v543 = vunpack.c.l.b16 %v309
      %v544 = vunpack.c.h.b16 %v309
      %v545 = vunpack.c.l.b16 %v310
      %v546 = vunpack.c.h.b16 %v310
      %v547 = vunpack.c.l.b16 %v311
      %v548 = vunpack.c.h.b16 %v311
      %v549 = vunpack.c.l.b16 %v312
      %v550 = vunpack.c.h.b16 %v312
      %v551 = vunpack.c.l.b16 %v313
      %v552 = vunpack.c.h.b16 %v313
      %v553 = vunpack.c.l.b16 %v314
      %v554 = vunpack.c.h.b16 %v314
      %v555 = vunpack.c.l.b16 %v315
      %v556 = vunpack.c.h.b16 %v315
      %v557 = vunpack.c.l.b16 %v316
      %v558 = vunpack.c.h.b16 %v316
      %v559 = vunpack.c.l.b16 %v317
      %v560 = vunpack.c.h.b16 %v317
      %v561 = vunpack.c.l.b16 %v318
      %v562 = vunpack.c.h.b16 %v318
      %v563 = vunpack.c.l.b16 %v319
      %v564 = vunpack.c.h.b16 %v319
      %v565 = vunpack.c.l.b16 %v320
      %v566 = vunpack.c.h.b16 %v320
      %v567 = vunpack.c.l.b16 %v321
      %v568 = vunpack.c.h.b16 %v321
      %v569 = vunpack.c.l.b16 %v322
      %v570 = vunpack.c.h.b16 %v322
      %v571 = vunpack.c.l.b16 %v323
      %v572 = vunpack.c.h.b16 %v323
      %v573 = vunpack.c.l.b16 %v324
      %v574 = vunpack.c.h.b16 %v324
      %v575 = vunpack.c.l.b16 %v325
      %v576 = vunpack.c.h.b16 %v325
      %v577 = vunpack.c.l.b16 %v326
      %v578 = vunpack.c.h.b16 %v326
      %v579 = vunpack.c.l.b16 %v327
      %v580 = vunpack.c.h.b16 %v327
      %v581 = vunpack.c.l.b16 %v328
      %v582 = vunpack.c.h.b16 %v328
      %v583 = vunpack.c.l.b16 %v329
      %v584 = vunpack.c.h.b16 %v329
      %v585 = vunpack.c.l.b16 %v330
      %v586 = vunpack.c.h.b16 %v330
      %v587 = vunpack.c.l.b16 %v331
      %v588 = vunpack.c.h.b16 %v331
      %v589 = vunpack.c.l.b16 %v332
      %v590 = vunpack.c.h.b16 %v332
      %v591 = vunpack.c.l.b16 %v333
      %v592 = vunpack.c.h.b16 %v333
      %v593 = vunpack.c.l.b16 %v334
      %v594 = vunpack.c.h.b16 %v334
      %v595 = vunpack.c.l.b16 %v335
      %v596 = vunpack.c.h.b16 %v335
      %v597 = vunpack.c.l.b16 %v336
      %v598 = vunpack.c.h.b16 %v336
      %v599 = vunpack.c.l.b16 %v337
      %v600 = vunpack.c.h.b16 %v337
      %v601 = vunpack.c.l.b16 %v338
      %v602 = vunpack.c.h.b16 %v338
      %v603 = vpack.c.b16 %v479, %v475
      %v604 = vpack.c.b16 %v480, %v476
      %v605 = vpack.c.b16 %v481, %v477
      %v606 = vpack.c.b16 %v482, %v478
      %v607 = vpack.c.b16 %v487, %v483
      %v608 = vpack.c.b16 %v488, %v484
      %v609 = vpack.c.b16 %v489, %v485
      %v610 = vpack.c.b16 %v490, %v486
      %v611 = vpack.c.b16 %v495, %v491
      %v612 = vpack.c.b16 %v496, %v492
      %v613 = vpack.c.b16 %v497, %v493
      %v614 = vpack.c.b16 %v498, %v494
      %v615 = vpack.c.b16 %v503, %v499
      %v616 = vpack.c.b16 %v504, %v500
      %v617 = vpack.c.b16 %v505, %v501
      %v618 = vpack.c.b16 %v506, %v502
      %v619 = vpack.c.b16 %v511, %v507
      %v620 = vpack.c.b16 %v512, %v508
      %v621 = vpack.c.b16 %v513, %v509
      %v622 = vpack.c.b16 %v514, %v510
      %v623 = vpack.c.b16 %v519, %v515
      %v624 = vpack.c.b16 %v520, %v516
      %v625 = vpack.c.b16 %v521, %v517
      %v626 = vpack.c.b16 %v522, %v518
      %v627 = vpack.c.b16 %v527, %v523
      %v628 = vpack.c.b16 %v528, %v524
      %v629 = vpack.c.b16 %v529, %v525
      %v630 = vpack.c.b16 %v530, %v526
      %v631 = vpack.c.b16 %v535, %v531
      %v632 = vpack.c.b16 %v536, %v532
      %v633 = vpack.c.b16 %v537, %v533
      %v634 = vpack.c.b16 %v538, %v534
      %v635 = vpack.c.b16 %v543, %v539
      %v636 = vpack.c.b16 %v544, %v540
      %v637 = vpack.c.b16 %v545, %v541
      %v638 = vpack.c.b16 %v546, %v542
      %v639 = vpack.c.b16 %v551, %v547
      %v640 = vpack.c.b16 %v552, %v548
      %v641 = vpack.c.b16 %v553, %v549
      %v642 = vpack.c.b16 %v554, %v550
      %v643 = vpack.c.b16 %v559, %v555
      %v644 = vpack.c.b16 %v560, %v556
      %v645 = vpack.c.b16 %v561, %v557
      %v646 = vpack.c.b16 %v562, %v558
      %v647 = vpack.c.b16 %v567, %v563
      %v648 = vpack.c.b16 %v568, %v564
      %v649 = vpack.c.b16 %v569, %v565
      %v650 = vpack.c.b16 %v570, %v566
      %v651 = vpack.c.b16 %v575, %v571
      %v652 = vpack.c.b16 %v576, %v572
      %v653 = vpack.c.b16 %v577, %v573
      %v654 = vpack.c.b16 %v578, %v574
      %v655 = vpack.c.b16 %v583, %v579
      %v656 = vpack.c.b16 %v584, %v580
      %v657 = vpack.c.b16 %v585, %v581
      %v658 = vpack.c.b16 %v586, %v582
      %v659 = vpack.c.b16 %v591, %v587
      %v660 = vpack.c.b16 %v592, %v588
      %v661 = vpack.c.b16 %v593, %v589
      %v662 = vpack.c.b16 %v594, %v590
      %v663 = vpack.c.b16 %v599, %v595
      %v664 = vpack.c.b16 %v600, %v596
      %v665 = vpack.c.b16 %v601, %v597
      %v666 = vpack.c.b16 %v602, %v598
      %v775 = vunpack.c.l.b16 %v339
      %v776 = vunpack.c.h.b16 %v339
      %v777 = vunpack.c.l.b16 %v340
      %v778 = vunpack.c.h.b16 %v340
      %v779 = vunpack.c.l.b16 %v341
      %v780 = vunpack.c.h.b16 %v341
      %v781 = vunpack.c.l.b16 %v342
      %v782 = vunpack.c.h.b16 %v342
      %v783 = vunpack.c.l.b16 %v343
      %v784 = vunpack.c.h.b16 %v343
      %v785 = vunpack.c.l.b16 %v344
      %v786 = vunpack.c.h.b16 %v344
      %v787 = vunpack.c.l.b16 %v345
      %v788 = vunpack.c.h.b16 %v345
      %v789 = vunpack.c.l.b16 %v346
      %v790 = vunpack.c.h.b16 %v346
      %v791 = vunpack.c.l.b16 %v347
      %v792 = vunpack.c.h.b16 %v347
      %v793 = vunpack.c.l.b16 %v348
      %v794 = vunpack.c.h.b16 %v348
      %v795 = vunpack.c.l.b16 %v349
      %v796 = vunpack.c.h.b16 %v349
      %v797 = vunpack.c.l.b16 %v350
      %v798 = vunpack.c.h.b16 %v350
      %v799 = vunpack.c.l.b16 %v351
      %v800 = vunpack.c.h.b16 %v351
      %v801 = vunpack.c.l.b16 %v352
      %v802 = vunpack.c.h.b16 %v352
      %v803 = vunpack.c.l.b16 %v353
      %v804 = vunpack.c.h.b16 %v353
      %v805 = vunpack.c.l.b16 %v354
      %v806 = vunpack.c.h.b16 %v354
      %v807 = vunpack.c.l.b16 %v355
      %v808 = vunpack.c.h.b16 %v355
      %v809 = vunpack.c.l.b16 %v356
      %v810 = vunpack.c.h.b16 %v356
      %v811 = vunpack.c.l.b16 %v357
      %v812 = vunpack.c.h.b16 %v357
      %v813 = vunpack.c.l.b16 %v358
      %v814 = vunpack.c.h.b16 %v358
      %v815 = vunpack.c.l.b16 %v359
      %v816 = vunpack.c.h.b16 %v359
      %v817 = vunpack.c.l.b16 %v360
      %v818 = vunpack.c.h.b16 %v360
      %v819 = vunpack.c.l.b16 %v361
      %v820 = vunpack.c.h.b16 %v361
      %v821 = vunpack.c.l.b16 %v362
      %v822 = vunpack.c.h.b16 %v362
      %v823 = vunpack.c.l.b16 %v363
      %v824 = vunpack.c.h.b16 %v363
      %v825 = vunpack.c.l.b16 %v364
      %v826 = vunpack.c.h.b16 %v364
      %v827 = vunpack.c.l.b16 %v365
      %v828 = vunpack.c.h.b16 %v365
      %v829 = vunpack.c.l.b16 %v366
      %v830 = vunpack.c.h.b16 %v366
      %v831 = vunpack.c.l.b16 %v367
      %v832 = vunpack.c.h.b16 %v367
      %v833 = vunpack.c.l.b16 %v368
      %v834 = vunpack.c.h.b16 %v368
      %v835 = vunpack.c.l.b16 %v369
      %v836 = vunpack.c.h.b16 %v369
      %v837 = vunpack.c.l.b16 %v370
      %v838 = vunpack.c.h.b16 %v370
      %v839 = vunpack.c.l.b16 %v371
      %v840 = vunpack.c.h.b16 %v371
      %v841 = vunpack.c.l.b16 %v372
      %v842 = vunpack.c.h.b16 %v372
      %v843 = vunpack.c.l.b16 %v373
      %v844 = vunpack.c.h.b16 %v373
      %v845 = vunpack.c.l.b16 %v374
      %v846 = vunpack.c.h.b16 %v374
      %v847 = vunpack.c.l.b16 %v375
      %v848 = vunpack.c.h.b16 %v375
      %v849 = vunpack.c.l.b16 %v376
      %v850 = vunpack.c.h.b16 %v376
      %v851 = vunpack.c.l.b16 %v377
      %v852 = vunpack.c.h.b16 %v377
      %v853 = vunpack.c.l.b16 %v378
      %v854 = vunpack.c.h.b16 %v378
      %v855 = vunpack.c.l.b16 %v379
      %v856 = vunpack.c.h.b16 %v379
      %v857 = vunpack.c.l.b16 %v380
      %v858 = vunpack.c.h.b16 %v380
      %v859 = vunpack.c.l.b16 %v381
      %v860 = vunpack.c.h.b16 %v381
      %v861 = vunpack.c.l.b16 %v382
      %v862 = vunpack.c.h.b16 %v382
      %v863 = vunpack.c.l.b16 %v383
      %v864 = vunpack.c.h.b16 %v383
      %v865 = vunpack.c.l.b16 %v384
      %v866 = vunpack.c.h.b16 %v384
      %v867 = vunpack.c.l.b16 %v385
      %v868 = vunpack.c.h.b16 %v385
      %v869 = vunpack.c.l.b16 %v386
      %v870 = vunpack.c.h.b16 %v386
      %v871 = vunpack.c.l.b16 %v387
      %v872 = vunpack.c.h.b16 %v387
      %v873 = vunpack.c.l.b16 %v388
      %v874 = vunpack.c.h.b16 %v388
      %v875 = vunpack.c.l.b16 %v389
      %v876 = vunpack.c.h.b16 %v389
      %v877 = vunpack.c.l.b16 %v390
      %v878 = vunpack.c.h.b16 %v390
      %v879 = vunpack.c.l.b16 %v391
      %v880 = vunpack.c.h.b16 %v391
      %v881 = vunpack.c.l.b16 %v392
      %v882 = vunpack.c.h.b16 %v392
      %v883 = vunpack.c.l.b16 %v393
      %v884 = vunpack.c.h.b16 %v393
      %v885 = vunpack.c.l.b16 %v394
      %v886 = vunpack.c.h.b16 %v394
      %v887 = vunpack.c.l.b16 %v395
      %v888 = vunpack.c.h.b16 %v395
      %v889 = vunpack.c.l.b16 %v396
      %v890 = vunpack.c.h.b16 %v396
      %v891 = vunpack.c.l.b16 %v397
      %v892 = vunpack.c.h.b16 %v397
      %v893 = vunpack.c.l.b16 %v398
      %v894 = vunpack.c.h.b16 %v398
      %v895 = vpack.c.b16 %v777, %v775
      %v896 = vpack.c.b16 %v778, %v776
      %v897 = vpack.c.b16 %v781, %v779
      %v898 = vpack.c.b16 %v782, %v780
      %v899 = vpack.c.b16 %v785, %v783
      %v900 = vpack.c.b16 %v786, %v784
      %v901 = vpack.c.b16 %v789, %v787
      %v902 = vpack.c.b16 %v790, %v788
      %v903 = vpack.c.b16 %v793, %v791
      %v904 = vpack.c.b16 %v794, %v792
      %v905 = vpack.c.b16 %v797, %v795
      %v906 = vpack.c.b16 %v798, %v796
      %v907 = vpack.c.b16 %v801, %v799
      %v908 = vpack.c.b16 %v802, %v800
      %v909 = vpack.c.b16 %v805, %v803
      %v910 = vpack.c.b16 %v806, %v804
      %v911 = vpack.c.b16 %v809, %v807
      %v912 = vpack.c.b16 %v810, %v808
      %v913 = vpack.c.b16 %v813, %v811
      %v914 = vpack.c.b16 %v814, %v812
      %v915 = vpack.c.b16 %v817, %v815
      %v916 = vpack.c.b16 %v818, %v816
      %v917 = vpack.c.b16 %v821, %v819
      %v918 = vpack.c.b16 %v822, %v820
      %v919 = vpack.c.b16 %v825, %v823
      %v920 = vpack.c.b16 %v826, %v824
      %v921 = vpack.c.b16 %v829, %v827
      %v922 = vpack.c.b16 %v830, %v828
      %v923 = vpack.c.b16 %v833, %v831
      %v924 = vpack.c.b16 %v834, %v832
      %v925 = vpack.c.b16 %v837, %v835
      %v926 = vpack.c.b16 %v838, %v836
      %v927 = vpack.c.b16 %v841, %v839
      %v928 = vpack.c.b16 %v842, %v840
      %v929 = vpack.c.b16 %v845, %v843
      %v930 = vpack.c.b16 %v846, %v844
      %v931 = vpack.c.b16 %v849, %v847
      %v932 = vpack.c.b16 %v850, %v848
      %v933 = vpack.c.b16 %v853, %v851
      %v934 = vpack.c.b16 %v854, %v852
      %v935 = vpack.c.b16 %v857, %v855
      %v936 = vpack.c.b16 %v858, %v856
      %v937 = vpack.c.b16 %v861, %v859
      %v938 = vpack.c.b16 %v862, %v860
      %v939 = vpack.c.b16 %v865, %v863
      %v940 = vpack.c.b16 %v866, %v864
      %v941 = vpack.c.b16 %v869, %v867
      %v942 = vpack.c.b16 %v870, %v868
      %v943 = vpack.c.b16 %v873, %v871
      %v944 = vpack.c.b16 %v874, %v872
      %v945 = vpack.c.b16 %v877, %v875
      %v946 = vpack.c.b16 %v878, %v876
      %v947 = vpack.c.b16 %v881, %v879
      %v948 = vpack.c.b16 %v882, %v880
      %v949 = vpack.c.b16 %v885, %v883
      %v950 = vpack.c.b16 %v886, %v884
      %v951 = vpack.c.b16 %v889, %v887
      %v952 = vpack.c.b16 %v890, %v888
      %v953 = vpack.c.b16 %v893, %v891
      %v954 = vpack.c.b16 %v894, %v892
      %vm1015 = vcmask 785408
      %v1017 = vsel %vm1015, %v606, 0
      %v1020 = vsel %vm1015, %v610, 0
      %v1023 = vsel %vm1015, %v614, 0
      %v1026 = vsel %vm1015, %v618, 0
      %v1029 = vsel %vm1015, %v622, 0
      %v1032 = vsel %vm1015, %v626, 0
      %v1035 = vsel %vm1015, %v630, 0
      %v1038 = vsel %vm1015, %v634, 0
      %v1041 = vsel %vm1015, %v638, 0
      %v1044 = vsel %vm1015, %v642, 0
      %v1047 = vsel %vm1015, %v646, 0
      %v1050 = vsel %vm1015, %v650, 0
      %v1053 = vsel %vm1015, %v654, 0
      %v1056 = vsel %vm1015, %v658, 0
      %v1059 = vsel %vm1015, %v662, 0
      %v1062 = vsel %vm1015, %v666, 0
      %1064 = vmatprep.subr.bf16.mxu0 %v896
      %1065 = vmatpush1.bf16.msra.mxu0 %v895
      %1066 = vmatprep.subr.bf16.mxu0 %v898
      %1067 = vmatpush1.bf16.msra.mxu0 %v897
      %1068 = vmatprep.subr.bf16.mxu0 %v900
      %1069 = vmatpush1.bf16.msra.mxu0 %v899
      %1070 = vmatprep.subr.bf16.mxu0 %v902
      %1071 = vmatpush1.bf16.msra.mxu0 %v901
      %1072 = vmatprep.subr.bf16.mxu0 %v904
      %1073 = vmatpush1.bf16.msra.mxu0 %v903
      %1074 = vmatprep.subr.bf16.mxu0 %v906
      %1075 = vmatpush1.bf16.msra.mxu0 %v905
      %1076 = vmatprep.subr.bf16.mxu0 %v908
      %1077 = vmatpush1.bf16.msra.mxu0 %v907
      %1078 = vmatprep.subr.bf16.mxu0 %v910
      %1079 = vmatpush1.bf16.msra.mxu0 %v909
      %1080 = vmatprep.subr.bf16.mxu0 %v912
      %1081 = vmatpush1.bf16.msra.mxu0 %v911
      %1082 = vmatprep.subr.bf16.mxu0 %v914
      %1083 = vmatpush1.bf16.msra.mxu0 %v913
      %1084 = vmatprep.subr.bf16.mxu0 %v916
      %1085 = vmatpush1.bf16.msra.mxu0 %v915
      %1086 = vmatprep.subr.bf16.mxu0 %v918
      %1087 = vmatpush1.bf16.msra.mxu0 %v917
      %1088 = vmatprep.subr.bf16.mxu0 %v920
      %1089 = vmatpush1.bf16.msra.mxu0 %v919
      %1090 = vmatprep.subr.bf16.mxu0 %v922
      %1091 = vmatpush1.bf16.msra.mxu0 %v921
      %1092 = vmatprep.subr.bf16.mxu0 %v924
      %1093 = vmatpush1.bf16.msra.mxu0 %v923
      %1094 = vmatprep.subr.bf16.mxu0 %v926
      %1095 = vmatpush1.bf16.msra.mxu0 %v925
      %1096 = vmatprep.mubr.bf16.mxu0 %v604
      %1097 = vmatmul.mubr.bf16.gmra.mrb[0].mxu0 %v603
      %v1098 = vpop.f32.mrb[0].mxu0
      %v1099 = vadd.f32 %v404, %v1098
      %v1100 = vpop.f32.mrb[0].mxu0
      %v1101 = vadd.f32 %v408, %v1100
      %v1102 = vpop.f32.mrb[0].mxu0
      %v1103 = vadd.f32 %v404, %v1102
      %v1104 = vpop.f32.mrb[0].mxu0
      %v1105 = vadd.f32 %v408, %v1104
      %1106 = vmatprep.mubr.bf16.mxu0 %v608
      %1107 = vmatmul.mubr.bf16.gmra.mrb[0].mxu0 %v607
      %v1108 = vpop.f32.mrb[0].mxu0
      %v1109 = vadd.f32 %v404, %v1108
      %v1110 = vpop.f32.mrb[0].mxu0
      %v1111 = vadd.f32 %v408, %v1110
      %v1112 = vpop.f32.mrb[0].mxu0
      %v1113 = vadd.f32 %v404, %v1112
      %v1114 = vpop.f32.mrb[0].mxu0
      %v1115 = vadd.f32 %v408, %v1114
      %1116 = vmatprep.mubr.bf16.mxu0 %v612
      %1117 = vmatmul.mubr.bf16.gmra.mrb[0].mxu0 %v611
      %v1118 = vpop.f32.mrb[0].mxu0
      %v1119 = vadd.f32 %v404, %v1118
      %v1120 = vpop.f32.mrb[0].mxu0
      %v1121 = vadd.f32 %v408, %v1120
      %v1122 = vpop.f32.mrb[0].mxu0
      %v1123 = vadd.f32 %v404, %v1122
      %v1124 = vpop.f32.mrb[0].mxu0
      %v1125 = vadd.f32 %v408, %v1124
      %1126 = vmatprep.mubr.bf16.mxu0 %v616
      %1127 = vmatmul.mubr.bf16.gmra.mrb[0].mxu0 %v615
      %v1128 = vpop.f32.mrb[0].mxu0
      %v1129 = vadd.f32 %v404, %v1128
      %v1130 = vpop.f32.mrb[0].mxu0
      %v1131 = vadd.f32 %v408, %v1130
      %v1132 = vpop.f32.mrb[0].mxu0
      %v1133 = vadd.f32 %v404, %v1132
      %v1134 = vpop.f32.mrb[0].mxu0
      %v1135 = vadd.f32 %v408, %v1134
      %1136 = vmatprep.mubr.bf16.mxu0 %v620
      %1137 = vmatmul.mubr.bf16.gmra.mrb[0].mxu0 %v619
      %v1138 = vpop.f32.mrb[0].mxu0
      %v1139 = vadd.f32 %v404, %v1138
      %v1140 = vpop.f32.mrb[0].mxu0
      %v1141 = vadd.f32 %v408, %v1140
      %v1142 = vpop.f32.mrb[0].mxu0
      %v1143 = vadd.f32 %v404, %v1142
      %v1144 = vpop.f32.mrb[0].mxu0
      %v1145 = vadd.f32 %v408, %v1144
      %1146 = vmatprep.mubr.bf16.mxu0 %v624
      %1147 = vmatmul.mubr.bf16.gmra.mrb[0].mxu0 %v623
      %v1148 = vpop.f32.mrb[0].mxu0
      %v1149 = vadd.f32 %v404, %v1148
      %v1150 = vpop.f32.mrb[0].mxu0
      %v1151 = vadd.f32 %v408, %v1150
      %v1152 = vpop.f32.mrb[0].mxu0
      %v1153 = vadd.f32 %v404, %v1152
      %v1154 = vpop.f32.mrb[0].mxu0
      %v1155 = vadd.f32 %v408, %v1154
      %1156 = vmatprep.mubr.bf16.mxu0 %v628
      %1157 = vmatmul.mubr.bf16.gmra.mrb[0].mxu0 %v627
      %v1158 = vpop.f32.mrb[0].mxu0
      %v1159 = vadd.f32 %v404, %v1158
      %v1160 = vpop.f32.mrb[0].mxu0
      %v1161 = vadd.f32 %v408, %v1160
      %v1162 = vpop.f32.mrb[0].mxu0
      %v1163 = vadd.f32 %v404, %v1162
      %v1164 = vpop.f32.mrb[0].mxu0
      %v1165 = vadd.f32 %v408, %v1164
      %1166 = vmatprep.mubr.bf16.mxu0 %v632
      %1167 = vmatmul.mubr.bf16.gmra.mrb[0].mxu0 %v631
      %v1168 = vpop.f32.mrb[0].mxu0
      %v1169 = vadd.f32 %v404, %v1168
      %v1170 = vpop.f32.mrb[0].mxu0
      %v1171 = vadd.f32 %v408, %v1170
      %v1172 = vpop.f32.mrb[0].mxu0
      %v1173 = vadd.f32 %v404, %v1172
      %v1174 = vpop.f32.mrb[0].mxu0
      %v1175 = vadd.f32 %v408, %v1174
      %1176 = vmatprep.mubr.bf16.mxu0 %v636
      %1177 = vmatmul.mubr.bf16.gmra.mrb[0].mxu0 %v635
      %v1178 = vpop.f32.mrb[0].mxu0
      %v1179 = vadd.f32 %v404, %v1178
      %v1180 = vpop.f32.mrb[0].mxu0
      %v1181 = vadd.f32 %v408, %v1180
      %v1182 = vpop.f32.mrb[0].mxu0
      %v1183 = vadd.f32 %v404, %v1182
      %v1184 = vpop.f32.mrb[0].mxu0
      %v1185 = vadd.f32 %v408, %v1184
      %1186 = vmatprep.mubr.bf16.mxu0 %v640
      %1187 = vmatmul.mubr.bf16.gmra.mrb[0].mxu0 %v639
      %v1188 = vpop.f32.mrb[0].mxu0
      %v1189 = vadd.f32 %v404, %v1188
      %v1190 = vpop.f32.mrb[0].mxu0
      %v1191 = vadd.f32 %v408, %v1190
      %v1192 = vpop.f32.mrb[0].mxu0
      %v1193 = vadd.f32 %v404, %v1192
      %v1194 = vpop.f32.mrb[0].mxu0
      %v1195 = vadd.f32 %v408, %v1194
      %1196 = vmatprep.mubr.bf16.mxu0 %v644
      %1197 = vmatmul.mubr.bf16.gmra.mrb[0].mxu0 %v643
      %v1198 = vpop.f32.mrb[0].mxu0
      %v1199 = vadd.f32 %v404, %v1198
      %v1200 = vpop.f32.mrb[0].mxu0
      %v1201 = vadd.f32 %v408, %v1200
      %v1202 = vpop.f32.mrb[0].mxu0
      %v1203 = vadd.f32 %v404, %v1202
      %v1204 = vpop.f32.mrb[0].mxu0
      %v1205 = vadd.f32 %v408, %v1204
      %1206 = vmatprep.mubr.bf16.mxu0 %v648
      %1207 = vmatmul.mubr.bf16.gmra.mrb[0].mxu0 %v647
      %v1208 = vpop.f32.mrb[0].mxu0
      %v1209 = vadd.f32 %v404, %v1208
      %v1210 = vpop.f32.mrb[0].mxu0
      %v1211 = vadd.f32 %v408, %v1210
      %v1212 = vpop.f32.mrb[0].mxu0
      %v1213 = vadd.f32 %v404, %v1212
      %v1214 = vpop.f32.mrb[0].mxu0
      %v1215 = vadd.f32 %v408, %v1214
      %1216 = vmatprep.mubr.bf16.mxu0 %v652
      %1217 = vmatmul.mubr.bf16.gmra.mrb[0].mxu0 %v651
      %v1218 = vpop.f32.mrb[0].mxu0
      %v1219 = vadd.f32 %v404, %v1218
      %v1220 = vpop.f32.mrb[0].mxu0
      %v1221 = vadd.f32 %v408, %v1220
      %v1222 = vpop.f32.mrb[0].mxu0
      %v1223 = vadd.f32 %v404, %v1222
      %v1224 = vpop.f32.mrb[0].mxu0
      %v1225 = vadd.f32 %v408, %v1224
      %1226 = vmatprep.mubr.bf16.mxu0 %v656
      %1227 = vmatmul.mubr.bf16.gmra.mrb[0].mxu0 %v655
      %v1228 = vpop.f32.mrb[0].mxu0
      %v1229 = vadd.f32 %v404, %v1228
      %v1230 = vpop.f32.mrb[0].mxu0
      %v1231 = vadd.f32 %v408, %v1230
      %v1232 = vpop.f32.mrb[0].mxu0
      %v1233 = vadd.f32 %v404, %v1232
      %v1234 = vpop.f32.mrb[0].mxu0
      %v1235 = vadd.f32 %v408, %v1234
      %1236 = vmatprep.mubr.bf16.mxu0 %v660
      %1237 = vmatmul.mubr.bf16.gmra.mrb[0].mxu0 %v659
      %v1238 = vpop.f32.mrb[0].mxu0
      %v1239 = vadd.f32 %v404, %v1238
      %v1240 = vpop.f32.mrb[0].mxu0
      %v1241 = vadd.f32 %v408, %v1240
      %v1242 = vpop.f32.mrb[0].mxu0
      %v1243 = vadd.f32 %v404, %v1242
      %v1244 = vpop.f32.mrb[0].mxu0
      %v1245 = vadd.f32 %v408, %v1244
      %1246 = vmatprep.mubr.bf16.mxu0 %v664
      %1247 = vmatmul.mubr.bf16.gmra.mrb[0].mxu0 %v663
      %v1248 = vpop.f32.mrb[0].mxu0
      %v1249 = vadd.f32 %v404, %v1248
      %v1250 = vpop.f32.mrb[0].mxu0
      %v1251 = vadd.f32 %v408, %v1250
      %v1252 = vpop.f32.mrb[0].mxu0
      %v1253 = vadd.f32 %v404, %v1252
      %v1254 = vpop.f32.mrb[0].mxu0
      %v1255 = vadd.f32 %v408, %v1254
      %1256 = vdwg.mxu0
      %1257 = vmatprep.subr.bf16.mxu0 %v928
      %1258 = vmatpush1.bf16.msra.mxu0 %v927
      %1259 = vmatprep.subr.bf16.mxu0 %v930
      %1260 = vmatpush1.bf16.msra.mxu0 %v929
      %1261 = vmatprep.subr.bf16.mxu0 %v932
      %1262 = vmatpush1.bf16.msra.mxu0 %v931
      %1263 = vmatprep.subr.bf16.mxu0 %v934
      %1264 = vmatpush1.bf16.msra.mxu0 %v933
      %1265 = vmatprep.subr.bf16.mxu0 %v936
      %1266 = vmatpush1.bf16.msra.mxu0 %v935
      %1267 = vmatprep.subr.bf16.mxu0 %v938
      %1268 = vmatpush1.bf16.msra.mxu0 %v937
      %1269 = vmatprep.subr.bf16.mxu0 %v940
      %1270 = vmatpush1.bf16.msra.mxu0 %v939
      %1271 = vmatprep.subr.bf16.mxu0 %v942
      %1272 = vmatpush1.bf16.msra.mxu0 %v941
      %1273 = vmatprep.subr.bf16.mxu0 %v944
      %1274 = vmatpush1.bf16.msra.mxu0 %v943
      %1275 = vmatprep.subr.bf16.mxu0 %v946
      %1276 = vmatpush1.bf16.msra.mxu0 %v945
      %1277 = vmatprep.subr.bf16.mxu0 %v948
      %1278 = vmatpush1.bf16.msra.mxu0 %v947
      %1279 = vmatprep.subr.bf16.mxu0 %v950
      %1280 = vmatpush1.bf16.msra.mxu0 %v949
      %1281 = vmatprep.subr.bf16.mxu0 %v952
      %1282 = vmatpush1.bf16.msra.mxu0 %v951
      %1283 = vmatprep.subr.bf16.mxu0 %v954
      %1284 = vmatpush1.bf16.msra.mxu0 %v953
      %1285 = vmatprep.subr.bf16.mxu0 0
      %1286 = vmatpush1.bf16.msra.mxu0 0
      %1287 = vmatprep.subr.bf16.mxu0 0
      %1288 = vmatpush1.bf16.msra.mxu0 0
      %1289 = vmatprep.mubr.bf16.mxu0 %v1017
      %1290 = vmatmul.mubr.bf16.gmra.mrb[0].mxu0 %v605
      %v1291 = vpop.f32.mrb[0].mxu0
      %v1292 = vadd.f32 %v1099, %v1291
      %v1293 = vpop.f32.mrb[0].mxu0
      %v1294 = vadd.f32 %v1101, %v1293
      %v1295 = vpop.f32.mrb[0].mxu0
      %v1296 = vadd.f32 %v1103, %v1295
      %v1297 = vpop.f32.mrb[0].mxu0
      %v1298 = vadd.f32 %v1105, %v1297
      %1299 = vmatprep.mubr.bf16.mxu0 %v1020
      %1300 = vmatmul.mubr.bf16.gmra.mrb[0].mxu0 %v609
      %v1301 = vpop.f32.mrb[0].mxu0
      %v1302 = vadd.f32 %v1109, %v1301
      %v1303 = vpop.f32.mrb[0].mxu0
      %v1304 = vadd.f32 %v1111, %v1303
      %v1305 = vpop.f32.mrb[0].mxu0
      %v1306 = vadd.f32 %v1113, %v1305
      %v1307 = vpop.f32.mrb[0].mxu0
      %v1308 = vadd.f32 %v1115, %v1307
      %1309 = vmatprep.mubr.bf16.mxu0 %v1023
      %1310 = vmatmul.mubr.bf16.gmra.mrb[0].mxu0 %v613
      %v1311 = vpop.f32.mrb[0].mxu0
      %v1312 = vadd.f32 %v1119, %v1311
      %v1313 = vpop.f32.mrb[0].mxu0
      %v1314 = vadd.f32 %v1121, %v1313
      %v1315 = vpop.f32.mrb[0].mxu0
      %v1316 = vadd.f32 %v1123, %v1315
      %v1317 = vpop.f32.mrb[0].mxu0
      %v1318 = vadd.f32 %v1125, %v1317
      %1319 = vmatprep.mubr.bf16.mxu0 %v1026
      %1320 = vmatmul.mubr.bf16.gmra.mrb[0].mxu0 %v617
      %v1321 = vpop.f32.mrb[0].mxu0
      %v1322 = vadd.f32 %v1129, %v1321
      %v1323 = vpop.f32.mrb[0].mxu0
      %v1324 = vadd.f32 %v1131, %v1323
      %v1325 = vpop.f32.mrb[0].mxu0
      %v1326 = vadd.f32 %v1133, %v1325
      %v1327 = vpop.f32.mrb[0].mxu0
      %v1328 = vadd.f32 %v1135, %v1327
      %1329 = vmatprep.mubr.bf16.mxu0 %v1029
      %1330 = vmatmul.mubr.bf16.gmra.mrb[0].mxu0 %v621
      %v1331 = vpop.f32.mrb[0].mxu0
      %v1332 = vadd.f32 %v1139, %v1331
      %v1333 = vpop.f32.mrb[0].mxu0
      %v1334 = vadd.f32 %v1141, %v1333
      %v1335 = vpop.f32.mrb[0].mxu0
      %v1336 = vadd.f32 %v1143, %v1335
      %v1337 = vpop.f32.mrb[0].mxu0
      %v1338 = vadd.f32 %v1145, %v1337
      %1339 = vmatprep.mubr.bf16.mxu0 %v1032
      %1340 = vmatmul.mubr.bf16.gmra.mrb[0].mxu0 %v625
      %v1341 = vpop.f32.mrb[0].mxu0
      %v1342 = vadd.f32 %v1149, %v1341
      %v1343 = vpop.f32.mrb[0].mxu0
      %v1344 = vadd.f32 %v1151, %v1343
      %v1345 = vpop.f32.mrb[0].mxu0
      %v1346 = vadd.f32 %v1153, %v1345
      %v1347 = vpop.f32.mrb[0].mxu0
      %v1348 = vadd.f32 %v1155, %v1347
      %1349 = vmatprep.mubr.bf16.mxu0 %v1035
      %1350 = vmatmul.mubr.bf16.gmra.mrb[0].mxu0 %v629
      %v1351 = vpop.f32.mrb[0].mxu0
      %v1352 = vadd.f32 %v1159, %v1351
      %v1353 = vpop.f32.mrb[0].mxu0
      %v1354 = vadd.f32 %v1161, %v1353
      %v1355 = vpop.f32.mrb[0].mxu0
      %v1356 = vadd.f32 %v1163, %v1355
      %v1357 = vpop.f32.mrb[0].mxu0
      %v1358 = vadd.f32 %v1165, %v1357
      %1359 = vmatprep.mubr.bf16.mxu0 %v1038
      %1360 = vmatmul.mubr.bf16.gmra.mrb[0].mxu0 %v633
      %v1361 = vpop.f32.mrb[0].mxu0
      %v1362 = vadd.f32 %v1169, %v1361
      %v1363 = vpop.f32.mrb[0].mxu0
      %v1364 = vadd.f32 %v1171, %v1363
      %v1365 = vpop.f32.mrb[0].mxu0
      %v1366 = vadd.f32 %v1173, %v1365
      %v1367 = vpop.f32.mrb[0].mxu0
      %v1368 = vadd.f32 %v1175, %v1367
      %1369 = vmatprep.mubr.bf16.mxu0 %v1041
      %1370 = vmatmul.mubr.bf16.gmra.mrb[0].mxu0 %v637
      %v1371 = vpop.f32.mrb[0].mxu0
      %v1372 = vadd.f32 %v1179, %v1371
      %v1373 = vpop.f32.mrb[0].mxu0
      %v1374 = vadd.f32 %v1181, %v1373
      %v1375 = vpop.f32.mrb[0].mxu0
      %v1376 = vadd.f32 %v1183, %v1375
      %v1377 = vpop.f32.mrb[0].mxu0
      %v1378 = vadd.f32 %v1185, %v1377
      %1379 = vmatprep.mubr.bf16.mxu0 %v1044
      %1380 = vmatmul.mubr.bf16.gmra.mrb[0].mxu0 %v641
      %v1381 = vpop.f32.mrb[0].mxu0
      %v1382 = vadd.f32 %v1189, %v1381
      %v1383 = vpop.f32.mrb[0].mxu0
      %v1384 = vadd.f32 %v1191, %v1383
      %v1385 = vpop.f32.mrb[0].mxu0
      %v1386 = vadd.f32 %v1193, %v1385
      %v1387 = vpop.f32.mrb[0].mxu0
      %v1388 = vadd.f32 %v1195, %v1387
      %1389 = vmatprep.mubr.bf16.mxu0 %v1047
      %1390 = vmatmul.mubr.bf16.gmra.mrb[0].mxu0 %v645
      %v1391 = vpop.f32.mrb[0].mxu0
      %v1392 = vadd.f32 %v1199, %v1391
      %v1393 = vpop.f32.mrb[0].mxu0
      %v1394 = vadd.f32 %v1201, %v1393
      %v1395 = vpop.f32.mrb[0].mxu0
      %v1396 = vadd.f32 %v1203, %v1395
      %v1397 = vpop.f32.mrb[0].mxu0
      %v1398 = vadd.f32 %v1205, %v1397
      %1399 = vmatprep.mubr.bf16.mxu0 %v1050
      %1400 = vmatmul.mubr.bf16.gmra.mrb[0].mxu0 %v649
      %v1401 = vpop.f32.mrb[0].mxu0
      %v1402 = vadd.f32 %v1209, %v1401
      %v1403 = vpop.f32.mrb[0].mxu0
      %v1404 = vadd.f32 %v1211, %v1403
      %v1405 = vpop.f32.mrb[0].mxu0
      %v1406 = vadd.f32 %v1213, %v1405
      %v1407 = vpop.f32.mrb[0].mxu0
      %v1408 = vadd.f32 %v1215, %v1407
      %1409 = vmatprep.mubr.bf16.mxu0 %v1053
      %1410 = vmatmul.mubr.bf16.gmra.mrb[0].mxu0 %v653
      %v1411 = vpop.f32.mrb[0].mxu0
      %v1412 = vadd.f32 %v1219, %v1411
      %v1413 = vpop.f32.mrb[0].mxu0
      %v1414 = vadd.f32 %v1221, %v1413
      %v1415 = vpop.f32.mrb[0].mxu0
      %v1416 = vadd.f32 %v1223, %v1415
      %v1417 = vpop.f32.mrb[0].mxu0
      %v1418 = vadd.f32 %v1225, %v1417
      %1419 = vmatprep.mubr.bf16.mxu0 %v1056
      %1420 = vmatmul.mubr.bf16.gmra.mrb[0].mxu0 %v657
      %v1421 = vpop.f32.mrb[0].mxu0
      %v1422 = vadd.f32 %v1229, %v1421
      %v1423 = vpop.f32.mrb[0].mxu0
      %v1424 = vadd.f32 %v1231, %v1423
      %v1425 = vpop.f32.mrb[0].mxu0
      %v1426 = vadd.f32 %v1233, %v1425
      %v1427 = vpop.f32.mrb[0].mxu0
      %v1428 = vadd.f32 %v1235, %v1427
      %1429 = vmatprep.mubr.bf16.mxu0 %v1059
      %1430 = vmatmul.mubr.bf16.gmra.mrb[0].mxu0 %v661
      %v1431 = vpop.f32.mrb[0].mxu0
      %v1432 = vadd.f32 %v1239, %v1431
      %v1433 = vpop.f32.mrb[0].mxu0
      %v1434 = vadd.f32 %v1241, %v1433
      %v1435 = vpop.f32.mrb[0].mxu0
      %v1436 = vadd.f32 %v1243, %v1435
      %v1437 = vpop.f32.mrb[0].mxu0
      %v1438 = vadd.f32 %v1245, %v1437
      %1439 = vmatprep.mubr.bf16.mxu0 %v1062
      %1440 = vmatmul.mubr.bf16.gmra.mrb[0].mxu0 %v665
      %v1441 = vpop.f32.mrb[0].mxu0
      %v1442 = vadd.f32 %v1249, %v1441
      %v1443 = vpop.f32.mrb[0].mxu0
      %v1444 = vadd.f32 %v1251, %v1443
      %v1445 = vpop.f32.mrb[0].mxu0
      %v1446 = vadd.f32 %v1253, %v1445
      %v1447 = vpop.f32.mrb[0].mxu0
      %v1448 = vadd.f32 %v1255, %v1447
      %1449 = vdwg.mxu0
      %v1450 = vmax.f32 %v1292, 0.0
      %v1451 = vmax.f32 %v1294, 0.0
      %v1452 = vmax.f32 %v1296, 0.0
      %v1453 = vmax.f32 %v1298, 0.0
      %v1454 = vmax.f32 %v1302, 0.0
      %v1455 = vmax.f32 %v1304, 0.0
      %v1456 = vmax.f32 %v1306, 0.0
      %v1457 = vmax.f32 %v1308, 0.0
      %v1458 = vmax.f32 %v1312, 0.0
      %v1459 = vmax.f32 %v1314, 0.0
      %v1460 = vmax.f32 %v1316, 0.0
      %v1461 = vmax.f32 %v1318, 0.0
      %v1462 = vmax.f32 %v1322, 0.0
      %v1463 = vmax.f32 %v1324, 0.0
      %v1464 = vmax.f32 %v1326, 0.0
      %v1465 = vmax.f32 %v1328, 0.0
      %v1466 = vmax.f32 %v1332, 0.0
      %v1467 = vmax.f32 %v1334, 0.0
      %v1468 = vmax.f32 %v1336, 0.0
      %v1469 = vmax.f32 %v1338, 0.0
      %v1470 = vmax.f32 %v1342, 0.0
      %v1471 = vmax.f32 %v1344, 0.0
      %v1472 = vmax.f32 %v1346, 0.0
      %v1473 = vmax.f32 %v1348, 0.0
      %v1474 = vmax.f32 %v1352, 0.0
      %v1475 = vmax.f32 %v1354, 0.0
      %v1476 = vmax.f32 %v1356, 0.0
      %v1477 = vmax.f32 %v1358, 0.0
      %v1478 = vmax.f32 %v1362, 0.0
      %v1479 = vmax.f32 %v1364, 0.0
      %v1480 = vmax.f32 %v1366, 0.0
      %v1481 = vmax.f32 %v1368, 0.0
      %v1482 = vmax.f32 %v1372, 0.0
      %v1483 = vmax.f32 %v1374, 0.0
      %v1484 = vmax.f32 %v1376, 0.0
      %v1485 = vmax.f32 %v1378, 0.0
      %v1486 = vmax.f32 %v1382, 0.0
      %v1487 = vmax.f32 %v1384, 0.0
      %v1488 = vmax.f32 %v1386, 0.0
      %v1489 = vmax.f32 %v1388, 0.0
      %v1490 = vmax.f32 %v1392, 0.0
      %v1491 = vmax.f32 %v1394, 0.0
      %v1492 = vmax.f32 %v1396, 0.0
      %v1493 = vmax.f32 %v1398, 0.0
      %v1494 = vmax.f32 %v1402, 0.0
      %v1495 = vmax.f32 %v1404, 0.0
      %v1496 = vmax.f32 %v1406, 0.0
      %v1497 = vmax.f32 %v1408, 0.0
      %v1498 = vmax.f32 %v1412, 0.0
      %v1499 = vmax.f32 %v1414, 0.0
      %v1500 = vmax.f32 %v1416, 0.0
      %v1501 = vmax.f32 %v1418, 0.0
      %v1502 = vmax.f32 %v1422, 0.0
      %v1503 = vmax.f32 %v1424, 0.0
      %v1504 = vmax.f32 %v1426, 0.0
      %v1505 = vmax.f32 %v1428, 0.0
      %v1506 = vmax.f32 %v1432, 0.0
      %v1507 = vmax.f32 %v1434, 0.0
      %v1508 = vmax.f32 %v1436, 0.0
      %v1509 = vmax.f32 %v1438, 0.0
      %v1510 = vmax.f32 %v1442, 0.0
      %v1511 = vmax.f32 %v1444, 0.0
      %v1512 = vmax.f32 %v1446, 0.0
      %v1513 = vmax.f32 %v1448, 0.0
      %v1514 = vpack.c.bf16 %v1452, %v1450
      %v1515 = vpack.c.bf16 %v1453, %v1451
      %v1516 = vpack.c.bf16 %v1456, %v1454
      %v1517 = vpack.c.bf16 %v1457, %v1455
      %v1518 = vpack.c.bf16 %v1460, %v1458
      %v1519 = vpack.c.bf16 %v1461, %v1459
      %v1520 = vpack.c.bf16 %v1464, %v1462
      %v1521 = vpack.c.bf16 %v1465, %v1463
      %v1522 = vpack.c.bf16 %v1468, %v1466
      %v1523 = vpack.c.bf16 %v1469, %v1467
      %v1524 = vpack.c.bf16 %v1472, %v1470
      %v1525 = vpack.c.bf16 %v1473, %v1471
      %v1526 = vpack.c.bf16 %v1476, %v1474
      %v1527 = vpack.c.bf16 %v1477, %v1475
      %v1528 = vpack.c.bf16 %v1480, %v1478
      %v1529 = vpack.c.bf16 %v1481, %v1479
      %v1530 = vpack.c.bf16 %v1484, %v1482
      %v1531 = vpack.c.bf16 %v1485, %v1483
      %v1532 = vpack.c.bf16 %v1488, %v1486
      %v1533 = vpack.c.bf16 %v1489, %v1487
      %v1534 = vpack.c.bf16 %v1492, %v1490
      %v1535 = vpack.c.bf16 %v1493, %v1491
      %v1536 = vpack.c.bf16 %v1496, %v1494
      %v1537 = vpack.c.bf16 %v1497, %v1495
      %v1538 = vpack.c.bf16 %v1500, %v1498
      %v1539 = vpack.c.bf16 %v1501, %v1499
      %v1540 = vpack.c.bf16 %v1504, %v1502
      %v1541 = vpack.c.bf16 %v1505, %v1503
      %v1542 = vpack.c.bf16 %v1508, %v1506
      %v1543 = vpack.c.bf16 %v1509, %v1507
      %v1544 = vpack.c.bf16 %v1512, %v1510
      %v1545 = vpack.c.bf16 %v1513, %v1511
      %v1578 = vunpack.c.l.b16 %v1514
      %v1579 = vunpack.c.l.b16 %v1515
      %v1580 = vunpack.c.h.b16 %v1514
      %v1581 = vunpack.c.h.b16 %v1515
      %v1582 = vunpack.c.l.b16 %v1516
      %v1583 = vunpack.c.l.b16 %v1517
      %v1584 = vunpack.c.h.b16 %v1516
      %v1585 = vunpack.c.h.b16 %v1517
      %v1586 = vunpack.c.l.b16 %v1518
      %v1587 = vunpack.c.l.b16 %v1519
      %v1588 = vunpack.c.h.b16 %v1518
      %v1589 = vunpack.c.h.b16 %v1519
      %v1590 = vunpack.c.l.b16 %v1520
      %v1591 = vunpack.c.l.b16 %v1521
      %v1592 = vunpack.c.h.b16 %v1520
      %v1593 = vunpack.c.h.b16 %v1521
      %v1594 = vunpack.c.l.b16 %v1522
      %v1595 = vunpack.c.l.b16 %v1523
      %v1596 = vunpack.c.h.b16 %v1522
      %v1597 = vunpack.c.h.b16 %v1523
      %v1598 = vunpack.c.l.b16 %v1524
      %v1599 = vunpack.c.l.b16 %v1525
      %v1600 = vunpack.c.h.b16 %v1524
      %v1601 = vunpack.c.h.b16 %v1525
      %v1602 = vunpack.c.l.b16 %v1526
      %v1603 = vunpack.c.l.b16 %v1527
      %v1604 = vunpack.c.h.b16 %v1526
      %v1605 = vunpack.c.h.b16 %v1527
      %v1606 = vunpack.c.l.b16 %v1528
      %v1607 = vunpack.c.l.b16 %v1529
      %v1608 = vunpack.c.h.b16 %v1528
      %v1609 = vunpack.c.h.b16 %v1529
      %v1610 = vunpack.c.l.b16 %v1530
      %v1611 = vunpack.c.l.b16 %v1531
      %v1612 = vunpack.c.h.b16 %v1530
      %v1613 = vunpack.c.h.b16 %v1531
      %v1614 = vunpack.c.l.b16 %v1532
      %v1615 = vunpack.c.l.b16 %v1533
      %v1616 = vunpack.c.h.b16 %v1532
      %v1617 = vunpack.c.h.b16 %v1533
      %v1618 = vunpack.c.l.b16 %v1534
      %v1619 = vunpack.c.l.b16 %v1535
      %v1620 = vunpack.c.h.b16 %v1534
      %v1621 = vunpack.c.h.b16 %v1535
      %v1622 = vunpack.c.l.b16 %v1536
      %v1623 = vunpack.c.l.b16 %v1537
      %v1624 = vunpack.c.h.b16 %v1536
      %v1625 = vunpack.c.h.b16 %v1537
      %v1626 = vunpack.c.l.b16 %v1538
      %v1627 = vunpack.c.l.b16 %v1539
      %v1628 = vunpack.c.h.b16 %v1538
      %v1629 = vunpack.c.h.b16 %v1539
      %v1630 = vunpack.c.l.b16 %v1540
      %v1631 = vunpack.c.l.b16 %v1541
      %v1632 = vunpack.c.h.b16 %v1540
      %v1633 = vunpack.c.h.b16 %v1541
      %v1634 = vunpack.c.l.b16 %v1542
      %v1635 = vunpack.c.l.b16 %v1543
      %v1636 = vunpack.c.h.b16 %v1542
      %v1637 = vunpack.c.h.b16 %v1543
      %v1638 = vunpack.c.l.b16 %v1544
      %v1639 = vunpack.c.l.b16 %v1545
      %v1640 = vunpack.c.h.b16 %v1544
      %v1641 = vunpack.c.h.b16 %v1545
      %v1642 = vpack.c.b16 %v1579, %v1578
      %v1643 = vpack.c.b16 %v1581, %v1580
      %v1644 = vpack.c.b16 %v1583, %v1582
      %v1645 = vpack.c.b16 %v1585, %v1584
      %v1646 = vpack.c.b16 %v1587, %v1586
      %v1647 = vpack.c.b16 %v1589, %v1588
      %v1648 = vpack.c.b16 %v1591, %v1590
      %v1649 = vpack.c.b16 %v1593, %v1592
      %v1650 = vpack.c.b16 %v1595, %v1594
      %v1651 = vpack.c.b16 %v1597, %v1596
      %v1652 = vpack.c.b16 %v1599, %v1598
      %v1653 = vpack.c.b16 %v1601, %v1600
      %v1654 = vpack.c.b16 %v1603, %v1602
      %v1655 = vpack.c.b16 %v1605, %v1604
      %v1656 = vpack.c.b16 %v1607, %v1606
      %v1657 = vpack.c.b16 %v1609, %v1608
      %v1658 = vpack.c.b16 %v1611, %v1610
      %v1659 = vpack.c.b16 %v1613, %v1612
      %v1660 = vpack.c.b16 %v1615, %v1614
      %v1661 = vpack.c.b16 %v1617, %v1616
      %v1662 = vpack.c.b16 %v1619, %v1618
      %v1663 = vpack.c.b16 %v1621, %v1620
      %v1664 = vpack.c.b16 %v1623, %v1622
      %v1665 = vpack.c.b16 %v1625, %v1624
      %v1666 = vpack.c.b16 %v1627, %v1626
      %v1667 = vpack.c.b16 %v1629, %v1628
      %v1668 = vpack.c.b16 %v1631, %v1630
      %v1669 = vpack.c.b16 %v1633, %v1632
      %v1670 = vpack.c.b16 %v1635, %v1634
      %v1671 = vpack.c.b16 %v1637, %v1636
      %v1672 = vpack.c.b16 %v1639, %v1638
      %v1673 = vpack.c.b16 %v1641, %v1640
      %vm1706 = vcmask 1043456
      %vm1707 = vcmask 523268
      %vm1708 = vmor %vm1707, %vm1706
      %1709 = vst.msk [vmem:[%s266] sm:$0xff] %vm1708, %v1642
      %1710 = vst.msk [vmem:[%s266 + $0x8] sm:$0xff] %vm1708, %v1643
      %1711 = vst.msk [vmem:[%s266 + $0x10] sm:$0xff] %vm1708, %v1644
      %1712 = vst.msk [vmem:[%s266 + $0x18] sm:$0xff] %vm1708, %v1645
      %1713 = vst.msk [vmem:[%s266 + $0x20] sm:$0xff] %vm1708, %v1646
      %1714 = vst.msk [vmem:[%s266 + $0x28] sm:$0xff] %vm1708, %v1647
      %1715 = vst.msk [vmem:[%s266 + $0x30] sm:$0xff] %vm1708, %v1648
      %1716 = vst.msk [vmem:[%s266 + $0x38] sm:$0xff] %vm1708, %v1649
      %1717 = vst.msk [vmem:[%s266 + $0x40] sm:$0xff] %vm1708, %v1650
      %1718 = vst.msk [vmem:[%s266 + $0x48] sm:$0xff] %vm1708, %v1651
      %1719 = vst.msk [vmem:[%s266 + $0x50] sm:$0xff] %vm1708, %v1652
      %1720 = vst.msk [vmem:[%s266 + $0x58] sm:$0xff] %vm1708, %v1653
      %1721 = vst.msk [vmem:[%s266 + $0x60] sm:$0xff] %vm1708, %v1654
      %1722 = vst.msk [vmem:[%s266 + $0x68] sm:$0xff] %vm1708, %v1655
      %1723 = vst.msk [vmem:[%s266 + $0x70] sm:$0xff] %vm1708, %v1656
      %1724 = vst.msk [vmem:[%s266 + $0x78] sm:$0xff] %vm1708, %v1657
      %1725 = vst.msk [vmem:[%s266 + $0x80] sm:$0xff] %vm1708, %v1658
      %1726 = vst.msk [vmem:[%s266 + $0x88] sm:$0xff] %vm1708, %v1659
      %1727 = vst.msk [vmem:[%s266 + $0x90] sm:$0xff] %vm1708, %v1660
      %1728 = vst.msk [vmem:[%s266 + $0x98] sm:$0xff] %vm1708, %v1661
      %1729 = vst.msk [vmem:[%s266 + $0xa0] sm:$0xff] %vm1708, %v1662
      %1730 = vst.msk [vmem:[%s266 + $0xa8] sm:$0xff] %vm1708, %v1663
      %1731 = vst.msk [vmem:[%s266 + $0xb0] sm:$0xff] %vm1708, %v1664
      %1732 = vst.msk [vmem:[%s266 + $0xb8] sm:$0xff] %vm1708, %v1665
      %1733 = vst.msk [vmem:[%s266 + $0xc0] sm:$0xff] %vm1708, %v1666
      %1734 = vst.msk [vmem:[%s266 + $0xc8] sm:$0xff] %vm1708, %v1667
      %1735 = vst.msk [vmem:[%s266 + $0xd0] sm:$0xff] %vm1708, %v1668
      %1736 = vst.msk [vmem:[%s266 + $0xd8] sm:$0xff] %vm1708, %v1669
      %1737 = vst.msk [vmem:[%s266 + $0xe0] sm:$0xff] %vm1708, %v1670
      %1738 = vst.msk [vmem:[%s266 + $0xe8] sm:$0xff] %vm1708, %v1671
      %1739 = vst.msk [vmem:[%s266 + $0xf0] sm:$0xff] %vm1708, %v1672
      %1740 = vst.msk [vmem:[%s266 + $0xf8] sm:$0xff] %vm1708, %v1673
      %v1741 = vld [vmem:[%s2] sm:$0xf]
      %v1742 = vld [vmem:[%s2 + $0x4] sm:$0xf]
      %v1743 = vld [vmem:[%s2 + $0x8] sm:$0xf]
      %v1744 = vld [vmem:[%s2 + $0xc] sm:$0xf]
      %v1745 = vld [vmem:[%s2 + $0x10] sm:$0xf]
      %v1746 = vld [vmem:[%s2 + $0x14] sm:$0xf]
      %v1747 = vld [vmem:[%s2 + $0x18] sm:$0xf]
      %v1748 = vld [vmem:[%s2 + $0x1c] sm:$0xf]
      %v1749 = vld [vmem:[%s2 + $0x20] sm:$0xf]
      %v1750 = vld [vmem:[%s2 + $0x24] sm:$0xf]
      %v1751 = vld [vmem:[%s2 + $0x28] sm:$0xf]
      %v1752 = vld [vmem:[%s2 + $0x2c] sm:$0xf]
      %v1753 = vld [vmem:[%s2 + $0x30] sm:$0xf]
      %v1754 = vld [vmem:[%s2 + $0x34] sm:$0xf]
      %v1755 = vld [vmem:[%s2 + $0x38] sm:$0xf]
      %v1756 = vld [vmem:[%s2 + $0x3c] sm:$0xf]
      %v1757 = vld [vmem:[%s2 + $0x40] sm:$0xf]
      %v1758 = vld [vmem:[%s2 + $0x44] sm:$0xf]
      %v1759 = vld [vmem:[%s2 + $0x48] sm:$0xf]
      %v1760 = vld [vmem:[%s2 + $0x4c] sm:$0xf]
      %v1761 = vld [vmem:[%s2 + $0x50] sm:$0xf]
      %v1762 = vld [vmem:[%s2 + $0x54] sm:$0xf]
      %v1763 = vld [vmem:[%s2 + $0x58] sm:$0xf]
      %v1764 = vld [vmem:[%s2 + $0x5c] sm:$0xf]
      %v1765 = vld [vmem:[%s2 + $0x60] sm:$0xf]
      %v1766 = vld [vmem:[%s2 + $0x64] sm:$0xf]
      %v1767 = vld [vmem:[%s2 + $0x68] sm:$0xf]
      %v1768 = vld [vmem:[%s2 + $0x6c] sm:$0xf]
      %v1769 = vld [vmem:[%s2 + $0x70] sm:$0xf]
      %v1770 = vld [vmem:[%s2 + $0x74] sm:$0xf]
      %v1771 = vld [vmem:[%s2 + $0x78] sm:$0xf]
      %v1772 = vld [vmem:[%s2 + $0x7c] sm:$0xf]
      %v1773 = vld [vmem:[%s2 + $0x80] sm:$0xf]
      %v1774 = vld [vmem:[%s2 + $0x84] sm:$0xf]
      %v1775 = vld [vmem:[%s2 + $0x88] sm:$0xf]
      %v1776 = vld [vmem:[%s2 + $0x8c] sm:$0xf]
      %v1777 = vld [vmem:[%s2 + $0x90] sm:$0xf]
      %v1778 = vld [vmem:[%s2 + $0x94] sm:$0xf]
      %v1779 = vld [vmem:[%s2 + $0x98] sm:$0xf]
      %v1780 = vld [vmem:[%s2 + $0x9c] sm:$0xf]
      %v1781 = vld [vmem:[%s2 + $0xa0] sm:$0xf]
      %v1782 = vld [vmem:[%s2 + $0xa4] sm:$0xf]
      %v1783 = vld [vmem:[%s2 + $0xa8] sm:$0xf]
      %v1784 = vld [vmem:[%s2 + $0xac] sm:$0xf]
      %v1785 = vld [vmem:[%s2 + $0xb0] sm:$0xf]
      %v1786 = vld [vmem:[%s2 + $0xb4] sm:$0xf]
      %v1787 = vld [vmem:[%s2 + $0xb8] sm:$0xf]
      %v1788 = vld [vmem:[%s2 + $0xbc] sm:$0xf]
      %v1789 = vld [vmem:[%s2 + $0xc0] sm:$0xf]
      %v1790 = vld [vmem:[%s2 + $0xc4] sm:$0xf]
      %v1791 = vld [vmem:[%s2 + $0xc8] sm:$0xf]
      %v1792 = vld [vmem:[%s2 + $0xcc] sm:$0xf]
      %v1793 = vld [vmem:[%s2 + $0xd0] sm:$0xf]
      %v1794 = vld [vmem:[%s2 + $0xd4] sm:$0xf]
      %v1795 = vld [vmem:[%s2 + $0xd8] sm:$0xf]
      %v1796 = vld [vmem:[%s2 + $0xdc] sm:$0xf]
      %v1797 = vld [vmem:[%s2 + $0xe0] sm:$0xf]
      %v1798 = vld [vmem:[%s2 + $0xe4] sm:$0xf]
      %v1799 = vld [vmem:[%s2 + $0xe8] sm:$0xf]
      %v1800 = vld [vmem:[%s2 + $0xec] sm:$0xf]
      %v1801 = vld [vmem:[%s4] sm:$0x1]
      %v1803 = vlaneseq
      %v1804 = vshrl.u32 %v1803, 7
      %v1805 = vsub.s32 0, %v1804
      %v1806 = vrot.slane %v1801, %v1805
      %v1868 = vunpack.c.l.b16 %v1741
      %v1869 = vunpack.c.l.b16 %v1742
      %v1870 = vunpack.c.l.b16 %v1743
      %v1871 = vunpack.c.l.b16 %v1744
      %v1872 = vunpack.c.l.b16 %v1745
      %v1873 = vunpack.c.l.b16 %v1746
      %v1874 = vunpack.c.l.b16 %v1747
      %v1875 = vunpack.c.l.b16 %v1748
      %v1876 = vunpack.c.l.b16 %v1749
      %v1877 = vunpack.c.l.b16 %v1750
      %v1878 = vunpack.c.l.b16 %v1751
      %v1879 = vunpack.c.l.b16 %v1752
      %v1880 = vunpack.c.l.b16 %v1753
      %v1881 = vunpack.c.l.b16 %v1754
      %v1882 = vunpack.c.l.b16 %v1755
      %v1883 = vunpack.c.l.b16 %v1756
      %v1884 = vunpack.c.l.b16 %v1757
      %v1885 = vunpack.c.l.b16 %v1758
      %v1886 = vunpack.c.l.b16 %v1759
      %v1887 = vunpack.c.l.b16 %v1760
      %v1888 = vunpack.c.l.b16 %v1761
      %v1889 = vunpack.c.l.b16 %v1762
      %v1890 = vunpack.c.l.b16 %v1763
      %v1891 = vunpack.c.l.b16 %v1764
      %v1892 = vunpack.c.l.b16 %v1765
      %v1893 = vunpack.c.l.b16 %v1766
      %v1894 = vunpack.c.l.b16 %v1767
      %v1895 = vunpack.c.l.b16 %v1768
      %v1896 = vunpack.c.l.b16 %v1769
      %v1897 = vunpack.c.l.b16 %v1770
      %v1898 = vunpack.c.l.b16 %v1771
      %v1899 = vunpack.c.l.b16 %v1772
      %v1900 = vunpack.c.l.b16 %v1773
      %v1901 = vunpack.c.l.b16 %v1774
      %v1902 = vunpack.c.l.b16 %v1775
      %v1903 = vunpack.c.l.b16 %v1776
      %v1904 = vunpack.c.l.b16 %v1777
      %v1905 = vunpack.c.l.b16 %v1778
      %v1906 = vunpack.c.l.b16 %v1779
      %v1907 = vunpack.c.l.b16 %v1780
      %v1908 = vunpack.c.l.b16 %v1781
      %v1909 = vunpack.c.l.b16 %v1782
      %v1910 = vunpack.c.l.b16 %v1783
      %v1911 = vunpack.c.l.b16 %v1784
      %v1912 = vunpack.c.l.b16 %v1785
      %v1913 = vunpack.c.l.b16 %v1786
      %v1914 = vunpack.c.l.b16 %v1787
      %v1915 = vunpack.c.l.b16 %v1788
      %v1916 = vunpack.c.l.b16 %v1789
      %v1917 = vunpack.c.l.b16 %v1790
      %v1918 = vunpack.c.l.b16 %v1791
      %v1919 = vunpack.c.l.b16 %v1792
      %v1920 = vunpack.c.l.b16 %v1793
      %v1921 = vunpack.c.l.b16 %v1794
      %v1922 = vunpack.c.l.b16 %v1795
      %v1923 = vunpack.c.l.b16 %v1796
      %v1924 = vunpack.c.l.b16 %v1797
      %v1925 = vunpack.c.l.b16 %v1798
      %v1926 = vunpack.c.l.b16 %v1799
      %v1927 = vunpack.c.l.b16 %v1800
      %v1928 = vpack.c.b16 %v1869, %v1868
      %v1929 = vpack.c.b16 %v1871, %v1870
      %v1930 = vpack.c.b16 %v1873, %v1872
      %v1931 = vpack.c.b16 %v1875, %v1874
      %v1932 = vpack.c.b16 %v1877, %v1876
      %v1933 = vpack.c.b16 %v1879, %v1878
      %v1934 = vpack.c.b16 %v1881, %v1880
      %v1935 = vpack.c.b16 %v1883, %v1882
      %v1936 = vpack.c.b16 %v1885, %v1884
      %v1937 = vpack.c.b16 %v1887, %v1886
      %v1938 = vpack.c.b16 %v1889, %v1888
      %v1939 = vpack.c.b16 %v1891, %v1890
      %v1940 = vpack.c.b16 %v1893, %v1892
      %v1941 = vpack.c.b16 %v1895, %v1894
      %v1942 = vpack.c.b16 %v1897, %v1896
      %v1943 = vpack.c.b16 %v1899, %v1898
      %v1944 = vpack.c.b16 %v1901, %v1900
      %v1945 = vpack.c.b16 %v1903, %v1902
      %v1946 = vpack.c.b16 %v1905, %v1904
      %v1947 = vpack.c.b16 %v1907, %v1906
      %v1948 = vpack.c.b16 %v1909, %v1908
      %v1949 = vpack.c.b16 %v1911, %v1910
      %v1950 = vpack.c.b16 %v1913, %v1912
      %v1951 = vpack.c.b16 %v1915, %v1914
      %v1952 = vpack.c.b16 %v1917, %v1916
      %v1953 = vpack.c.b16 %v1919, %v1918
      %v1954 = vpack.c.b16 %v1921, %v1920
      %v1955 = vpack.c.b16 %v1923, %v1922
      %v1956 = vpack.c.b16 %v1925, %v1924
      %v1957 = vpack.c.b16 %v1927, %v1926
      %1988 = vmatprep.subr.bf16.mxu0 0
      %1989 = vmatpush1.bf16.msra.mxu0 %v1928
      %1990 = vmatprep.subr.bf16.mxu0 0
      %1991 = vmatpush1.bf16.msra.mxu0 %v1929
      %1992 = vmatprep.subr.bf16.mxu0 0
      %1993 = vmatpush1.bf16.msra.mxu0 %v1930
      %1994 = vmatprep.subr.bf16.mxu0 0
      %1995 = vmatpush1.bf16.msra.mxu0 %v1931
      %1996 = vmatprep.subr.bf16.mxu0 0
      %1997 = vmatpush1.bf16.msra.mxu0 %v1932
      %1998 = vmatprep.subr.bf16.mxu0 0
      %1999 = vmatpush1.bf16.msra.mxu0 %v1933
      %2000 = vmatprep.subr.bf16.mxu0 0
      %2001 = vmatpush1.bf16.msra.mxu0 %v1934
      %2002 = vmatprep.subr.bf16.mxu0 0
      %2003 = vmatpush1.bf16.msra.mxu0 %v1935
      %2004 = vmatprep.subr.bf16.mxu0 0
      %2005 = vmatpush1.bf16.msra.mxu0 %v1936
      %2006 = vmatprep.subr.bf16.mxu0 0
      %2007 = vmatpush1.bf16.msra.mxu0 %v1937
      %2008 = vmatprep.subr.bf16.mxu0 0
      %2009 = vmatpush1.bf16.msra.mxu0 %v1938
      %2010 = vmatprep.subr.bf16.mxu0 0
      %2011 = vmatpush1.bf16.msra.mxu0 %v1939
      %2012 = vmatprep.subr.bf16.mxu0 0
      %2013 = vmatpush1.bf16.msra.mxu0 %v1940
      %2014 = vmatprep.subr.bf16.mxu0 0
      %2015 = vmatpush1.bf16.msra.mxu0 %v1941
      %2016 = vmatprep.subr.bf16.mxu0 0
      %2017 = vmatpush1.bf16.msra.mxu0 %v1942
      %2018 = vmatprep.subr.bf16.mxu0 0
      %2019 = vmatpush1.bf16.msra.mxu0 %v1943
      %2020 = vmatprep.mubr.bf16.mxu0 %v604
      %2021 = vmatmul.mubr.bf16.gmra.mrb[0].mxu0 %v603
      %v2022 = vpop.f32.mrb[0].mxu0
      %v2023 = vadd.f32 %v1806, %v2022
      %v2024 = vpop.f32.mrb[0].mxu0
      %v2025 = vpop.f32.mrb[0].mxu0
      %v2026 = vadd.f32 %v1806, %v2025
      %v2027 = vpop.f32.mrb[0].mxu0
      %2028 = vmatprep.mubr.bf16.mxu0 %v608
      %2029 = vmatmul.mubr.bf16.gmra.mrb[0].mxu0 %v607
      %v2030 = vpop.f32.mrb[0].mxu0
      %v2031 = vadd.f32 %v1806, %v2030
      %v2032 = vpop.f32.mrb[0].mxu0
      %v2033 = vpop.f32.mrb[0].mxu0
      %v2034 = vadd.f32 %v1806, %v2033
      %v2035 = vpop.f32.mrb[0].mxu0
      %2036 = vmatprep.mubr.bf16.mxu0 %v612
      %2037 = vmatmul.mubr.bf16.gmra.mrb[0].mxu0 %v611
      %v2038 = vpop.f32.mrb[0].mxu0
      %v2039 = vadd.f32 %v1806, %v2038
      %v2040 = vpop.f32.mrb[0].mxu0
      %v2041 = vpop.f32.mrb[0].mxu0
      %v2042 = vadd.f32 %v1806, %v2041
      %v2043 = vpop.f32.mrb[0].mxu0
      %2044 = vmatprep.mubr.bf16.mxu0 %v616
      %2045 = vmatmul.mubr.bf16.gmra.mrb[0].mxu0 %v615
      %v2046 = vpop.f32.mrb[0].mxu0
      %v2047 = vadd.f32 %v1806, %v2046
      %v2048 = vpop.f32.mrb[0].mxu0
      %v2049 = vpop.f32.mrb[0].mxu0
      %v2050 = vadd.f32 %v1806, %v2049
      %v2051 = vpop.f32.mrb[0].mxu0
      %2052 = vmatprep.mubr.bf16.mxu0 %v620
      %2053 = vmatmul.mubr.bf16.gmra.mrb[0].mxu0 %v619
      %v2054 = vpop.f32.mrb[0].mxu0
      %v2055 = vadd.f32 %v1806, %v2054
      %v2056 = vpop.f32.mrb[0].mxu0
      %v2057 = vpop.f32.mrb[0].mxu0
      %v2058 = vadd.f32 %v1806, %v2057
      %v2059 = vpop.f32.mrb[0].mxu0
      %2060 = vmatprep.mubr.bf16.mxu0 %v624
      %2061 = vmatmul.mubr.bf16.gmra.mrb[0].mxu0 %v623
      %v2062 = vpop.f32.mrb[0].mxu0
      %v2063 = vadd.f32 %v1806, %v2062
      %v2064 = vpop.f32.mrb[0].mxu0
      %v2065 = vpop.f32.mrb[0].mxu0
      %v2066 = vadd.f32 %v1806, %v2065
      %v2067 = vpop.f32.mrb[0].mxu0
      %2068 = vmatprep.mubr.bf16.mxu0 %v628
      %2069 = vmatmul.mubr.bf16.gmra.mrb[0].mxu0 %v627
      %v2070 = vpop.f32.mrb[0].mxu0
      %v2071 = vadd.f32 %v1806, %v2070
      %v2072 = vpop.f32.mrb[0].mxu0
      %v2073 = vpop.f32.mrb[0].mxu0
      %v2074 = vadd.f32 %v1806, %v2073
      %v2075 = vpop.f32.mrb[0].mxu0
      %2076 = vmatprep.mubr.bf16.mxu0 %v632
      %2077 = vmatmul.mubr.bf16.gmra.mrb[0].mxu0 %v631
      %v2078 = vpop.f32.mrb[0].mxu0
      %v2079 = vadd.f32 %v1806, %v2078
      %v2080 = vpop.f32.mrb[0].mxu0
      %v2081 = vpop.f32.mrb[0].mxu0
      %v2082 = vadd.f32 %v1806, %v2081
      %v2083 = vpop.f32.mrb[0].mxu0
      %2084 = vmatprep.mubr.bf16.mxu0 %v636
      %2085 = vmatmul.mubr.bf16.gmra.mrb[0].mxu0 %v635
      %v2086 = vpop.f32.mrb[0].mxu0
      %v2087 = vadd.f32 %v1806, %v2086
      %v2088 = vpop.f32.mrb[0].mxu0
      %v2089 = vpop.f32.mrb[0].mxu0
      %v2090 = vadd.f32 %v1806, %v2089
      %v2091 = vpop.f32.mrb[0].mxu0
      %2092 = vmatprep.mubr.bf16.mxu0 %v640
      %2093 = vmatmul.mubr.bf16.gmra.mrb[0].mxu0 %v639
      %v2094 = vpop.f32.mrb[0].mxu0
      %v2095 = vadd.f32 %v1806, %v2094
      %v2096 = vpop.f32.mrb[0].mxu0
      %v2097 = vpop.f32.mrb[0].mxu0
      %v2098 = vadd.f32 %v1806, %v2097
      %v2099 = vpop.f32.mrb[0].mxu0
      %2100 = vmatprep.mubr.bf16.mxu0 %v644
      %2101 = vmatmul.mubr.bf16.gmra.mrb[0].mxu0 %v643
      %v2102 = vpop.f32.mrb[0].mxu0
      %v2103 = vadd.f32 %v1806, %v2102
      %v2104 = vpop.f32.mrb[0].mxu0
      %v2105 = vpop.f32.mrb[0].mxu0
      %v2106 = vadd.f32 %v1806, %v2105
      %v2107 = vpop.f32.mrb[0].mxu0
      %2108 = vmatprep.mubr.bf16.mxu0 %v648
      %2109 = vmatmul.mubr.bf16.gmra.mrb[0].mxu0 %v647
      %v2110 = vpop.f32.mrb[0].mxu0
      %v2111 = vadd.f32 %v1806, %v2110
      %v2112 = vpop.f32.mrb[0].mxu0
      %v2113 = vpop.f32.mrb[0].mxu0
      %v2114 = vadd.f32 %v1806, %v2113
      %v2115 = vpop.f32.mrb[0].mxu0
      %2116 = vmatprep.mubr.bf16.mxu0 %v652
      %2117 = vmatmul.mubr.bf16.gmra.mrb[0].mxu0 %v651
      %v2118 = vpop.f32.mrb[0].mxu0
      %v2119 = vadd.f32 %v1806, %v2118
      %v2120 = vpop.f32.mrb[0].mxu0
      %v2121 = vpop.f32.mrb[0].mxu0
      %v2122 = vadd.f32 %v1806, %v2121
      %v2123 = vpop.f32.mrb[0].mxu0
      %2124 = vmatprep.mubr.bf16.mxu0 %v656
      %2125 = vmatmul.mubr.bf16.gmra.mrb[0].mxu0 %v655
      %v2126 = vpop.f32.mrb[0].mxu0
      %v2127 = vadd.f32 %v1806, %v2126
      %v2128 = vpop.f32.mrb[0].mxu0
      %v2129 = vpop.f32.mrb[0].mxu0
      %v2130 = vadd.f32 %v1806, %v2129
      %v2131 = vpop.f32.mrb[0].mxu0
      %2132 = vmatprep.mubr.bf16.mxu0 %v660
      %2133 = vmatmul.mubr.bf16.gmra.mrb[0].mxu0 %v659
      %v2134 = vpop.f32.mrb[0].mxu0
      %v2135 = vadd.f32 %v1806, %v2134
      %v2136 = vpop.f32.mrb[0].mxu0
      %v2137 = vpop.f32.mrb[0].mxu0
      %v2138 = vadd.f32 %v1806, %v2137
      %v2139 = vpop.f32.mrb[0].mxu0
      %2140 = vmatprep.mubr.bf16.mxu0 %v664
      %2141 = vmatmul.mubr.bf16.gmra.mrb[0].mxu0 %v663
      %v2142 = vpop.f32.mrb[0].mxu0
      %v2143 = vadd.f32 %v1806, %v2142
      %v2144 = vpop.f32.mrb[0].mxu0
      %v2145 = vpop.f32.mrb[0].mxu0
      %v2146 = vadd.f32 %v1806, %v2145
      %v2147 = vpop.f32.mrb[0].mxu0
      %2148 = vdwg.mxu0
      %2149 = vmatprep.subr.bf16.mxu0 0
      %2150 = vmatpush1.bf16.msra.mxu0 %v1944
      %2151 = vmatprep.subr.bf16.mxu0 0
      %2152 = vmatpush1.bf16.msra.mxu0 %v1945
      %2153 = vmatprep.subr.bf16.mxu0 0
      %2154 = vmatpush1.bf16.msra.mxu0 %v1946
      %2155 = vmatprep.subr.bf16.mxu0 0
      %2156 = vmatpush1.bf16.msra.mxu0 %v1947
      %2157 = vmatprep.subr.bf16.mxu0 0
      %2158 = vmatpush1.bf16.msra.mxu0 %v1948
      %2159 = vmatprep.subr.bf16.mxu0 0
      %2160 = vmatpush1.bf16.msra.mxu0 %v1949
      %2161 = vmatprep.subr.bf16.mxu0 0
      %2162 = vmatpush1.bf16.msra.mxu0 %v1950
      %2163 = vmatprep.subr.bf16.mxu0 0
      %2164 = vmatpush1.bf16.msra.mxu0 %v1951
      %2165 = vmatprep.subr.bf16.mxu0 0
      %2166 = vmatpush1.bf16.msra.mxu0 %v1952
      %2167 = vmatprep.subr.bf16.mxu0 0
      %2168 = vmatpush1.bf16.msra.mxu0 %v1953
      %2169 = vmatprep.subr.bf16.mxu0 0
      %2170 = vmatpush1.bf16.msra.mxu0 %v1954
      %2171 = vmatprep.subr.bf16.mxu0 0
      %2172 = vmatpush1.bf16.msra.mxu0 %v1955
      %2173 = vmatprep.subr.bf16.mxu0 0
      %2174 = vmatpush1.bf16.msra.mxu0 %v1956
      %2175 = vmatprep.subr.bf16.mxu0 0
      %2176 = vmatpush1.bf16.msra.mxu0 %v1957
      %2177 = vmatprep.subr.bf16.mxu0 0
      %2178 = vmatpush1.bf16.msra.mxu0 0
      %2179 = vmatprep.subr.bf16.mxu0 0
      %2180 = vmatpush1.bf16.msra.mxu0 0
      %2181 = vmatprep.mubr.bf16.mxu0 %v1017
      %2182 = vmatmul.mubr.bf16.gmra.mrb[0].mxu0 %v605
      %v2183 = vpop.f32.mrb[0].mxu0
      %v2184 = vadd.f32 %v2023, %v2183
      %v2185 = vpop.f32.mrb[0].mxu0
      %v2186 = vpop.f32.mrb[0].mxu0
      %v2187 = vadd.f32 %v2026, %v2186
      %v2188 = vpop.f32.mrb[0].mxu0
      %2189 = vmatprep.mubr.bf16.mxu0 %v1020
      %2190 = vmatmul.mubr.bf16.gmra.mrb[0].mxu0 %v609
      %v2191 = vpop.f32.mrb[0].mxu0
      %v2192 = vadd.f32 %v2031, %v2191
      %v2193 = vpop.f32.mrb[0].mxu0
      %v2194 = vpop.f32.mrb[0].mxu0
      %v2195 = vadd.f32 %v2034, %v2194
      %v2196 = vpop.f32.mrb[0].mxu0
      %2197 = vmatprep.mubr.bf16.mxu0 %v1023
      %2198 = vmatmul.mubr.bf16.gmra.mrb[0].mxu0 %v613
      %v2199 = vpop.f32.mrb[0].mxu0
      %v2200 = vadd.f32 %v2039, %v2199
      %v2201 = vpop.f32.mrb[0].mxu0
      %v2202 = vpop.f32.mrb[0].mxu0
      %v2203 = vadd.f32 %v2042, %v2202
      %v2204 = vpop.f32.mrb[0].mxu0
      %2205 = vmatprep.mubr.bf16.mxu0 %v1026
      %2206 = vmatmul.mubr.bf16.gmra.mrb[0].mxu0 %v617
      %v2207 = vpop.f32.mrb[0].mxu0
      %v2208 = vadd.f32 %v2047, %v2207
      %v2209 = vpop.f32.mrb[0].mxu0
      %v2210 = vpop.f32.mrb[0].mxu0
      %v2211 = vadd.f32 %v2050, %v2210
      %v2212 = vpop.f32.mrb[0].mxu0
      %2213 = vmatprep.mubr.bf16.mxu0 %v1029
      %2214 = vmatmul.mubr.bf16.gmra.mrb[0].mxu0 %v621
      %v2215 = vpop.f32.mrb[0].mxu0
      %v2216 = vadd.f32 %v2055, %v2215
      %v2217 = vpop.f32.mrb[0].mxu0
      %v2218 = vpop.f32.mrb[0].mxu0
      %v2219 = vadd.f32 %v2058, %v2218
      %v2220 = vpop.f32.mrb[0].mxu0
      %2221 = vmatprep.mubr.bf16.mxu0 %v1032
      %2222 = vmatmul.mubr.bf16.gmra.mrb[0].mxu0 %v625
      %v2223 = vpop.f32.mrb[0].mxu0
      %v2224 = vadd.f32 %v2063, %v2223
      %v2225 = vpop.f32.mrb[0].mxu0
      %v2226 = vpop.f32.mrb[0].mxu0
      %v2227 = vadd.f32 %v2066, %v2226
      %v2228 = vpop.f32.mrb[0].mxu0
      %2229 = vmatprep.mubr.bf16.mxu0 %v1035
      %2230 = vmatmul.mubr.bf16.gmra.mrb[0].mxu0 %v629
      %v2231 = vpop.f32.mrb[0].mxu0
      %v2232 = vadd.f32 %v2071, %v2231
      %v2233 = vpop.f32.mrb[0].mxu0
      %v2234 = vpop.f32.mrb[0].mxu0
      %v2235 = vadd.f32 %v2074, %v2234
      %v2236 = vpop.f32.mrb[0].mxu0
      %2237 = vmatprep.mubr.bf16.mxu0 %v1038
      %2238 = vmatmul.mubr.bf16.gmra.mrb[0].mxu0 %v633
      %v2239 = vpop.f32.mrb[0].mxu0
      %v2240 = vadd.f32 %v2079, %v2239
      %v2241 = vpop.f32.mrb[0].mxu0
      %v2242 = vpop.f32.mrb[0].mxu0
      %v2243 = vadd.f32 %v2082, %v2242
      %v2244 = vpop.f32.mrb[0].mxu0
      %2245 = vmatprep.mubr.bf16.mxu0 %v1041
      %2246 = vmatmul.mubr.bf16.gmra.mrb[0].mxu0 %v637
      %v2247 = vpop.f32.mrb[0].mxu0
      %v2248 = vadd.f32 %v2087, %v2247
      %v2249 = vpop.f32.mrb[0].mxu0
      %v2250 = vpop.f32.mrb[0].mxu0
      %v2251 = vadd.f32 %v2090, %v2250
      %v2252 = vpop.f32.mrb[0].mxu0
      %2253 = vmatprep.mubr.bf16.mxu0 %v1044
      %2254 = vmatmul.mubr.bf16.gmra.mrb[0].mxu0 %v641
      %v2255 = vpop.f32.mrb[0].mxu0
      %v2256 = vadd.f32 %v2095, %v2255
      %v2257 = vpop.f32.mrb[0].mxu0
      %v2258 = vpop.f32.mrb[0].mxu0
      %v2259 = vadd.f32 %v2098, %v2258
      %v2260 = vpop.f32.mrb[0].mxu0
      %2261 = vmatprep.mubr.bf16.mxu0 %v1047
      %2262 = vmatmul.mubr.bf16.gmra.mrb[0].mxu0 %v645
      %v2263 = vpop.f32.mrb[0].mxu0
      %v2264 = vadd.f32 %v2103, %v2263
      %v2265 = vpop.f32.mrb[0].mxu0
      %v2266 = vpop.f32.mrb[0].mxu0
      %v2267 = vadd.f32 %v2106, %v2266
      %v2268 = vpop.f32.mrb[0].mxu0
      %2269 = vmatprep.mubr.bf16.mxu0 %v1050
      %2270 = vmatmul.mubr.bf16.gmra.mrb[0].mxu0 %v649
      %v2271 = vpop.f32.mrb[0].mxu0
      %v2272 = vadd.f32 %v2111, %v2271
      %v2273 = vpop.f32.mrb[0].mxu0
      %v2274 = vpop.f32.mrb[0].mxu0
      %v2275 = vadd.f32 %v2114, %v2274
      %v2276 = vpop.f32.mrb[0].mxu0
      %2277 = vmatprep.mubr.bf16.mxu0 %v1053
      %2278 = vmatmul.mubr.bf16.gmra.mrb[0].mxu0 %v653
      %v2279 = vpop.f32.mrb[0].mxu0
      %v2280 = vadd.f32 %v2119, %v2279
      %v2281 = vpop.f32.mrb[0].mxu0
      %v2282 = vpop.f32.mrb[0].mxu0
      %v2283 = vadd.f32 %v2122, %v2282
      %v2284 = vpop.f32.mrb[0].mxu0
      %2285 = vmatprep.mubr.bf16.mxu0 %v1056
      %2286 = vmatmul.mubr.bf16.gmra.mrb[0].mxu0 %v657
      %v2287 = vpop.f32.mrb[0].mxu0
      %v2288 = vadd.f32 %v2127, %v2287
      %v2289 = vpop.f32.mrb[0].mxu0
      %v2290 = vpop.f32.mrb[0].mxu0
      %v2291 = vadd.f32 %v2130, %v2290
      %v2292 = vpop.f32.mrb[0].mxu0
      %2293 = vmatprep.mubr.bf16.mxu0 %v1059
      %2294 = vmatmul.mubr.bf16.gmra.mrb[0].mxu0 %v661
      %v2295 = vpop.f32.mrb[0].mxu0
      %v2296 = vadd.f32 %v2135, %v2295
      %v2297 = vpop.f32.mrb[0].mxu0
      %v2298 = vpop.f32.mrb[0].mxu0
      %v2299 = vadd.f32 %v2138, %v2298
      %v2300 = vpop.f32.mrb[0].mxu0
      %2301 = vmatprep.mubr.bf16.mxu0 %v1062
      %2302 = vmatmul.mubr.bf16.gmra.mrb[0].mxu0 %v665
      %v2303 = vpop.f32.mrb[0].mxu0
      %v2304 = vadd.f32 %v2143, %v2303
      %v2305 = vpop.f32.mrb[0].mxu0
      %v2306 = vpop.f32.mrb[0].mxu0
      %v2307 = vadd.f32 %v2146, %v2306
      %v2308 = vpop.f32.mrb[0].mxu0
      %2309 = vdwg.mxu0
      %v2310 = vmax.f32 %v2184, 0.0
      %v2311 = vmax.f32 %v2187, 0.0
      %v2312 = vmax.f32 %v2192, 0.0
      %v2313 = vmax.f32 %v2195, 0.0
      %v2314 = vmax.f32 %v2200, 0.0
      %v2315 = vmax.f32 %v2203, 0.0
      %v2316 = vmax.f32 %v2208, 0.0
      %v2317 = vmax.f32 %v2211, 0.0
      %v2318 = vmax.f32 %v2216, 0.0
      %v2319 = vmax.f32 %v2219, 0.0
      %v2320 = vmax.f32 %v2224, 0.0
      %v2321 = vmax.f32 %v2227, 0.0
      %v2322 = vmax.f32 %v2232, 0.0
      %v2323 = vmax.f32 %v2235, 0.0
      %v2324 = vmax.f32 %v2240, 0.0
      %v2325 = vmax.f32 %v2243, 0.0
      %v2326 = vmax.f32 %v2248, 0.0
      %v2327 = vmax.f32 %v2251, 0.0
      %v2328 = vmax.f32 %v2256, 0.0
      %v2329 = vmax.f32 %v2259, 0.0
      %v2330 = vmax.f32 %v2264, 0.0
      %v2331 = vmax.f32 %v2267, 0.0
      %v2332 = vmax.f32 %v2272, 0.0
      %v2333 = vmax.f32 %v2275, 0.0
      %v2334 = vmax.f32 %v2280, 0.0
      %v2335 = vmax.f32 %v2283, 0.0
      %v2336 = vmax.f32 %v2288, 0.0
      %v2337 = vmax.f32 %v2291, 0.0
      %v2338 = vmax.f32 %v2296, 0.0
      %v2339 = vmax.f32 %v2299, 0.0
      %v2340 = vmax.f32 %v2304, 0.0
      %v2341 = vmax.f32 %v2307, 0.0
      %v2342 = vpack.c.bf16 %v2311, %v2310
      %v2343 = vpack.c.bf16 %v2313, %v2312
      %v2344 = vpack.c.bf16 %v2315, %v2314
      %v2345 = vpack.c.bf16 %v2317, %v2316
      %v2346 = vpack.c.bf16 %v2319, %v2318
      %v2347 = vpack.c.bf16 %v2321, %v2320
      %v2348 = vpack.c.bf16 %v2323, %v2322
      %v2349 = vpack.c.bf16 %v2325, %v2324
      %v2350 = vpack.c.bf16 %v2327, %v2326
      %v2351 = vpack.c.bf16 %v2329, %v2328
      %v2352 = vpack.c.bf16 %v2331, %v2330
      %v2353 = vpack.c.bf16 %v2333, %v2332
      %v2354 = vpack.c.bf16 %v2335, %v2334
      %v2355 = vpack.c.bf16 %v2337, %v2336
      %v2356 = vpack.c.bf16 %v2339, %v2338
      %v2357 = vpack.c.bf16 %v2341, %v2340
      %v2374 = vunpack.c.l.b16 %v2342
      %v2375 = vunpack.c.h.b16 %v2342
      %v2376 = vunpack.c.l.b16 %v2343
      %v2377 = vunpack.c.h.b16 %v2343
      %v2378 = vunpack.c.l.b16 %v2344
      %v2379 = vunpack.c.h.b16 %v2344
      %v2380 = vunpack.c.l.b16 %v2345
      %v2381 = vunpack.c.h.b16 %v2345
      %v2382 = vunpack.c.l.b16 %v2346
      %v2383 = vunpack.c.h.b16 %v2346
      %v2384 = vunpack.c.l.b16 %v2347
      %v2385 = vunpack.c.h.b16 %v2347
      %v2386 = vunpack.c.l.b16 %v2348
      %v2387 = vunpack.c.h.b16 %v2348
      %v2388 = vunpack.c.l.b16 %v2349
      %v2389 = vunpack.c.h.b16 %v2349
      %v2390 = vunpack.c.l.b16 %v2350
      %v2391 = vunpack.c.h.b16 %v2350
      %v2392 = vunpack.c.l.b16 %v2351
      %v2393 = vunpack.c.h.b16 %v2351
      %v2394 = vunpack.c.l.b16 %v2352
      %v2395 = vunpack.c.h.b16 %v2352
      %v2396 = vunpack.c.l.b16 %v2353
      %v2397 = vunpack.c.h.b16 %v2353
      %v2398 = vunpack.c.l.b16 %v2354
      %v2399 = vunpack.c.h.b16 %v2354
      %v2400 = vunpack.c.l.b16 %v2355
      %v2401 = vunpack.c.h.b16 %v2355
      %v2402 = vunpack.c.l.b16 %v2356
      %v2403 = vunpack.c.h.b16 %v2356
      %v2404 = vunpack.c.l.b16 %v2357
      %v2405 = vunpack.c.h.b16 %v2357
      %v2406 = vpack.c.b16 %v2374, %v2374
      %v2407 = vpack.c.b16 %v2375, %v2375
      %v2408 = vpack.c.b16 %v2376, %v2376
      %v2409 = vpack.c.b16 %v2377, %v2377
      %v2410 = vpack.c.b16 %v2378, %v2378
      %v2411 = vpack.c.b16 %v2379, %v2379
      %v2412 = vpack.c.b16 %v2380, %v2380
      %v2413 = vpack.c.b16 %v2381, %v2381
      %v2414 = vpack.c.b16 %v2382, %v2382
      %v2415 = vpack.c.b16 %v2383, %v2383
      %v2416 = vpack.c.b16 %v2384, %v2384
      %v2417 = vpack.c.b16 %v2385, %v2385
      %v2418 = vpack.c.b16 %v2386, %v2386
      %v2419 = vpack.c.b16 %v2387, %v2387
      %v2420 = vpack.c.b16 %v2388, %v2388
      %v2421 = vpack.c.b16 %v2389, %v2389
      %v2422 = vpack.c.b16 %v2390, %v2390
      %v2423 = vpack.c.b16 %v2391, %v2391
      %v2424 = vpack.c.b16 %v2392, %v2392
      %v2425 = vpack.c.b16 %v2393, %v2393
      %v2426 = vpack.c.b16 %v2394, %v2394
      %v2427 = vpack.c.b16 %v2395, %v2395
      %v2428 = vpack.c.b16 %v2396, %v2396
      %v2429 = vpack.c.b16 %v2397, %v2397
      %v2430 = vpack.c.b16 %v2398, %v2398
      %v2431 = vpack.c.b16 %v2399, %v2399
      %v2432 = vpack.c.b16 %v2400, %v2400
      %v2433 = vpack.c.b16 %v2401, %v2401
      %v2434 = vpack.c.b16 %v2402, %v2402
      %v2435 = vpack.c.b16 %v2403, %v2403
      %v2436 = vpack.c.b16 %v2404, %v2404
      %v2437 = vpack.c.b16 %v2405, %v2405
      %2470 = vst [vmem:[%s272] sm:$0xf] %v2406
      %2471 = vst [vmem:[%s272 + $0x4] sm:$0xf] %v2407
      %2472 = vst [vmem:[%s272 + $0x8] sm:$0xf] %v2408
      %2473 = vst [vmem:[%s272 + $0xc] sm:$0xf] %v2409
      %2474 = vst [vmem:[%s272 + $0x10] sm:$0xf] %v2410
      %2475 = vst [vmem:[%s272 + $0x14] sm:$0xf] %v2411
      %2476 = vst [vmem:[%s272 + $0x18] sm:$0xf] %v2412
      %2477 = vst [vmem:[%s272 + $0x1c] sm:$0xf] %v2413
      %2478 = vst [vmem:[%s272 + $0x20] sm:$0xf] %v2414
      %2479 = vst [vmem:[%s272 + $0x24] sm:$0xf] %v2415
      %2480 = vst [vmem:[%s272 + $0x28] sm:$0xf] %v2416
      %2481 = vst [vmem:[%s272 + $0x2c] sm:$0xf] %v2417
      %2482 = vst [vmem:[%s272 + $0x30] sm:$0xf] %v2418
      %2483 = vst [vmem:[%s272 + $0x34] sm:$0xf] %v2419
      %2484 = vst [vmem:[%s272 + $0x38] sm:$0xf] %v2420
      %2485 = vst [vmem:[%s272 + $0x3c] sm:$0xf] %v2421
      %2486 = vst [vmem:[%s272 + $0x40] sm:$0xf] %v2422
      %2487 = vst [vmem:[%s272 + $0x44] sm:$0xf] %v2423
      %2488 = vst [vmem:[%s272 + $0x48] sm:$0xf] %v2424
      %2489 = vst [vmem:[%s272 + $0x4c] sm:$0xf] %v2425
      %2490 = vst [vmem:[%s272 + $0x50] sm:$0xf] %v2426
      %2491 = vst [vmem:[%s272 + $0x54] sm:$0xf] %v2427
      %2492 = vst [vmem:[%s272 + $0x58] sm:$0xf] %v2428
      %2493 = vst [vmem:[%s272 + $0x5c] sm:$0xf] %v2429
      %2494 = vst [vmem:[%s272 + $0x60] sm:$0xf] %v2430
      %2495 = vst [vmem:[%s272 + $0x64] sm:$0xf] %v2431
      %2496 = vst [vmem:[%s272 + $0x68] sm:$0xf] %v2432
      %2497 = vst [vmem:[%s272 + $0x6c] sm:$0xf] %v2433
      %2498 = vst [vmem:[%s272 + $0x70] sm:$0xf] %v2434
      %2499 = vst [vmem:[%s272 + $0x74] sm:$0xf] %v2435
      %2500 = vst [vmem:[%s272 + $0x78] sm:$0xf] %v2436
      %2501 = vst [vmem:[%s272 + $0x7c] sm:$0xf] %v2437
      %s2502 = smul.u32 32, %s18
      %p2503 = scmp.lt.s32.totalorder %s2502, 63
      %s2504 = scalar_select %p2503, %s2502, 63
      %s2505 = smul.addr %s2504, 2
      %s2506 = smul.addr %s2505, 4
      %s2507 = scalar_lea.vmem %s5, %s2506
      %s2508 = smul.u32 32, %s18
      %p2509 = scmp.lt.s32.totalorder %s2508, 63
      %s2510 = scalar_select %p2509, %s2508, 63
      %s2511 = smul.addr %s2510, 4
      %s2512 = scalar_lea.vmem %s6, %s2511
      // Predicated region
      $region41: #{mixed_4b.4} parent=39 // pred_check
        %p2513 = pneg %p146
      $region42: #{mixed_4b.4} parent=39 // pred_check_branch
        %2515 = sbr.rel (%p2513) target = $region44
      $region43: #{mixed_4b.4} parent=39 // pred_region
        %s2516 = smul.u32 32, %s18
      $region44: #{mixed_4b.4} parent=39 // pred_fallthru
        _
      // Predicated region
      $region45: #{mixed_4b.4} parent=39 // pred_check
        %p2517 = pneg %p172
      $region46: #{mixed_4b.4} parent=39 // pred_check_branch
        %2519 = sbr.rel (%p2517) target = $region48
      $region47: #{mixed_4b.4} parent=39 // pred_region
        %s2520 = smul.u32 32, %s18
      $region48: #{mixed_4b.4} parent=39 // pred_fallthru
        _
    $region40: #{mixed_4b.4} parent=5 // pred_fallthru
      _
    %p2521 = scmp.le.s32.totalorder 2, %s13
    // Predicated region
    $region49: #{mixed_4b.4} parent=5 // pred_check
      %p2522 = pneg %p2521
    $region50: #{mixed_4b.4} parent=5 // pred_check_branch
      %2524 = sbr.rel (%p2522) target = $region52
    $region51: #{mixed_4b.4} parent=5 // pred_region
      %s2525 = ssub.s32 %s13, 2
      // Predicated region
      $region53: #{mixed_4b.4} parent=51 // pred_check
        %p2526 = pneg %p152
      $region54: #{mixed_4b.4} parent=51 // pred_check_branch
        %2528 = sbr.rel (%p2526) target = $region56
      $region55: #{mixed_4b.4} parent=51 // pred_region
        %s2529 = smul.u32 32, %s19
        %p2530 = scmp.lt.s32.totalorder %s2529, 63
        %s2531 = scalar_select %p2530, %s2529, 63
        %s2532 = smul.addr %s2531, 2
        %s2533 = smul.addr %s2532, 4
        %s2534 = scalar_lea.vmem %s5, %s2533
      $region56: #{mixed_4b.4} parent=51 // pred_fallthru
        _
      // Predicated region
      $region57: #{mixed_4b.4} parent=51 // pred_check
        %p2535 = pneg %p178
      $region58: #{mixed_4b.4} parent=51 // pred_check_branch
        %2537 = sbr.rel (%p2535) target = $region60
      $region59: #{mixed_4b.4} parent=51 // pred_region
        %s2538 = smul.u32 32, %s19
        %p2539 = scmp.lt.s32.totalorder %s2538, 63
        %s2540 = scalar_select %p2539, %s2538, 63
        %s2541 = smul.addr %s2540, 4
        %s2542 = scalar_lea.vmem %s6, %s2541
      $region60: #{mixed_4b.4} parent=51 // pred_fallthru
        _
    $region52: #{mixed_4b.4} parent=5 // pred_fallthru
      _
  $region6: #{mixed_4b.4} parent=0 // loop_footer
    %s17 = sadd.s32 1, %s13
  $region7: #{mixed_4b.4} parent=0 // loop_footer_branch
    %12 = sbr.rel target = $region3
  $region8: #{mixed_4b.4} parent=0 // loop_exit
    _

// kernel: mixed_4b.7
$region0: #{mixed_4b.7}
  #allocation0 [shape = 'u32[]', space=smem, size = 0x4, offset = 0x4, fixed_abs, tag = 'smem constant byte address 0x4 - core index']
  #allocation1 [shape = 'u32[144,128]{1,0:T(1,128)}', space=vmem, size = 0x12000, scoped, tag = 'internal scratch']
  %s0 = inlined_call_operand.vmem [shape: bf16[2,6,10,10,480], index: 0, kind: input, shape index: {}]
  %s1 = inlined_call_operand.vmem [shape: bf16[480,64], index: 1, kind: input, shape index: {}]
  %s2 = inlined_call_operand.vmem [shape: f32[1,64], index: 2, kind: input, shape index: {}]
  %s3 = inlined_call_operand.vmem [shape: bf16[2,4,8,8,64], index: 3, kind: output, shape index: {}]
  %s4 = sld [smem:[#allocation0]]
  $region45: #{mixed_4b.7} parent=0
    _
  %s6 = ssub.s32 1, %s4
  %s7 = scalar_select 0, %s6, %s4
  loop: start=0, step=1, limit=4
  $region2: #{mixed_4b.7} parent=0 // loop_pre_header
    _
  $region3: #{mixed_4b.7} parent=0 // loop_header
    %s9 = sphi 0, %s13
    %p10 = scmp.ge.s32.totalorder %s9, 4
    %s19 = sphi 0, %s21
    %s22 = sphi 0, %s19
    %s23 = sphi 0, %s22
    %s39 = sphi 0, %s23
    %s43 = sphi 0, %s43
    %s45 = sphi 0, %s43
    %s46 = sphi 0, %s45
    %s60 = sphi 0, %s46
    %s64 = sphi 0, %s64
    %s66 = sphi 0, %s64
    %s67 = sphi 0, %s66
    %s81 = sphi 0, %s67
    %s87 = sphi 0, %s89
    %s90 = sphi 0, %s87
    %s91 = sphi 0, %s90
    %s107 = sphi 0, %s91
  $region4: #{mixed_4b.7} parent=0 // loop_header_branch
    %12 = sbr.rel (%p10) target = $region8
  $region5: #{mixed_4b.7} parent=0 // loop_body
    %s14 = ssub.s32 %s9, 1
    %s15 = ssub.s32 %s9, 2
    %s16 = sadd.s32 %s9, 1
    %s17 = ssub.s32 %s9, %s16
    %p18 = scmp.eq.s32.totalorder %s17, 0
    %s20 = sadd.s32 %s19, 1
    %s21 = scalar_select %p18, %s19, %s20
    %p24 = pneg %p18
    %p25 = scmp.eq.s32.totalorder %s9, 1
    %p26 = por %p24, %p25
    %p27 = scmp.ne.s32.totalorder %s19, %s22
    %p28 = scmp.eq.s32.totalorder %s9, 0
    %p29 = por %p27, %p28
    %p30 = scmp.ne.s32.totalorder %s19, %s22
    %p31 = scmp.eq.s32.totalorder %s14, 1
    %p32 = por %p30, %p31
    %p33 = scmp.ne.s32.totalorder %s22, %s23
    %p34 = scmp.eq.s32.totalorder %s14, 0
    %p35 = por %p33, %p34
    %p36 = scmp.ne.s32.totalorder %s22, %s23
    %p37 = scmp.eq.s32.totalorder %s15, 1
    %p38 = por %p36, %p37
    %p40 = scmp.ne.s32.totalorder %s23, %s39
    %p41 = scmp.eq.s32.totalorder %s15, 0
    %p42 = por %p40, %p41
    %s44 = sadd.s32 %s43, 1
    %p47 = scmp.eq.s32.totalorder %s9, 1
    %p48 = scmp.ne.s32.totalorder %s43, %s45
    %p49 = scmp.eq.s32.totalorder %s9, 0
    %p50 = por %p48, %p49
    %p51 = scmp.ne.s32.totalorder %s43, %s45
    %p52 = scmp.eq.s32.totalorder %s14, 1
    %p53 = por %p51, %p52
    %p54 = scmp.ne.s32.totalorder %s45, %s46
    %p55 = scmp.eq.s32.totalorder %s14, 0
    %p56 = por %p54, %p55
    %p57 = scmp.ne.s32.totalorder %s45, %s46
    %p58 = scmp.eq.s32.totalorder %s15, 1
    %p59 = por %p57, %p58
    %p61 = scmp.ne.s32.totalorder %s46, %s60
    %p62 = scmp.eq.s32.totalorder %s15, 0
    %p63 = por %p61, %p62
    %s65 = sadd.s32 %s64, 1
    %p68 = scmp.eq.s32.totalorder %s9, 1
    %p69 = scmp.ne.s32.totalorder %s64, %s66
    %p70 = scmp.eq.s32.totalorder %s9, 0
    %p71 = por %p69, %p70
    %p72 = scmp.ne.s32.totalorder %s64, %s66
    %p73 = scmp.eq.s32.totalorder %s14, 1
    %p74 = por %p72, %p73
    %p75 = scmp.ne.s32.totalorder %s66, %s67
    %p76 = scmp.eq.s32.totalorder %s14, 0
    %p77 = por %p75, %p76
    %p78 = scmp.ne.s32.totalorder %s66, %s67
    %p79 = scmp.eq.s32.totalorder %s15, 1
    %p80 = por %p78, %p79
    %p82 = scmp.ne.s32.totalorder %s67, %s81
    %p83 = scmp.eq.s32.totalorder %s15, 0
    %p84 = por %p82, %p83
    %s85 = ssub.s32 %s9, %s16
    %p86 = scmp.eq.s32.totalorder %s85, 0
    %s88 = sadd.s32 %s87, 1
    %s89 = scalar_select %p86, %s87, %s88
    %p92 = pneg %p86
    %p93 = scmp.eq.s32.totalorder %s9, 1
    %p94 = por %p92, %p93
    %p95 = scmp.ne.s32.totalorder %s87, %s90
    %p96 = scmp.eq.s32.totalorder %s9, 0
    %p97 = por %p95, %p96
    %p98 = scmp.ne.s32.totalorder %s87, %s90
    %p99 = scmp.eq.s32.totalorder %s14, 1
    %p100 = por %p98, %p99
    %p101 = scmp.ne.s32.totalorder %s90, %s91
    %p102 = scmp.eq.s32.totalorder %s14, 0
    %p103 = por %p101, %p102
    %p104 = scmp.ne.s32.totalorder %s90, %s91
    %p105 = scmp.eq.s32.totalorder %s15, 1
    %p106 = por %p104, %p105
    %p108 = scmp.ne.s32.totalorder %s91, %s107
    %p109 = scmp.eq.s32.totalorder %s15, 0
    %p110 = por %p108, %p109
    %p111 = scmp.le.s32.totalorder 1, %s9
    %p112 = scmp.lt.s32.totalorder %s9, 3
    %p113 = pnand %p111, %p112
    %p114 = pneg %p113
    // Predicated region
    $region9: #{mixed_4b.7} parent=5 // pred_check
      _
    $region10: #{mixed_4b.7} parent=5 // pred_check_branch
      %116 = sbr.rel (%p113) target = $region12
    $region11: #{mixed_4b.7} parent=5 // pred_region
      %s117 = ssub.s32 %s9, 1
      // Predicated region
      $region13: #{mixed_4b.7} parent=11 // pred_check
        %p118 = pneg %p56
      $region14: #{mixed_4b.7} parent=11 // pred_check_branch
        %120 = sbr.rel (%p118) target = $region16
      $region15: #{mixed_4b.7} parent=11 // pred_region
        _
      $region16: #{mixed_4b.7} parent=11 // pred_fallthru
        _
      // Predicated region
      $region17: #{mixed_4b.7} parent=11 // pred_check
        %p121 = pneg %p77
      $region18: #{mixed_4b.7} parent=11 // pred_check_branch
        %123 = sbr.rel (%p121) target = $region20
      $region19: #{mixed_4b.7} parent=11 // pred_region
        _
      $region20: #{mixed_4b.7} parent=11 // pred_fallthru
        _
    $region12: #{mixed_4b.7} parent=5 // pred_fallthru
      _
    %p124 = scmp.lt.s32.totalorder %s9, 2
    // Predicated region
    $region21: #{mixed_4b.7} parent=5 // pred_check
      %p125 = pneg %p124
    $region22: #{mixed_4b.7} parent=5 // pred_check_branch
      %127 = sbr.rel (%p125) target = $region24
    $region23: #{mixed_4b.7} parent=5 // pred_region
      // Predicated region
      $region25: #{mixed_4b.7} parent=23 // pred_check
        %p128 = pneg %p29
      $region26: #{mixed_4b.7} parent=23 // pred_check_branch
        %130 = sbr.rel (%p128) target = $region28
      $region27: #{mixed_4b.7} parent=23 // pred_region
        %p131 = scmp.lt.s32.totalorder %s9, 1
        %s132 = scalar_select %p131, %s9, 1
        %s133 = smul.addr %s132, 480
        %s134 = smul.addr %s133, 4
        %s135 = scalar_lea.vmem %s0, %s134
      $region28: #{mixed_4b.7} parent=23 // pred_fallthru
        _
    $region24: #{mixed_4b.7} parent=5 // pred_fallthru
      _
    %p136 = scmp.le.s32.totalorder 1, %s9
    %p137 = scmp.lt.s32.totalorder %s9, 3
    %p138 = pnand %p136, %p137
    %p139 = pneg %p138
    // Predicated region
    $region29: #{mixed_4b.7} parent=5 // pred_check
      _
    $region30: #{mixed_4b.7} parent=5 // pred_check_branch
      %141 = sbr.rel (%p138) target = $region32
    $region31: #{mixed_4b.7} parent=5 // pred_region
      %s142 = ssub.s32 %s9, 1
      %p143 = scmp.lt.s32.totalorder %s14, 1
      %s144 = scalar_select %p143, %s14, 1
      %s145 = smul.addr %s144, 480
      %s146 = smul.addr %s145, 4
      %s147 = scalar_lea.vmem %s0, %s146
      %p148 = pneg %p35
      %p149 = pneg %p32
      %p150 = pneg %p56
      %p151 = pneg %p53
      %p152 = pneg %p77
      %p153 = pneg %p74
      %p154 = pneg %p103
      %p155 = pneg %p100
      %p156 = scmp.lt.s32.totalorder %s14, 1
      %s157 = scalar_select %p156, %s14, 1
      %s158 = smul.addr %s157, 32
      %s159 = smul.addr %s158, 4
      %s160 = scalar_lea.vmem %s3, %s159
      %p161 = scmp.lt.s32.totalorder %s14, 1
      %s162 = scalar_select %p161, %s14, 1
      %s163 = smul.addr %s162, 480
      %s164 = smul.addr %s163, 4
      %s165 = scalar_lea.vmem %s0, %s164
      %p166 = scmp.lt.s32.totalorder %s14, 1
      %s167 = scalar_select %p166, %s14, 1
      %s168 = smul.addr %s167, 32
      %s169 = smul.addr %s168, 4
      %s170 = scalar_lea.vmem %s3, %s169
      %v172 = vld [vmem:[%s165] sm:$0xff]
      %v173 = vld [vmem:[%s165 + $0x8] sm:$0xff]
      %v174 = vld [vmem:[%s165 + $0x10] sm:$0x11]
      %v175 = vld [vmem:[%s165 + $0x18] sm:$0x11]
      %v176 = vld [vmem:[%s165 + $0x20] sm:$0xff]
      %v177 = vld [vmem:[%s165 + $0x28] sm:$0xff]
      %v178 = vld [vmem:[%s165 + $0x30] sm:$0x11]
      %v179 = vld [vmem:[%s165 + $0x38] sm:$0x11]
      %v180 = vld [vmem:[%s165 + $0x40] sm:$0xff]
      %v181 = vld [vmem:[%s165 + $0x48] sm:$0xff]
      %v182 = vld [vmem:[%s165 + $0x50] sm:$0x11]
      %v183 = vld [vmem:[%s165 + $0x58] sm:$0x11]
      %v184 = vld [vmem:[%s165 + $0x60] sm:$0xff]
      %v185 = vld [vmem:[%s165 + $0x68] sm:$0xff]
      %v186 = vld [vmem:[%s165 + $0x70] sm:$0x11]
      %v187 = vld [vmem:[%s165 + $0x78] sm:$0x11]
      %v188 = vld [vmem:[%s165 + $0x80] sm:$0xff]
      %v189 = vld [vmem:[%s165 + $0x88] sm:$0xff]
      %v190 = vld [vmem:[%s165 + $0x90] sm:$0x11]
      %v191 = vld [vmem:[%s165 + $0x98] sm:$0x11]
      %v192 = vld [vmem:[%s165 + $0xa0] sm:$0xff]
      %v193 = vld [vmem:[%s165 + $0xa8] sm:$0xff]
      %v194 = vld [vmem:[%s165 + $0xb0] sm:$0x11]
      %v195 = vld [vmem:[%s165 + $0xb8] sm:$0x11]
      %v196 = vld [vmem:[%s165 + $0xc0] sm:$0xff]
      %v197 = vld [vmem:[%s165 + $0xc8] sm:$0xff]
      %v198 = vld [vmem:[%s165 + $0xd0] sm:$0x11]
      %v199 = vld [vmem:[%s165 + $0xd8] sm:$0x11]
      %v200 = vld [vmem:[%s165 + $0xe0] sm:$0xff]
      %v201 = vld [vmem:[%s165 + $0xe8] sm:$0xff]
      %v202 = vld [vmem:[%s165 + $0xf0] sm:$0x11]
      %v203 = vld [vmem:[%s165 + $0xf8] sm:$0x11]
      %v204 = vld [vmem:[%s165 + $0x100] sm:$0xff]
      %v205 = vld [vmem:[%s165 + $0x108] sm:$0xff]
      %v206 = vld [vmem:[%s165 + $0x110] sm:$0x11]
      %v207 = vld [vmem:[%s165 + $0x118] sm:$0x11]
      %v208 = vld [vmem:[%s165 + $0x120] sm:$0xff]
      %v209 = vld [vmem:[%s165 + $0x128] sm:$0xff]
      %v210 = vld [vmem:[%s165 + $0x130] sm:$0x11]
      %v211 = vld [vmem:[%s165 + $0x138] sm:$0x11]
      %v212 = vld [vmem:[%s165 + $0x140] sm:$0xff]
      %v213 = vld [vmem:[%s165 + $0x148] sm:$0xff]
      %v214 = vld [vmem:[%s165 + $0x150] sm:$0x11]
      %v215 = vld [vmem:[%s165 + $0x158] sm:$0x11]
      %v216 = vld [vmem:[%s165 + $0x160] sm:$0xff]
      %v217 = vld [vmem:[%s165 + $0x168] sm:$0xff]
      %v218 = vld [vmem:[%s165 + $0x170] sm:$0x11]
      %v219 = vld [vmem:[%s165 + $0x178] sm:$0x11]
      %v220 = vld [vmem:[%s165 + $0x180] sm:$0xff]
      %v221 = vld [vmem:[%s165 + $0x188] sm:$0xff]
      %v222 = vld [vmem:[%s165 + $0x190] sm:$0x11]
      %v223 = vld [vmem:[%s165 + $0x198] sm:$0x11]
      %v224 = vld [vmem:[%s165 + $0x1a0] sm:$0xff]
      %v225 = vld [vmem:[%s165 + $0x1a8] sm:$0xff]
      %v226 = vld [vmem:[%s165 + $0x1b0] sm:$0x11]
      %v227 = vld [vmem:[%s165 + $0x1b8] sm:$0x11]
      %v228 = vld [vmem:[%s165 + $0x1c0] sm:$0xff]
      %v229 = vld [vmem:[%s165 + $0x1c8] sm:$0xff]
      %v230 = vld [vmem:[%s165 + $0x1d0] sm:$0x11]
      %v231 = vld [vmem:[%s165 + $0x1d8] sm:$0x11]
      %v232 = vld [vmem:[%s165 + $0x1e0] sm:$0xff]
      %v233 = vld [vmem:[%s165 + $0x1e8] sm:$0xff]
      %v234 = vld [vmem:[%s165 + $0x1f0] sm:$0x11]
      %v235 = vld [vmem:[%s165 + $0x1f8] sm:$0x11]
      %v236 = vld [vmem:[%s165 + $0x200] sm:$0xff]
      %v237 = vld [vmem:[%s165 + $0x208] sm:$0xff]
      %v238 = vld [vmem:[%s165 + $0x210] sm:$0x11]
      %v239 = vld [vmem:[%s165 + $0x218] sm:$0x11]
      %v240 = vld [vmem:[%s165 + $0x220] sm:$0xff]
      %v241 = vld [vmem:[%s165 + $0x228] sm:$0xff]
      %v242 = vld [vmem:[%s165 + $0x230] sm:$0x11]
      %v243 = vld [vmem:[%s165 + $0x238] sm:$0x11]
      %v244 = vld [vmem:[%s165 + $0x240] sm:$0xff]
      %v245 = vld [vmem:[%s165 + $0x248] sm:$0xff]
      %v246 = vld [vmem:[%s165 + $0x250] sm:$0x11]
      %v247 = vld [vmem:[%s165 + $0x258] sm:$0x11]
      %v248 = vld [vmem:[%s165 + $0x260] sm:$0xff]
      %v249 = vld [vmem:[%s165 + $0x268] sm:$0xff]
      %v250 = vld [vmem:[%s165 + $0x270] sm:$0x11]
      %v251 = vld [vmem:[%s165 + $0x278] sm:$0x11]
      %v252 = vld [vmem:[%s165 + $0x280] sm:$0xff]
      %v253 = vld [vmem:[%s165 + $0x288] sm:$0xff]
      %v254 = vld [vmem:[%s165 + $0x290] sm:$0x11]
      %v255 = vld [vmem:[%s165 + $0x298] sm:$0x11]
      %v256 = vld [vmem:[%s165 + $0x2a0] sm:$0xff]
      %v257 = vld [vmem:[%s165 + $0x2a8] sm:$0xff]
      %v258 = vld [vmem:[%s165 + $0x2b0] sm:$0x11]
      %v259 = vld [vmem:[%s165 + $0x2b8] sm:$0x11]
      %v260 = vld [vmem:[%s165 + $0x2c0] sm:$0xff]
      %v261 = vld [vmem:[%s165 + $0x2c8] sm:$0xff]
      %v262 = vld [vmem:[%s165 + $0x2d0] sm:$0x11]
      %v263 = vld [vmem:[%s165 + $0x2d8] sm:$0x11]
      %v264 = vld [vmem:[%s165 + $0x2e0] sm:$0xff]
      %v265 = vld [vmem:[%s165 + $0x2e8] sm:$0xff]
      %v266 = vld [vmem:[%s165 + $0x2f0] sm:$0x11]
      %v267 = vld [vmem:[%s165 + $0x2f8] sm:$0x11]
      %v268 = vld [vmem:[%s165 + $0x300] sm:$0xff]
      %v269 = vld [vmem:[%s165 + $0x308] sm:$0xff]
      %v270 = vld [vmem:[%s165 + $0x310] sm:$0x11]
      %v271 = vld [vmem:[%s165 + $0x318] sm:$0x11]
      %v272 = vld [vmem:[%s165 + $0x320] sm:$0xff]
      %v273 = vld [vmem:[%s165 + $0x328] sm:$0xff]
      %v274 = vld [vmem:[%s165 + $0x330] sm:$0x11]
      %v275 = vld [vmem:[%s165 + $0x338] sm:$0x11]
      %v276 = vld [vmem:[%s165 + $0x340] sm:$0xff]
      %v277 = vld [vmem:[%s165 + $0x348] sm:$0xff]
      %v278 = vld [vmem:[%s165 + $0x350] sm:$0x11]
      %v279 = vld [vmem:[%s165 + $0x358] sm:$0x11]
      %v280 = vld [vmem:[%s165 + $0x360] sm:$0xff]
      %v281 = vld [vmem:[%s165 + $0x368] sm:$0xff]
      %v282 = vld [vmem:[%s165 + $0x370] sm:$0x11]
      %v283 = vld [vmem:[%s165 + $0x378] sm:$0x11]
      %v284 = vld [vmem:[%s165 + $0x380] sm:$0xff]
      %v285 = vld [vmem:[%s165 + $0x388] sm:$0xff]
      %v286 = vld [vmem:[%s165 + $0x390] sm:$0x11]
      %v287 = vld [vmem:[%s165 + $0x398] sm:$0x11]
      %v288 = vld [vmem:[%s165 + $0x3a0] sm:$0xff]
      %v289 = vld [vmem:[%s165 + $0x3a8] sm:$0xff]
      %v290 = vld [vmem:[%s165 + $0x3b0] sm:$0x11]
      %v291 = vld [vmem:[%s165 + $0x3b8] sm:$0x11]
      %v292 = vld [vmem:[%s165 + $0x3c0] sm:$0xff]
      %v293 = vld [vmem:[%s165 + $0x3c8] sm:$0xff]
      %v294 = vld [vmem:[%s165 + $0x3d0] sm:$0x11]
      %v295 = vld [vmem:[%s165 + $0x3d8] sm:$0x11]
      %v296 = vld [vmem:[%s165 + $0x3e0] sm:$0xff]
      %v297 = vld [vmem:[%s165 + $0x3e8] sm:$0xff]
      %v298 = vld [vmem:[%s165 + $0x3f0] sm:$0x11]
      %v299 = vld [vmem:[%s165 + $0x3f8] sm:$0x11]
      %v300 = vld [vmem:[%s165 + $0x400] sm:$0xff]
      %v301 = vld [vmem:[%s165 + $0x408] sm:$0xff]
      %v302 = vld [vmem:[%s165 + $0x410] sm:$0x11]
      %v303 = vld [vmem:[%s165 + $0x418] sm:$0x11]
      %v304 = vld [vmem:[%s165 + $0x420] sm:$0xff]
      %v305 = vld [vmem:[%s165 + $0x428] sm:$0xff]
      %v306 = vld [vmem:[%s165 + $0x430] sm:$0x11]
      %v307 = vld [vmem:[%s165 + $0x438] sm:$0x11]
      %v308 = vld [vmem:[%s165 + $0x440] sm:$0xff]
      %v309 = vld [vmem:[%s165 + $0x448] sm:$0xff]
      %v310 = vld [vmem:[%s165 + $0x450] sm:$0x11]
      %v311 = vld [vmem:[%s165 + $0x458] sm:$0x11]
      %v312 = vld [vmem:[%s165 + $0x460] sm:$0xff]
      %v313 = vld [vmem:[%s165 + $0x468] sm:$0xff]
      %v314 = vld [vmem:[%s165 + $0x470] sm:$0x11]
      %v315 = vld [vmem:[%s165 + $0x478] sm:$0x11]
      %v316 = vld [vmem:[%s165 + $0x480] sm:$0xff]
      %v317 = vld [vmem:[%s165 + $0x488] sm:$0xff]
      %v318 = vld [vmem:[%s165 + $0x490] sm:$0x11]
      %v319 = vld [vmem:[%s165 + $0x498] sm:$0x11]
      %v320 = vld [vmem:[%s165 + $0x4a0] sm:$0xff]
      %v321 = vld [vmem:[%s165 + $0x4a8] sm:$0xff]
      %v322 = vld [vmem:[%s165 + $0x4b0] sm:$0x11]
      %v323 = vld [vmem:[%s165 + $0x4b8] sm:$0x11]
      %v324 = vld [vmem:[%s165 + $0x4c0] sm:$0xff]
      %v325 = vld [vmem:[%s165 + $0x4c8] sm:$0xff]
      %v326 = vld [vmem:[%s165 + $0x4d0] sm:$0x11]
      %v327 = vld [vmem:[%s165 + $0x4d8] sm:$0x11]
      %v328 = vld [vmem:[%s165 + $0x4e0] sm:$0xff]
      %v329 = vld [vmem:[%s165 + $0x4e8] sm:$0xff]
      %v330 = vld [vmem:[%s165 + $0x4f0] sm:$0x11]
      %v331 = vld [vmem:[%s165 + $0x4f8] sm:$0x11]
      %v332 = vld [vmem:[%s165 + $0x500] sm:$0xff]
      %v333 = vld [vmem:[%s165 + $0x508] sm:$0xff]
      %v334 = vld [vmem:[%s165 + $0x510] sm:$0x11]
      %v335 = vld [vmem:[%s165 + $0x518] sm:$0x11]
      %v336 = vld [vmem:[%s165 + $0x520] sm:$0xff]
      %v337 = vld [vmem:[%s165 + $0x528] sm:$0xff]
      %v338 = vld [vmem:[%s165 + $0x530] sm:$0x11]
      %v339 = vld [vmem:[%s165 + $0x538] sm:$0x11]
      %v340 = vld [vmem:[%s165 + $0x540] sm:$0xff]
      %v341 = vld [vmem:[%s165 + $0x548] sm:$0xff]
      %v342 = vld [vmem:[%s165 + $0x550] sm:$0x11]
      %v343 = vld [vmem:[%s165 + $0x558] sm:$0x11]
      %v344 = vld [vmem:[%s165 + $0x560] sm:$0xff]
      %v345 = vld [vmem:[%s165 + $0x568] sm:$0xff]
      %v346 = vld [vmem:[%s165 + $0x570] sm:$0x11]
      %v347 = vld [vmem:[%s165 + $0x578] sm:$0x11]
      %v348 = vld [vmem:[%s165 + $0x580] sm:$0xff]
      %v349 = vld [vmem:[%s165 + $0x588] sm:$0xff]
      %v350 = vld [vmem:[%s165 + $0x590] sm:$0x11]
      %v351 = vld [vmem:[%s165 + $0x598] sm:$0x11]
      %v352 = vld [vmem:[%s165 + $0x5a0] sm:$0xff]
      %v353 = vld [vmem:[%s165 + $0x5a8] sm:$0xff]
      %v354 = vld [vmem:[%s165 + $0x5b0] sm:$0x11]
      %v355 = vld [vmem:[%s165 + $0x5b8] sm:$0x11]
      %v356 = vld [vmem:[%s165 + $0x5c0] sm:$0xff]
      %v357 = vld [vmem:[%s165 + $0x5c8] sm:$0xff]
      %v358 = vld [vmem:[%s165 + $0x5d0] sm:$0x11]
      %v359 = vld [vmem:[%s165 + $0x5d8] sm:$0x11]
      %v360 = vld [vmem:[%s165 + $0x5e0] sm:$0xff]
      %v361 = vld [vmem:[%s165 + $0x5e8] sm:$0xff]
      %v362 = vld [vmem:[%s165 + $0x5f0] sm:$0x11]
      %v363 = vld [vmem:[%s165 + $0x5f8] sm:$0x11]
      %v364 = vld [vmem:[%s165 + $0x600] sm:$0xff]
      %v365 = vld [vmem:[%s165 + $0x608] sm:$0xff]
      %v366 = vld [vmem:[%s165 + $0x610] sm:$0x11]
      %v367 = vld [vmem:[%s165 + $0x618] sm:$0x11]
      %v368 = vld [vmem:[%s165 + $0x620] sm:$0xff]
      %v369 = vld [vmem:[%s165 + $0x628] sm:$0xff]
      %v370 = vld [vmem:[%s165 + $0x630] sm:$0x11]
      %v371 = vld [vmem:[%s165 + $0x638] sm:$0x11]
      %v372 = vld [vmem:[%s165 + $0x640] sm:$0xff]
      %v373 = vld [vmem:[%s165 + $0x648] sm:$0xff]
      %v374 = vld [vmem:[%s165 + $0x650] sm:$0x11]
      %v375 = vld [vmem:[%s165 + $0x658] sm:$0x11]
      %v376 = vld [vmem:[%s165 + $0x660] sm:$0xff]
      %v377 = vld [vmem:[%s165 + $0x668] sm:$0xff]
      %v378 = vld [vmem:[%s165 + $0x670] sm:$0x11]
      %v379 = vld [vmem:[%s165 + $0x678] sm:$0x11]
      %v380 = vld [vmem:[%s165 + $0x680] sm:$0xff]
      %v381 = vld [vmem:[%s165 + $0x688] sm:$0xff]
      %v382 = vld [vmem:[%s165 + $0x690] sm:$0x11]
      %v383 = vld [vmem:[%s165 + $0x698] sm:$0x11]
      %v384 = vld [vmem:[%s165 + $0x6a0] sm:$0xff]
      %v385 = vld [vmem:[%s165 + $0x6a8] sm:$0xff]
      %v386 = vld [vmem:[%s165 + $0x6b0] sm:$0x11]
      %v387 = vld [vmem:[%s165 + $0x6b8] sm:$0x11]
      %v388 = vld [vmem:[%s165 + $0x6c0] sm:$0xff]
      %v389 = vld [vmem:[%s165 + $0x6c8] sm:$0xff]
      %v390 = vld [vmem:[%s165 + $0x6d0] sm:$0x11]
      %v391 = vld [vmem:[%s165 + $0x6d8] sm:$0x11]
      %v392 = vld [vmem:[%s165 + $0x6e0] sm:$0xff]
      %v393 = vld [vmem:[%s165 + $0x6e8] sm:$0xff]
      %v394 = vld [vmem:[%s165 + $0x6f0] sm:$0x11]
      %v395 = vld [vmem:[%s165 + $0x6f8] sm:$0x11]
      %v396 = vld [vmem:[%s165 + $0x700] sm:$0xff]
      %v397 = vld [vmem:[%s165 + $0x708] sm:$0xff]
      %v398 = vld [vmem:[%s165 + $0x710] sm:$0x11]
      %v399 = vld [vmem:[%s165 + $0x718] sm:$0x11]
      %v400 = vld [vmem:[%s165 + $0x720] sm:$0xff]
      %v401 = vld [vmem:[%s165 + $0x728] sm:$0xff]
      %v402 = vld [vmem:[%s165 + $0x730] sm:$0x11]
      %v403 = vld [vmem:[%s165 + $0x738] sm:$0x11]
      %v404 = vld [vmem:[%s165 + $0x740] sm:$0xff]
      %v405 = vld [vmem:[%s165 + $0x748] sm:$0xff]
      %v406 = vld [vmem:[%s165 + $0x750] sm:$0x11]
      %v407 = vld [vmem:[%s165 + $0x758] sm:$0x11]
      %v408 = vld [vmem:[%s165 + $0x760] sm:$0xff]
      %v409 = vld [vmem:[%s165 + $0x768] sm:$0xff]
      %v410 = vld [vmem:[%s165 + $0x770] sm:$0x11]
      %v411 = vld [vmem:[%s165 + $0x778] sm:$0x11]
      %vm412 = vsmask.f32 3328
      %vm413 = vsmask.f32 7440
      %vm414 = vmor %vm412, %vm413
      %v416 = vshrl.u32 %v172, 16
      %v418 = vrot.slane %v416, 4
      %v419 = vshll.u32 %v172, 16
      %v421 = vrot.slane %v419, 5
      %v422 = vor.u32 %v418, %v421
      %v423 = vrot.slane %v422, 4
      %v425 = vshll.u32 %v174, 16
      %v427 = vrot.slane %v425, 5
      %v428 = vsel %vm414, %v423, %v427
      %v430 = vshrl.u32 %v173, 16
      %v432 = vrot.slane %v430, 4
      %v433 = vshll.u32 %v173, 16
      %v435 = vrot.slane %v433, 5
      %v436 = vor.u32 %v432, %v435
      %v437 = vrot.slane %v436, 4
      %v439 = vshll.u32 %v175, 16
      %v441 = vrot.slane %v439, 5
      %v442 = vsel %vm414, %v437, %v441
      %v444 = vshrl.u32 %v176, 16
      %v446 = vrot.slane %v444, 4
      %v447 = vshll.u32 %v176, 16
      %v449 = vrot.slane %v447, 5
      %v450 = vor.u32 %v446, %v449
      %v451 = vrot.slane %v450, 4
      %v453 = vshll.u32 %v178, 16
      %v455 = vrot.slane %v453, 5
      %v456 = vsel %vm414, %v451, %v455
      %v458 = vshrl.u32 %v177, 16
      %v460 = vrot.slane %v458, 4
      %v461 = vshll.u32 %v177, 16
      %v463 = vrot.slane %v461, 5
      %v464 = vor.u32 %v460, %v463
      %v465 = vrot.slane %v464, 4
      %v467 = vshll.u32 %v179, 16
      %v469 = vrot.slane %v467, 5
      %v470 = vsel %vm414, %v465, %v469
      %v472 = vshrl.u32 %v180, 16
      %v474 = vrot.slane %v472, 4
      %v475 = vshll.u32 %v180, 16
      %v477 = vrot.slane %v475, 5
      %v478 = vor.u32 %v474, %v477
      %v479 = vrot.slane %v478, 4
      %v481 = vshll.u32 %v182, 16
      %v483 = vrot.slane %v481, 5
      %v484 = vsel %vm414, %v479, %v483
      %v486 = vshrl.u32 %v181, 16
      %v488 = vrot.slane %v486, 4
      %v489 = vshll.u32 %v181, 16
      %v491 = vrot.slane %v489, 5
      %v492 = vor.u32 %v488, %v491
      %v493 = vrot.slane %v492, 4
      %v495 = vshll.u32 %v183, 16
      %v497 = vrot.slane %v495, 5
      %v498 = vsel %vm414, %v493, %v497
      %v500 = vshrl.u32 %v184, 16
      %v502 = vrot.slane %v500, 4
      %v503 = vshll.u32 %v184, 16
      %v505 = vrot.slane %v503, 5
      %v506 = vor.u32 %v502, %v505
      %v507 = vrot.slane %v506, 4
      %v509 = vshll.u32 %v186, 16
      %v511 = vrot.slane %v509, 5
      %v512 = vsel %vm414, %v507, %v511
      %v514 = vshrl.u32 %v185, 16
      %v516 = vrot.slane %v514, 4
      %v517 = vshll.u32 %v185, 16
      %v519 = vrot.slane %v517, 5
      %v520 = vor.u32 %v516, %v519
      %v521 = vrot.slane %v520, 4
      %v523 = vshll.u32 %v187, 16
      %v525 = vrot.slane %v523, 5
      %v526 = vsel %vm414, %v521, %v525
      %v528 = vshrl.u32 %v188, 16
      %v530 = vrot.slane %v528, 4
      %v531 = vshll.u32 %v188, 16
      %v533 = vrot.slane %v531, 5
      %v534 = vor.u32 %v530, %v533
      %v535 = vrot.slane %v534, 4
      %v537 = vshll.u32 %v190, 16
      %v539 = vrot.slane %v537, 5
      %v540 = vsel %vm414, %v535, %v539
      %v542 = vshrl.u32 %v189, 16
      %v544 = vrot.slane %v542, 4
      %v545 = vshll.u32 %v189, 16
      %v547 = vrot.slane %v545, 5
      %v548 = vor.u32 %v544, %v547
      %v549 = vrot.slane %v548, 4
      %v551 = vshll.u32 %v191, 16
      %v553 = vrot.slane %v551, 5
      %v554 = vsel %vm414, %v549, %v553
      %v556 = vshrl.u32 %v192, 16
      %v558 = vrot.slane %v556, 4
      %v559 = vshll.u32 %v192, 16
      %v561 = vrot.slane %v559, 5
      %v562 = vor.u32 %v558, %v561
      %v563 = vrot.slane %v562, 4
      %v565 = vshll.u32 %v194, 16
      %v567 = vrot.slane %v565, 5
      %v568 = vsel %vm414, %v563, %v567
      %v570 = vshrl.u32 %v193, 16
      %v572 = vrot.slane %v570, 4
      %v573 = vshll.u32 %v193, 16
      %v575 = vrot.slane %v573, 5
      %v576 = vor.u32 %v572, %v575
      %v577 = vrot.slane %v576, 4
      %v579 = vshll.u32 %v195, 16
      %v581 = vrot.slane %v579, 5
      %v582 = vsel %vm414, %v577, %v581
      %v584 = vshrl.u32 %v196, 16
      %v586 = vrot.slane %v584, 4
      %v587 = vshll.u32 %v196, 16
      %v589 = vrot.slane %v587, 5
      %v590 = vor.u32 %v586, %v589
      %v591 = vrot.slane %v590, 4
      %v593 = vshll.u32 %v198, 16
      %v595 = vrot.slane %v593, 5
      %v596 = vsel %vm414, %v591, %v595
      %v598 = vshrl.u32 %v197, 16
      %v600 = vrot.slane %v598, 4
      %v601 = vshll.u32 %v197, 16
      %v603 = vrot.slane %v601, 5
      %v604 = vor.u32 %v600, %v603
      %v605 = vrot.slane %v604, 4
      %v607 = vshll.u32 %v199, 16
      %v609 = vrot.slane %v607, 5
      %v610 = vsel %vm414, %v605, %v609
      %v612 = vshrl.u32 %v200, 16
      %v614 = vrot.slane %v612, 4
      %v615 = vshll.u32 %v200, 16
      %v617 = vrot.slane %v615, 5
      %v618 = vor.u32 %v614, %v617
      %v619 = vrot.slane %v618, 4
      %v621 = vshll.u32 %v202, 16
      %v623 = vrot.slane %v621, 5
      %v624 = vsel %vm414, %v619, %v623
      %v626 = vshrl.u32 %v201, 16
      %v628 = vrot.slane %v626, 4
      %v629 = vshll.u32 %v201, 16
      %v631 = vrot.slane %v629, 5
      %v632 = vor.u32 %v628, %v631
      %v633 = vrot.slane %v632, 4
      %v635 = vshll.u32 %v203, 16
      %v637 = vrot.slane %v635, 5
      %v638 = vsel %vm414, %v633, %v637
      %v640 = vshrl.u32 %v204, 16
      %v642 = vrot.slane %v640, 4
      %v643 = vshll.u32 %v204, 16
      %v645 = vrot.slane %v643, 5
      %v646 = vor.u32 %v642, %v645
      %v647 = vrot.slane %v646, 4
      %v649 = vshll.u32 %v206, 16
      %v651 = vrot.slane %v649, 5
      %v652 = vsel %vm414, %v647, %v651
      %v654 = vshrl.u32 %v205, 16
      %v656 = vrot.slane %v654, 4
      %v657 = vshll.u32 %v205, 16
      %v659 = vrot.slane %v657, 5
      %v660 = vor.u32 %v656, %v659
      %v661 = vrot.slane %v660, 4
      %v663 = vshll.u32 %v207, 16
      %v665 = vrot.slane %v663, 5
      %v666 = vsel %vm414, %v661, %v665
      %v668 = vshrl.u32 %v208, 16
      %v670 = vrot.slane %v668, 4
      %v671 = vshll.u32 %v208, 16
      %v673 = vrot.slane %v671, 5
      %v674 = vor.u32 %v670, %v673
      %v675 = vrot.slane %v674, 4
      %v677 = vshll.u32 %v210, 16
      %v679 = vrot.slane %v677, 5
      %v680 = vsel %vm414, %v675, %v679
      %v682 = vshrl.u32 %v209, 16
      %v684 = vrot.slane %v682, 4
      %v685 = vshll.u32 %v209, 16
      %v687 = vrot.slane %v685, 5
      %v688 = vor.u32 %v684, %v687
      %v689 = vrot.slane %v688, 4
      %v691 = vshll.u32 %v211, 16
      %v693 = vrot.slane %v691, 5
      %v694 = vsel %vm414, %v689, %v693
      %v696 = vshrl.u32 %v212, 16
      %v698 = vrot.slane %v696, 4
      %v699 = vshll.u32 %v212, 16
      %v701 = vrot.slane %v699, 5
      %v702 = vor.u32 %v698, %v701
      %v703 = vrot.slane %v702, 4
      %v705 = vshll.u32 %v214, 16
      %v707 = vrot.slane %v705, 5
      %v708 = vsel %vm414, %v703, %v707
      %v710 = vshrl.u32 %v213, 16
      %v712 = vrot.slane %v710, 4
      %v713 = vshll.u32 %v213, 16
      %v715 = vrot.slane %v713, 5
      %v716 = vor.u32 %v712, %v715
      %v717 = vrot.slane %v716, 4
      %v719 = vshll.u32 %v215, 16
      %v721 = vrot.slane %v719, 5
      %v722 = vsel %vm414, %v717, %v721
      %v724 = vshrl.u32 %v216, 16
      %v726 = vrot.slane %v724, 4
      %v727 = vshll.u32 %v216, 16
      %v729 = vrot.slane %v727, 5
      %v730 = vor.u32 %v726, %v729
      %v731 = vrot.slane %v730, 4
      %v733 = vshll.u32 %v218, 16
      %v735 = vrot.slane %v733, 5
      %v736 = vsel %vm414, %v731, %v735
      %v738 = vshrl.u32 %v217, 16
      %v740 = vrot.slane %v738, 4
      %v741 = vshll.u32 %v217, 16
      %v743 = vrot.slane %v741, 5
      %v744 = vor.u32 %v740, %v743
      %v745 = vrot.slane %v744, 4
      %v747 = vshll.u32 %v219, 16
      %v749 = vrot.slane %v747, 5
      %v750 = vsel %vm414, %v745, %v749
      %v752 = vshrl.u32 %v220, 16
      %v754 = vrot.slane %v752, 4
      %v755 = vshll.u32 %v220, 16
      %v757 = vrot.slane %v755, 5
      %v758 = vor.u32 %v754, %v757
      %v759 = vrot.slane %v758, 4
      %v761 = vshll.u32 %v222, 16
      %v763 = vrot.slane %v761, 5
      %v764 = vsel %vm414, %v759, %v763
      %v766 = vshrl.u32 %v221, 16
      %v768 = vrot.slane %v766, 4
      %v769 = vshll.u32 %v221, 16
      %v771 = vrot.slane %v769, 5
      %v772 = vor.u32 %v768, %v771
      %v773 = vrot.slane %v772, 4
      %v775 = vshll.u32 %v223, 16
      %v777 = vrot.slane %v775, 5
      %v778 = vsel %vm414, %v773, %v777
      %v780 = vshrl.u32 %v224, 16
      %v782 = vrot.slane %v780, 4
      %v783 = vshll.u32 %v224, 16
      %v785 = vrot.slane %v783, 5
      %v786 = vor.u32 %v782, %v785
      %v787 = vrot.slane %v786, 4
      %v789 = vshll.u32 %v226, 16
      %v791 = vrot.slane %v789, 5
      %v792 = vsel %vm414, %v787, %v791
      %v794 = vshrl.u32 %v225, 16
      %v796 = vrot.slane %v794, 4
      %v797 = vshll.u32 %v225, 16
      %v799 = vrot.slane %v797, 5
      %v800 = vor.u32 %v796, %v799
      %v801 = vrot.slane %v800, 4
      %v803 = vshll.u32 %v227, 16
      %v805 = vrot.slane %v803, 5
      %v806 = vsel %vm414, %v801, %v805
      %v808 = vshrl.u32 %v228, 16
      %v810 = vrot.slane %v808, 4
      %v811 = vshll.u32 %v228, 16
      %v813 = vrot.slane %v811, 5
      %v814 = vor.u32 %v810, %v813
      %v815 = vrot.slane %v814, 4
      %v817 = vshll.u32 %v230, 16
      %v819 = vrot.slane %v817, 5
      %v820 = vsel %vm414, %v815, %v819
      %v822 = vshrl.u32 %v229, 16
      %v824 = vrot.slane %v822, 4
      %v825 = vshll.u32 %v229, 16
      %v827 = vrot.slane %v825, 5
      %v828 = vor.u32 %v824, %v827
      %v829 = vrot.slane %v828, 4
      %v831 = vshll.u32 %v231, 16
      %v833 = vrot.slane %v831, 5
      %v834 = vsel %vm414, %v829, %v833
      %v836 = vshrl.u32 %v232, 16
      %v838 = vrot.slane %v836, 4
      %v839 = vshll.u32 %v232, 16
      %v841 = vrot.slane %v839, 5
      %v842 = vor.u32 %v838, %v841
      %v843 = vrot.slane %v842, 4
      %v845 = vshll.u32 %v234, 16
      %v847 = vrot.slane %v845, 5
      %v848 = vsel %vm414, %v843, %v847
      %v850 = vshrl.u32 %v233, 16
      %v852 = vrot.slane %v850, 4
      %v853 = vshll.u32 %v233, 16
      %v855 = vrot.slane %v853, 5
      %v856 = vor.u32 %v852, %v855
      %v857 = vrot.slane %v856, 4
      %v859 = vshll.u32 %v235, 16
      %v861 = vrot.slane %v859, 5
      %v862 = vsel %vm414, %v857, %v861
      %v864 = vshrl.u32 %v236, 16
      %v866 = vrot.slane %v864, 4
      %v867 = vshll.u32 %v236, 16
      %v869 = vrot.slane %v867, 5
      %v870 = vor.u32 %v866, %v869
      %v871 = vrot.slane %v870, 4
      %v873 = vshll.u32 %v238, 16
      %v875 = vrot.slane %v873, 5
      %v876 = vsel %vm414, %v871, %v875
      %v878 = vshrl.u32 %v237, 16
      %v880 = vrot.slane %v878, 4
      %v881 = vshll.u32 %v237, 16
      %v883 = vrot.slane %v881, 5
      %v884 = vor.u32 %v880, %v883
      %v885 = vrot.slane %v884, 4
      %v887 = vshll.u32 %v239, 16
      %v889 = vrot.slane %v887, 5
      %v890 = vsel %vm414, %v885, %v889
      %v892 = vshrl.u32 %v240, 16
      %v894 = vrot.slane %v892, 4
      %v895 = vshll.u32 %v240, 16
      %v897 = vrot.slane %v895, 5
      %v898 = vor.u32 %v894, %v897
      %v899 = vrot.slane %v898, 4
      %v901 = vshll.u32 %v242, 16
      %v903 = vrot.slane %v901, 5
      %v904 = vsel %vm414, %v899, %v903
      %v906 = vshrl.u32 %v241, 16
      %v908 = vrot.slane %v906, 4
      %v909 = vshll.u32 %v241, 16
      %v911 = vrot.slane %v909, 5
      %v912 = vor.u32 %v908, %v911
      %v913 = vrot.slane %v912, 4
      %v915 = vshll.u32 %v243, 16
      %v917 = vrot.slane %v915, 5
      %v918 = vsel %vm414, %v913, %v917
      %v920 = vshrl.u32 %v244, 16
      %v922 = vrot.slane %v920, 4
      %v923 = vshll.u32 %v244, 16
      %v925 = vrot.slane %v923, 5
      %v926 = vor.u32 %v922, %v925
      %v927 = vrot.slane %v926, 4
      %v929 = vshll.u32 %v246, 16
      %v931 = vrot.slane %v929, 5
      %v932 = vsel %vm414, %v927, %v931
      %v934 = vshrl.u32 %v245, 16
      %v936 = vrot.slane %v934, 4
      %v937 = vshll.u32 %v245, 16
      %v939 = vrot.slane %v937, 5
      %v940 = vor.u32 %v936, %v939
      %v941 = vrot.slane %v940, 4
      %v943 = vshll.u32 %v247, 16
      %v945 = vrot.slane %v943, 5
      %v946 = vsel %vm414, %v941, %v945
      %v948 = vshrl.u32 %v248, 16
      %v950 = vrot.slane %v948, 4
      %v951 = vshll.u32 %v248, 16
      %v953 = vrot.slane %v951, 5
      %v954 = vor.u32 %v950, %v953
      %v955 = vrot.slane %v954, 4
      %v957 = vshll.u32 %v250, 16
      %v959 = vrot.slane %v957, 5
      %v960 = vsel %vm414, %v955, %v959
      %v962 = vshrl.u32 %v249, 16
      %v964 = vrot.slane %v962, 4
      %v965 = vshll.u32 %v249, 16
      %v967 = vrot.slane %v965, 5
      %v968 = vor.u32 %v964, %v967
      %v969 = vrot.slane %v968, 4
      %v971 = vshll.u32 %v251, 16
      %v973 = vrot.slane %v971, 5
      %v974 = vsel %vm414, %v969, %v973
      %v976 = vshrl.u32 %v252, 16
      %v978 = vrot.slane %v976, 4
      %v979 = vshll.u32 %v252, 16
      %v981 = vrot.slane %v979, 5
      %v982 = vor.u32 %v978, %v981
      %v983 = vrot.slane %v982, 4
      %v985 = vshll.u32 %v254, 16
      %v987 = vrot.slane %v985, 5
      %v988 = vsel %vm414, %v983, %v987
      %v990 = vshrl.u32 %v253, 16
      %v992 = vrot.slane %v990, 4
      %v993 = vshll.u32 %v253, 16
      %v995 = vrot.slane %v993, 5
      %v996 = vor.u32 %v992, %v995
      %v997 = vrot.slane %v996, 4
      %v999 = vshll.u32 %v255, 16
      %v1001 = vrot.slane %v999, 5
      %v1002 = vsel %vm414, %v997, %v1001
      %v1004 = vshrl.u32 %v256, 16
      %v1006 = vrot.slane %v1004, 4
      %v1007 = vshll.u32 %v256, 16
      %v1009 = vrot.slane %v1007, 5
      %v1010 = vor.u32 %v1006, %v1009
      %v1011 = vrot.slane %v1010, 4
      %v1013 = vshll.u32 %v258, 16
      %v1015 = vrot.slane %v1013, 5
      %v1016 = vsel %vm414, %v1011, %v1015
      %v1018 = vshrl.u32 %v257, 16
      %v1020 = vrot.slane %v1018, 4
      %v1021 = vshll.u32 %v257, 16
      %v1023 = vrot.slane %v1021, 5
      %v1024 = vor.u32 %v1020, %v1023
      %v1025 = vrot.slane %v1024, 4
      %v1027 = vshll.u32 %v259, 16
      %v1029 = vrot.slane %v1027, 5
      %v1030 = vsel %vm414, %v1025, %v1029
      %v1032 = vshrl.u32 %v260, 16
      %v1034 = vrot.slane %v1032, 4
      %v1035 = vshll.u32 %v260, 16
      %v1037 = vrot.slane %v1035, 5
      %v1038 = vor.u32 %v1034, %v1037
      %v1039 = vrot.slane %v1038, 4
      %v1041 = vshll.u32 %v262, 16
      %v1043 = vrot.slane %v1041, 5
      %v1044 = vsel %vm414, %v1039, %v1043
      %v1046 = vshrl.u32 %v261, 16
      %v1048 = vrot.slane %v1046, 4
      %v1049 = vshll.u32 %v261, 16
      %v1051 = vrot.slane %v1049, 5
      %v1052 = vor.u32 %v1048, %v1051
      %v1053 = vrot.slane %v1052, 4
      %v1055 = vshll.u32 %v263, 16
      %v1057 = vrot.slane %v1055, 5
      %v1058 = vsel %vm414, %v1053, %v1057
      %v1060 = vshrl.u32 %v264, 16
      %v1062 = vrot.slane %v1060, 4
      %v1063 = vshll.u32 %v264, 16
      %v1065 = vrot.slane %v1063, 5
      %v1066 = vor.u32 %v1062, %v1065
      %v1067 = vrot.slane %v1066, 4
      %v1069 = vshll.u32 %v266, 16
      %v1071 = vrot.slane %v1069, 5
      %v1072 = vsel %vm414, %v1067, %v1071
      %v1074 = vshrl.u32 %v265, 16
      %v1076 = vrot.slane %v1074, 4
      %v1077 = vshll.u32 %v265, 16
      %v1079 = vrot.slane %v1077, 5
      %v1080 = vor.u32 %v1076, %v1079
      %v1081 = vrot.slane %v1080, 4
      %v1083 = vshll.u32 %v267, 16
      %v1085 = vrot.slane %v1083, 5
      %v1086 = vsel %vm414, %v1081, %v1085
      %v1088 = vshrl.u32 %v268, 16
      %v1090 = vrot.slane %v1088, 4
      %v1091 = vshll.u32 %v268, 16
      %v1093 = vrot.slane %v1091, 5
      %v1094 = vor.u32 %v1090, %v1093
      %v1095 = vrot.slane %v1094, 4
      %v1097 = vshll.u32 %v270, 16
      %v1099 = vrot.slane %v1097, 5
      %v1100 = vsel %vm414, %v1095, %v1099
      %v1102 = vshrl.u32 %v269, 16
      %v1104 = vrot.slane %v1102, 4
      %v1105 = vshll.u32 %v269, 16
      %v1107 = vrot.slane %v1105, 5
      %v1108 = vor.u32 %v1104, %v1107
      %v1109 = vrot.slane %v1108, 4
      %v1111 = vshll.u32 %v271, 16
      %v1113 = vrot.slane %v1111, 5
      %v1114 = vsel %vm414, %v1109, %v1113
      %v1116 = vshrl.u32 %v272, 16
      %v1118 = vrot.slane %v1116, 4
      %v1119 = vshll.u32 %v272, 16
      %v1121 = vrot.slane %v1119, 5
      %v1122 = vor.u32 %v1118, %v1121
      %v1123 = vrot.slane %v1122, 4
      %v1125 = vshll.u32 %v274, 16
      %v1127 = vrot.slane %v1125, 5
      %v1128 = vsel %vm414, %v1123, %v1127
      %v1130 = vshrl.u32 %v273, 16
      %v1132 = vrot.slane %v1130, 4
      %v1133 = vshll.u32 %v273, 16
      %v1135 = vrot.slane %v1133, 5
      %v1136 = vor.u32 %v1132, %v1135
      %v1137 = vrot.slane %v1136, 4
      %v1139 = vshll.u32 %v275, 16
      %v1141 = vrot.slane %v1139, 5
      %v1142 = vsel %vm414, %v1137, %v1141
      %v1144 = vshrl.u32 %v276, 16
      %v1146 = vrot.slane %v1144, 4
      %v1147 = vshll.u32 %v276, 16
      %v1149 = vrot.slane %v1147, 5
      %v1150 = vor.u32 %v1146, %v1149
      %v1151 = vrot.slane %v1150, 4
      %v1153 = vshll.u32 %v278, 16
      %v1155 = vrot.slane %v1153, 5
      %v1156 = vsel %vm414, %v1151, %v1155
      %v1158 = vshrl.u32 %v277, 16
      %v1160 = vrot.slane %v1158, 4
      %v1161 = vshll.u32 %v277, 16
      %v1163 = vrot.slane %v1161, 5
      %v1164 = vor.u32 %v1160, %v1163
      %v1165 = vrot.slane %v1164, 4
      %v1167 = vshll.u32 %v279, 16
      %v1169 = vrot.slane %v1167, 5
      %v1170 = vsel %vm414, %v1165, %v1169
      %v1172 = vshrl.u32 %v280, 16
      %v1174 = vrot.slane %v1172, 4
      %v1175 = vshll.u32 %v280, 16
      %v1177 = vrot.slane %v1175, 5
      %v1178 = vor.u32 %v1174, %v1177
      %v1179 = vrot.slane %v1178, 4
      %v1181 = vshll.u32 %v282, 16
      %v1183 = vrot.slane %v1181, 5
      %v1184 = vsel %vm414, %v1179, %v1183
      %v1186 = vshrl.u32 %v281, 16
      %v1188 = vrot.slane %v1186, 4
      %v1189 = vshll.u32 %v281, 16
      %v1191 = vrot.slane %v1189, 5
      %v1192 = vor.u32 %v1188, %v1191
      %v1193 = vrot.slane %v1192, 4
      %v1195 = vshll.u32 %v283, 16
      %v1197 = vrot.slane %v1195, 5
      %v1198 = vsel %vm414, %v1193, %v1197
      %v1200 = vshrl.u32 %v284, 16
      %v1202 = vrot.slane %v1200, 4
      %v1203 = vshll.u32 %v284, 16
      %v1205 = vrot.slane %v1203, 5
      %v1206 = vor.u32 %v1202, %v1205
      %v1207 = vrot.slane %v1206, 4
      %v1209 = vshll.u32 %v286, 16
      %v1211 = vrot.slane %v1209, 5
      %v1212 = vsel %vm414, %v1207, %v1211
      %v1214 = vshrl.u32 %v285, 16
      %v1216 = vrot.slane %v1214, 4
      %v1217 = vshll.u32 %v285, 16
      %v1219 = vrot.slane %v1217, 5
      %v1220 = vor.u32 %v1216, %v1219
      %v1221 = vrot.slane %v1220, 4
      %v1223 = vshll.u32 %v287, 16
      %v1225 = vrot.slane %v1223, 5
      %v1226 = vsel %vm414, %v1221, %v1225
      %v1228 = vshrl.u32 %v288, 16
      %v1230 = vrot.slane %v1228, 4
      %v1231 = vshll.u32 %v288, 16
      %v1233 = vrot.slane %v1231, 5
      %v1234 = vor.u32 %v1230, %v1233
      %v1235 = vrot.slane %v1234, 4
      %v1237 = vshll.u32 %v290, 16
      %v1239 = vrot.slane %v1237, 5
      %v1240 = vsel %vm414, %v1235, %v1239
      %v1242 = vshrl.u32 %v289, 16
      %v1244 = vrot.slane %v1242, 4
      %v1245 = vshll.u32 %v289, 16
      %v1247 = vrot.slane %v1245, 5
      %v1248 = vor.u32 %v1244, %v1247
      %v1249 = vrot.slane %v1248, 4
      %v1251 = vshll.u32 %v291, 16
      %v1253 = vrot.slane %v1251, 5
      %v1254 = vsel %vm414, %v1249, %v1253
      %v1256 = vshrl.u32 %v292, 16
      %v1258 = vrot.slane %v1256, 4
      %v1259 = vshll.u32 %v292, 16
      %v1261 = vrot.slane %v1259, 5
      %v1262 = vor.u32 %v1258, %v1261
      %v1263 = vrot.slane %v1262, 4
      %v1265 = vshll.u32 %v294, 16
      %v1267 = vrot.slane %v1265, 5
      %v1268 = vsel %vm414, %v1263, %v1267
      %v1270 = vshrl.u32 %v293, 16
      %v1272 = vrot.slane %v1270, 4
      %v1273 = vshll.u32 %v293, 16
      %v1275 = vrot.slane %v1273, 5
      %v1276 = vor.u32 %v1272, %v1275
      %v1277 = vrot.slane %v1276, 4
      %v1279 = vshll.u32 %v295, 16
      %v1281 = vrot.slane %v1279, 5
      %v1282 = vsel %vm414, %v1277, %v1281
      %v1284 = vshrl.u32 %v296, 16
      %v1286 = vrot.slane %v1284, 4
      %v1287 = vshll.u32 %v296, 16
      %v1289 = vrot.slane %v1287, 5
      %v1290 = vor.u32 %v1286, %v1289
      %v1291 = vrot.slane %v1290, 4
      %v1293 = vshll.u32 %v298, 16
      %v1295 = vrot.slane %v1293, 5
      %v1296 = vsel %vm414, %v1291, %v1295
      %v1298 = vshrl.u32 %v297, 16
      %v1300 = vrot.slane %v1298, 4
      %v1301 = vshll.u32 %v297, 16
      %v1303 = vrot.slane %v1301, 5
      %v1304 = vor.u32 %v1300, %v1303
      %v1305 = vrot.slane %v1304, 4
      %v1307 = vshll.u32 %v299, 16
      %v1309 = vrot.slane %v1307, 5
      %v1310 = vsel %vm414, %v1305, %v1309
      %v1312 = vshrl.u32 %v300, 16
      %v1314 = vrot.slane %v1312, 4
      %v1315 = vshll.u32 %v300, 16
      %v1317 = vrot.slane %v1315, 5
      %v1318 = vor.u32 %v1314, %v1317
      %v1319 = vrot.slane %v1318, 4
      %v1321 = vshll.u32 %v302, 16
      %v1323 = vrot.slane %v1321, 5
      %v1324 = vsel %vm414, %v1319, %v1323
      %v1326 = vshrl.u32 %v301, 16
      %v1328 = vrot.slane %v1326, 4
      %v1329 = vshll.u32 %v301, 16
      %v1331 = vrot.slane %v1329, 5
      %v1332 = vor.u32 %v1328, %v1331
      %v1333 = vrot.slane %v1332, 4
      %v1335 = vshll.u32 %v303, 16
      %v1337 = vrot.slane %v1335, 5
      %v1338 = vsel %vm414, %v1333, %v1337
      %v1340 = vshrl.u32 %v304, 16
      %v1342 = vrot.slane %v1340, 4
      %v1343 = vshll.u32 %v304, 16
      %v1345 = vrot.slane %v1343, 5
      %v1346 = vor.u32 %v1342, %v1345
      %v1347 = vrot.slane %v1346, 4
      %v1349 = vshll.u32 %v306, 16
      %v1351 = vrot.slane %v1349, 5
      %v1352 = vsel %vm414, %v1347, %v1351
      %v1354 = vshrl.u32 %v305, 16
      %v1356 = vrot.slane %v1354, 4
      %v1357 = vshll.u32 %v305, 16
      %v1359 = vrot.slane %v1357, 5
      %v1360 = vor.u32 %v1356, %v1359
      %v1361 = vrot.slane %v1360, 4
      %v1363 = vshll.u32 %v307, 16
      %v1365 = vrot.slane %v1363, 5
      %v1366 = vsel %vm414, %v1361, %v1365
      %v1368 = vshrl.u32 %v308, 16
      %v1370 = vrot.slane %v1368, 4
      %v1371 = vshll.u32 %v308, 16
      %v1373 = vrot.slane %v1371, 5
      %v1374 = vor.u32 %v1370, %v1373
      %v1375 = vrot.slane %v1374, 4
      %v1377 = vshll.u32 %v310, 16
      %v1379 = vrot.slane %v1377, 5
      %v1380 = vsel %vm414, %v1375, %v1379
      %v1382 = vshrl.u32 %v309, 16
      %v1384 = vrot.slane %v1382, 4
      %v1385 = vshll.u32 %v309, 16
      %v1387 = vrot.slane %v1385, 5
      %v1388 = vor.u32 %v1384, %v1387
      %v1389 = vrot.slane %v1388, 4
      %v1391 = vshll.u32 %v311, 16
      %v1393 = vrot.slane %v1391, 5
      %v1394 = vsel %vm414, %v1389, %v1393
      %v1396 = vshrl.u32 %v312, 16
      %v1398 = vrot.slane %v1396, 4
      %v1399 = vshll.u32 %v312, 16
      %v1401 = vrot.slane %v1399, 5
      %v1402 = vor.u32 %v1398, %v1401
      %v1403 = vrot.slane %v1402, 4
      %v1405 = vshll.u32 %v314, 16
      %v1407 = vrot.slane %v1405, 5
      %v1408 = vsel %vm414, %v1403, %v1407
      %v1410 = vshrl.u32 %v313, 16
      %v1412 = vrot.slane %v1410, 4
      %v1413 = vshll.u32 %v313, 16
      %v1415 = vrot.slane %v1413, 5
      %v1416 = vor.u32 %v1412, %v1415
      %v1417 = vrot.slane %v1416, 4
      %v1419 = vshll.u32 %v315, 16
      %v1421 = vrot.slane %v1419, 5
      %v1422 = vsel %vm414, %v1417, %v1421
      %v1424 = vshrl.u32 %v316, 16
      %v1426 = vrot.slane %v1424, 4
      %v1427 = vshll.u32 %v316, 16
      %v1429 = vrot.slane %v1427, 5
      %v1430 = vor.u32 %v1426, %v1429
      %v1431 = vrot.slane %v1430, 4
      %v1433 = vshll.u32 %v318, 16
      %v1435 = vrot.slane %v1433, 5
      %v1436 = vsel %vm414, %v1431, %v1435
      %v1438 = vshrl.u32 %v317, 16
      %v1440 = vrot.slane %v1438, 4
      %v1441 = vshll.u32 %v317, 16
      %v1443 = vrot.slane %v1441, 5
      %v1444 = vor.u32 %v1440, %v1443
      %v1445 = vrot.slane %v1444, 4
      %v1447 = vshll.u32 %v319, 16
      %v1449 = vrot.slane %v1447, 5
      %v1450 = vsel %vm414, %v1445, %v1449
      %v1452 = vshrl.u32 %v320, 16
      %v1454 = vrot.slane %v1452, 4
      %v1455 = vshll.u32 %v320, 16
      %v1457 = vrot.slane %v1455, 5
      %v1458 = vor.u32 %v1454, %v1457
      %v1459 = vrot.slane %v1458, 4
      %v1461 = vshll.u32 %v322, 16
      %v1463 = vrot.slane %v1461, 5
      %v1464 = vsel %vm414, %v1459, %v1463
      %v1466 = vshrl.u32 %v321, 16
      %v1468 = vrot.slane %v1466, 4
      %v1469 = vshll.u32 %v321, 16
      %v1471 = vrot.slane %v1469, 5
      %v1472 = vor.u32 %v1468, %v1471
      %v1473 = vrot.slane %v1472, 4
      %v1475 = vshll.u32 %v323, 16
      %v1477 = vrot.slane %v1475, 5
      %v1478 = vsel %vm414, %v1473, %v1477
      %v1480 = vshrl.u32 %v324, 16
      %v1482 = vrot.slane %v1480, 4
      %v1483 = vshll.u32 %v324, 16
      %v1485 = vrot.slane %v1483, 5
      %v1486 = vor.u32 %v1482, %v1485
      %v1487 = vrot.slane %v1486, 4
      %v1489 = vshll.u32 %v326, 16
      %v1491 = vrot.slane %v1489, 5
      %v1492 = vsel %vm414, %v1487, %v1491
      %v1494 = vshrl.u32 %v325, 16
      %v1496 = vrot.slane %v1494, 4
      %v1497 = vshll.u32 %v325, 16
      %v1499 = vrot.slane %v1497, 5
      %v1500 = vor.u32 %v1496, %v1499
      %v1501 = vrot.slane %v1500, 4
      %v1503 = vshll.u32 %v327, 16
      %v1505 = vrot.slane %v1503, 5
      %v1506 = vsel %vm414, %v1501, %v1505
      %v1508 = vshrl.u32 %v328, 16
      %v1510 = vrot.slane %v1508, 4
      %v1511 = vshll.u32 %v328, 16
      %v1513 = vrot.slane %v1511, 5
      %v1514 = vor.u32 %v1510, %v1513
      %v1515 = vrot.slane %v1514, 4
      %v1517 = vshll.u32 %v330, 16
      %v1519 = vrot.slane %v1517, 5
      %v1520 = vsel %vm414, %v1515, %v1519
      %v1522 = vshrl.u32 %v329, 16
      %v1524 = vrot.slane %v1522, 4
      %v1525 = vshll.u32 %v329, 16
      %v1527 = vrot.slane %v1525, 5
      %v1528 = vor.u32 %v1524, %v1527
      %v1529 = vrot.slane %v1528, 4
      %v1531 = vshll.u32 %v331, 16
      %v1533 = vrot.slane %v1531, 5
      %v1534 = vsel %vm414, %v1529, %v1533
      %v1536 = vshrl.u32 %v332, 16
      %v1538 = vrot.slane %v1536, 4
      %v1539 = vshll.u32 %v332, 16
      %v1541 = vrot.slane %v1539, 5
      %v1542 = vor.u32 %v1538, %v1541
      %v1543 = vrot.slane %v1542, 4
      %v1545 = vshll.u32 %v334, 16
      %v1547 = vrot.slane %v1545, 5
      %v1548 = vsel %vm414, %v1543, %v1547
      %v1550 = vshrl.u32 %v333, 16
      %v1552 = vrot.slane %v1550, 4
      %v1553 = vshll.u32 %v333, 16
      %v1555 = vrot.slane %v1553, 5
      %v1556 = vor.u32 %v1552, %v1555
      %v1557 = vrot.slane %v1556, 4
      %v1559 = vshll.u32 %v335, 16
      %v1561 = vrot.slane %v1559, 5
      %v1562 = vsel %vm414, %v1557, %v1561
      %v1564 = vshrl.u32 %v336, 16
      %v1566 = vrot.slane %v1564, 4
      %v1567 = vshll.u32 %v336, 16
      %v1569 = vrot.slane %v1567, 5
      %v1570 = vor.u32 %v1566, %v1569
      %v1571 = vrot.slane %v1570, 4
      %v1573 = vshll.u32 %v338, 16
      %v1575 = vrot.slane %v1573, 5
      %v1576 = vsel %vm414, %v1571, %v1575
      %v1578 = vshrl.u32 %v337, 16
      %v1580 = vrot.slane %v1578, 4
      %v1581 = vshll.u32 %v337, 16
      %v1583 = vrot.slane %v1581, 5
      %v1584 = vor.u32 %v1580, %v1583
      %v1585 = vrot.slane %v1584, 4
      %v1587 = vshll.u32 %v339, 16
      %v1589 = vrot.slane %v1587, 5
      %v1590 = vsel %vm414, %v1585, %v1589
      %v1592 = vshrl.u32 %v340, 16
      %v1594 = vrot.slane %v1592, 4
      %v1595 = vshll.u32 %v340, 16
      %v1597 = vrot.slane %v1595, 5
      %v1598 = vor.u32 %v1594, %v1597
      %v1599 = vrot.slane %v1598, 4
      %v1601 = vshll.u32 %v342, 16
      %v1603 = vrot.slane %v1601, 5
      %v1604 = vsel %vm414, %v1599, %v1603
      %v1606 = vshrl.u32 %v341, 16
      %v1608 = vrot.slane %v1606, 4
      %v1609 = vshll.u32 %v341, 16
      %v1611 = vrot.slane %v1609, 5
      %v1612 = vor.u32 %v1608, %v1611
      %v1613 = vrot.slane %v1612, 4
      %v1615 = vshll.u32 %v343, 16
      %v1617 = vrot.slane %v1615, 5
      %v1618 = vsel %vm414, %v1613, %v1617
      %v1620 = vshrl.u32 %v344, 16
      %v1622 = vrot.slane %v1620, 4
      %v1623 = vshll.u32 %v344, 16
      %v1625 = vrot.slane %v1623, 5
      %v1626 = vor.u32 %v1622, %v1625
      %v1627 = vrot.slane %v1626, 4
      %v1629 = vshll.u32 %v346, 16
      %v1631 = vrot.slane %v1629, 5
      %v1632 = vsel %vm414, %v1627, %v1631
      %v1634 = vshrl.u32 %v345, 16
      %v1636 = vrot.slane %v1634, 4
      %v1637 = vshll.u32 %v345, 16
      %v1639 = vrot.slane %v1637, 5
      %v1640 = vor.u32 %v1636, %v1639
      %v1641 = vrot.slane %v1640, 4
      %v1643 = vshll.u32 %v347, 16
      %v1645 = vrot.slane %v1643, 5
      %v1646 = vsel %vm414, %v1641, %v1645
      %v1648 = vshrl.u32 %v348, 16
      %v1650 = vrot.slane %v1648, 4
      %v1651 = vshll.u32 %v348, 16
      %v1653 = vrot.slane %v1651, 5
      %v1654 = vor.u32 %v1650, %v1653
      %v1655 = vrot.slane %v1654, 4
      %v1657 = vshll.u32 %v350, 16
      %v1659 = vrot.slane %v1657, 5
      %v1660 = vsel %vm414, %v1655, %v1659
      %v1662 = vshrl.u32 %v349, 16
      %v1664 = vrot.slane %v1662, 4
      %v1665 = vshll.u32 %v349, 16
      %v1667 = vrot.slane %v1665, 5
      %v1668 = vor.u32 %v1664, %v1667
      %v1669 = vrot.slane %v1668, 4
      %v1671 = vshll.u32 %v351, 16
      %v1673 = vrot.slane %v1671, 5
      %v1674 = vsel %vm414, %v1669, %v1673
      %v1676 = vshrl.u32 %v352, 16
      %v1678 = vrot.slane %v1676, 4
      %v1679 = vshll.u32 %v352, 16
      %v1681 = vrot.slane %v1679, 5
      %v1682 = vor.u32 %v1678, %v1681
      %v1683 = vrot.slane %v1682, 4
      %v1685 = vshll.u32 %v354, 16
      %v1687 = vrot.slane %v1685, 5
      %v1688 = vsel %vm414, %v1683, %v1687
      %v1690 = vshrl.u32 %v353, 16
      %v1692 = vrot.slane %v1690, 4
      %v1693 = vshll.u32 %v353, 16
      %v1695 = vrot.slane %v1693, 5
      %v1696 = vor.u32 %v1692, %v1695
      %v1697 = vrot.slane %v1696, 4
      %v1699 = vshll.u32 %v355, 16
      %v1701 = vrot.slane %v1699, 5
      %v1702 = vsel %vm414, %v1697, %v1701
      %v1704 = vshrl.u32 %v356, 16
      %v1706 = vrot.slane %v1704, 4
      %v1707 = vshll.u32 %v356, 16
      %v1709 = vrot.slane %v1707, 5
      %v1710 = vor.u32 %v1706, %v1709
      %v1711 = vrot.slane %v1710, 4
      %v1713 = vshll.u32 %v358, 16
      %v1715 = vrot.slane %v1713, 5
      %v1716 = vsel %vm414, %v1711, %v1715
      %v1718 = vshrl.u32 %v357, 16
      %v1720 = vrot.slane %v1718, 4
      %v1721 = vshll.u32 %v357, 16
      %v1723 = vrot.slane %v1721, 5
      %v1724 = vor.u32 %v1720, %v1723
      %v1725 = vrot.slane %v1724, 4
      %v1727 = vshll.u32 %v359, 16
      %v1729 = vrot.slane %v1727, 5
      %v1730 = vsel %vm414, %v1725, %v1729
      %v1732 = vshrl.u32 %v360, 16
      %v1734 = vrot.slane %v1732, 4
      %v1735 = vshll.u32 %v360, 16
      %v1737 = vrot.slane %v1735, 5
      %v1738 = vor.u32 %v1734, %v1737
      %v1739 = vrot.slane %v1738, 4
      %v1741 = vshll.u32 %v362, 16
      %v1743 = vrot.slane %v1741, 5
      %v1744 = vsel %vm414, %v1739, %v1743
      %v1746 = vshrl.u32 %v361, 16
      %v1748 = vrot.slane %v1746, 4
      %v1749 = vshll.u32 %v361, 16
      %v1751 = vrot.slane %v1749, 5
      %v1752 = vor.u32 %v1748, %v1751
      %v1753 = vrot.slane %v1752, 4
      %v1755 = vshll.u32 %v363, 16
      %v1757 = vrot.slane %v1755, 5
      %v1758 = vsel %vm414, %v1753, %v1757
      %v1760 = vshrl.u32 %v364, 16
      %v1762 = vrot.slane %v1760, 4
      %v1763 = vshll.u32 %v364, 16
      %v1765 = vrot.slane %v1763, 5
      %v1766 = vor.u32 %v1762, %v1765
      %v1767 = vrot.slane %v1766, 4
      %v1769 = vshll.u32 %v366, 16
      %v1771 = vrot.slane %v1769, 5
      %v1772 = vsel %vm414, %v1767, %v1771
      %v1774 = vshrl.u32 %v365, 16
      %v1776 = vrot.slane %v1774, 4
      %v1777 = vshll.u32 %v365, 16
      %v1779 = vrot.slane %v1777, 5
      %v1780 = vor.u32 %v1776, %v1779
      %v1781 = vrot.slane %v1780, 4
      %v1783 = vshll.u32 %v367, 16
      %v1785 = vrot.slane %v1783, 5
      %v1786 = vsel %vm414, %v1781, %v1785
      %v1788 = vshrl.u32 %v368, 16
      %v1790 = vrot.slane %v1788, 4
      %v1791 = vshll.u32 %v368, 16
      %v1793 = vrot.slane %v1791, 5
      %v1794 = vor.u32 %v1790, %v1793
      %v1795 = vrot.slane %v1794, 4
      %v1797 = vshll.u32 %v370, 16
      %v1799 = vrot.slane %v1797, 5
      %v1800 = vsel %vm414, %v1795, %v1799
      %v1802 = vshrl.u32 %v369, 16
      %v1804 = vrot.slane %v1802, 4
      %v1805 = vshll.u32 %v369, 16
      %v1807 = vrot.slane %v1805, 5
      %v1808 = vor.u32 %v1804, %v1807
      %v1809 = vrot.slane %v1808, 4
      %v1811 = vshll.u32 %v371, 16
      %v1813 = vrot.slane %v1811, 5
      %v1814 = vsel %vm414, %v1809, %v1813
      %v1816 = vshrl.u32 %v372, 16
      %v1818 = vrot.slane %v1816, 4
      %v1819 = vshll.u32 %v372, 16
      %v1821 = vrot.slane %v1819, 5
      %v1822 = vor.u32 %v1818, %v1821
      %v1823 = vrot.slane %v1822, 4
      %v1825 = vshll.u32 %v374, 16
      %v1827 = vrot.slane %v1825, 5
      %v1828 = vsel %vm414, %v1823, %v1827
      %v1830 = vshrl.u32 %v373, 16
      %v1832 = vrot.slane %v1830, 4
      %v1833 = vshll.u32 %v373, 16
      %v1835 = vrot.slane %v1833, 5
      %v1836 = vor.u32 %v1832, %v1835
      %v1837 = vrot.slane %v1836, 4
      %v1839 = vshll.u32 %v375, 16
      %v1841 = vrot.slane %v1839, 5
      %v1842 = vsel %vm414, %v1837, %v1841
      %v1844 = vshrl.u32 %v376, 16
      %v1846 = vrot.slane %v1844, 4
      %v1847 = vshll.u32 %v376, 16
      %v1849 = vrot.slane %v1847, 5
      %v1850 = vor.u32 %v1846, %v1849
      %v1851 = vrot.slane %v1850, 4
      %v1853 = vshll.u32 %v378, 16
      %v1855 = vrot.slane %v1853, 5
      %v1856 = vsel %vm414, %v1851, %v1855
      %v1858 = vshrl.u32 %v377, 16
      %v1860 = vrot.slane %v1858, 4
      %v1861 = vshll.u32 %v377, 16
      %v1863 = vrot.slane %v1861, 5
      %v1864 = vor.u32 %v1860, %v1863
      %v1865 = vrot.slane %v1864, 4
      %v1867 = vshll.u32 %v379, 16
      %v1869 = vrot.slane %v1867, 5
      %v1870 = vsel %vm414, %v1865, %v1869
      %v1872 = vshrl.u32 %v380, 16
      %v1874 = vrot.slane %v1872, 4
      %v1875 = vshll.u32 %v380, 16
      %v1877 = vrot.slane %v1875, 5
      %v1878 = vor.u32 %v1874, %v1877
      %v1879 = vrot.slane %v1878, 4
      %v1881 = vshll.u32 %v382, 16
      %v1883 = vrot.slane %v1881, 5
      %v1884 = vsel %vm414, %v1879, %v1883
      %v1886 = vshrl.u32 %v381, 16
      %v1888 = vrot.slane %v1886, 4
      %v1889 = vshll.u32 %v381, 16
      %v1891 = vrot.slane %v1889, 5
      %v1892 = vor.u32 %v1888, %v1891
      %v1893 = vrot.slane %v1892, 4
      %v1895 = vshll.u32 %v383, 16
      %v1897 = vrot.slane %v1895, 5
      %v1898 = vsel %vm414, %v1893, %v1897
      %v1900 = vshrl.u32 %v384, 16
      %v1902 = vrot.slane %v1900, 4
      %v1903 = vshll.u32 %v384, 16
      %v1905 = vrot.slane %v1903, 5
      %v1906 = vor.u32 %v1902, %v1905
      %v1907 = vrot.slane %v1906, 4
      %v1909 = vshll.u32 %v386, 16
      %v1911 = vrot.slane %v1909, 5
      %v1912 = vsel %vm414, %v1907, %v1911
      %v1914 = vshrl.u32 %v385, 16
      %v1916 = vrot.slane %v1914, 4
      %v1917 = vshll.u32 %v385, 16
      %v1919 = vrot.slane %v1917, 5
      %v1920 = vor.u32 %v1916, %v1919
      %v1921 = vrot.slane %v1920, 4
      %v1923 = vshll.u32 %v387, 16
      %v1925 = vrot.slane %v1923, 5
      %v1926 = vsel %vm414, %v1921, %v1925
      %v1928 = vshrl.u32 %v388, 16
      %v1930 = vrot.slane %v1928, 4
      %v1931 = vshll.u32 %v388, 16
      %v1933 = vrot.slane %v1931, 5
      %v1934 = vor.u32 %v1930, %v1933
      %v1935 = vrot.slane %v1934, 4
      %v1937 = vshll.u32 %v390, 16
      %v1939 = vrot.slane %v1937, 5
      %v1940 = vsel %vm414, %v1935, %v1939
      %v1942 = vshrl.u32 %v389, 16
      %v1944 = vrot.slane %v1942, 4
      %v1945 = vshll.u32 %v389, 16
      %v1947 = vrot.slane %v1945, 5
      %v1948 = vor.u32 %v1944, %v1947
      %v1949 = vrot.slane %v1948, 4
      %v1951 = vshll.u32 %v391, 16
      %v1953 = vrot.slane %v1951, 5
      %v1954 = vsel %vm414, %v1949, %v1953
      %v1956 = vshrl.u32 %v392, 16
      %v1958 = vrot.slane %v1956, 4
      %v1959 = vshll.u32 %v392, 16
      %v1961 = vrot.slane %v1959, 5
      %v1962 = vor.u32 %v1958, %v1961
      %v1963 = vrot.slane %v1962, 4
      %v1965 = vshll.u32 %v394, 16
      %v1967 = vrot.slane %v1965, 5
      %v1968 = vsel %vm414, %v1963, %v1967
      %v1970 = vshrl.u32 %v393, 16
      %v1972 = vrot.slane %v1970, 4
      %v1973 = vshll.u32 %v393, 16
      %v1975 = vrot.slane %v1973, 5
      %v1976 = vor.u32 %v1972, %v1975
      %v1977 = vrot.slane %v1976, 4
      %v1979 = vshll.u32 %v395, 16
      %v1981 = vrot.slane %v1979, 5
      %v1982 = vsel %vm414, %v1977, %v1981
      %v1984 = vshrl.u32 %v396, 16
      %v1986 = vrot.slane %v1984, 4
      %v1987 = vshll.u32 %v396, 16
      %v1989 = vrot.slane %v1987, 5
      %v1990 = vor.u32 %v1986, %v1989
      %v1991 = vrot.slane %v1990, 4
      %v1993 = vshll.u32 %v398, 16
      %v1995 = vrot.slane %v1993, 5
      %v1996 = vsel %vm414, %v1991, %v1995
      %v1998 = vshrl.u32 %v397, 16
      %v2000 = vrot.slane %v1998, 4
      %v2001 = vshll.u32 %v397, 16
      %v2003 = vrot.slane %v2001, 5
      %v2004 = vor.u32 %v2000, %v2003
      %v2005 = vrot.slane %v2004, 4
      %v2007 = vshll.u32 %v399, 16
      %v2009 = vrot.slane %v2007, 5
      %v2010 = vsel %vm414, %v2005, %v2009
      %v2012 = vshrl.u32 %v400, 16
      %v2014 = vrot.slane %v2012, 4
      %v2015 = vshll.u32 %v400, 16
      %v2017 = vrot.slane %v2015, 5
      %v2018 = vor.u32 %v2014, %v2017
      %v2019 = vrot.slane %v2018, 4
      %v2021 = vshll.u32 %v402, 16
      %v2023 = vrot.slane %v2021, 5
      %v2024 = vsel %vm414, %v2019, %v2023
      %v2026 = vshrl.u32 %v401, 16
      %v2028 = vrot.slane %v2026, 4
      %v2029 = vshll.u32 %v401, 16
      %v2031 = vrot.slane %v2029, 5
      %v2032 = vor.u32 %v2028, %v2031
      %v2033 = vrot.slane %v2032, 4
      %v2035 = vshll.u32 %v403, 16
      %v2037 = vrot.slane %v2035, 5
      %v2038 = vsel %vm414, %v2033, %v2037
      %v2040 = vshrl.u32 %v404, 16
      %v2042 = vrot.slane %v2040, 4
      %v2043 = vshll.u32 %v404, 16
      %v2045 = vrot.slane %v2043, 5
      %v2046 = vor.u32 %v2042, %v2045
      %v2047 = vrot.slane %v2046, 4
      %v2049 = vshll.u32 %v406, 16
      %v2051 = vrot.slane %v2049, 5
      %v2052 = vsel %vm414, %v2047, %v2051
      %v2054 = vshrl.u32 %v405, 16
      %v2056 = vrot.slane %v2054, 4
      %v2057 = vshll.u32 %v405, 16
      %v2059 = vrot.slane %v2057, 5
      %v2060 = vor.u32 %v2056, %v2059
      %v2061 = vrot.slane %v2060, 4
      %v2063 = vshll.u32 %v407, 16
      %v2065 = vrot.slane %v2063, 5
      %v2066 = vsel %vm414, %v2061, %v2065
      %v2068 = vshrl.u32 %v408, 16
      %v2070 = vrot.slane %v2068, 4
      %v2071 = vshll.u32 %v408, 16
      %v2073 = vrot.slane %v2071, 5
      %v2074 = vor.u32 %v2070, %v2073
      %v2075 = vrot.slane %v2074, 4
      %v2077 = vshll.u32 %v410, 16
      %v2079 = vrot.slane %v2077, 5
      %v2080 = vsel %vm414, %v2075, %v2079
      %v2082 = vshrl.u32 %v409, 16
      %v2084 = vrot.slane %v2082, 4
      %v2085 = vshll.u32 %v409, 16
      %v2087 = vrot.slane %v2085, 5
      %v2088 = vor.u32 %v2084, %v2087
      %v2089 = vrot.slane %v2088, 4
      %v2091 = vshll.u32 %v411, 16
      %v2093 = vrot.slane %v2091, 5
      %v2094 = vsel %vm414, %v2089, %v2093
      %v2215 = vmax.bf16 %v172, %v428
      %v2216 = vmax.bf16 %v173, %v442
      %v2217 = vmax.bf16 %v176, %v456
      %v2218 = vmax.bf16 %v177, %v470
      %v2219 = vmax.bf16 %v180, %v484
      %v2220 = vmax.bf16 %v181, %v498
      %v2221 = vmax.bf16 %v184, %v512
      %v2222 = vmax.bf16 %v185, %v526
      %v2223 = vmax.bf16 %v188, %v540
      %v2224 = vmax.bf16 %v189, %v554
      %v2225 = vmax.bf16 %v192, %v568
      %v2226 = vmax.bf16 %v193, %v582
      %v2227 = vmax.bf16 %v196, %v596
      %v2228 = vmax.bf16 %v197, %v610
      %v2229 = vmax.bf16 %v200, %v624
      %v2230 = vmax.bf16 %v201, %v638
      %v2231 = vmax.bf16 %v204, %v652
      %v2232 = vmax.bf16 %v205, %v666
      %v2233 = vmax.bf16 %v208, %v680
      %v2234 = vmax.bf16 %v209, %v694
      %v2235 = vmax.bf16 %v212, %v708
      %v2236 = vmax.bf16 %v213, %v722
      %v2237 = vmax.bf16 %v216, %v736
      %v2238 = vmax.bf16 %v217, %v750
      %v2239 = vmax.bf16 %v220, %v764
      %v2240 = vmax.bf16 %v221, %v778
      %v2241 = vmax.bf16 %v224, %v792
      %v2242 = vmax.bf16 %v225, %v806
      %v2243 = vmax.bf16 %v228, %v820
      %v2244 = vmax.bf16 %v229, %v834
      %v2245 = vmax.bf16 %v232, %v848
      %v2246 = vmax.bf16 %v233, %v862
      %v2247 = vmax.bf16 %v236, %v876
      %v2248 = vmax.bf16 %v237, %v890
      %v2249 = vmax.bf16 %v240, %v904
      %v2250 = vmax.bf16 %v241, %v918
      %v2251 = vmax.bf16 %v244, %v932
      %v2252 = vmax.bf16 %v245, %v946
      %v2253 = vmax.bf16 %v248, %v960
      %v2254 = vmax.bf16 %v249, %v974
      %v2255 = vmax.bf16 %v252, %v988
      %v2256 = vmax.bf16 %v253, %v1002
      %v2257 = vmax.bf16 %v256, %v1016
      %v2258 = vmax.bf16 %v257, %v1030
      %v2259 = vmax.bf16 %v260, %v1044
      %v2260 = vmax.bf16 %v261, %v1058
      %v2261 = vmax.bf16 %v264, %v1072
      %v2262 = vmax.bf16 %v265, %v1086
      %v2263 = vmax.bf16 %v268, %v1100
      %v2264 = vmax.bf16 %v269, %v1114
      %v2265 = vmax.bf16 %v272, %v1128
      %v2266 = vmax.bf16 %v273, %v1142
      %v2267 = vmax.bf16 %v276, %v1156
      %v2268 = vmax.bf16 %v277, %v1170
      %v2269 = vmax.bf16 %v280, %v1184
      %v2270 = vmax.bf16 %v281, %v1198
      %v2271 = vmax.bf16 %v284, %v1212
      %v2272 = vmax.bf16 %v285, %v1226
      %v2273 = vmax.bf16 %v288, %v1240
      %v2274 = vmax.bf16 %v289, %v1254
      %v2275 = vmax.bf16 %v292, %v1268
      %v2276 = vmax.bf16 %v293, %v1282
      %v2277 = vmax.bf16 %v296, %v1296
      %v2278 = vmax.bf16 %v297, %v1310
      %v2279 = vmax.bf16 %v300, %v1324
      %v2280 = vmax.bf16 %v301, %v1338
      %v2281 = vmax.bf16 %v304, %v1352
      %v2282 = vmax.bf16 %v305, %v1366
      %v2283 = vmax.bf16 %v308, %v1380
      %v2284 = vmax.bf16 %v309, %v1394
      %v2285 = vmax.bf16 %v312, %v1408
      %v2286 = vmax.bf16 %v313, %v1422
      %v2287 = vmax.bf16 %v316, %v1436
      %v2288 = vmax.bf16 %v317, %v1450
      %v2289 = vmax.bf16 %v320, %v1464
      %v2290 = vmax.bf16 %v321, %v1478
      %v2291 = vmax.bf16 %v324, %v1492
      %v2292 = vmax.bf16 %v325, %v1506
      %v2293 = vmax.bf16 %v328, %v1520
      %v2294 = vmax.bf16 %v329, %v1534
      %v2295 = vmax.bf16 %v332, %v1548
      %v2296 = vmax.bf16 %v333, %v1562
      %v2297 = vmax.bf16 %v336, %v1576
      %v2298 = vmax.bf16 %v337, %v1590
      %v2299 = vmax.bf16 %v340, %v1604
      %v2300 = vmax.bf16 %v341, %v1618
      %v2301 = vmax.bf16 %v344, %v1632
      %v2302 = vmax.bf16 %v345, %v1646
      %v2303 = vmax.bf16 %v348, %v1660
      %v2304 = vmax.bf16 %v349, %v1674
      %v2305 = vmax.bf16 %v352, %v1688
      %v2306 = vmax.bf16 %v353, %v1702
      %v2307 = vmax.bf16 %v356, %v1716
      %v2308 = vmax.bf16 %v357, %v1730
      %v2309 = vmax.bf16 %v360, %v1744
      %v2310 = vmax.bf16 %v361, %v1758
      %v2311 = vmax.bf16 %v364, %v1772
      %v2312 = vmax.bf16 %v365, %v1786
      %v2313 = vmax.bf16 %v368, %v1800
      %v2314 = vmax.bf16 %v369, %v1814
      %v2315 = vmax.bf16 %v372, %v1828
      %v2316 = vmax.bf16 %v373, %v1842
      %v2317 = vmax.bf16 %v376, %v1856
      %v2318 = vmax.bf16 %v377, %v1870
      %v2319 = vmax.bf16 %v380, %v1884
      %v2320 = vmax.bf16 %v381, %v1898
      %v2321 = vmax.bf16 %v384, %v1912
      %v2322 = vmax.bf16 %v385, %v1926
      %v2323 = vmax.bf16 %v388, %v1940
      %v2324 = vmax.bf16 %v389, %v1954
      %v2325 = vmax.bf16 %v392, %v1968
      %v2326 = vmax.bf16 %v393, %v1982
      %v2327 = vmax.bf16 %v396, %v1996
      %v2328 = vmax.bf16 %v397, %v2010
      %v2329 = vmax.bf16 %v400, %v2024
      %v2330 = vmax.bf16 %v401, %v2038
      %v2331 = vmax.bf16 %v404, %v2052
      %v2332 = vmax.bf16 %v405, %v2066
      %v2333 = vmax.bf16 %v408, %v2080
      %v2334 = vmax.bf16 %v409, %v2094
      %vm2575 = vcmask 1042432
      %vm2576 = vcmask 1046532
      %vm2577 = vmor %vm2575, %vm2576
      %v2578 = vrot.slane %v172, 5
      %v2579 = vrot.slane %v2578, 4
      %v2580 = vrot.slane %v174, 5
      %v2581 = vsel %vm2577, %v2579, %v2580
      %v2582 = vrot.slane %v173, 5
      %v2583 = vrot.slane %v2582, 4
      %v2584 = vrot.slane %v175, 5
      %v2585 = vsel %vm2577, %v2583, %v2584
      %v2586 = vrot.slane %v176, 5
      %v2587 = vrot.slane %v2586, 4
      %v2588 = vrot.slane %v178, 5
      %v2589 = vsel %vm2577, %v2587, %v2588
      %v2590 = vrot.slane %v177, 5
      %v2591 = vrot.slane %v2590, 4
      %v2592 = vrot.slane %v179, 5
      %v2593 = vsel %vm2577, %v2591, %v2592
      %v2594 = vrot.slane %v180, 5
      %v2595 = vrot.slane %v2594, 4
      %v2596 = vrot.slane %v182, 5
      %v2597 = vsel %vm2577, %v2595, %v2596
      %v2598 = vrot.slane %v181, 5
      %v2599 = vrot.slane %v2598, 4
      %v2600 = vrot.slane %v183, 5
      %v2601 = vsel %vm2577, %v2599, %v2600
      %v2602 = vrot.slane %v184, 5
      %v2603 = vrot.slane %v2602, 4
      %v2604 = vrot.slane %v186, 5
      %v2605 = vsel %vm2577, %v2603, %v2604
      %v2606 = vrot.slane %v185, 5
      %v2607 = vrot.slane %v2606, 4
      %v2608 = vrot.slane %v187, 5
      %v2609 = vsel %vm2577, %v2607, %v2608
      %v2610 = vrot.slane %v188, 5
      %v2611 = vrot.slane %v2610, 4
      %v2612 = vrot.slane %v190, 5
      %v2613 = vsel %vm2577, %v2611, %v2612
      %v2614 = vrot.slane %v189, 5
      %v2615 = vrot.slane %v2614, 4
      %v2616 = vrot.slane %v191, 5
      %v2617 = vsel %vm2577, %v2615, %v2616
      %v2618 = vrot.slane %v192, 5
      %v2619 = vrot.slane %v2618, 4
      %v2620 = vrot.slane %v194, 5
      %v2621 = vsel %vm2577, %v2619, %v2620
      %v2622 = vrot.slane %v193, 5
      %v2623 = vrot.slane %v2622, 4
      %v2624 = vrot.slane %v195, 5
      %v2625 = vsel %vm2577, %v2623, %v2624
      %v2626 = vrot.slane %v196, 5
      %v2627 = vrot.slane %v2626, 4
      %v2628 = vrot.slane %v198, 5
      %v2629 = vsel %vm2577, %v2627, %v2628
      %v2630 = vrot.slane %v197, 5
      %v2631 = vrot.slane %v2630, 4
      %v2632 = vrot.slane %v199, 5
      %v2633 = vsel %vm2577, %v2631, %v2632
      %v2634 = vrot.slane %v200, 5
      %v2635 = vrot.slane %v2634, 4
      %v2636 = vrot.slane %v202, 5
      %v2637 = vsel %vm2577, %v2635, %v2636
      %v2638 = vrot.slane %v201, 5
      %v2639 = vrot.slane %v2638, 4
      %v2640 = vrot.slane %v203, 5
      %v2641 = vsel %vm2577, %v2639, %v2640
      %v2642 = vrot.slane %v204, 5
      %v2643 = vrot.slane %v2642, 4
      %v2644 = vrot.slane %v206, 5
      %v2645 = vsel %vm2577, %v2643, %v2644
      %v2646 = vrot.slane %v205, 5
      %v2647 = vrot.slane %v2646, 4
      %v2648 = vrot.slane %v207, 5
      %v2649 = vsel %vm2577, %v2647, %v2648
      %v2650 = vrot.slane %v208, 5
      %v2651 = vrot.slane %v2650, 4
      %v2652 = vrot.slane %v210, 5
      %v2653 = vsel %vm2577, %v2651, %v2652
      %v2654 = vrot.slane %v209, 5
      %v2655 = vrot.slane %v2654, 4
      %v2656 = vrot.slane %v211, 5
      %v2657 = vsel %vm2577, %v2655, %v2656
      %v2658 = vrot.slane %v212, 5
      %v2659 = vrot.slane %v2658, 4
      %v2660 = vrot.slane %v214, 5
      %v2661 = vsel %vm2577, %v2659, %v2660
      %v2662 = vrot.slane %v213, 5
      %v2663 = vrot.slane %v2662, 4
      %v2664 = vrot.slane %v215, 5
      %v2665 = vsel %vm2577, %v2663, %v2664
      %v2666 = vrot.slane %v216, 5
      %v2667 = vrot.slane %v2666, 4
      %v2668 = vrot.slane %v218, 5
      %v2669 = vsel %vm2577, %v2667, %v2668
      %v2670 = vrot.slane %v217, 5
      %v2671 = vrot.slane %v2670, 4
      %v2672 = vrot.slane %v219, 5
      %v2673 = vsel %vm2577, %v2671, %v2672
      %v2674 = vrot.slane %v220, 5
      %v2675 = vrot.slane %v2674, 4
      %v2676 = vrot.slane %v222, 5
      %v2677 = vsel %vm2577, %v2675, %v2676
      %v2678 = vrot.slane %v221, 5
      %v2679 = vrot.slane %v2678, 4
      %v2680 = vrot.slane %v223, 5
      %v2681 = vsel %vm2577, %v2679, %v2680
      %v2682 = vrot.slane %v224, 5
      %v2683 = vrot.slane %v2682, 4
      %v2684 = vrot.slane %v226, 5
      %v2685 = vsel %vm2577, %v2683, %v2684
      %v2686 = vrot.slane %v225, 5
      %v2687 = vrot.slane %v2686, 4
      %v2688 = vrot.slane %v227, 5
      %v2689 = vsel %vm2577, %v2687, %v2688
      %v2690 = vrot.slane %v228, 5
      %v2691 = vrot.slane %v2690, 4
      %v2692 = vrot.slane %v230, 5
      %v2693 = vsel %vm2577, %v2691, %v2692
      %v2694 = vrot.slane %v229, 5
      %v2695 = vrot.slane %v2694, 4
      %v2696 = vrot.slane %v231, 5
      %v2697 = vsel %vm2577, %v2695, %v2696
      %v2698 = vrot.slane %v232, 5
      %v2699 = vrot.slane %v2698, 4
      %v2700 = vrot.slane %v234, 5
      %v2701 = vsel %vm2577, %v2699, %v2700
      %v2702 = vrot.slane %v233, 5
      %v2703 = vrot.slane %v2702, 4
      %v2704 = vrot.slane %v235, 5
      %v2705 = vsel %vm2577, %v2703, %v2704
      %v2706 = vrot.slane %v236, 5
      %v2707 = vrot.slane %v2706, 4
      %v2708 = vrot.slane %v238, 5
      %v2709 = vsel %vm2577, %v2707, %v2708
      %v2710 = vrot.slane %v237, 5
      %v2711 = vrot.slane %v2710, 4
      %v2712 = vrot.slane %v239, 5
      %v2713 = vsel %vm2577, %v2711, %v2712
      %v2714 = vrot.slane %v240, 5
      %v2715 = vrot.slane %v2714, 4
      %v2716 = vrot.slane %v242, 5
      %v2717 = vsel %vm2577, %v2715, %v2716
      %v2718 = vrot.slane %v241, 5
      %v2719 = vrot.slane %v2718, 4
      %v2720 = vrot.slane %v243, 5
      %v2721 = vsel %vm2577, %v2719, %v2720
      %v2722 = vrot.slane %v244, 5
      %v2723 = vrot.slane %v2722, 4
      %v2724 = vrot.slane %v246, 5
      %v2725 = vsel %vm2577, %v2723, %v2724
      %v2726 = vrot.slane %v245, 5
      %v2727 = vrot.slane %v2726, 4
      %v2728 = vrot.slane %v247, 5
      %v2729 = vsel %vm2577, %v2727, %v2728
      %v2730 = vrot.slane %v248, 5
      %v2731 = vrot.slane %v2730, 4
      %v2732 = vrot.slane %v250, 5
      %v2733 = vsel %vm2577, %v2731, %v2732
      %v2734 = vrot.slane %v249, 5
      %v2735 = vrot.slane %v2734, 4
      %v2736 = vrot.slane %v251, 5
      %v2737 = vsel %vm2577, %v2735, %v2736
      %v2738 = vrot.slane %v252, 5
      %v2739 = vrot.slane %v2738, 4
      %v2740 = vrot.slane %v254, 5
      %v2741 = vsel %vm2577, %v2739, %v2740
      %v2742 = vrot.slane %v253, 5
      %v2743 = vrot.slane %v2742, 4
      %v2744 = vrot.slane %v255, 5
      %v2745 = vsel %vm2577, %v2743, %v2744
      %v2746 = vrot.slane %v256, 5
      %v2747 = vrot.slane %v2746, 4
      %v2748 = vrot.slane %v258, 5
      %v2749 = vsel %vm2577, %v2747, %v2748
      %v2750 = vrot.slane %v257, 5
      %v2751 = vrot.slane %v2750, 4
      %v2752 = vrot.slane %v259, 5
      %v2753 = vsel %vm2577, %v2751, %v2752
      %v2754 = vrot.slane %v260, 5
      %v2755 = vrot.slane %v2754, 4
      %v2756 = vrot.slane %v262, 5
      %v2757 = vsel %vm2577, %v2755, %v2756
      %v2758 = vrot.slane %v261, 5
      %v2759 = vrot.slane %v2758, 4
      %v2760 = vrot.slane %v263, 5
      %v2761 = vsel %vm2577, %v2759, %v2760
      %v2762 = vrot.slane %v264, 5
      %v2763 = vrot.slane %v2762, 4
      %v2764 = vrot.slane %v266, 5
      %v2765 = vsel %vm2577, %v2763, %v2764
      %v2766 = vrot.slane %v265, 5
      %v2767 = vrot.slane %v2766, 4
      %v2768 = vrot.slane %v267, 5
      %v2769 = vsel %vm2577, %v2767, %v2768
      %v2770 = vrot.slane %v268, 5
      %v2771 = vrot.slane %v2770, 4
      %v2772 = vrot.slane %v270, 5
      %v2773 = vsel %vm2577, %v2771, %v2772
      %v2774 = vrot.slane %v269, 5
      %v2775 = vrot.slane %v2774, 4
      %v2776 = vrot.slane %v271, 5
      %v2777 = vsel %vm2577, %v2775, %v2776
      %v2778 = vrot.slane %v272, 5
      %v2779 = vrot.slane %v2778, 4
      %v2780 = vrot.slane %v274, 5
      %v2781 = vsel %vm2577, %v2779, %v2780
      %v2782 = vrot.slane %v273, 5
      %v2783 = vrot.slane %v2782, 4
      %v2784 = vrot.slane %v275, 5
      %v2785 = vsel %vm2577, %v2783, %v2784
      %v2786 = vrot.slane %v276, 5
      %v2787 = vrot.slane %v2786, 4
      %v2788 = vrot.slane %v278, 5
      %v2789 = vsel %vm2577, %v2787, %v2788
      %v2790 = vrot.slane %v277, 5
      %v2791 = vrot.slane %v2790, 4
      %v2792 = vrot.slane %v279, 5
      %v2793 = vsel %vm2577, %v2791, %v2792
      %v2794 = vrot.slane %v280, 5
      %v2795 = vrot.slane %v2794, 4
      %v2796 = vrot.slane %v282, 5
      %v2797 = vsel %vm2577, %v2795, %v2796
      %v2798 = vrot.slane %v281, 5
      %v2799 = vrot.slane %v2798, 4
      %v2800 = vrot.slane %v283, 5
      %v2801 = vsel %vm2577, %v2799, %v2800
      %v2802 = vrot.slane %v284, 5
      %v2803 = vrot.slane %v2802, 4
      %v2804 = vrot.slane %v286, 5
      %v2805 = vsel %vm2577, %v2803, %v2804
      %v2806 = vrot.slane %v285, 5
      %v2807 = vrot.slane %v2806, 4
      %v2808 = vrot.slane %v287, 5
      %v2809 = vsel %vm2577, %v2807, %v2808
      %v2810 = vrot.slane %v288, 5
      %v2811 = vrot.slane %v2810, 4
      %v2812 = vrot.slane %v290, 5
      %v2813 = vsel %vm2577, %v2811, %v2812
      %v2814 = vrot.slane %v289, 5
      %v2815 = vrot.slane %v2814, 4
      %v2816 = vrot.slane %v291, 5
      %v2817 = vsel %vm2577, %v2815, %v2816
      %v2818 = vrot.slane %v292, 5
      %v2819 = vrot.slane %v2818, 4
      %v2820 = vrot.slane %v294, 5
      %v2821 = vsel %vm2577, %v2819, %v2820
      %v2822 = vrot.slane %v293, 5
      %v2823 = vrot.slane %v2822, 4
      %v2824 = vrot.slane %v295, 5
      %v2825 = vsel %vm2577, %v2823, %v2824
      %v2826 = vrot.slane %v296, 5
      %v2827 = vrot.slane %v2826, 4
      %v2828 = vrot.slane %v298, 5
      %v2829 = vsel %vm2577, %v2827, %v2828
      %v2830 = vrot.slane %v297, 5
      %v2831 = vrot.slane %v2830, 4
      %v2832 = vrot.slane %v299, 5
      %v2833 = vsel %vm2577, %v2831, %v2832
      %v2834 = vrot.slane %v300, 5
      %v2835 = vrot.slane %v2834, 4
      %v2836 = vrot.slane %v302, 5
      %v2837 = vsel %vm2577, %v2835, %v2836
      %v2838 = vrot.slane %v301, 5
      %v2839 = vrot.slane %v2838, 4
      %v2840 = vrot.slane %v303, 5
      %v2841 = vsel %vm2577, %v2839, %v2840
      %v2842 = vrot.slane %v304, 5
      %v2843 = vrot.slane %v2842, 4
      %v2844 = vrot.slane %v306, 5
      %v2845 = vsel %vm2577, %v2843, %v2844
      %v2846 = vrot.slane %v305, 5
      %v2847 = vrot.slane %v2846, 4
      %v2848 = vrot.slane %v307, 5
      %v2849 = vsel %vm2577, %v2847, %v2848
      %v2850 = vrot.slane %v308, 5
      %v2851 = vrot.slane %v2850, 4
      %v2852 = vrot.slane %v310, 5
      %v2853 = vsel %vm2577, %v2851, %v2852
      %v2854 = vrot.slane %v309, 5
      %v2855 = vrot.slane %v2854, 4
      %v2856 = vrot.slane %v311, 5
      %v2857 = vsel %vm2577, %v2855, %v2856
      %v2858 = vrot.slane %v312, 5
      %v2859 = vrot.slane %v2858, 4
      %v2860 = vrot.slane %v314, 5
      %v2861 = vsel %vm2577, %v2859, %v2860
      %v2862 = vrot.slane %v313, 5
      %v2863 = vrot.slane %v2862, 4
      %v2864 = vrot.slane %v315, 5
      %v2865 = vsel %vm2577, %v2863, %v2864
      %v2866 = vrot.slane %v316, 5
      %v2867 = vrot.slane %v2866, 4
      %v2868 = vrot.slane %v318, 5
      %v2869 = vsel %vm2577, %v2867, %v2868
      %v2870 = vrot.slane %v317, 5
      %v2871 = vrot.slane %v2870, 4
      %v2872 = vrot.slane %v319, 5
      %v2873 = vsel %vm2577, %v2871, %v2872
      %v2874 = vrot.slane %v320, 5
      %v2875 = vrot.slane %v2874, 4
      %v2876 = vrot.slane %v322, 5
      %v2877 = vsel %vm2577, %v2875, %v2876
      %v2878 = vrot.slane %v321, 5
      %v2879 = vrot.slane %v2878, 4
      %v2880 = vrot.slane %v323, 5
      %v2881 = vsel %vm2577, %v2879, %v2880
      %v2882 = vrot.slane %v324, 5
      %v2883 = vrot.slane %v2882, 4
      %v2884 = vrot.slane %v326, 5
      %v2885 = vsel %vm2577, %v2883, %v2884
      %v2886 = vrot.slane %v325, 5
      %v2887 = vrot.slane %v2886, 4
      %v2888 = vrot.slane %v327, 5
      %v2889 = vsel %vm2577, %v2887, %v2888
      %v2890 = vrot.slane %v328, 5
      %v2891 = vrot.slane %v2890, 4
      %v2892 = vrot.slane %v330, 5
      %v2893 = vsel %vm2577, %v2891, %v2892
      %v2894 = vrot.slane %v329, 5
      %v2895 = vrot.slane %v2894, 4
      %v2896 = vrot.slane %v331, 5
      %v2897 = vsel %vm2577, %v2895, %v2896
      %v2898 = vrot.slane %v332, 5
      %v2899 = vrot.slane %v2898, 4
      %v2900 = vrot.slane %v334, 5
      %v2901 = vsel %vm2577, %v2899, %v2900
      %v2902 = vrot.slane %v333, 5
      %v2903 = vrot.slane %v2902, 4
      %v2904 = vrot.slane %v335, 5
      %v2905 = vsel %vm2577, %v2903, %v2904
      %v2906 = vrot.slane %v336, 5
      %v2907 = vrot.slane %v2906, 4
      %v2908 = vrot.slane %v338, 5
      %v2909 = vsel %vm2577, %v2907, %v2908
      %v2910 = vrot.slane %v337, 5
      %v2911 = vrot.slane %v2910, 4
      %v2912 = vrot.slane %v339, 5
      %v2913 = vsel %vm2577, %v2911, %v2912
      %v2914 = vrot.slane %v340, 5
      %v2915 = vrot.slane %v2914, 4
      %v2916 = vrot.slane %v342, 5
      %v2917 = vsel %vm2577, %v2915, %v2916
      %v2918 = vrot.slane %v341, 5
      %v2919 = vrot.slane %v2918, 4
      %v2920 = vrot.slane %v343, 5
      %v2921 = vsel %vm2577, %v2919, %v2920
      %v2922 = vrot.slane %v344, 5
      %v2923 = vrot.slane %v2922, 4
      %v2924 = vrot.slane %v346, 5
      %v2925 = vsel %vm2577, %v2923, %v2924
      %v2926 = vrot.slane %v345, 5
      %v2927 = vrot.slane %v2926, 4
      %v2928 = vrot.slane %v347, 5
      %v2929 = vsel %vm2577, %v2927, %v2928
      %v2930 = vrot.slane %v348, 5
      %v2931 = vrot.slane %v2930, 4
      %v2932 = vrot.slane %v350, 5
      %v2933 = vsel %vm2577, %v2931, %v2932
      %v2934 = vrot.slane %v349, 5
      %v2935 = vrot.slane %v2934, 4
      %v2936 = vrot.slane %v351, 5
      %v2937 = vsel %vm2577, %v2935, %v2936
      %v2938 = vrot.slane %v352, 5
      %v2939 = vrot.slane %v2938, 4
      %v2940 = vrot.slane %v354, 5
      %v2941 = vsel %vm2577, %v2939, %v2940
      %v2942 = vrot.slane %v353, 5
      %v2943 = vrot.slane %v2942, 4
      %v2944 = vrot.slane %v355, 5
      %v2945 = vsel %vm2577, %v2943, %v2944
      %v2946 = vrot.slane %v356, 5
      %v2947 = vrot.slane %v2946, 4
      %v2948 = vrot.slane %v358, 5
      %v2949 = vsel %vm2577, %v2947, %v2948
      %v2950 = vrot.slane %v357, 5
      %v2951 = vrot.slane %v2950, 4
      %v2952 = vrot.slane %v359, 5
      %v2953 = vsel %vm2577, %v2951, %v2952
      %v2954 = vrot.slane %v360, 5
      %v2955 = vrot.slane %v2954, 4
      %v2956 = vrot.slane %v362, 5
      %v2957 = vsel %vm2577, %v2955, %v2956
      %v2958 = vrot.slane %v361, 5
      %v2959 = vrot.slane %v2958, 4
      %v2960 = vrot.slane %v363, 5
      %v2961 = vsel %vm2577, %v2959, %v2960
      %v2962 = vrot.slane %v364, 5
      %v2963 = vrot.slane %v2962, 4
      %v2964 = vrot.slane %v366, 5
      %v2965 = vsel %vm2577, %v2963, %v2964
      %v2966 = vrot.slane %v365, 5
      %v2967 = vrot.slane %v2966, 4
      %v2968 = vrot.slane %v367, 5
      %v2969 = vsel %vm2577, %v2967, %v2968
      %v2970 = vrot.slane %v368, 5
      %v2971 = vrot.slane %v2970, 4
      %v2972 = vrot.slane %v370, 5
      %v2973 = vsel %vm2577, %v2971, %v2972
      %v2974 = vrot.slane %v369, 5
      %v2975 = vrot.slane %v2974, 4
      %v2976 = vrot.slane %v371, 5
      %v2977 = vsel %vm2577, %v2975, %v2976
      %v2978 = vrot.slane %v372, 5
      %v2979 = vrot.slane %v2978, 4
      %v2980 = vrot.slane %v374, 5
      %v2981 = vsel %vm2577, %v2979, %v2980
      %v2982 = vrot.slane %v373, 5
      %v2983 = vrot.slane %v2982, 4
      %v2984 = vrot.slane %v375, 5
      %v2985 = vsel %vm2577, %v2983, %v2984
      %v2986 = vrot.slane %v376, 5
      %v2987 = vrot.slane %v2986, 4
      %v2988 = vrot.slane %v378, 5
      %v2989 = vsel %vm2577, %v2987, %v2988
      %v2990 = vrot.slane %v377, 5
      %v2991 = vrot.slane %v2990, 4
      %v2992 = vrot.slane %v379, 5
      %v2993 = vsel %vm2577, %v2991, %v2992
      %v2994 = vrot.slane %v380, 5
      %v2995 = vrot.slane %v2994, 4
      %v2996 = vrot.slane %v382, 5
      %v2997 = vsel %vm2577, %v2995, %v2996
      %v2998 = vrot.slane %v381, 5
      %v2999 = vrot.slane %v2998, 4
      %v3000 = vrot.slane %v383, 5
      %v3001 = vsel %vm2577, %v2999, %v3000
      %v3002 = vrot.slane %v384, 5
      %v3003 = vrot.slane %v3002, 4
      %v3004 = vrot.slane %v386, 5
      %v3005 = vsel %vm2577, %v3003, %v3004
      %v3006 = vrot.slane %v385, 5
      %v3007 = vrot.slane %v3006, 4
      %v3008 = vrot.slane %v387, 5
      %v3009 = vsel %vm2577, %v3007, %v3008
      %v3010 = vrot.slane %v388, 5
      %v3011 = vrot.slane %v3010, 4
      %v3012 = vrot.slane %v390, 5
      %v3013 = vsel %vm2577, %v3011, %v3012
      %v3014 = vrot.slane %v389, 5
      %v3015 = vrot.slane %v3014, 4
      %v3016 = vrot.slane %v391, 5
      %v3017 = vsel %vm2577, %v3015, %v3016
      %v3018 = vrot.slane %v392, 5
      %v3019 = vrot.slane %v3018, 4
      %v3020 = vrot.slane %v394, 5
      %v3021 = vsel %vm2577, %v3019, %v3020
      %v3022 = vrot.slane %v393, 5
      %v3023 = vrot.slane %v3022, 4
      %v3024 = vrot.slane %v395, 5
      %v3025 = vsel %vm2577, %v3023, %v3024
      %v3026 = vrot.slane %v396, 5
      %v3027 = vrot.slane %v3026, 4
      %v3028 = vrot.slane %v398, 5
      %v3029 = vsel %vm2577, %v3027, %v3028
      %v3030 = vrot.slane %v397, 5
      %v3031 = vrot.slane %v3030, 4
      %v3032 = vrot.slane %v399, 5
      %v3033 = vsel %vm2577, %v3031, %v3032
      %v3034 = vrot.slane %v400, 5
      %v3035 = vrot.slane %v3034, 4
      %v3036 = vrot.slane %v402, 5
      %v3037 = vsel %vm2577, %v3035, %v3036
      %v3038 = vrot.slane %v401, 5
      %v3039 = vrot.slane %v3038, 4
      %v3040 = vrot.slane %v403, 5
      %v3041 = vsel %vm2577, %v3039, %v3040
      %v3042 = vrot.slane %v404, 5
      %v3043 = vrot.slane %v3042, 4
      %v3044 = vrot.slane %v406, 5
      %v3045 = vsel %vm2577, %v3043, %v3044
      %v3046 = vrot.slane %v405, 5
      %v3047 = vrot.slane %v3046, 4
      %v3048 = vrot.slane %v407, 5
      %v3049 = vsel %vm2577, %v3047, %v3048
      %v3050 = vrot.slane %v408, 5
      %v3051 = vrot.slane %v3050, 4
      %v3052 = vrot.slane %v410, 5
      %v3053 = vsel %vm2577, %v3051, %v3052
      %v3054 = vrot.slane %v409, 5
      %v3055 = vrot.slane %v3054, 4
      %v3056 = vrot.slane %v411, 5
      %v3057 = vsel %vm2577, %v3055, %v3056
      %v3178 = vmax.bf16 %v2215, %v2581
      %v3179 = vmax.bf16 %v2216, %v2585
      %v3180 = vmax.bf16 %v2217, %v2589
      %v3181 = vmax.bf16 %v2218, %v2593
      %v3182 = vmax.bf16 %v2219, %v2597
      %v3183 = vmax.bf16 %v2220, %v2601
      %v3184 = vmax.bf16 %v2221, %v2605
      %v3185 = vmax.bf16 %v2222, %v2609
      %v3186 = vmax.bf16 %v2223, %v2613
      %v3187 = vmax.bf16 %v2224, %v2617
      %v3188 = vmax.bf16 %v2225, %v2621
      %v3189 = vmax.bf16 %v2226, %v2625
      %v3190 = vmax.bf16 %v2227, %v2629
      %v3191 = vmax.bf16 %v2228, %v2633
      %v3192 = vmax.bf16 %v2229, %v2637
      %v3193 = vmax.bf16 %v2230, %v2641
      %v3194 = vmax.bf16 %v2231, %v2645
      %v3195 = vmax.bf16 %v2232, %v2649
      %v3196 = vmax.bf16 %v2233, %v2653
      %v3197 = vmax.bf16 %v2234, %v2657
      %v3198 = vmax.bf16 %v2235, %v2661
      %v3199 = vmax.bf16 %v2236, %v2665
      %v3200 = vmax.bf16 %v2237, %v2669
      %v3201 = vmax.bf16 %v2238, %v2673
      %v3202 = vmax.bf16 %v2239, %v2677
      %v3203 = vmax.bf16 %v2240, %v2681
      %v3204 = vmax.bf16 %v2241, %v2685
      %v3205 = vmax.bf16 %v2242, %v2689
      %v3206 = vmax.bf16 %v2243, %v2693
      %v3207 = vmax.bf16 %v2244, %v2697
      %v3208 = vmax.bf16 %v2245, %v2701
      %v3209 = vmax.bf16 %v2246, %v2705
      %v3210 = vmax.bf16 %v2247, %v2709
      %v3211 = vmax.bf16 %v2248, %v2713
      %v3212 = vmax.bf16 %v2249, %v2717
      %v3213 = vmax.bf16 %v2250, %v2721
      %v3214 = vmax.bf16 %v2251, %v2725
      %v3215 = vmax.bf16 %v2252, %v2729
      %v3216 = vmax.bf16 %v2253, %v2733
      %v3217 = vmax.bf16 %v2254, %v2737
      %v3218 = vmax.bf16 %v2255, %v2741
      %v3219 = vmax.bf16 %v2256, %v2745
      %v3220 = vmax.bf16 %v2257, %v2749
      %v3221 = vmax.bf16 %v2258, %v2753
      %v3222 = vmax.bf16 %v2259, %v2757
      %v3223 = vmax.bf16 %v2260, %v2761
      %v3224 = vmax.bf16 %v2261, %v2765
      %v3225 = vmax.bf16 %v2262, %v2769
      %v3226 = vmax.bf16 %v2263, %v2773
      %v3227 = vmax.bf16 %v2264, %v2777
      %v3228 = vmax.bf16 %v2265, %v2781
      %v3229 = vmax.bf16 %v2266, %v2785
      %v3230 = vmax.bf16 %v2267, %v2789
      %v3231 = vmax.bf16 %v2268, %v2793
      %v3232 = vmax.bf16 %v2269, %v2797
      %v3233 = vmax.bf16 %v2270, %v2801
      %v3234 = vmax.bf16 %v2271, %v2805
      %v3235 = vmax.bf16 %v2272, %v2809
      %v3236 = vmax.bf16 %v2273, %v2813
      %v3237 = vmax.bf16 %v2274, %v2817
      %v3238 = vmax.bf16 %v2275, %v2821
      %v3239 = vmax.bf16 %v2276, %v2825
      %v3240 = vmax.bf16 %v2277, %v2829
      %v3241 = vmax.bf16 %v2278, %v2833
      %v3242 = vmax.bf16 %v2279, %v2837
      %v3243 = vmax.bf16 %v2280, %v2841
      %v3244 = vmax.bf16 %v2281, %v2845
      %v3245 = vmax.bf16 %v2282, %v2849
      %v3246 = vmax.bf16 %v2283, %v2853
      %v3247 = vmax.bf16 %v2284, %v2857
      %v3248 = vmax.bf16 %v2285, %v2861
      %v3249 = vmax.bf16 %v2286, %v2865
      %v3250 = vmax.bf16 %v2287, %v2869
      %v3251 = vmax.bf16 %v2288, %v2873
      %v3252 = vmax.bf16 %v2289, %v2877
      %v3253 = vmax.bf16 %v2290, %v2881
      %v3254 = vmax.bf16 %v2291, %v2885
      %v3255 = vmax.bf16 %v2292, %v2889
      %v3256 = vmax.bf16 %v2293, %v2893
      %v3257 = vmax.bf16 %v2294, %v2897
      %v3258 = vmax.bf16 %v2295, %v2901
      %v3259 = vmax.bf16 %v2296, %v2905
      %v3260 = vmax.bf16 %v2297, %v2909
      %v3261 = vmax.bf16 %v2298, %v2913
      %v3262 = vmax.bf16 %v2299, %v2917
      %v3263 = vmax.bf16 %v2300, %v2921
      %v3264 = vmax.bf16 %v2301, %v2925
      %v3265 = vmax.bf16 %v2302, %v2929
      %v3266 = vmax.bf16 %v2303, %v2933
      %v3267 = vmax.bf16 %v2304, %v2937
      %v3268 = vmax.bf16 %v2305, %v2941
      %v3269 = vmax.bf16 %v2306, %v2945
      %v3270 = vmax.bf16 %v2307, %v2949
      %v3271 = vmax.bf16 %v2308, %v2953
      %v3272 = vmax.bf16 %v2309, %v2957
      %v3273 = vmax.bf16 %v2310, %v2961
      %v3274 = vmax.bf16 %v2311, %v2965
      %v3275 = vmax.bf16 %v2312, %v2969
      %v3276 = vmax.bf16 %v2313, %v2973
      %v3277 = vmax.bf16 %v2314, %v2977
      %v3278 = vmax.bf16 %v2315, %v2981
      %v3279 = vmax.bf16 %v2316, %v2985
      %v3280 = vmax.bf16 %v2317, %v2989
      %v3281 = vmax.bf16 %v2318, %v2993
      %v3282 = vmax.bf16 %v2319, %v2997
      %v3283 = vmax.bf16 %v2320, %v3001
      %v3284 = vmax.bf16 %v2321, %v3005
      %v3285 = vmax.bf16 %v2322, %v3009
      %v3286 = vmax.bf16 %v2323, %v3013
      %v3287 = vmax.bf16 %v2324, %v3017
      %v3288 = vmax.bf16 %v2325, %v3021
      %v3289 = vmax.bf16 %v2326, %v3025
      %v3290 = vmax.bf16 %v2327, %v3029
      %v3291 = vmax.bf16 %v2328, %v3033
      %v3292 = vmax.bf16 %v2329, %v3037
      %v3293 = vmax.bf16 %v2330, %v3041
      %v3294 = vmax.bf16 %v2331, %v3045
      %v3295 = vmax.bf16 %v2332, %v3049
      %v3296 = vmax.bf16 %v2333, %v3053
      %v3297 = vmax.bf16 %v2334, %v3057
      %v3298 = vmax.bf16 %v3178, %v3180
      %v3299 = vmax.bf16 %v3179, %v3181
      %v3300 = vmax.bf16 %v3180, %v3182
      %v3301 = vmax.bf16 %v3181, %v3183
      %v3302 = vmax.bf16 %v3182, %v3184
      %v3303 = vmax.bf16 %v3183, %v3185
      %v3304 = vmax.bf16 %v3184, %v3186
      %v3305 = vmax.bf16 %v3185, %v3187
      %v3306 = vmax.bf16 %v3186, %v3188
      %v3307 = vmax.bf16 %v3187, %v3189
      %v3308 = vmax.bf16 %v3188, %v3190
      %v3309 = vmax.bf16 %v3189, %v3191
      %v3310 = vmax.bf16 %v3190, %v3192
      %v3311 = vmax.bf16 %v3191, %v3193
      %v3312 = vmax.bf16 %v3192, %v3194
      %v3313 = vmax.bf16 %v3193, %v3195
      %v3314 = vmax.bf16 %v3198, %v3200
      %v3315 = vmax.bf16 %v3199, %v3201
      %v3316 = vmax.bf16 %v3200, %v3202
      %v3317 = vmax.bf16 %v3201, %v3203
      %v3318 = vmax.bf16 %v3202, %v3204
      %v3319 = vmax.bf16 %v3203, %v3205
      %v3320 = vmax.bf16 %v3204, %v3206
      %v3321 = vmax.bf16 %v3205, %v3207
      %v3322 = vmax.bf16 %v3206, %v3208
      %v3323 = vmax.bf16 %v3207, %v3209
      %v3324 = vmax.bf16 %v3208, %v3210
      %v3325 = vmax.bf16 %v3209, %v3211
      %v3326 = vmax.bf16 %v3210, %v3212
      %v3327 = vmax.bf16 %v3211, %v3213
      %v3328 = vmax.bf16 %v3212, %v3214
      %v3329 = vmax.bf16 %v3213, %v3215
      %v3330 = vmax.bf16 %v3218, %v3220
      %v3331 = vmax.bf16 %v3219, %v3221
      %v3332 = vmax.bf16 %v3220, %v3222
      %v3333 = vmax.bf16 %v3221, %v3223
      %v3334 = vmax.bf16 %v3222, %v3224
      %v3335 = vmax.bf16 %v3223, %v3225
      %v3336 = vmax.bf16 %v3224, %v3226
      %v3337 = vmax.bf16 %v3225, %v3227
      %v3338 = vmax.bf16 %v3226, %v3228
      %v3339 = vmax.bf16 %v3227, %v3229
      %v3340 = vmax.bf16 %v3228, %v3230
      %v3341 = vmax.bf16 %v3229, %v3231
      %v3342 = vmax.bf16 %v3230, %v3232
      %v3343 = vmax.bf16 %v3231, %v3233
      %v3344 = vmax.bf16 %v3232, %v3234
      %v3345 = vmax.bf16 %v3233, %v3235
      %v3346 = vmax.bf16 %v3238, %v3240
      %v3347 = vmax.bf16 %v3239, %v3241
      %v3348 = vmax.bf16 %v3240, %v3242
      %v3349 = vmax.bf16 %v3241, %v3243
      %v3350 = vmax.bf16 %v3242, %v3244
      %v3351 = vmax.bf16 %v3243, %v3245
      %v3352 = vmax.bf16 %v3244, %v3246
      %v3353 = vmax.bf16 %v3245, %v3247
      %v3354 = vmax.bf16 %v3246, %v3248
      %v3355 = vmax.bf16 %v3247, %v3249
      %v3356 = vmax.bf16 %v3248, %v3250
      %v3357 = vmax.bf16 %v3249, %v3251
      %v3358 = vmax.bf16 %v3250, %v3252
      %v3359 = vmax.bf16 %v3251, %v3253
      %v3360 = vmax.bf16 %v3252, %v3254
      %v3361 = vmax.bf16 %v3253, %v3255
      %v3362 = vmax.bf16 %v3258, %v3260
      %v3363 = vmax.bf16 %v3259, %v3261
      %v3364 = vmax.bf16 %v3260, %v3262
      %v3365 = vmax.bf16 %v3261, %v3263
      %v3366 = vmax.bf16 %v3262, %v3264
      %v3367 = vmax.bf16 %v3263, %v3265
      %v3368 = vmax.bf16 %v3264, %v3266
      %v3369 = vmax.bf16 %v3265, %v3267
      %v3370 = vmax.bf16 %v3266, %v3268
      %v3371 = vmax.bf16 %v3267, %v3269
      %v3372 = vmax.bf16 %v3268, %v3270
      %v3373 = vmax.bf16 %v3269, %v3271
      %v3374 = vmax.bf16 %v3270, %v3272
      %v3375 = vmax.bf16 %v3271, %v3273
      %v3376 = vmax.bf16 %v3272, %v3274
      %v3377 = vmax.bf16 %v3273, %v3275
      %v3378 = vmax.bf16 %v3278, %v3280
      %v3379 = vmax.bf16 %v3279, %v3281
      %v3380 = vmax.bf16 %v3280, %v3282
      %v3381 = vmax.bf16 %v3281, %v3283
      %v3382 = vmax.bf16 %v3282, %v3284
      %v3383 = vmax.bf16 %v3283, %v3285
      %v3384 = vmax.bf16 %v3284, %v3286
      %v3385 = vmax.bf16 %v3285, %v3287
      %v3386 = vmax.bf16 %v3286, %v3288
      %v3387 = vmax.bf16 %v3287, %v3289
      %v3388 = vmax.bf16 %v3288, %v3290
      %v3389 = vmax.bf16 %v3289, %v3291
      %v3390 = vmax.bf16 %v3290, %v3292
      %v3391 = vmax.bf16 %v3291, %v3293
      %v3392 = vmax.bf16 %v3292, %v3294
      %v3393 = vmax.bf16 %v3293, %v3295
      %v3394 = vmax.bf16 %v3298, %v3182
      %v3395 = vmax.bf16 %v3299, %v3183
      %v3396 = vmax.bf16 %v3300, %v3184
      %v3397 = vmax.bf16 %v3301, %v3185
      %v3398 = vmax.bf16 %v3302, %v3186
      %v3399 = vmax.bf16 %v3303, %v3187
      %v3400 = vmax.bf16 %v3304, %v3188
      %v3401 = vmax.bf16 %v3305, %v3189
      %v3402 = vmax.bf16 %v3306, %v3190
      %v3403 = vmax.bf16 %v3307, %v3191
      %v3404 = vmax.bf16 %v3308, %v3192
      %v3405 = vmax.bf16 %v3309, %v3193
      %v3406 = vmax.bf16 %v3310, %v3194
      %v3407 = vmax.bf16 %v3311, %v3195
      %v3408 = vmax.bf16 %v3312, %v3196
      %v3409 = vmax.bf16 %v3313, %v3197
      %v3410 = vmax.bf16 %v3314, %v3202
      %v3411 = vmax.bf16 %v3315, %v3203
      %v3412 = vmax.bf16 %v3316, %v3204
      %v3413 = vmax.bf16 %v3317, %v3205
      %v3414 = vmax.bf16 %v3318, %v3206
      %v3415 = vmax.bf16 %v3319, %v3207
      %v3416 = vmax.bf16 %v3320, %v3208
      %v3417 = vmax.bf16 %v3321, %v3209
      %v3418 = vmax.bf16 %v3322, %v3210
      %v3419 = vmax.bf16 %v3323, %v3211
      %v3420 = vmax.bf16 %v3324, %v3212
      %v3421 = vmax.bf16 %v3325, %v3213
      %v3422 = vmax.bf16 %v3326, %v3214
      %v3423 = vmax.bf16 %v3327, %v3215
      %v3424 = vmax.bf16 %v3328, %v3216
      %v3425 = vmax.bf16 %v3329, %v3217
      %v3426 = vmax.bf16 %v3330, %v3222
      %v3427 = vmax.bf16 %v3331, %v3223
      %v3428 = vmax.bf16 %v3332, %v3224
      %v3429 = vmax.bf16 %v3333, %v3225
      %v3430 = vmax.bf16 %v3334, %v3226
      %v3431 = vmax.bf16 %v3335, %v3227
      %v3432 = vmax.bf16 %v3336, %v3228
      %v3433 = vmax.bf16 %v3337, %v3229
      %v3434 = vmax.bf16 %v3338, %v3230
      %v3435 = vmax.bf16 %v3339, %v3231
      %v3436 = vmax.bf16 %v3340, %v3232
      %v3437 = vmax.bf16 %v3341, %v3233
      %v3438 = vmax.bf16 %v3342, %v3234
      %v3439 = vmax.bf16 %v3343, %v3235
      %v3440 = vmax.bf16 %v3344, %v3236
      %v3441 = vmax.bf16 %v3345, %v3237
      %v3442 = vmax.bf16 %v3346, %v3242
      %v3443 = vmax.bf16 %v3347, %v3243
      %v3444 = vmax.bf16 %v3348, %v3244
      %v3445 = vmax.bf16 %v3349, %v3245
      %v3446 = vmax.bf16 %v3350, %v3246
      %v3447 = vmax.bf16 %v3351, %v3247
      %v3448 = vmax.bf16 %v3352, %v3248
      %v3449 = vmax.bf16 %v3353, %v3249
      %v3450 = vmax.bf16 %v3354, %v3250
      %v3451 = vmax.bf16 %v3355, %v3251
      %v3452 = vmax.bf16 %v3356, %v3252
      %v3453 = vmax.bf16 %v3357, %v3253
      %v3454 = vmax.bf16 %v3358, %v3254
      %v3455 = vmax.bf16 %v3359, %v3255
      %v3456 = vmax.bf16 %v3360, %v3256
      %v3457 = vmax.bf16 %v3361, %v3257
      %v3458 = vmax.bf16 %v3362, %v3262
      %v3459 = vmax.bf16 %v3363, %v3263
      %v3460 = vmax.bf16 %v3364, %v3264
      %v3461 = vmax.bf16 %v3365, %v3265
      %v3462 = vmax.bf16 %v3366, %v3266
      %v3463 = vmax.bf16 %v3367, %v3267
      %v3464 = vmax.bf16 %v3368, %v3268
      %v3465 = vmax.bf16 %v3369, %v3269
      %v3466 = vmax.bf16 %v3370, %v3270
      %v3467 = vmax.bf16 %v3371, %v3271
      %v3468 = vmax.bf16 %v3372, %v3272
      %v3469 = vmax.bf16 %v3373, %v3273
      %v3470 = vmax.bf16 %v3374, %v3274
      %v3471 = vmax.bf16 %v3375, %v3275
      %v3472 = vmax.bf16 %v3376, %v3276
      %v3473 = vmax.bf16 %v3377, %v3277
      %v3474 = vmax.bf16 %v3378, %v3282
      %v3475 = vmax.bf16 %v3379, %v3283
      %v3476 = vmax.bf16 %v3380, %v3284
      %v3477 = vmax.bf16 %v3381, %v3285
      %v3478 = vmax.bf16 %v3382, %v3286
      %v3479 = vmax.bf16 %v3383, %v3287
      %v3480 = vmax.bf16 %v3384, %v3288
      %v3481 = vmax.bf16 %v3385, %v3289
      %v3482 = vmax.bf16 %v3386, %v3290
      %v3483 = vmax.bf16 %v3387, %v3291
      %v3484 = vmax.bf16 %v3388, %v3292
      %v3485 = vmax.bf16 %v3389, %v3293
      %v3486 = vmax.bf16 %v3390, %v3294
      %v3487 = vmax.bf16 %v3391, %v3295
      %v3488 = vmax.bf16 %v3392, %v3296
      %v3489 = vmax.bf16 %v3393, %v3297
      %v3490 = vmax.bf16 %v3394, %v3410
      %v3491 = vmax.bf16 %v3395, %v3411
      %v3492 = vmax.bf16 %v3396, %v3412
      %v3493 = vmax.bf16 %v3397, %v3413
      %v3494 = vmax.bf16 %v3398, %v3414
      %v3495 = vmax.bf16 %v3399, %v3415
      %v3496 = vmax.bf16 %v3400, %v3416
      %v3497 = vmax.bf16 %v3401, %v3417
      %v3498 = vmax.bf16 %v3402, %v3418
      %v3499 = vmax.bf16 %v3403, %v3419
      %v3500 = vmax.bf16 %v3404, %v3420
      %v3501 = vmax.bf16 %v3405, %v3421
      %v3502 = vmax.bf16 %v3406, %v3422
      %v3503 = vmax.bf16 %v3407, %v3423
      %v3504 = vmax.bf16 %v3408, %v3424
      %v3505 = vmax.bf16 %v3409, %v3425
      %v3506 = vmax.bf16 %v3410, %v3426
      %v3507 = vmax.bf16 %v3411, %v3427
      %v3508 = vmax.bf16 %v3412, %v3428
      %v3509 = vmax.bf16 %v3413, %v3429
      %v3510 = vmax.bf16 %v3414, %v3430
      %v3511 = vmax.bf16 %v3415, %v3431
      %v3512 = vmax.bf16 %v3416, %v3432
      %v3513 = vmax.bf16 %v3417, %v3433
      %v3514 = vmax.bf16 %v3418, %v3434
      %v3515 = vmax.bf16 %v3419, %v3435
      %v3516 = vmax.bf16 %v3420, %v3436
      %v3517 = vmax.bf16 %v3421, %v3437
      %v3518 = vmax.bf16 %v3422, %v3438
      %v3519 = vmax.bf16 %v3423, %v3439
      %v3520 = vmax.bf16 %v3424, %v3440
      %v3521 = vmax.bf16 %v3425, %v3441
      %v3522 = vmax.bf16 %v3426, %v3442
      %v3523 = vmax.bf16 %v3427, %v3443
      %v3524 = vmax.bf16 %v3428, %v3444
      %v3525 = vmax.bf16 %v3429, %v3445
      %v3526 = vmax.bf16 %v3430, %v3446
      %v3527 = vmax.bf16 %v3431, %v3447
      %v3528 = vmax.bf16 %v3432, %v3448
      %v3529 = vmax.bf16 %v3433, %v3449
      %v3530 = vmax.bf16 %v3434, %v3450
      %v3531 = vmax.bf16 %v3435, %v3451
      %v3532 = vmax.bf16 %v3436, %v3452
      %v3533 = vmax.bf16 %v3437, %v3453
      %v3534 = vmax.bf16 %v3438, %v3454
      %v3535 = vmax.bf16 %v3439, %v3455
      %v3536 = vmax.bf16 %v3440, %v3456
      %v3537 = vmax.bf16 %v3441, %v3457
      %v3538 = vmax.bf16 %v3442, %v3458
      %v3539 = vmax.bf16 %v3443, %v3459
      %v3540 = vmax.bf16 %v3444, %v3460
      %v3541 = vmax.bf16 %v3445, %v3461
      %v3542 = vmax.bf16 %v3446, %v3462
      %v3543 = vmax.bf16 %v3447, %v3463
      %v3544 = vmax.bf16 %v3448, %v3464
      %v3545 = vmax.bf16 %v3449, %v3465
      %v3546 = vmax.bf16 %v3450, %v3466
      %v3547 = vmax.bf16 %v3451, %v3467
      %v3548 = vmax.bf16 %v3452, %v3468
      %v3549 = vmax.bf16 %v3453, %v3469
      %v3550 = vmax.bf16 %v3454, %v3470
      %v3551 = vmax.bf16 %v3455, %v3471
      %v3552 = vmax.bf16 %v3456, %v3472
      %v3553 = vmax.bf16 %v3457, %v3473
      %v3554 = vmax.bf16 %v3490, %v3426
      %v3555 = vmax.bf16 %v3491, %v3427
      %v3556 = vmax.bf16 %v3492, %v3428
      %v3557 = vmax.bf16 %v3493, %v3429
      %v3558 = vmax.bf16 %v3494, %v3430
      %v3559 = vmax.bf16 %v3495, %v3431
      %v3560 = vmax.bf16 %v3496, %v3432
      %v3561 = vmax.bf16 %v3497, %v3433
      %v3562 = vmax.bf16 %v3498, %v3434
      %v3563 = vmax.bf16 %v3499, %v3435
      %v3564 = vmax.bf16 %v3500, %v3436
      %v3565 = vmax.bf16 %v3501, %v3437
      %v3566 = vmax.bf16 %v3502, %v3438
      %v3567 = vmax.bf16 %v3503, %v3439
      %v3568 = vmax.bf16 %v3504, %v3440
      %v3569 = vmax.bf16 %v3505, %v3441
      %v3570 = vmax.bf16 %v3506, %v3442
      %v3571 = vmax.bf16 %v3507, %v3443
      %v3572 = vmax.bf16 %v3508, %v3444
      %v3573 = vmax.bf16 %v3509, %v3445
      %v3574 = vmax.bf16 %v3510, %v3446
      %v3575 = vmax.bf16 %v3511, %v3447
      %v3576 = vmax.bf16 %v3512, %v3448
      %v3577 = vmax.bf16 %v3513, %v3449
      %v3578 = vmax.bf16 %v3514, %v3450
      %v3579 = vmax.bf16 %v3515, %v3451
      %v3580 = vmax.bf16 %v3516, %v3452
      %v3581 = vmax.bf16 %v3517, %v3453
      %v3582 = vmax.bf16 %v3518, %v3454
      %v3583 = vmax.bf16 %v3519, %v3455
      %v3584 = vmax.bf16 %v3520, %v3456
      %v3585 = vmax.bf16 %v3521, %v3457
      %v3586 = vmax.bf16 %v3522, %v3458
      %v3587 = vmax.bf16 %v3523, %v3459
      %v3588 = vmax.bf16 %v3524, %v3460
      %v3589 = vmax.bf16 %v3525, %v3461
      %v3590 = vmax.bf16 %v3526, %v3462
      %v3591 = vmax.bf16 %v3527, %v3463
      %v3592 = vmax.bf16 %v3528, %v3464
      %v3593 = vmax.bf16 %v3529, %v3465
      %v3594 = vmax.bf16 %v3530, %v3466
      %v3595 = vmax.bf16 %v3531, %v3467
      %v3596 = vmax.bf16 %v3532, %v3468
      %v3597 = vmax.bf16 %v3533, %v3469
      %v3598 = vmax.bf16 %v3534, %v3470
      %v3599 = vmax.bf16 %v3535, %v3471
      %v3600 = vmax.bf16 %v3536, %v3472
      %v3601 = vmax.bf16 %v3537, %v3473
      %v3602 = vmax.bf16 %v3538, %v3474
      %v3603 = vmax.bf16 %v3539, %v3475
      %v3604 = vmax.bf16 %v3540, %v3476
      %v3605 = vmax.bf16 %v3541, %v3477
      %v3606 = vmax.bf16 %v3542, %v3478
      %v3607 = vmax.bf16 %v3543, %v3479
      %v3608 = vmax.bf16 %v3544, %v3480
      %v3609 = vmax.bf16 %v3545, %v3481
      %v3610 = vmax.bf16 %v3546, %v3482
      %v3611 = vmax.bf16 %v3547, %v3483
      %v3612 = vmax.bf16 %v3548, %v3484
      %v3613 = vmax.bf16 %v3549, %v3485
      %v3614 = vmax.bf16 %v3550, %v3486
      %v3615 = vmax.bf16 %v3551, %v3487
      %v3616 = vmax.bf16 %v3552, %v3488
      %v3617 = vmax.bf16 %v3553, %v3489
      %v3618 = vld [vmem:[%s1] sm:$0xf]
      %v3619 = vld [vmem:[%s1 + $0x4] sm:$0xf]
      %v3620 = vld [vmem:[%s1 + $0x8] sm:$0xf]
      %v3621 = vld [vmem:[%s1 + $0xc] sm:$0xf]
      %v3622 = vld [vmem:[%s1 + $0x10] sm:$0xf]
      %v3623 = vld [vmem:[%s1 + $0x14] sm:$0xf]
      %v3624 = vld [vmem:[%s1 + $0x18] sm:$0xf]
      %v3625 = vld [vmem:[%s1 + $0x1c] sm:$0xf]
      %v3626 = vld [vmem:[%s1 + $0x20] sm:$0xf]
      %v3627 = vld [vmem:[%s1 + $0x24] sm:$0xf]
      %v3628 = vld [vmem:[%s1 + $0x28] sm:$0xf]
      %v3629 = vld [vmem:[%s1 + $0x2c] sm:$0xf]
      %v3630 = vld [vmem:[%s1 + $0x30] sm:$0xf]
      %v3631 = vld [vmem:[%s1 + $0x34] sm:$0xf]
      %v3632 = vld [vmem:[%s1 + $0x38] sm:$0xf]
      %v3633 = vld [vmem:[%s1 + $0x3c] sm:$0xf]
      %v3634 = vld [vmem:[%s1 + $0x40] sm:$0xf]
      %v3635 = vld [vmem:[%s1 + $0x44] sm:$0xf]
      %v3636 = vld [vmem:[%s1 + $0x48] sm:$0xf]
      %v3637 = vld [vmem:[%s1 + $0x4c] sm:$0xf]
      %v3638 = vld [vmem:[%s1 + $0x50] sm:$0xf]
      %v3639 = vld [vmem:[%s1 + $0x54] sm:$0xf]
      %v3640 = vld [vmem:[%s1 + $0x58] sm:$0xf]
      %v3641 = vld [vmem:[%s1 + $0x5c] sm:$0xf]
      %v3642 = vld [vmem:[%s1 + $0x60] sm:$0xf]
      %v3643 = vld [vmem:[%s1 + $0x64] sm:$0xf]
      %v3644 = vld [vmem:[%s1 + $0x68] sm:$0xf]
      %v3645 = vld [vmem:[%s1 + $0x6c] sm:$0xf]
      %v3646 = vld [vmem:[%s1 + $0x70] sm:$0xf]
      %v3647 = vld [vmem:[%s1 + $0x74] sm:$0xf]
      %v3648 = vld [vmem:[%s1 + $0x78] sm:$0xf]
      %v3649 = vld [vmem:[%s1 + $0x7c] sm:$0xf]
      %v3650 = vld [vmem:[%s1 + $0x80] sm:$0xf]
      %v3651 = vld [vmem:[%s1 + $0x84] sm:$0xf]
      %v3652 = vld [vmem:[%s1 + $0x88] sm:$0xf]
      %v3653 = vld [vmem:[%s1 + $0x8c] sm:$0xf]
      %v3654 = vld [vmem:[%s1 + $0x90] sm:$0xf]
      %v3655 = vld [vmem:[%s1 + $0x94] sm:$0xf]
      %v3656 = vld [vmem:[%s1 + $0x98] sm:$0xf]
      %v3657 = vld [vmem:[%s1 + $0x9c] sm:$0xf]
      %v3658 = vld [vmem:[%s1 + $0xa0] sm:$0xf]
      %v3659 = vld [vmem:[%s1 + $0xa4] sm:$0xf]
      %v3660 = vld [vmem:[%s1 + $0xa8] sm:$0xf]
      %v3661 = vld [vmem:[%s1 + $0xac] sm:$0xf]
      %v3662 = vld [vmem:[%s1 + $0xb0] sm:$0xf]
      %v3663 = vld [vmem:[%s1 + $0xb4] sm:$0xf]
      %v3664 = vld [vmem:[%s1 + $0xb8] sm:$0xf]
      %v3665 = vld [vmem:[%s1 + $0xbc] sm:$0xf]
      %v3666 = vld [vmem:[%s1 + $0xc0] sm:$0xf]
      %v3667 = vld [vmem:[%s1 + $0xc4] sm:$0xf]
      %v3668 = vld [vmem:[%s1 + $0xc8] sm:$0xf]
      %v3669 = vld [vmem:[%s1 + $0xcc] sm:$0xf]
      %v3670 = vld [vmem:[%s1 + $0xd0] sm:$0xf]
      %v3671 = vld [vmem:[%s1 + $0xd4] sm:$0xf]
      %v3672 = vld [vmem:[%s1 + $0xd8] sm:$0xf]
      %v3673 = vld [vmem:[%s1 + $0xdc] sm:$0xf]
      %v3674 = vld [vmem:[%s1 + $0xe0] sm:$0xf]
      %v3675 = vld [vmem:[%s1 + $0xe4] sm:$0xf]
      %v3676 = vld [vmem:[%s1 + $0xe8] sm:$0xf]
      %v3677 = vld [vmem:[%s1 + $0xec] sm:$0xf]
      %v3678 = vld [vmem:[%s2] sm:$0x1]
      %v3680 = vlaneseq
      %v3681 = vshrl.u32 %v3680, 7
      %v3682 = vsub.s32 0, %v3681
      %v3683 = vrot.slane %v3678, %v3682
      %v3749 = vunpack.c.l.b16 %v3554
      %v3750 = vunpack.c.h.b16 %v3554
      %v3751 = vunpack.c.l.b16 %v3555
      %v3752 = vunpack.c.h.b16 %v3555
      %v3753 = vunpack.c.l.b16 %v3556
      %v3754 = vunpack.c.h.b16 %v3556
      %v3755 = vunpack.c.l.b16 %v3557
      %v3756 = vunpack.c.h.b16 %v3557
      %v3757 = vunpack.c.l.b16 %v3558
      %v3758 = vunpack.c.h.b16 %v3558
      %v3759 = vunpack.c.l.b16 %v3559
      %v3760 = vunpack.c.h.b16 %v3559
      %v3761 = vunpack.c.l.b16 %v3560
      %v3762 = vunpack.c.h.b16 %v3560
      %v3763 = vunpack.c.l.b16 %v3561
      %v3764 = vunpack.c.h.b16 %v3561
      %v3765 = vunpack.c.l.b16 %v3562
      %v3766 = vunpack.c.h.b16 %v3562
      %v3767 = vunpack.c.l.b16 %v3563
      %v3768 = vunpack.c.h.b16 %v3563
      %v3769 = vunpack.c.l.b16 %v3564
      %v3770 = vunpack.c.h.b16 %v3564
      %v3771 = vunpack.c.l.b16 %v3565
      %v3772 = vunpack.c.h.b16 %v3565
      %v3773 = vunpack.c.l.b16 %v3566
      %v3774 = vunpack.c.h.b16 %v3566
      %v3775 = vunpack.c.l.b16 %v3567
      %v3776 = vunpack.c.h.b16 %v3567
      %v3777 = vunpack.c.l.b16 %v3568
      %v3778 = vunpack.c.h.b16 %v3568
      %v3779 = vunpack.c.l.b16 %v3569
      %v3780 = vunpack.c.h.b16 %v3569
      %v3781 = vunpack.c.l.b16 %v3570
      %v3782 = vunpack.c.h.b16 %v3570
      %v3783 = vunpack.c.l.b16 %v3571
      %v3784 = vunpack.c.h.b16 %v3571
      %v3785 = vunpack.c.l.b16 %v3572
      %v3786 = vunpack.c.h.b16 %v3572
      %v3787 = vunpack.c.l.b16 %v3573
      %v3788 = vunpack.c.h.b16 %v3573
      %v3789 = vunpack.c.l.b16 %v3574
      %v3790 = vunpack.c.h.b16 %v3574
      %v3791 = vunpack.c.l.b16 %v3575
      %v3792 = vunpack.c.h.b16 %v3575
      %v3793 = vunpack.c.l.b16 %v3576
      %v3794 = vunpack.c.h.b16 %v3576
      %v3795 = vunpack.c.l.b16 %v3577
      %v3796 = vunpack.c.h.b16 %v3577
      %v3797 = vunpack.c.l.b16 %v3578
      %v3798 = vunpack.c.h.b16 %v3578
      %v3799 = vunpack.c.l.b16 %v3579
      %v3800 = vunpack.c.h.b16 %v3579
      %v3801 = vunpack.c.l.b16 %v3580
      %v3802 = vunpack.c.h.b16 %v3580
      %v3803 = vunpack.c.l.b16 %v3581
      %v3804 = vunpack.c.h.b16 %v3581
      %v3805 = vunpack.c.l.b16 %v3582
      %v3806 = vunpack.c.h.b16 %v3582
      %v3807 = vunpack.c.l.b16 %v3583
      %v3808 = vunpack.c.h.b16 %v3583
      %v3809 = vunpack.c.l.b16 %v3584
      %v3810 = vunpack.c.h.b16 %v3584
      %v3811 = vunpack.c.l.b16 %v3585
      %v3812 = vunpack.c.h.b16 %v3585
      %v3813 = vunpack.c.l.b16 %v3586
      %v3814 = vunpack.c.h.b16 %v3586
      %v3815 = vunpack.c.l.b16 %v3587
      %v3816 = vunpack.c.h.b16 %v3587
      %v3817 = vunpack.c.l.b16 %v3588
      %v3818 = vunpack.c.h.b16 %v3588
      %v3819 = vunpack.c.l.b16 %v3589
      %v3820 = vunpack.c.h.b16 %v3589
      %v3821 = vunpack.c.l.b16 %v3590
      %v3822 = vunpack.c.h.b16 %v3590
      %v3823 = vunpack.c.l.b16 %v3591
      %v3824 = vunpack.c.h.b16 %v3591
      %v3825 = vunpack.c.l.b16 %v3592
      %v3826 = vunpack.c.h.b16 %v3592
      %v3827 = vunpack.c.l.b16 %v3593
      %v3828 = vunpack.c.h.b16 %v3593
      %v3829 = vunpack.c.l.b16 %v3594
      %v3830 = vunpack.c.h.b16 %v3594
      %v3831 = vunpack.c.l.b16 %v3595
      %v3832 = vunpack.c.h.b16 %v3595
      %v3833 = vunpack.c.l.b16 %v3596
      %v3834 = vunpack.c.h.b16 %v3596
      %v3835 = vunpack.c.l.b16 %v3597
      %v3836 = vunpack.c.h.b16 %v3597
      %v3837 = vunpack.c.l.b16 %v3598
      %v3838 = vunpack.c.h.b16 %v3598
      %v3839 = vunpack.c.l.b16 %v3599
      %v3840 = vunpack.c.h.b16 %v3599
      %v3841 = vunpack.c.l.b16 %v3600
      %v3842 = vunpack.c.h.b16 %v3600
      %v3843 = vunpack.c.l.b16 %v3601
      %v3844 = vunpack.c.h.b16 %v3601
      %v3845 = vunpack.c.l.b16 %v3602
      %v3846 = vunpack.c.h.b16 %v3602
      %v3847 = vunpack.c.l.b16 %v3603
      %v3848 = vunpack.c.h.b16 %v3603
      %v3849 = vunpack.c.l.b16 %v3604
      %v3850 = vunpack.c.h.b16 %v3604
      %v3851 = vunpack.c.l.b16 %v3605
      %v3852 = vunpack.c.h.b16 %v3605
      %v3853 = vunpack.c.l.b16 %v3606
      %v3854 = vunpack.c.h.b16 %v3606
      %v3855 = vunpack.c.l.b16 %v3607
      %v3856 = vunpack.c.h.b16 %v3607
      %v3857 = vunpack.c.l.b16 %v3608
      %v3858 = vunpack.c.h.b16 %v3608
      %v3859 = vunpack.c.l.b16 %v3609
      %v3860 = vunpack.c.h.b16 %v3609
      %v3861 = vunpack.c.l.b16 %v3610
      %v3862 = vunpack.c.h.b16 %v3610
      %v3863 = vunpack.c.l.b16 %v3611
      %v3864 = vunpack.c.h.b16 %v3611
      %v3865 = vunpack.c.l.b16 %v3612
      %v3866 = vunpack.c.h.b16 %v3612
      %v3867 = vunpack.c.l.b16 %v3613
      %v3868 = vunpack.c.h.b16 %v3613
      %v3869 = vunpack.c.l.b16 %v3614
      %v3870 = vunpack.c.h.b16 %v3614
      %v3871 = vunpack.c.l.b16 %v3615
      %v3872 = vunpack.c.h.b16 %v3615
      %v3873 = vunpack.c.l.b16 %v3616
      %v3874 = vunpack.c.h.b16 %v3616
      %v3875 = vunpack.c.l.b16 %v3617
      %v3876 = vunpack.c.h.b16 %v3617
      %v3877 = vpack.c.b16 %v3753, %v3749
      %v3878 = vpack.c.b16 %v3754, %v3750
      %v3879 = vpack.c.b16 %v3755, %v3751
      %v3880 = vpack.c.b16 %v3756, %v3752
      %v3881 = vpack.c.b16 %v3761, %v3757
      %v3882 = vpack.c.b16 %v3762, %v3758
      %v3883 = vpack.c.b16 %v3763, %v3759
      %v3884 = vpack.c.b16 %v3764, %v3760
      %v3885 = vpack.c.b16 %v3769, %v3765
      %v3886 = vpack.c.b16 %v3770, %v3766
      %v3887 = vpack.c.b16 %v3771, %v3767
      %v3888 = vpack.c.b16 %v3772, %v3768
      %v3889 = vpack.c.b16 %v3777, %v3773
      %v3890 = vpack.c.b16 %v3778, %v3774
      %v3891 = vpack.c.b16 %v3779, %v3775
      %v3892 = vpack.c.b16 %v3780, %v3776
      %v3893 = vpack.c.b16 %v3785, %v3781
      %v3894 = vpack.c.b16 %v3786, %v3782
      %v3895 = vpack.c.b16 %v3787, %v3783
      %v3896 = vpack.c.b16 %v3788, %v3784
      %v3897 = vpack.c.b16 %v3793, %v3789
      %v3898 = vpack.c.b16 %v3794, %v3790
      %v3899 = vpack.c.b16 %v3795, %v3791
      %v3900 = vpack.c.b16 %v3796, %v3792
      %v3901 = vpack.c.b16 %v3801, %v3797
      %v3902 = vpack.c.b16 %v3802, %v3798
      %v3903 = vpack.c.b16 %v3803, %v3799
      %v3904 = vpack.c.b16 %v3804, %v3800
      %v3905 = vpack.c.b16 %v3809, %v3805
      %v3906 = vpack.c.b16 %v3810, %v3806
      %v3907 = vpack.c.b16 %v3811, %v3807
      %v3908 = vpack.c.b16 %v3812, %v3808
      %v3909 = vpack.c.b16 %v3817, %v3813
      %v3910 = vpack.c.b16 %v3818, %v3814
      %v3911 = vpack.c.b16 %v3819, %v3815
      %v3912 = vpack.c.b16 %v3820, %v3816
      %v3913 = vpack.c.b16 %v3825, %v3821
      %v3914 = vpack.c.b16 %v3826, %v3822
      %v3915 = vpack.c.b16 %v3827, %v3823
      %v3916 = vpack.c.b16 %v3828, %v3824
      %v3917 = vpack.c.b16 %v3833, %v3829
      %v3918 = vpack.c.b16 %v3834, %v3830
      %v3919 = vpack.c.b16 %v3835, %v3831
      %v3920 = vpack.c.b16 %v3836, %v3832
      %v3921 = vpack.c.b16 %v3841, %v3837
      %v3922 = vpack.c.b16 %v3842, %v3838
      %v3923 = vpack.c.b16 %v3843, %v3839
      %v3924 = vpack.c.b16 %v3844, %v3840
      %v3925 = vpack.c.b16 %v3849, %v3845
      %v3926 = vpack.c.b16 %v3850, %v3846
      %v3927 = vpack.c.b16 %v3851, %v3847
      %v3928 = vpack.c.b16 %v3852, %v3848
      %v3929 = vpack.c.b16 %v3857, %v3853
      %v3930 = vpack.c.b16 %v3858, %v3854
      %v3931 = vpack.c.b16 %v3859, %v3855
      %v3932 = vpack.c.b16 %v3860, %v3856
      %v3933 = vpack.c.b16 %v3865, %v3861
      %v3934 = vpack.c.b16 %v3866, %v3862
      %v3935 = vpack.c.b16 %v3867, %v3863
      %v3936 = vpack.c.b16 %v3868, %v3864
      %v3937 = vpack.c.b16 %v3873, %v3869
      %v3938 = vpack.c.b16 %v3874, %v3870
      %v3939 = vpack.c.b16 %v3875, %v3871
      %v3940 = vpack.c.b16 %v3876, %v3872
      %v4049 = vunpack.c.l.b16 %v3618
      %v4050 = vunpack.c.l.b16 %v3619
      %v4051 = vunpack.c.l.b16 %v3620
      %v4052 = vunpack.c.l.b16 %v3621
      %v4053 = vunpack.c.l.b16 %v3622
      %v4054 = vunpack.c.l.b16 %v3623
      %v4055 = vunpack.c.l.b16 %v3624
      %v4056 = vunpack.c.l.b16 %v3625
      %v4057 = vunpack.c.l.b16 %v3626
      %v4058 = vunpack.c.l.b16 %v3627
      %v4059 = vunpack.c.l.b16 %v3628
      %v4060 = vunpack.c.l.b16 %v3629
      %v4061 = vunpack.c.l.b16 %v3630
      %v4062 = vunpack.c.l.b16 %v3631
      %v4063 = vunpack.c.l.b16 %v3632
      %v4064 = vunpack.c.l.b16 %v3633
      %v4065 = vunpack.c.l.b16 %v3634
      %v4066 = vunpack.c.l.b16 %v3635
      %v4067 = vunpack.c.l.b16 %v3636
      %v4068 = vunpack.c.l.b16 %v3637
      %v4069 = vunpack.c.l.b16 %v3638
      %v4070 = vunpack.c.l.b16 %v3639
      %v4071 = vunpack.c.l.b16 %v3640
      %v4072 = vunpack.c.l.b16 %v3641
      %v4073 = vunpack.c.l.b16 %v3642
      %v4074 = vunpack.c.l.b16 %v3643
      %v4075 = vunpack.c.l.b16 %v3644
      %v4076 = vunpack.c.l.b16 %v3645
      %v4077 = vunpack.c.l.b16 %v3646
      %v4078 = vunpack.c.l.b16 %v3647
      %v4079 = vunpack.c.l.b16 %v3648
      %v4080 = vunpack.c.l.b16 %v3649
      %v4081 = vunpack.c.l.b16 %v3650
      %v4082 = vunpack.c.l.b16 %v3651
      %v4083 = vunpack.c.l.b16 %v3652
      %v4084 = vunpack.c.l.b16 %v3653
      %v4085 = vunpack.c.l.b16 %v3654
      %v4086 = vunpack.c.l.b16 %v3655
      %v4087 = vunpack.c.l.b16 %v3656
      %v4088 = vunpack.c.l.b16 %v3657
      %v4089 = vunpack.c.l.b16 %v3658
      %v4090 = vunpack.c.l.b16 %v3659
      %v4091 = vunpack.c.l.b16 %v3660
      %v4092 = vunpack.c.l.b16 %v3661
      %v4093 = vunpack.c.l.b16 %v3662
      %v4094 = vunpack.c.l.b16 %v3663
      %v4095 = vunpack.c.l.b16 %v3664
      %v4096 = vunpack.c.l.b16 %v3665
      %v4097 = vunpack.c.l.b16 %v3666
      %v4098 = vunpack.c.l.b16 %v3667
      %v4099 = vunpack.c.l.b16 %v3668
      %v4100 = vunpack.c.l.b16 %v3669
      %v4101 = vunpack.c.l.b16 %v3670
      %v4102 = vunpack.c.l.b16 %v3671
      %v4103 = vunpack.c.l.b16 %v3672
      %v4104 = vunpack.c.l.b16 %v3673
      %v4105 = vunpack.c.l.b16 %v3674
      %v4106 = vunpack.c.l.b16 %v3675
      %v4107 = vunpack.c.l.b16 %v3676
      %v4108 = vunpack.c.l.b16 %v3677
      %v4109 = vpack.c.b16 %v4050, %v4049
      %v4110 = vpack.c.b16 %v4052, %v4051
      %v4111 = vpack.c.b16 %v4054, %v4053
      %v4112 = vpack.c.b16 %v4056, %v4055
      %v4113 = vpack.c.b16 %v4058, %v4057
      %v4114 = vpack.c.b16 %v4060, %v4059
      %v4115 = vpack.c.b16 %v4062, %v4061
      %v4116 = vpack.c.b16 %v4064, %v4063
      %v4117 = vpack.c.b16 %v4066, %v4065
      %v4118 = vpack.c.b16 %v4068, %v4067
      %v4119 = vpack.c.b16 %v4070, %v4069
      %v4120 = vpack.c.b16 %v4072, %v4071
      %v4121 = vpack.c.b16 %v4074, %v4073
      %v4122 = vpack.c.b16 %v4076, %v4075
      %v4123 = vpack.c.b16 %v4078, %v4077
      %v4124 = vpack.c.b16 %v4080, %v4079
      %v4125 = vpack.c.b16 %v4082, %v4081
      %v4126 = vpack.c.b16 %v4084, %v4083
      %v4127 = vpack.c.b16 %v4086, %v4085
      %v4128 = vpack.c.b16 %v4088, %v4087
      %v4129 = vpack.c.b16 %v4090, %v4089
      %v4130 = vpack.c.b16 %v4092, %v4091
      %v4131 = vpack.c.b16 %v4094, %v4093
      %v4132 = vpack.c.b16 %v4096, %v4095
      %v4133 = vpack.c.b16 %v4098, %v4097
      %v4134 = vpack.c.b16 %v4100, %v4099
      %v4135 = vpack.c.b16 %v4102, %v4101
      %v4136 = vpack.c.b16 %v4104, %v4103
      %v4137 = vpack.c.b16 %v4106, %v4105
      %v4138 = vpack.c.b16 %v4108, %v4107
      %vm4169 = vcmask 785408
      %v4171 = vsel %vm4169, %v3880, 0
      %v4174 = vsel %vm4169, %v3884, 0
      %v4177 = vsel %vm4169, %v3888, 0
      %v4180 = vsel %vm4169, %v3892, 0
      %v4183 = vsel %vm4169, %v3896, 0
      %v4186 = vsel %vm4169, %v3900, 0
      %v4189 = vsel %vm4169, %v3904, 0
      %v4192 = vsel %vm4169, %v3908, 0
      %v4195 = vsel %vm4169, %v3912, 0
      %v4198 = vsel %vm4169, %v3916, 0
      %v4201 = vsel %vm4169, %v3920, 0
      %v4204 = vsel %vm4169, %v3924, 0
      %v4207 = vsel %vm4169, %v3928, 0
      %v4210 = vsel %vm4169, %v3932, 0
      %v4213 = vsel %vm4169, %v3936, 0
      %v4216 = vsel %vm4169, %v3940, 0
      %4218 = vmatprep.subr.bf16.mxu0 0
      %4219 = vmatpush1.bf16.msra.mxu0 %v4109
      %4220 = vmatprep.subr.bf16.mxu0 0
      %4221 = vmatpush1.bf16.msra.mxu0 %v4110
      %4222 = vmatprep.subr.bf16.mxu0 0
      %4223 = vmatpush1.bf16.msra.mxu0 %v4111
      %4224 = vmatprep.subr.bf16.mxu0 0
      %4225 = vmatpush1.bf16.msra.mxu0 %v4112
      %4226 = vmatprep.subr.bf16.mxu0 0
      %4227 = vmatpush1.bf16.msra.mxu0 %v4113
      %4228 = vmatprep.subr.bf16.mxu0 0
      %4229 = vmatpush1.bf16.msra.mxu0 %v4114
      %4230 = vmatprep.subr.bf16.mxu0 0
      %4231 = vmatpush1.bf16.msra.mxu0 %v4115
      %4232 = vmatprep.subr.bf16.mxu0 0
      %4233 = vmatpush1.bf16.msra.mxu0 %v4116
      %4234 = vmatprep.subr.bf16.mxu0 0
      %4235 = vmatpush1.bf16.msra.mxu0 %v4117
      %4236 = vmatprep.subr.bf16.mxu0 0
      %4237 = vmatpush1.bf16.msra.mxu0 %v4118
      %4238 = vmatprep.subr.bf16.mxu0 0
      %4239 = vmatpush1.bf16.msra.mxu0 %v4119
      %4240 = vmatprep.subr.bf16.mxu0 0
      %4241 = vmatpush1.bf16.msra.mxu0 %v4120
      %4242 = vmatprep.subr.bf16.mxu0 0
      %4243 = vmatpush1.bf16.msra.mxu0 %v4121
      %4244 = vmatprep.subr.bf16.mxu0 0
      %4245 = vmatpush1.bf16.msra.mxu0 %v4122
      %4246 = vmatprep.subr.bf16.mxu0 0
      %4247 = vmatpush1.bf16.msra.mxu0 %v4123
      %4248 = vmatprep.subr.bf16.mxu0 0
      %4249 = vmatpush1.bf16.msra.mxu0 %v4124
      %4250 = vmatprep.mubr.bf16.mxu0 %v3878
      %4251 = vmatmul.mubr.bf16.gmra.mrb[0].mxu0 %v3877
      %v4252 = vpop.f32.mrb[0].mxu0
      %v4253 = vadd.f32 %v3683, %v4252
      %v4254 = vpop.f32.mrb[0].mxu0
      %v4255 = vpop.f32.mrb[0].mxu0
      %v4256 = vadd.f32 %v3683, %v4255
      %v4257 = vpop.f32.mrb[0].mxu0
      %4258 = vmatprep.mubr.bf16.mxu0 %v3882
      %4259 = vmatmul.mubr.bf16.gmra.mrb[0].mxu0 %v3881
      %v4260 = vpop.f32.mrb[0].mxu0
      %v4261 = vadd.f32 %v3683, %v4260
      %v4262 = vpop.f32.mrb[0].mxu0
      %v4263 = vpop.f32.mrb[0].mxu0
      %v4264 = vadd.f32 %v3683, %v4263
      %v4265 = vpop.f32.mrb[0].mxu0
      %4266 = vmatprep.mubr.bf16.mxu0 %v3886
      %4267 = vmatmul.mubr.bf16.gmra.mrb[0].mxu0 %v3885
      %v4268 = vpop.f32.mrb[0].mxu0
      %v4269 = vadd.f32 %v3683, %v4268
      %v4270 = vpop.f32.mrb[0].mxu0
      %v4271 = vpop.f32.mrb[0].mxu0
      %v4272 = vadd.f32 %v3683, %v4271
      %v4273 = vpop.f32.mrb[0].mxu0
      %4274 = vmatprep.mubr.bf16.mxu0 %v3890
      %4275 = vmatmul.mubr.bf16.gmra.mrb[0].mxu0 %v3889
      %v4276 = vpop.f32.mrb[0].mxu0
      %v4277 = vadd.f32 %v3683, %v4276
      %v4278 = vpop.f32.mrb[0].mxu0
      %v4279 = vpop.f32.mrb[0].mxu0
      %v4280 = vadd.f32 %v3683, %v4279
      %v4281 = vpop.f32.mrb[0].mxu0
      %4282 = vmatprep.mubr.bf16.mxu0 %v3894
      %4283 = vmatmul.mubr.bf16.gmra.mrb[0].mxu0 %v3893
      %v4284 = vpop.f32.mrb[0].mxu0
      %v4285 = vadd.f32 %v3683, %v4284
      %v4286 = vpop.f32.mrb[0].mxu0
      %v4287 = vpop.f32.mrb[0].mxu0
      %v4288 = vadd.f32 %v3683, %v4287
      %v4289 = vpop.f32.mrb[0].mxu0
      %4290 = vmatprep.mubr.bf16.mxu0 %v3898
      %4291 = vmatmul.mubr.bf16.gmra.mrb[0].mxu0 %v3897
      %v4292 = vpop.f32.mrb[0].mxu0
      %v4293 = vadd.f32 %v3683, %v4292
      %v4294 = vpop.f32.mrb[0].mxu0
      %v4295 = vpop.f32.mrb[0].mxu0
      %v4296 = vadd.f32 %v3683, %v4295
      %v4297 = vpop.f32.mrb[0].mxu0
      %4298 = vmatprep.mubr.bf16.mxu0 %v3902
      %4299 = vmatmul.mubr.bf16.gmra.mrb[0].mxu0 %v3901
      %v4300 = vpop.f32.mrb[0].mxu0
      %v4301 = vadd.f32 %v3683, %v4300
      %v4302 = vpop.f32.mrb[0].mxu0
      %v4303 = vpop.f32.mrb[0].mxu0
      %v4304 = vadd.f32 %v3683, %v4303
      %v4305 = vpop.f32.mrb[0].mxu0
      %4306 = vmatprep.mubr.bf16.mxu0 %v3906
      %4307 = vmatmul.mubr.bf16.gmra.mrb[0].mxu0 %v3905
      %v4308 = vpop.f32.mrb[0].mxu0
      %v4309 = vadd.f32 %v3683, %v4308
      %v4310 = vpop.f32.mrb[0].mxu0
      %v4311 = vpop.f32.mrb[0].mxu0
      %v4312 = vadd.f32 %v3683, %v4311
      %v4313 = vpop.f32.mrb[0].mxu0
      %4314 = vmatprep.mubr.bf16.mxu0 %v3910
      %4315 = vmatmul.mubr.bf16.gmra.mrb[0].mxu0 %v3909
      %v4316 = vpop.f32.mrb[0].mxu0
      %v4317 = vadd.f32 %v3683, %v4316
      %v4318 = vpop.f32.mrb[0].mxu0
      %v4319 = vpop.f32.mrb[0].mxu0
      %v4320 = vadd.f32 %v3683, %v4319
      %v4321 = vpop.f32.mrb[0].mxu0
      %4322 = vmatprep.mubr.bf16.mxu0 %v3914
      %4323 = vmatmul.mubr.bf16.gmra.mrb[0].mxu0 %v3913
      %v4324 = vpop.f32.mrb[0].mxu0
      %v4325 = vadd.f32 %v3683, %v4324
      %v4326 = vpop.f32.mrb[0].mxu0
      %v4327 = vpop.f32.mrb[0].mxu0
      %v4328 = vadd.f32 %v3683, %v4327
      %v4329 = vpop.f32.mrb[0].mxu0
      %4330 = vmatprep.mubr.bf16.mxu0 %v3918
      %4331 = vmatmul.mubr.bf16.gmra.mrb[0].mxu0 %v3917
      %v4332 = vpop.f32.mrb[0].mxu0
      %v4333 = vadd.f32 %v3683, %v4332
      %v4334 = vpop.f32.mrb[0].mxu0
      %v4335 = vpop.f32.mrb[0].mxu0
      %v4336 = vadd.f32 %v3683, %v4335
      %v4337 = vpop.f32.mrb[0].mxu0
      %4338 = vmatprep.mubr.bf16.mxu0 %v3922
      %4339 = vmatmul.mubr.bf16.gmra.mrb[0].mxu0 %v3921
      %v4340 = vpop.f32.mrb[0].mxu0
      %v4341 = vadd.f32 %v3683, %v4340
      %v4342 = vpop.f32.mrb[0].mxu0
      %v4343 = vpop.f32.mrb[0].mxu0
      %v4344 = vadd.f32 %v3683, %v4343
      %v4345 = vpop.f32.mrb[0].mxu0
      %4346 = vmatprep.mubr.bf16.mxu0 %v3926
      %4347 = vmatmul.mubr.bf16.gmra.mrb[0].mxu0 %v3925
      %v4348 = vpop.f32.mrb[0].mxu0
      %v4349 = vadd.f32 %v3683, %v4348
      %v4350 = vpop.f32.mrb[0].mxu0
      %v4351 = vpop.f32.mrb[0].mxu0
      %v4352 = vadd.f32 %v3683, %v4351
      %v4353 = vpop.f32.mrb[0].mxu0
      %4354 = vmatprep.mubr.bf16.mxu0 %v3930
      %4355 = vmatmul.mubr.bf16.gmra.mrb[0].mxu0 %v3929
      %v4356 = vpop.f32.mrb[0].mxu0
      %v4357 = vadd.f32 %v3683, %v4356
      %v4358 = vpop.f32.mrb[0].mxu0
      %v4359 = vpop.f32.mrb[0].mxu0
      %v4360 = vadd.f32 %v3683, %v4359
      %v4361 = vpop.f32.mrb[0].mxu0
      %4362 = vmatprep.mubr.bf16.mxu0 %v3934
      %4363 = vmatmul.mubr.bf16.gmra.mrb[0].mxu0 %v3933
      %v4364 = vpop.f32.mrb[0].mxu0
      %v4365 = vadd.f32 %v3683, %v4364
      %v4366 = vpop.f32.mrb[0].mxu0
      %v4367 = vpop.f32.mrb[0].mxu0
      %v4368 = vadd.f32 %v3683, %v4367
      %v4369 = vpop.f32.mrb[0].mxu0
      %4370 = vmatprep.mubr.bf16.mxu0 %v3938
      %4371 = vmatmul.mubr.bf16.gmra.mrb[0].mxu0 %v3937
      %v4372 = vpop.f32.mrb[0].mxu0
      %v4373 = vadd.f32 %v3683, %v4372
      %v4374 = vpop.f32.mrb[0].mxu0
      %v4375 = vpop.f32.mrb[0].mxu0
      %v4376 = vadd.f32 %v3683, %v4375
      %v4377 = vpop.f32.mrb[0].mxu0
      %4378 = vdwg.mxu0
      %4379 = vmatprep.subr.bf16.mxu0 0
      %4380 = vmatpush1.bf16.msra.mxu0 %v4125
      %4381 = vmatprep.subr.bf16.mxu0 0
      %4382 = vmatpush1.bf16.msra.mxu0 %v4126
      %4383 = vmatprep.subr.bf16.mxu0 0
      %4384 = vmatpush1.bf16.msra.mxu0 %v4127
      %4385 = vmatprep.subr.bf16.mxu0 0
      %4386 = vmatpush1.bf16.msra.mxu0 %v4128
      %4387 = vmatprep.subr.bf16.mxu0 0
      %4388 = vmatpush1.bf16.msra.mxu0 %v4129
      %4389 = vmatprep.subr.bf16.mxu0 0
      %4390 = vmatpush1.bf16.msra.mxu0 %v4130
      %4391 = vmatprep.subr.bf16.mxu0 0
      %4392 = vmatpush1.bf16.msra.mxu0 %v4131
      %4393 = vmatprep.subr.bf16.mxu0 0
      %4394 = vmatpush1.bf16.msra.mxu0 %v4132
      %4395 = vmatprep.subr.bf16.mxu0 0
      %4396 = vmatpush1.bf16.msra.mxu0 %v4133
      %4397 = vmatprep.subr.bf16.mxu0 0
      %4398 = vmatpush1.bf16.msra.mxu0 %v4134
      %4399 = vmatprep.subr.bf16.mxu0 0
      %4400 = vmatpush1.bf16.msra.mxu0 %v4135
      %4401 = vmatprep.subr.bf16.mxu0 0
      %4402 = vmatpush1.bf16.msra.mxu0 %v4136
      %4403 = vmatprep.subr.bf16.mxu0 0
      %4404 = vmatpush1.bf16.msra.mxu0 %v4137
      %4405 = vmatprep.subr.bf16.mxu0 0
      %4406 = vmatpush1.bf16.msra.mxu0 %v4138
      %4407 = vmatprep.subr.bf16.mxu0 0
      %4408 = vmatpush1.bf16.msra.mxu0 0
      %4409 = vmatprep.subr.bf16.mxu0 0
      %4410 = vmatpush1.bf16.msra.mxu0 0
      %4411 = vmatprep.mubr.bf16.mxu0 %v4171
      %4412 = vmatmul.mubr.bf16.gmra.mrb[0].mxu0 %v3879
      %v4413 = vpop.f32.mrb[0].mxu0
      %v4414 = vadd.f32 %v4253, %v4413
      %v4415 = vpop.f32.mrb[0].mxu0
      %v4416 = vpop.f32.mrb[0].mxu0
      %v4417 = vadd.f32 %v4256, %v4416
      %v4418 = vpop.f32.mrb[0].mxu0
      %4419 = vmatprep.mubr.bf16.mxu0 %v4174
      %4420 = vmatmul.mubr.bf16.gmra.mrb[0].mxu0 %v3883
      %v4421 = vpop.f32.mrb[0].mxu0
      %v4422 = vadd.f32 %v4261, %v4421
      %v4423 = vpop.f32.mrb[0].mxu0
      %v4424 = vpop.f32.mrb[0].mxu0
      %v4425 = vadd.f32 %v4264, %v4424
      %v4426 = vpop.f32.mrb[0].mxu0
      %4427 = vmatprep.mubr.bf16.mxu0 %v4177
      %4428 = vmatmul.mubr.bf16.gmra.mrb[0].mxu0 %v3887
      %v4429 = vpop.f32.mrb[0].mxu0
      %v4430 = vadd.f32 %v4269, %v4429
      %v4431 = vpop.f32.mrb[0].mxu0
      %v4432 = vpop.f32.mrb[0].mxu0
      %v4433 = vadd.f32 %v4272, %v4432
      %v4434 = vpop.f32.mrb[0].mxu0
      %4435 = vmatprep.mubr.bf16.mxu0 %v4180
      %4436 = vmatmul.mubr.bf16.gmra.mrb[0].mxu0 %v3891
      %v4437 = vpop.f32.mrb[0].mxu0
      %v4438 = vadd.f32 %v4277, %v4437
      %v4439 = vpop.f32.mrb[0].mxu0
      %v4440 = vpop.f32.mrb[0].mxu0
      %v4441 = vadd.f32 %v4280, %v4440
      %v4442 = vpop.f32.mrb[0].mxu0
      %4443 = vmatprep.mubr.bf16.mxu0 %v4183
      %4444 = vmatmul.mubr.bf16.gmra.mrb[0].mxu0 %v3895
      %v4445 = vpop.f32.mrb[0].mxu0
      %v4446 = vadd.f32 %v4285, %v4445
      %v4447 = vpop.f32.mrb[0].mxu0
      %v4448 = vpop.f32.mrb[0].mxu0
      %v4449 = vadd.f32 %v4288, %v4448
      %v4450 = vpop.f32.mrb[0].mxu0
      %4451 = vmatprep.mubr.bf16.mxu0 %v4186
      %4452 = vmatmul.mubr.bf16.gmra.mrb[0].mxu0 %v3899
      %v4453 = vpop.f32.mrb[0].mxu0
      %v4454 = vadd.f32 %v4293, %v4453
      %v4455 = vpop.f32.mrb[0].mxu0
      %v4456 = vpop.f32.mrb[0].mxu0
      %v4457 = vadd.f32 %v4296, %v4456
      %v4458 = vpop.f32.mrb[0].mxu0
      %4459 = vmatprep.mubr.bf16.mxu0 %v4189
      %4460 = vmatmul.mubr.bf16.gmra.mrb[0].mxu0 %v3903
      %v4461 = vpop.f32.mrb[0].mxu0
      %v4462 = vadd.f32 %v4301, %v4461
      %v4463 = vpop.f32.mrb[0].mxu0
      %v4464 = vpop.f32.mrb[0].mxu0
      %v4465 = vadd.f32 %v4304, %v4464
      %v4466 = vpop.f32.mrb[0].mxu0
      %4467 = vmatprep.mubr.bf16.mxu0 %v4192
      %4468 = vmatmul.mubr.bf16.gmra.mrb[0].mxu0 %v3907
      %v4469 = vpop.f32.mrb[0].mxu0
      %v4470 = vadd.f32 %v4309, %v4469
      %v4471 = vpop.f32.mrb[0].mxu0
      %v4472 = vpop.f32.mrb[0].mxu0
      %v4473 = vadd.f32 %v4312, %v4472
      %v4474 = vpop.f32.mrb[0].mxu0
      %4475 = vmatprep.mubr.bf16.mxu0 %v4195
      %4476 = vmatmul.mubr.bf16.gmra.mrb[0].mxu0 %v3911
      %v4477 = vpop.f32.mrb[0].mxu0
      %v4478 = vadd.f32 %v4317, %v4477
      %v4479 = vpop.f32.mrb[0].mxu0
      %v4480 = vpop.f32.mrb[0].mxu0
      %v4481 = vadd.f32 %v4320, %v4480
      %v4482 = vpop.f32.mrb[0].mxu0
      %4483 = vmatprep.mubr.bf16.mxu0 %v4198
      %4484 = vmatmul.mubr.bf16.gmra.mrb[0].mxu0 %v3915
      %v4485 = vpop.f32.mrb[0].mxu0
      %v4486 = vadd.f32 %v4325, %v4485
      %v4487 = vpop.f32.mrb[0].mxu0
      %v4488 = vpop.f32.mrb[0].mxu0
      %v4489 = vadd.f32 %v4328, %v4488
      %v4490 = vpop.f32.mrb[0].mxu0
      %4491 = vmatprep.mubr.bf16.mxu0 %v4201
      %4492 = vmatmul.mubr.bf16.gmra.mrb[0].mxu0 %v3919
      %v4493 = vpop.f32.mrb[0].mxu0
      %v4494 = vadd.f32 %v4333, %v4493
      %v4495 = vpop.f32.mrb[0].mxu0
      %v4496 = vpop.f32.mrb[0].mxu0
      %v4497 = vadd.f32 %v4336, %v4496
      %v4498 = vpop.f32.mrb[0].mxu0
      %4499 = vmatprep.mubr.bf16.mxu0 %v4204
      %4500 = vmatmul.mubr.bf16.gmra.mrb[0].mxu0 %v3923
      %v4501 = vpop.f32.mrb[0].mxu0
      %v4502 = vadd.f32 %v4341, %v4501
      %v4503 = vpop.f32.mrb[0].mxu0
      %v4504 = vpop.f32.mrb[0].mxu0
      %v4505 = vadd.f32 %v4344, %v4504
      %v4506 = vpop.f32.mrb[0].mxu0
      %4507 = vmatprep.mubr.bf16.mxu0 %v4207
      %4508 = vmatmul.mubr.bf16.gmra.mrb[0].mxu0 %v3927
      %v4509 = vpop.f32.mrb[0].mxu0
      %v4510 = vadd.f32 %v4349, %v4509
      %v4511 = vpop.f32.mrb[0].mxu0
      %v4512 = vpop.f32.mrb[0].mxu0
      %v4513 = vadd.f32 %v4352, %v4512
      %v4514 = vpop.f32.mrb[0].mxu0
      %4515 = vmatprep.mubr.bf16.mxu0 %v4210
      %4516 = vmatmul.mubr.bf16.gmra.mrb[0].mxu0 %v3931
      %v4517 = vpop.f32.mrb[0].mxu0
      %v4518 = vadd.f32 %v4357, %v4517
      %v4519 = vpop.f32.mrb[0].mxu0
      %v4520 = vpop.f32.mrb[0].mxu0
      %v4521 = vadd.f32 %v4360, %v4520
      %v4522 = vpop.f32.mrb[0].mxu0
      %4523 = vmatprep.mubr.bf16.mxu0 %v4213
      %4524 = vmatmul.mubr.bf16.gmra.mrb[0].mxu0 %v3935
      %v4525 = vpop.f32.mrb[0].mxu0
      %v4526 = vadd.f32 %v4365, %v4525
      %v4527 = vpop.f32.mrb[0].mxu0
      %v4528 = vpop.f32.mrb[0].mxu0
      %v4529 = vadd.f32 %v4368, %v4528
      %v4530 = vpop.f32.mrb[0].mxu0
      %4531 = vmatprep.mubr.bf16.mxu0 %v4216
      %4532 = vmatmul.mubr.bf16.gmra.mrb[0].mxu0 %v3939
      %v4533 = vpop.f32.mrb[0].mxu0
      %v4534 = vadd.f32 %v4373, %v4533
      %v4535 = vpop.f32.mrb[0].mxu0
      %v4536 = vpop.f32.mrb[0].mxu0
      %v4537 = vadd.f32 %v4376, %v4536
      %v4538 = vpop.f32.mrb[0].mxu0
      %4539 = vdwg.mxu0
      %v4540 = vmax.f32 %v4414, 0.0
      %v4541 = vmax.f32 %v4417, 0.0
      %v4542 = vmax.f32 %v4422, 0.0
      %v4543 = vmax.f32 %v4425, 0.0
      %v4544 = vmax.f32 %v4430, 0.0
      %v4545 = vmax.f32 %v4433, 0.0
      %v4546 = vmax.f32 %v4438, 0.0
      %v4547 = vmax.f32 %v4441, 0.0
      %v4548 = vmax.f32 %v4446, 0.0
      %v4549 = vmax.f32 %v4449, 0.0
      %v4550 = vmax.f32 %v4454, 0.0
      %v4551 = vmax.f32 %v4457, 0.0
      %v4552 = vmax.f32 %v4462, 0.0
      %v4553 = vmax.f32 %v4465, 0.0
      %v4554 = vmax.f32 %v4470, 0.0
      %v4555 = vmax.f32 %v4473, 0.0
      %v4556 = vmax.f32 %v4478, 0.0
      %v4557 = vmax.f32 %v4481, 0.0
      %v4558 = vmax.f32 %v4486, 0.0
      %v4559 = vmax.f32 %v4489, 0.0
      %v4560 = vmax.f32 %v4494, 0.0
      %v4561 = vmax.f32 %v4497, 0.0
      %v4562 = vmax.f32 %v4502, 0.0
      %v4563 = vmax.f32 %v4505, 0.0
      %v4564 = vmax.f32 %v4510, 0.0
      %v4565 = vmax.f32 %v4513, 0.0
      %v4566 = vmax.f32 %v4518, 0.0
      %v4567 = vmax.f32 %v4521, 0.0
      %v4568 = vmax.f32 %v4526, 0.0
      %v4569 = vmax.f32 %v4529, 0.0
      %v4570 = vmax.f32 %v4534, 0.0
      %v4571 = vmax.f32 %v4537, 0.0
      %v4572 = vpack.c.bf16 %v4540, %v4540
      %v4573 = vpack.c.bf16 %v4541, %v4541
      %v4574 = vpack.c.bf16 %v4542, %v4542
      %v4575 = vpack.c.bf16 %v4543, %v4543
      %v4576 = vpack.c.bf16 %v4544, %v4544
      %v4577 = vpack.c.bf16 %v4545, %v4545
      %v4578 = vpack.c.bf16 %v4546, %v4546
      %v4579 = vpack.c.bf16 %v4547, %v4547
      %v4580 = vpack.c.bf16 %v4548, %v4548
      %v4581 = vpack.c.bf16 %v4549, %v4549
      %v4582 = vpack.c.bf16 %v4550, %v4550
      %v4583 = vpack.c.bf16 %v4551, %v4551
      %v4584 = vpack.c.bf16 %v4552, %v4552
      %v4585 = vpack.c.bf16 %v4553, %v4553
      %v4586 = vpack.c.bf16 %v4554, %v4554
      %v4587 = vpack.c.bf16 %v4555, %v4555
      %v4588 = vpack.c.bf16 %v4556, %v4556
      %v4589 = vpack.c.bf16 %v4557, %v4557
      %v4590 = vpack.c.bf16 %v4558, %v4558
      %v4591 = vpack.c.bf16 %v4559, %v4559
      %v4592 = vpack.c.bf16 %v4560, %v4560
      %v4593 = vpack.c.bf16 %v4561, %v4561
      %v4594 = vpack.c.bf16 %v4562, %v4562
      %v4595 = vpack.c.bf16 %v4563, %v4563
      %v4596 = vpack.c.bf16 %v4564, %v4564
      %v4597 = vpack.c.bf16 %v4565, %v4565
      %v4598 = vpack.c.bf16 %v4566, %v4566
      %v4599 = vpack.c.bf16 %v4567, %v4567
      %v4600 = vpack.c.bf16 %v4568, %v4568
      %v4601 = vpack.c.bf16 %v4569, %v4569
      %v4602 = vpack.c.bf16 %v4570, %v4570
      %v4603 = vpack.c.bf16 %v4571, %v4571
      %vm4604 = vcmask 519168
      %4605 = vst.msk [vmem:[%s170] sm:$0xf] %vm4604, %v4572
      %4606 = vst.msk [vmem:[%s170 + $0x4] sm:$0xf] %vm4604, %v4573
      %4607 = vst.msk [vmem:[%s170 + $0x8] sm:$0xf] %vm4604, %v4574
      %4608 = vst.msk [vmem:[%s170 + $0xc] sm:$0xf] %vm4604, %v4575
      %4609 = vst.msk [vmem:[%s170 + $0x10] sm:$0xf] %vm4604, %v4576
      %4610 = vst.msk [vmem:[%s170 + $0x14] sm:$0xf] %vm4604, %v4577
      %4611 = vst.msk [vmem:[%s170 + $0x18] sm:$0xf] %vm4604, %v4578
      %4612 = vst.msk [vmem:[%s170 + $0x1c] sm:$0xf] %vm4604, %v4579
      %4613 = vst.msk [vmem:[%s170 + $0x20] sm:$0xf] %vm4604, %v4580
      %4614 = vst.msk [vmem:[%s170 + $0x24] sm:$0xf] %vm4604, %v4581
      %4615 = vst.msk [vmem:[%s170 + $0x28] sm:$0xf] %vm4604, %v4582
      %4616 = vst.msk [vmem:[%s170 + $0x2c] sm:$0xf] %vm4604, %v4583
      %4617 = vst.msk [vmem:[%s170 + $0x30] sm:$0xf] %vm4604, %v4584
      %4618 = vst.msk [vmem:[%s170 + $0x34] sm:$0xf] %vm4604, %v4585
      %4619 = vst.msk [vmem:[%s170 + $0x38] sm:$0xf] %vm4604, %v4586
      %4620 = vst.msk [vmem:[%s170 + $0x3c] sm:$0xf] %vm4604, %v4587
      %4621 = vst.msk [vmem:[%s170 + $0x40] sm:$0xf] %vm4604, %v4588
      %4622 = vst.msk [vmem:[%s170 + $0x44] sm:$0xf] %vm4604, %v4589
      %4623 = vst.msk [vmem:[%s170 + $0x48] sm:$0xf] %vm4604, %v4590
      %4624 = vst.msk [vmem:[%s170 + $0x4c] sm:$0xf] %vm4604, %v4591
      %4625 = vst.msk [vmem:[%s170 + $0x50] sm:$0xf] %vm4604, %v4592
      %4626 = vst.msk [vmem:[%s170 + $0x54] sm:$0xf] %vm4604, %v4593
      %4627 = vst.msk [vmem:[%s170 + $0x58] sm:$0xf] %vm4604, %v4594
      %4628 = vst.msk [vmem:[%s170 + $0x5c] sm:$0xf] %vm4604, %v4595
      %4629 = vst.msk [vmem:[%s170 + $0x60] sm:$0xf] %vm4604, %v4596
      %4630 = vst.msk [vmem:[%s170 + $0x64] sm:$0xf] %vm4604, %v4597
      %4631 = vst.msk [vmem:[%s170 + $0x68] sm:$0xf] %vm4604, %v4598
      %4632 = vst.msk [vmem:[%s170 + $0x6c] sm:$0xf] %vm4604, %v4599
      %4633 = vst.msk [vmem:[%s170 + $0x70] sm:$0xf] %vm4604, %v4600
      %4634 = vst.msk [vmem:[%s170 + $0x74] sm:$0xf] %vm4604, %v4601
      %4635 = vst.msk [vmem:[%s170 + $0x78] sm:$0xf] %vm4604, %v4602
      %4636 = vst.msk [vmem:[%s170 + $0x7c] sm:$0xf] %vm4604, %v4603
      %p4637 = scmp.lt.s32.totalorder %s14, 1
      %s4638 = scalar_select %p4637, %s14, 1
      %s4639 = smul.addr %s4638, 32
      %s4640 = smul.addr %s4639, 4
      %s4641 = scalar_lea.vmem %s3, %s4640
      // Predicated region
      $region33: #{mixed_4b.7} parent=31 // pred_check
        %p4642 = pneg %p100
      $region34: #{mixed_4b.7} parent=31 // pred_check_branch
        %4644 = sbr.rel (%p4642) target = $region36
      $region35: #{mixed_4b.7} parent=31 // pred_region
        _
      $region36: #{mixed_4b.7} parent=31 // pred_fallthru
        _
    $region32: #{mixed_4b.7} parent=5 // pred_fallthru
      _
    %p4645 = scmp.le.s32.totalorder 2, %s9
    // Predicated region
    $region37: #{mixed_4b.7} parent=5 // pred_check
      %p4646 = pneg %p4645
    $region38: #{mixed_4b.7} parent=5 // pred_check_branch
      %4648 = sbr.rel (%p4646) target = $region40
    $region39: #{mixed_4b.7} parent=5 // pred_region
      %s4649 = ssub.s32 %s9, 2
      // Predicated region
      $region41: #{mixed_4b.7} parent=39 // pred_check
        %p4650 = pneg %p106
      $region42: #{mixed_4b.7} parent=39 // pred_check_branch
        %4652 = sbr.rel (%p4650) target = $region44
      $region43: #{mixed_4b.7} parent=39 // pred_region
        %p4653 = scmp.lt.s32.totalorder %s15, 1
        %s4654 = scalar_select %p4653, %s15, 1
        %s4655 = smul.addr %s4654, 32
        %s4656 = smul.addr %s4655, 4
        %s4657 = scalar_lea.vmem %s3, %s4656
      $region44: #{mixed_4b.7} parent=39 // pred_fallthru
        _
    $region40: #{mixed_4b.7} parent=5 // pred_fallthru
      _
  $region6: #{mixed_4b.7} parent=0 // loop_footer
    %s13 = sadd.s32 1, %s9
  $region7: #{mixed_4b.7} parent=0 // loop_footer_branch
    %8 = sbr.rel target = $region3
  $region8: #{mixed_4b.7} parent=0 // loop_exit
    _

// kernel: mixed_4b.6
$region0: #{mixed_4b.6}
  #allocation0 [shape = 'u32[]', space=smem, size = 0x4, offset = 0x4, fixed_abs, tag = 'smem constant byte address 0x4 - core index']
  #allocation1 [shape = 'u32[144,128]{1,0:T(1,128)}', space=vmem, size = 0x12000, scoped, tag = 'internal scratch']
  %s0 = inlined_call_operand.vmem [shape: bf16[2,6,64,256], index: 0, kind: input, shape index: {}]
  %s1 = inlined_call_operand.vmem [shape: bf16[3,256,256], index: 1, kind: input, shape index: {}]
  %s2 = inlined_call_operand.vmem [shape: f32[1,256], index: 2, kind: input, shape index: {}]
  %s3 = inlined_call_operand.vmem [shape: bf16[2,4,64,256], index: 3, kind: output, shape index: {}]
  %s4 = sld [smem:[#allocation0]]
  $region45: #{mixed_4b.6} parent=0
    _
  %s6 = ssub.s32 1, %s4
  %s7 = scalar_select 0, %s6, %s4
  loop: start=0, step=1, limit=4
  $region2: #{mixed_4b.6} parent=0 // loop_pre_header
    _
  $region3: #{mixed_4b.6} parent=0 // loop_header
    %s9 = sphi 0, %s13
    %p10 = scmp.ge.s32.totalorder %s9, 4
    %s16 = sphi 0, %s28
    %s17 = sphi 0, %s24
    %s18 = sphi 0, %s16
    %s19 = sphi 0, %s17
    %s20 = sphi 0, %s18
    %s21 = sphi 0, %s19
    %s33 = sphi 0, %s35
    %s36 = sphi 0, %s33
    %s37 = sphi 0, %s36
    %s53 = sphi 0, %s37
    %s57 = sphi 0, %s57
    %s59 = sphi 0, %s57
    %s60 = sphi 0, %s59
    %s74 = sphi 0, %s60
    %s78 = sphi 0, %s78
    %s80 = sphi 0, %s78
    %s81 = sphi 0, %s80
    %s95 = sphi 0, %s81
    %s103 = sphi 0, %s105
    %s106 = sphi 0, %s103
    %s107 = sphi 0, %s106
    %s123 = sphi 0, %s107
  $region4: #{mixed_4b.6} parent=0 // loop_header_branch
    %12 = sbr.rel (%p10) target = $region8
  $region5: #{mixed_4b.6} parent=0 // loop_body
    %s14 = ssub.s32 %s9, 1
    %s15 = ssub.s32 %s9, 2
    %s22 = sadd.s32 1, %s17
    %p23 = scmp.ge.s32.totalorder %s22, 1
    %s24 = scalar_select %p23, 0, %s22
    %s25 = sadd.s32 1, %s16
    %s26 = scalar_select %p23, %s25, %s16
    %p27 = scmp.ge.s32.totalorder %s26, 2
    %s28 = scalar_select %p27, 0, %s26
    %s29 = ssub.s32 %s16, %s28
    %s30 = ssub.s32 %s17, %s24
    %s31 = sor.u32 %s29, %s30
    %p32 = scmp.eq.s32.totalorder %s31, 0
    %s34 = sadd.s32 %s33, 1
    %s35 = scalar_select %p32, %s33, %s34
    %p38 = pneg %p32
    %p39 = scmp.eq.s32.totalorder %s9, 1
    %p40 = por %p38, %p39
    %p41 = scmp.ne.s32.totalorder %s33, %s36
    %p42 = scmp.eq.s32.totalorder %s9, 0
    %p43 = por %p41, %p42
    %p44 = scmp.ne.s32.totalorder %s33, %s36
    %p45 = scmp.eq.s32.totalorder %s14, 1
    %p46 = por %p44, %p45
    %p47 = scmp.ne.s32.totalorder %s36, %s37
    %p48 = scmp.eq.s32.totalorder %s14, 0
    %p49 = por %p47, %p48
    %p50 = scmp.ne.s32.totalorder %s36, %s37
    %p51 = scmp.eq.s32.totalorder %s15, 1
    %p52 = por %p50, %p51
    %p54 = scmp.ne.s32.totalorder %s37, %s53
    %p55 = scmp.eq.s32.totalorder %s15, 0
    %p56 = por %p54, %p55
    %s58 = sadd.s32 %s57, 1
    %p61 = scmp.eq.s32.totalorder %s9, 1
    %p62 = scmp.ne.s32.totalorder %s57, %s59
    %p63 = scmp.eq.s32.totalorder %s9, 0
    %p64 = por %p62, %p63
    %p65 = scmp.ne.s32.totalorder %s57, %s59
    %p66 = scmp.eq.s32.totalorder %s14, 1
    %p67 = por %p65, %p66
    %p68 = scmp.ne.s32.totalorder %s59, %s60
    %p69 = scmp.eq.s32.totalorder %s14, 0
    %p70 = por %p68, %p69
    %p71 = scmp.ne.s32.totalorder %s59, %s60
    %p72 = scmp.eq.s32.totalorder %s15, 1
    %p73 = por %p71, %p72
    %p75 = scmp.ne.s32.totalorder %s60, %s74
    %p76 = scmp.eq.s32.totalorder %s15, 0
    %p77 = por %p75, %p76
    %s79 = sadd.s32 %s78, 1
    %p82 = scmp.eq.s32.totalorder %s9, 1
    %p83 = scmp.ne.s32.totalorder %s78, %s80
    %p84 = scmp.eq.s32.totalorder %s9, 0
    %p85 = por %p83, %p84
    %p86 = scmp.ne.s32.totalorder %s78, %s80
    %p87 = scmp.eq.s32.totalorder %s14, 1
    %p88 = por %p86, %p87
    %p89 = scmp.ne.s32.totalorder %s80, %s81
    %p90 = scmp.eq.s32.totalorder %s14, 0
    %p91 = por %p89, %p90
    %p92 = scmp.ne.s32.totalorder %s80, %s81
    %p93 = scmp.eq.s32.totalorder %s15, 1
    %p94 = por %p92, %p93
    %p96 = scmp.ne.s32.totalorder %s81, %s95
    %p97 = scmp.eq.s32.totalorder %s15, 0
    %p98 = por %p96, %p97
    %s99 = ssub.s32 %s16, %s28
    %s100 = ssub.s32 %s17, %s24
    %s101 = sor.u32 %s99, %s100
    %p102 = scmp.eq.s32.totalorder %s101, 0
    %s104 = sadd.s32 %s103, 1
    %s105 = scalar_select %p102, %s103, %s104
    %p108 = pneg %p102
    %p109 = scmp.eq.s32.totalorder %s9, 1
    %p110 = por %p108, %p109
    %p111 = scmp.ne.s32.totalorder %s103, %s106
    %p112 = scmp.eq.s32.totalorder %s9, 0
    %p113 = por %p111, %p112
    %p114 = scmp.ne.s32.totalorder %s103, %s106
    %p115 = scmp.eq.s32.totalorder %s14, 1
    %p116 = por %p114, %p115
    %p117 = scmp.ne.s32.totalorder %s106, %s107
    %p118 = scmp.eq.s32.totalorder %s14, 0
    %p119 = por %p117, %p118
    %p120 = scmp.ne.s32.totalorder %s106, %s107
    %p121 = scmp.eq.s32.totalorder %s15, 1
    %p122 = por %p120, %p121
    %p124 = scmp.ne.s32.totalorder %s107, %s123
    %p125 = scmp.eq.s32.totalorder %s15, 0
    %p126 = por %p124, %p125
    %p127 = scmp.le.s32.totalorder 1, %s9
    %p128 = scmp.lt.s32.totalorder %s9, 3
    %p129 = pnand %p127, %p128
    %p130 = pneg %p129
    // Predicated region
    $region9: #{mixed_4b.6} parent=5 // pred_check
      _
    $region10: #{mixed_4b.6} parent=5 // pred_check_branch
      %132 = sbr.rel (%p129) target = $region12
    $region11: #{mixed_4b.6} parent=5 // pred_region
      %s133 = ssub.s32 %s9, 1
      // Predicated region
      $region13: #{mixed_4b.6} parent=11 // pred_check
        %p134 = pneg %p70
      $region14: #{mixed_4b.6} parent=11 // pred_check_branch
        %136 = sbr.rel (%p134) target = $region16
      $region15: #{mixed_4b.6} parent=11 // pred_region
        _
      $region16: #{mixed_4b.6} parent=11 // pred_fallthru
        _
      // Predicated region
      $region17: #{mixed_4b.6} parent=11 // pred_check
        %p137 = pneg %p91
      $region18: #{mixed_4b.6} parent=11 // pred_check_branch
        %139 = sbr.rel (%p137) target = $region20
      $region19: #{mixed_4b.6} parent=11 // pred_region
        _
      $region20: #{mixed_4b.6} parent=11 // pred_fallthru
        _
    $region12: #{mixed_4b.6} parent=5 // pred_fallthru
      _
    %p140 = scmp.lt.s32.totalorder %s9, 2
    // Predicated region
    $region21: #{mixed_4b.6} parent=5 // pred_check
      %p141 = pneg %p140
    $region22: #{mixed_4b.6} parent=5 // pred_check_branch
      %143 = sbr.rel (%p141) target = $region24
    $region23: #{mixed_4b.6} parent=5 // pred_region
      // Predicated region
      $region25: #{mixed_4b.6} parent=23 // pred_check
        %p144 = pneg %p43
      $region26: #{mixed_4b.6} parent=23 // pred_check_branch
        %146 = sbr.rel (%p144) target = $region28
      $region27: #{mixed_4b.6} parent=23 // pred_region
        %s147 = smul.u32 8, %s17
        %p148 = scmp.lt.s32.totalorder %s16, 1
        %s149 = scalar_select %p148, %s16, 1
        %p150 = scmp.lt.s32.totalorder %s147, 7
        %s151 = scalar_select %p150, %s147, 7
        %s152 = smul.addr %s151, 2
        %s153 = smul.addr %s149, 96
        %s154 = sadd.s32 %s152, %s153
        %s155 = smul.addr %s154, 4
        %s156 = scalar_lea.vmem %s0, %s155
        %s157 = smul.u32 8, %s17
      $region28: #{mixed_4b.6} parent=23 // pred_fallthru
        _
    $region24: #{mixed_4b.6} parent=5 // pred_fallthru
      _
    %p158 = scmp.le.s32.totalorder 1, %s9
    %p159 = scmp.lt.s32.totalorder %s9, 3
    %p160 = pnand %p158, %p159
    %p161 = pneg %p160
    // Predicated region
    $region29: #{mixed_4b.6} parent=5 // pred_check
      _
    $region30: #{mixed_4b.6} parent=5 // pred_check_branch
      %163 = sbr.rel (%p160) target = $region32
    $region31: #{mixed_4b.6} parent=5 // pred_region
      %s164 = ssub.s32 %s9, 1
      %s165 = smul.u32 8, %s19
      %p166 = scmp.lt.s32.totalorder %s18, 1
      %s167 = scalar_select %p166, %s18, 1
      %p168 = scmp.lt.s32.totalorder %s165, 7
      %s169 = scalar_select %p168, %s165, 7
      %s170 = smul.addr %s169, 2
      %s171 = smul.addr %s167, 96
      %s172 = sadd.s32 %s170, %s171
      %s173 = smul.addr %s172, 4
      %s174 = scalar_lea.vmem %s0, %s173
      %p175 = pneg %p49
      %p176 = pneg %p46
      %p177 = pneg %p70
      %p178 = pneg %p67
      %p179 = pneg %p91
      %p180 = pneg %p88
      %p181 = pneg %p119
      %p182 = pneg %p116
      %s183 = smul.u32 8, %s19
      %p184 = scmp.lt.s32.totalorder %s18, 1
      %s185 = scalar_select %p184, %s18, 1
      %p186 = scmp.lt.s32.totalorder %s183, 7
      %s187 = scalar_select %p186, %s183, 7
      %s188 = smul.addr %s187, 2
      %s189 = smul.addr %s185, 64
      %s190 = sadd.s32 %s188, %s189
      %s191 = smul.addr %s190, 4
      %s192 = scalar_lea.vmem %s3, %s191
      %s193 = smul.u32 8, %s19
      %p194 = scmp.lt.s32.totalorder %s18, 1
      %s195 = scalar_select %p194, %s18, 1
      %p196 = scmp.lt.s32.totalorder %s193, 7
      %s197 = scalar_select %p196, %s193, 7
      %s198 = smul.addr %s197, 2
      %s199 = smul.addr %s195, 96
      %s200 = sadd.s32 %s198, %s199
      %s201 = smul.addr %s200, 4
      %s202 = scalar_lea.vmem %s0, %s201
      %s203 = smul.u32 8, %s19
      %s204 = smul.u32 8, %s19
      %p205 = scmp.lt.s32.totalorder %s18, 1
      %s206 = scalar_select %p205, %s18, 1
      %p207 = scmp.lt.s32.totalorder %s204, 7
      %s208 = scalar_select %p207, %s204, 7
      %s209 = smul.addr %s208, 2
      %s210 = smul.addr %s206, 64
      %s211 = sadd.s32 %s209, %s210
      %s212 = smul.addr %s211, 4
      %s213 = scalar_lea.vmem %s3, %s212
      %s214 = smul.u32 8, %s19
      %v215 = vld [vmem:[%s202] sm:$0xff]
      %v216 = vld [vmem:[%s202 + $0x8] sm:$0xff]
      %v217 = vld [vmem:[%s202 + $0x10] sm:$0xff]
      %v218 = vld [vmem:[%s202 + $0x18] sm:$0xff]
      %v219 = vld [vmem:[%s202 + $0x20] sm:$0xff]
      %v220 = vld [vmem:[%s202 + $0x28] sm:$0xff]
      %v221 = vld [vmem:[%s202 + $0x30] sm:$0xff]
      %v222 = vld [vmem:[%s202 + $0x38] sm:$0xff]
      %v223 = vld [vmem:[%s202 + $0x40] sm:$0xff]
      %v224 = vld [vmem:[%s202 + $0x48] sm:$0xff]
      %v225 = vld [vmem:[%s202 + $0x50] sm:$0xff]
      %v226 = vld [vmem:[%s202 + $0x58] sm:$0xff]
      %v227 = vld [vmem:[%s202 + $0x60] sm:$0xff]
      %v228 = vld [vmem:[%s202 + $0x68] sm:$0xff]
      %v229 = vld [vmem:[%s202 + $0x70] sm:$0xff]
      %v230 = vld [vmem:[%s202 + $0x78] sm:$0xff]
      %v231 = vld [vmem:[%s202 + $0x80] sm:$0xff]
      %v232 = vld [vmem:[%s202 + $0x88] sm:$0xff]
      %v233 = vld [vmem:[%s202 + $0x90] sm:$0xff]
      %v234 = vld [vmem:[%s202 + $0x98] sm:$0xff]
      %v235 = vld [vmem:[%s202 + $0xa0] sm:$0xff]
      %v236 = vld [vmem:[%s202 + $0xa8] sm:$0xff]
      %v237 = vld [vmem:[%s202 + $0xb0] sm:$0xff]
      %v238 = vld [vmem:[%s202 + $0xb8] sm:$0xff]
      %v239 = vld [vmem:[%s202 + $0xc0] sm:$0xff]
      %v240 = vld [vmem:[%s202 + $0xc8] sm:$0xff]
      %v241 = vld [vmem:[%s202 + $0xd0] sm:$0xff]
      %v242 = vld [vmem:[%s202 + $0xd8] sm:$0xff]
      %v243 = vld [vmem:[%s202 + $0xe0] sm:$0xff]
      %v244 = vld [vmem:[%s202 + $0xe8] sm:$0xff]
      %v245 = vld [vmem:[%s202 + $0xf0] sm:$0xff]
      %v246 = vld [vmem:[%s202 + $0xf8] sm:$0xff]
      %v247 = vld [vmem:[%s202 + $0x100] sm:$0xff]
      %v248 = vld [vmem:[%s202 + $0x108] sm:$0xff]
      %v249 = vld [vmem:[%s202 + $0x110] sm:$0xff]
      %v250 = vld [vmem:[%s202 + $0x118] sm:$0xff]
      %v251 = vld [vmem:[%s202 + $0x120] sm:$0xff]
      %v252 = vld [vmem:[%s202 + $0x128] sm:$0xff]
      %v253 = vld [vmem:[%s202 + $0x130] sm:$0xff]
      %v254 = vld [vmem:[%s202 + $0x138] sm:$0xff]
      %v255 = vld [vmem:[%s202 + $0x140] sm:$0xff]
      %v256 = vld [vmem:[%s202 + $0x148] sm:$0xff]
      %v257 = vld [vmem:[%s202 + $0x150] sm:$0xff]
      %v258 = vld [vmem:[%s202 + $0x158] sm:$0xff]
      %v259 = vld [vmem:[%s202 + $0x160] sm:$0xff]
      %v260 = vld [vmem:[%s202 + $0x168] sm:$0xff]
      %v261 = vld [vmem:[%s202 + $0x170] sm:$0xff]
      %v262 = vld [vmem:[%s202 + $0x178] sm:$0xff]
      %v263 = vld [vmem:[%s1] sm:$0xff]
      %v264 = vld [vmem:[%s1 + $0x8] sm:$0xff]
      %v265 = vld [vmem:[%s1 + $0x10] sm:$0xff]
      %v266 = vld [vmem:[%s1 + $0x18] sm:$0xff]
      %v267 = vld [vmem:[%s1 + $0x20] sm:$0xff]
      %v268 = vld [vmem:[%s1 + $0x28] sm:$0xff]
      %v269 = vld [vmem:[%s1 + $0x30] sm:$0xff]
      %v270 = vld [vmem:[%s1 + $0x38] sm:$0xff]
      %v271 = vld [vmem:[%s1 + $0x40] sm:$0xff]
      %v272 = vld [vmem:[%s1 + $0x48] sm:$0xff]
      %v273 = vld [vmem:[%s1 + $0x50] sm:$0xff]
      %v274 = vld [vmem:[%s1 + $0x58] sm:$0xff]
      %v275 = vld [vmem:[%s1 + $0x60] sm:$0xff]
      %v276 = vld [vmem:[%s1 + $0x68] sm:$0xff]
      %v277 = vld [vmem:[%s1 + $0x70] sm:$0xff]
      %v278 = vld [vmem:[%s1 + $0x78] sm:$0xff]
      %v279 = vld [vmem:[%s1 + $0x80] sm:$0xff]
      %v280 = vld [vmem:[%s1 + $0x88] sm:$0xff]
      %v281 = vld [vmem:[%s1 + $0x90] sm:$0xff]
      %v282 = vld [vmem:[%s1 + $0x98] sm:$0xff]
      %v283 = vld [vmem:[%s1 + $0xa0] sm:$0xff]
      %v284 = vld [vmem:[%s1 + $0xa8] sm:$0xff]
      %v285 = vld [vmem:[%s1 + $0xb0] sm:$0xff]
      %v286 = vld [vmem:[%s1 + $0xb8] sm:$0xff]
      %v287 = vld [vmem:[%s1 + $0xc0] sm:$0xff]
      %v288 = vld [vmem:[%s1 + $0xc8] sm:$0xff]
      %v289 = vld [vmem:[%s1 + $0xd0] sm:$0xff]
      %v290 = vld [vmem:[%s1 + $0xd8] sm:$0xff]
      %v291 = vld [vmem:[%s1 + $0xe0] sm:$0xff]
      %v292 = vld [vmem:[%s1 + $0xe8] sm:$0xff]
      %v293 = vld [vmem:[%s1 + $0xf0] sm:$0xff]
      %v294 = vld [vmem:[%s1 + $0xf8] sm:$0xff]
      %s295 = scalar_lea.vmem %s1, 256
      %v296 = vld [vmem:[%s295] sm:$0xff]
      %v297 = vld [vmem:[%s295 + $0x8] sm:$0xff]
      %v298 = vld [vmem:[%s295 + $0x10] sm:$0xff]
      %v299 = vld [vmem:[%s295 + $0x18] sm:$0xff]
      %v300 = vld [vmem:[%s295 + $0x20] sm:$0xff]
      %v301 = vld [vmem:[%s295 + $0x28] sm:$0xff]
      %v302 = vld [vmem:[%s295 + $0x30] sm:$0xff]
      %v303 = vld [vmem:[%s295 + $0x38] sm:$0xff]
      %v304 = vld [vmem:[%s295 + $0x40] sm:$0xff]
      %v305 = vld [vmem:[%s295 + $0x48] sm:$0xff]
      %v306 = vld [vmem:[%s295 + $0x50] sm:$0xff]
      %v307 = vld [vmem:[%s295 + $0x58] sm:$0xff]
      %v308 = vld [vmem:[%s295 + $0x60] sm:$0xff]
      %v309 = vld [vmem:[%s295 + $0x68] sm:$0xff]
      %v310 = vld [vmem:[%s295 + $0x70] sm:$0xff]
      %v311 = vld [vmem:[%s295 + $0x78] sm:$0xff]
      %v312 = vld [vmem:[%s295 + $0x80] sm:$0xff]
      %v313 = vld [vmem:[%s295 + $0x88] sm:$0xff]
      %v314 = vld [vmem:[%s295 + $0x90] sm:$0xff]
      %v315 = vld [vmem:[%s295 + $0x98] sm:$0xff]
      %v316 = vld [vmem:[%s295 + $0xa0] sm:$0xff]
      %v317 = vld [vmem:[%s295 + $0xa8] sm:$0xff]
      %v318 = vld [vmem:[%s295 + $0xb0] sm:$0xff]
      %v319 = vld [vmem:[%s295 + $0xb8] sm:$0xff]
      %v320 = vld [vmem:[%s295 + $0xc0] sm:$0xff]
      %v321 = vld [vmem:[%s295 + $0xc8] sm:$0xff]
      %v322 = vld [vmem:[%s295 + $0xd0] sm:$0xff]
      %v323 = vld [vmem:[%s295 + $0xd8] sm:$0xff]
      %v324 = vld [vmem:[%s295 + $0xe0] sm:$0xff]
      %v325 = vld [vmem:[%s295 + $0xe8] sm:$0xff]
      %v326 = vld [vmem:[%s295 + $0xf0] sm:$0xff]
      %v327 = vld [vmem:[%s295 + $0xf8] sm:$0xff]
      %v360 = vunpack.c.l.b16 %v223
      %v361 = vunpack.c.h.b16 %v223
      %v362 = vunpack.c.l.b16 %v224
      %v363 = vunpack.c.h.b16 %v224
      %v364 = vunpack.c.l.b16 %v225
      %v365 = vunpack.c.h.b16 %v225
      %v366 = vunpack.c.l.b16 %v226
      %v367 = vunpack.c.h.b16 %v226
      %v368 = vunpack.c.l.b16 %v227
      %v369 = vunpack.c.h.b16 %v227
      %v370 = vunpack.c.l.b16 %v228
      %v371 = vunpack.c.h.b16 %v228
      %v372 = vunpack.c.l.b16 %v229
      %v373 = vunpack.c.h.b16 %v229
      %v374 = vunpack.c.l.b16 %v230
      %v375 = vunpack.c.h.b16 %v230
      %v376 = vunpack.c.l.b16 %v231
      %v377 = vunpack.c.h.b16 %v231
      %v378 = vunpack.c.l.b16 %v232
      %v379 = vunpack.c.h.b16 %v232
      %v380 = vunpack.c.l.b16 %v233
      %v381 = vunpack.c.h.b16 %v233
      %v382 = vunpack.c.l.b16 %v234
      %v383 = vunpack.c.h.b16 %v234
      %v384 = vunpack.c.l.b16 %v235
      %v385 = vunpack.c.h.b16 %v235
      %v386 = vunpack.c.l.b16 %v236
      %v387 = vunpack.c.h.b16 %v236
      %v388 = vunpack.c.l.b16 %v237
      %v389 = vunpack.c.h.b16 %v237
      %v390 = vunpack.c.l.b16 %v238
      %v391 = vunpack.c.h.b16 %v238
      %v392 = vunpack.c.l.b16 %v239
      %v393 = vunpack.c.h.b16 %v239
      %v394 = vunpack.c.l.b16 %v240
      %v395 = vunpack.c.h.b16 %v240
      %v396 = vunpack.c.l.b16 %v241
      %v397 = vunpack.c.h.b16 %v241
      %v398 = vunpack.c.l.b16 %v242
      %v399 = vunpack.c.h.b16 %v242
      %v400 = vunpack.c.l.b16 %v243
      %v401 = vunpack.c.h.b16 %v243
      %v402 = vunpack.c.l.b16 %v244
      %v403 = vunpack.c.h.b16 %v244
      %v404 = vunpack.c.l.b16 %v245
      %v405 = vunpack.c.h.b16 %v245
      %v406 = vunpack.c.l.b16 %v246
      %v407 = vunpack.c.h.b16 %v246
      %v408 = vunpack.c.l.b16 %v247
      %v409 = vunpack.c.h.b16 %v247
      %v410 = vunpack.c.l.b16 %v248
      %v411 = vunpack.c.h.b16 %v248
      %v412 = vunpack.c.l.b16 %v249
      %v413 = vunpack.c.h.b16 %v249
      %v414 = vunpack.c.l.b16 %v250
      %v415 = vunpack.c.h.b16 %v250
      %v416 = vunpack.c.l.b16 %v251
      %v417 = vunpack.c.h.b16 %v251
      %v418 = vunpack.c.l.b16 %v252
      %v419 = vunpack.c.h.b16 %v252
      %v420 = vunpack.c.l.b16 %v253
      %v421 = vunpack.c.h.b16 %v253
      %v422 = vunpack.c.l.b16 %v254
      %v423 = vunpack.c.h.b16 %v254
      %v424 = vpack.c.b16 %v362, %v360
      %v425 = vpack.c.b16 %v363, %v361
      %v426 = vpack.c.b16 %v366, %v364
      %v427 = vpack.c.b16 %v367, %v365
      %v428 = vpack.c.b16 %v370, %v368
      %v429 = vpack.c.b16 %v371, %v369
      %v430 = vpack.c.b16 %v374, %v372
      %v431 = vpack.c.b16 %v375, %v373
      %v432 = vpack.c.b16 %v378, %v376
      %v433 = vpack.c.b16 %v379, %v377
      %v434 = vpack.c.b16 %v382, %v380
      %v435 = vpack.c.b16 %v383, %v381
      %v436 = vpack.c.b16 %v386, %v384
      %v437 = vpack.c.b16 %v387, %v385
      %v438 = vpack.c.b16 %v390, %v388
      %v439 = vpack.c.b16 %v391, %v389
      %v440 = vpack.c.b16 %v394, %v392
      %v441 = vpack.c.b16 %v395, %v393
      %v442 = vpack.c.b16 %v398, %v396
      %v443 = vpack.c.b16 %v399, %v397
      %v444 = vpack.c.b16 %v402, %v400
      %v445 = vpack.c.b16 %v403, %v401
      %v446 = vpack.c.b16 %v406, %v404
      %v447 = vpack.c.b16 %v407, %v405
      %v448 = vpack.c.b16 %v410, %v408
      %v449 = vpack.c.b16 %v411, %v409
      %v450 = vpack.c.b16 %v414, %v412
      %v451 = vpack.c.b16 %v415, %v413
      %v452 = vpack.c.b16 %v418, %v416
      %v453 = vpack.c.b16 %v419, %v417
      %v454 = vpack.c.b16 %v422, %v420
      %v455 = vpack.c.b16 %v423, %v421
      %v520 = vunpack.c.l.b16 %v296
      %v521 = vunpack.c.h.b16 %v296
      %v522 = vunpack.c.l.b16 %v297
      %v523 = vunpack.c.h.b16 %v297
      %v524 = vunpack.c.l.b16 %v298
      %v525 = vunpack.c.h.b16 %v298
      %v526 = vunpack.c.l.b16 %v299
      %v527 = vunpack.c.h.b16 %v299
      %v528 = vunpack.c.l.b16 %v300
      %v529 = vunpack.c.h.b16 %v300
      %v530 = vunpack.c.l.b16 %v301
      %v531 = vunpack.c.h.b16 %v301
      %v532 = vunpack.c.l.b16 %v302
      %v533 = vunpack.c.h.b16 %v302
      %v534 = vunpack.c.l.b16 %v303
      %v535 = vunpack.c.h.b16 %v303
      %v536 = vunpack.c.l.b16 %v304
      %v537 = vunpack.c.h.b16 %v304
      %v538 = vunpack.c.l.b16 %v305
      %v539 = vunpack.c.h.b16 %v305
      %v540 = vunpack.c.l.b16 %v306
      %v541 = vunpack.c.h.b16 %v306
      %v542 = vunpack.c.l.b16 %v307
      %v543 = vunpack.c.h.b16 %v307
      %v544 = vunpack.c.l.b16 %v308
      %v545 = vunpack.c.h.b16 %v308
      %v546 = vunpack.c.l.b16 %v309
      %v547 = vunpack.c.h.b16 %v309
      %v548 = vunpack.c.l.b16 %v310
      %v549 = vunpack.c.h.b16 %v310
      %v550 = vunpack.c.l.b16 %v311
      %v551 = vunpack.c.h.b16 %v311
      %v552 = vunpack.c.l.b16 %v312
      %v553 = vunpack.c.h.b16 %v312
      %v554 = vunpack.c.l.b16 %v313
      %v555 = vunpack.c.h.b16 %v313
      %v556 = vunpack.c.l.b16 %v314
      %v557 = vunpack.c.h.b16 %v314
      %v558 = vunpack.c.l.b16 %v315
      %v559 = vunpack.c.h.b16 %v315
      %v560 = vunpack.c.l.b16 %v316
      %v561 = vunpack.c.h.b16 %v316
      %v562 = vunpack.c.l.b16 %v317
      %v563 = vunpack.c.h.b16 %v317
      %v564 = vunpack.c.l.b16 %v318
      %v565 = vunpack.c.h.b16 %v318
      %v566 = vunpack.c.l.b16 %v319
      %v567 = vunpack.c.h.b16 %v319
      %v568 = vunpack.c.l.b16 %v320
      %v569 = vunpack.c.h.b16 %v320
      %v570 = vunpack.c.l.b16 %v321
      %v571 = vunpack.c.h.b16 %v321
      %v572 = vunpack.c.l.b16 %v322
      %v573 = vunpack.c.h.b16 %v322
      %v574 = vunpack.c.l.b16 %v323
      %v575 = vunpack.c.h.b16 %v323
      %v576 = vunpack.c.l.b16 %v324
      %v577 = vunpack.c.h.b16 %v324
      %v578 = vunpack.c.l.b16 %v325
      %v579 = vunpack.c.h.b16 %v325
      %v580 = vunpack.c.l.b16 %v326
      %v581 = vunpack.c.h.b16 %v326
      %v582 = vunpack.c.l.b16 %v327
      %v583 = vunpack.c.h.b16 %v327
      %v584 = vpack.c.b16 %v522, %v520
      %v585 = vpack.c.b16 %v523, %v521
      %v586 = vpack.c.b16 %v526, %v524
      %v587 = vpack.c.b16 %v527, %v525
      %v588 = vpack.c.b16 %v530, %v528
      %v589 = vpack.c.b16 %v531, %v529
      %v590 = vpack.c.b16 %v534, %v532
      %v591 = vpack.c.b16 %v535, %v533
      %v592 = vpack.c.b16 %v538, %v536
      %v593 = vpack.c.b16 %v539, %v537
      %v594 = vpack.c.b16 %v542, %v540
      %v595 = vpack.c.b16 %v543, %v541
      %v596 = vpack.c.b16 %v546, %v544
      %v597 = vpack.c.b16 %v547, %v545
      %v598 = vpack.c.b16 %v550, %v548
      %v599 = vpack.c.b16 %v551, %v549
      %v600 = vpack.c.b16 %v554, %v552
      %v601 = vpack.c.b16 %v555, %v553
      %v602 = vpack.c.b16 %v558, %v556
      %v603 = vpack.c.b16 %v559, %v557
      %v604 = vpack.c.b16 %v562, %v560
      %v605 = vpack.c.b16 %v563, %v561
      %v606 = vpack.c.b16 %v566, %v564
      %v607 = vpack.c.b16 %v567, %v565
      %v608 = vpack.c.b16 %v570, %v568
      %v609 = vpack.c.b16 %v571, %v569
      %v610 = vpack.c.b16 %v574, %v572
      %v611 = vpack.c.b16 %v575, %v573
      %v612 = vpack.c.b16 %v578, %v576
      %v613 = vpack.c.b16 %v579, %v577
      %v614 = vpack.c.b16 %v582, %v580
      %v615 = vpack.c.b16 %v583, %v581
      %648 = vmatprep.subr.bf16.mxu0 %v585
      %649 = vmatpush1.bf16.msra.mxu0 %v584
      %650 = vmatprep.subr.bf16.mxu0 %v587
      %651 = vmatpush1.bf16.msra.mxu0 %v586
      %652 = vmatprep.subr.bf16.mxu0 %v589
      %653 = vmatpush1.bf16.msra.mxu0 %v588
      %654 = vmatprep.subr.bf16.mxu0 %v591
      %655 = vmatpush1.bf16.msra.mxu0 %v590
      %656 = vmatprep.subr.bf16.mxu0 %v593
      %657 = vmatpush1.bf16.msra.mxu0 %v592
      %658 = vmatprep.subr.bf16.mxu0 %v595
      %659 = vmatpush1.bf16.msra.mxu0 %v594
      %660 = vmatprep.subr.bf16.mxu0 %v597
      %661 = vmatpush1.bf16.msra.mxu0 %v596
      %662 = vmatprep.subr.bf16.mxu0 %v599
      %663 = vmatpush1.bf16.msra.mxu0 %v598
      %664 = vmatprep.subr.bf16.mxu0 %v601
      %665 = vmatpush1.bf16.msra.mxu0 %v600
      %666 = vmatprep.subr.bf16.mxu0 %v603
      %667 = vmatpush1.bf16.msra.mxu0 %v602
      %668 = vmatprep.subr.bf16.mxu0 %v605
      %669 = vmatpush1.bf16.msra.mxu0 %v604
      %670 = vmatprep.subr.bf16.mxu0 %v607
      %671 = vmatpush1.bf16.msra.mxu0 %v606
      %672 = vmatprep.subr.bf16.mxu0 %v609
      %673 = vmatpush1.bf16.msra.mxu0 %v608
      %674 = vmatprep.subr.bf16.mxu0 %v611
      %675 = vmatpush1.bf16.msra.mxu0 %v610
      %676 = vmatprep.subr.bf16.mxu0 %v613
      %677 = vmatpush1.bf16.msra.mxu0 %v612
      %678 = vmatprep.subr.bf16.mxu0 %v615
      %679 = vmatpush1.bf16.msra.mxu0 %v614
      %680 = vmatprep.mubr.bf16.mxu0 %v425
      %681 = vmatmul.mubr.bf16.gmra.mrb[0].mxu0 %v424
      %v682 = vpop.f32.mrb[0].mxu0
      %v683 = vadd.f32 0.0, %v682
      %v684 = vpop.f32.mrb[0].mxu0
      %v685 = vadd.f32 0.0, %v684
      %v686 = vpop.f32.mrb[0].mxu0
      %v687 = vadd.f32 0.0, %v686
      %v688 = vpop.f32.mrb[0].mxu0
      %v689 = vadd.f32 0.0, %v688
      %690 = vmatprep.mubr.bf16.mxu0 %v427
      %691 = vmatmul.mubr.bf16.gmra.mrb[0].mxu0 %v426
      %v692 = vpop.f32.mrb[0].mxu0
      %v693 = vadd.f32 0.0, %v692
      %v694 = vpop.f32.mrb[0].mxu0
      %v695 = vadd.f32 0.0, %v694
      %v696 = vpop.f32.mrb[0].mxu0
      %v697 = vadd.f32 0.0, %v696
      %v698 = vpop.f32.mrb[0].mxu0
      %v699 = vadd.f32 0.0, %v698
      %700 = vmatprep.mubr.bf16.mxu0 %v429
      %701 = vmatmul.mubr.bf16.gmra.mrb[0].mxu0 %v428
      %v702 = vpop.f32.mrb[0].mxu0
      %v703 = vadd.f32 0.0, %v702
      %v704 = vpop.f32.mrb[0].mxu0
      %v705 = vadd.f32 0.0, %v704
      %v706 = vpop.f32.mrb[0].mxu0
      %v707 = vadd.f32 0.0, %v706
      %v708 = vpop.f32.mrb[0].mxu0
      %v709 = vadd.f32 0.0, %v708
      %710 = vmatprep.mubr.bf16.mxu0 %v431
      %711 = vmatmul.mubr.bf16.gmra.mrb[0].mxu0 %v430
      %v712 = vpop.f32.mrb[0].mxu0
      %v713 = vadd.f32 0.0, %v712
      %v714 = vpop.f32.mrb[0].mxu0
      %v715 = vadd.f32 0.0, %v714
      %v716 = vpop.f32.mrb[0].mxu0
      %v717 = vadd.f32 0.0, %v716
      %v718 = vpop.f32.mrb[0].mxu0
      %v719 = vadd.f32 0.0, %v718
      %720 = vmatprep.mubr.bf16.mxu0 %v433
      %721 = vmatmul.mubr.bf16.gmra.mrb[0].mxu0 %v432
      %v722 = vpop.f32.mrb[0].mxu0
      %v723 = vadd.f32 0.0, %v722
      %v724 = vpop.f32.mrb[0].mxu0
      %v725 = vadd.f32 0.0, %v724
      %v726 = vpop.f32.mrb[0].mxu0
      %v727 = vadd.f32 0.0, %v726
      %v728 = vpop.f32.mrb[0].mxu0
      %v729 = vadd.f32 0.0, %v728
      %730 = vmatprep.mubr.bf16.mxu0 %v435
      %731 = vmatmul.mubr.bf16.gmra.mrb[0].mxu0 %v434
      %v732 = vpop.f32.mrb[0].mxu0
      %v733 = vadd.f32 0.0, %v732
      %v734 = vpop.f32.mrb[0].mxu0
      %v735 = vadd.f32 0.0, %v734
      %v736 = vpop.f32.mrb[0].mxu0
      %v737 = vadd.f32 0.0, %v736
      %v738 = vpop.f32.mrb[0].mxu0
      %v739 = vadd.f32 0.0, %v738
      %740 = vmatprep.mubr.bf16.mxu0 %v437
      %741 = vmatmul.mubr.bf16.gmra.mrb[0].mxu0 %v436
      %v742 = vpop.f32.mrb[0].mxu0
      %v743 = vadd.f32 0.0, %v742
      %v744 = vpop.f32.mrb[0].mxu0
      %v745 = vadd.f32 0.0, %v744
      %v746 = vpop.f32.mrb[0].mxu0
      %v747 = vadd.f32 0.0, %v746
      %v748 = vpop.f32.mrb[0].mxu0
      %v749 = vadd.f32 0.0, %v748
      %750 = vmatprep.mubr.bf16.mxu0 %v439
      %751 = vmatmul.mubr.bf16.gmra.mrb[0].mxu0 %v438
      %v752 = vpop.f32.mrb[0].mxu0
      %v753 = vadd.f32 0.0, %v752
      %v754 = vpop.f32.mrb[0].mxu0
      %v755 = vadd.f32 0.0, %v754
      %v756 = vpop.f32.mrb[0].mxu0
      %v757 = vadd.f32 0.0, %v756
      %v758 = vpop.f32.mrb[0].mxu0
      %v759 = vadd.f32 0.0, %v758
      %760 = vmatprep.mubr.bf16.mxu0 %v441
      %761 = vmatmul.mubr.bf16.gmra.mrb[0].mxu0 %v440
      %v762 = vpop.f32.mrb[0].mxu0
      %v763 = vadd.f32 0.0, %v762
      %v764 = vpop.f32.mrb[0].mxu0
      %v765 = vadd.f32 0.0, %v764
      %v766 = vpop.f32.mrb[0].mxu0
      %v767 = vadd.f32 0.0, %v766
      %v768 = vpop.f32.mrb[0].mxu0
      %v769 = vadd.f32 0.0, %v768
      %770 = vmatprep.mubr.bf16.mxu0 %v443
      %771 = vmatmul.mubr.bf16.gmra.mrb[0].mxu0 %v442
      %v772 = vpop.f32.mrb[0].mxu0
      %v773 = vadd.f32 0.0, %v772
      %v774 = vpop.f32.mrb[0].mxu0
      %v775 = vadd.f32 0.0, %v774
      %v776 = vpop.f32.mrb[0].mxu0
      %v777 = vadd.f32 0.0, %v776
      %v778 = vpop.f32.mrb[0].mxu0
      %v779 = vadd.f32 0.0, %v778
      %780 = vmatprep.mubr.bf16.mxu0 %v445
      %781 = vmatmul.mubr.bf16.gmra.mrb[0].mxu0 %v444
      %v782 = vpop.f32.mrb[0].mxu0
      %v783 = vadd.f32 0.0, %v782
      %v784 = vpop.f32.mrb[0].mxu0
      %v785 = vadd.f32 0.0, %v784
      %v786 = vpop.f32.mrb[0].mxu0
      %v787 = vadd.f32 0.0, %v786
      %v788 = vpop.f32.mrb[0].mxu0
      %v789 = vadd.f32 0.0, %v788
      %790 = vmatprep.mubr.bf16.mxu0 %v447
      %791 = vmatmul.mubr.bf16.gmra.mrb[0].mxu0 %v446
      %v792 = vpop.f32.mrb[0].mxu0
      %v793 = vadd.f32 0.0, %v792
      %v794 = vpop.f32.mrb[0].mxu0
      %v795 = vadd.f32 0.0, %v794
      %v796 = vpop.f32.mrb[0].mxu0
      %v797 = vadd.f32 0.0, %v796
      %v798 = vpop.f32.mrb[0].mxu0
      %v799 = vadd.f32 0.0, %v798
      %800 = vmatprep.mubr.bf16.mxu0 %v449
      %801 = vmatmul.mubr.bf16.gmra.mrb[0].mxu0 %v448
      %v802 = vpop.f32.mrb[0].mxu0
      %v803 = vadd.f32 0.0, %v802
      %v804 = vpop.f32.mrb[0].mxu0
      %v805 = vadd.f32 0.0, %v804
      %v806 = vpop.f32.mrb[0].mxu0
      %v807 = vadd.f32 0.0, %v806
      %v808 = vpop.f32.mrb[0].mxu0
      %v809 = vadd.f32 0.0, %v808
      %810 = vmatprep.mubr.bf16.mxu0 %v451
      %811 = vmatmul.mubr.bf16.gmra.mrb[0].mxu0 %v450
      %v812 = vpop.f32.mrb[0].mxu0
      %v813 = vadd.f32 0.0, %v812
      %v814 = vpop.f32.mrb[0].mxu0
      %v815 = vadd.f32 0.0, %v814
      %v816 = vpop.f32.mrb[0].mxu0
      %v817 = vadd.f32 0.0, %v816
      %v818 = vpop.f32.mrb[0].mxu0
      %v819 = vadd.f32 0.0, %v818
      %820 = vmatprep.mubr.bf16.mxu0 %v453
      %821 = vmatmul.mubr.bf16.gmra.mrb[0].mxu0 %v452
      %v822 = vpop.f32.mrb[0].mxu0
      %v823 = vadd.f32 0.0, %v822
      %v824 = vpop.f32.mrb[0].mxu0
      %v825 = vadd.f32 0.0, %v824
      %v826 = vpop.f32.mrb[0].mxu0
      %v827 = vadd.f32 0.0, %v826
      %v828 = vpop.f32.mrb[0].mxu0
      %v829 = vadd.f32 0.0, %v828
      %830 = vmatprep.mubr.bf16.mxu0 %v455
      %831 = vmatmul.mubr.bf16.gmra.mrb[0].mxu0 %v454
      %v832 = vpop.f32.mrb[0].mxu0
      %v833 = vadd.f32 0.0, %v832
      %v834 = vpop.f32.mrb[0].mxu0
      %v835 = vadd.f32 0.0, %v834
      %v836 = vpop.f32.mrb[0].mxu0
      %v837 = vadd.f32 0.0, %v836
      %v838 = vpop.f32.mrb[0].mxu0
      %v839 = vadd.f32 0.0, %v838
      %840 = vdwg.mxu0
      %v849 = vunpack.c.l.b16 %v215
      %v850 = vunpack.c.h.b16 %v215
      %v851 = vunpack.c.l.b16 %v216
      %v852 = vunpack.c.h.b16 %v216
      %v853 = vunpack.c.l.b16 %v217
      %v854 = vunpack.c.h.b16 %v217
      %v855 = vunpack.c.l.b16 %v218
      %v856 = vunpack.c.h.b16 %v218
      %v857 = vunpack.c.l.b16 %v219
      %v858 = vunpack.c.h.b16 %v219
      %v859 = vunpack.c.l.b16 %v220
      %v860 = vunpack.c.h.b16 %v220
      %v861 = vunpack.c.l.b16 %v221
      %v862 = vunpack.c.h.b16 %v221
      %v863 = vunpack.c.l.b16 %v222
      %v864 = vunpack.c.h.b16 %v222
      %v865 = vpack.c.b16 %v851, %v849
      %v866 = vpack.c.b16 %v852, %v850
      %v867 = vpack.c.b16 %v855, %v853
      %v868 = vpack.c.b16 %v856, %v854
      %v869 = vpack.c.b16 %v859, %v857
      %v870 = vpack.c.b16 %v860, %v858
      %v871 = vpack.c.b16 %v863, %v861
      %v872 = vpack.c.b16 %v864, %v862
      %v913 = vunpack.c.l.b16 %v263
      %v914 = vunpack.c.h.b16 %v263
      %v915 = vunpack.c.l.b16 %v264
      %v916 = vunpack.c.h.b16 %v264
      %v917 = vunpack.c.l.b16 %v265
      %v918 = vunpack.c.h.b16 %v265
      %v919 = vunpack.c.l.b16 %v266
      %v920 = vunpack.c.h.b16 %v266
      %v921 = vunpack.c.l.b16 %v267
      %v922 = vunpack.c.h.b16 %v267
      %v923 = vunpack.c.l.b16 %v268
      %v924 = vunpack.c.h.b16 %v268
      %v925 = vunpack.c.l.b16 %v269
      %v926 = vunpack.c.h.b16 %v269
      %v927 = vunpack.c.l.b16 %v270
      %v928 = vunpack.c.h.b16 %v270
      %v929 = vunpack.c.l.b16 %v271
      %v930 = vunpack.c.h.b16 %v271
      %v931 = vunpack.c.l.b16 %v272
      %v932 = vunpack.c.h.b16 %v272
      %v933 = vunpack.c.l.b16 %v273
      %v934 = vunpack.c.h.b16 %v273
      %v935 = vunpack.c.l.b16 %v274
      %v936 = vunpack.c.h.b16 %v274
      %v937 = vunpack.c.l.b16 %v275
      %v938 = vunpack.c.h.b16 %v275
      %v939 = vunpack.c.l.b16 %v276
      %v940 = vunpack.c.h.b16 %v276
      %v941 = vunpack.c.l.b16 %v277
      %v942 = vunpack.c.h.b16 %v277
      %v943 = vunpack.c.l.b16 %v278
      %v944 = vunpack.c.h.b16 %v278
      %v945 = vunpack.c.l.b16 %v279
      %v946 = vunpack.c.h.b16 %v279
      %v947 = vunpack.c.l.b16 %v280
      %v948 = vunpack.c.h.b16 %v280
      %v949 = vunpack.c.l.b16 %v281
      %v950 = vunpack.c.h.b16 %v281
      %v951 = vunpack.c.l.b16 %v282
      %v952 = vunpack.c.h.b16 %v282
      %v953 = vunpack.c.l.b16 %v283
      %v954 = vunpack.c.h.b16 %v283
      %v955 = vunpack.c.l.b16 %v284
      %v956 = vunpack.c.h.b16 %v284
      %v957 = vunpack.c.l.b16 %v285
      %v958 = vunpack.c.h.b16 %v285
      %v959 = vunpack.c.l.b16 %v286
      %v960 = vunpack.c.h.b16 %v286
      %v961 = vunpack.c.l.b16 %v287
      %v962 = vunpack.c.h.b16 %v287
      %v963 = vunpack.c.l.b16 %v288
      %v964 = vunpack.c.h.b16 %v288
      %v965 = vunpack.c.l.b16 %v289
      %v966 = vunpack.c.h.b16 %v289
      %v967 = vunpack.c.l.b16 %v290
      %v968 = vunpack.c.h.b16 %v290
      %v969 = vunpack.c.l.b16 %v291
      %v970 = vunpack.c.h.b16 %v291
      %v971 = vunpack.c.l.b16 %v292
      %v972 = vunpack.c.h.b16 %v292
      %v973 = vunpack.c.l.b16 %v293
      %v974 = vunpack.c.h.b16 %v293
      %v975 = vunpack.c.l.b16 %v294
      %v976 = vunpack.c.h.b16 %v294
      %v977 = vpack.c.b16 %v915, %v913
      %v978 = vpack.c.b16 %v916, %v914
      %v979 = vpack.c.b16 %v919, %v917
      %v980 = vpack.c.b16 %v920, %v918
      %v981 = vpack.c.b16 %v923, %v921
      %v982 = vpack.c.b16 %v924, %v922
      %v983 = vpack.c.b16 %v927, %v925
      %v984 = vpack.c.b16 %v928, %v926
      %v985 = vpack.c.b16 %v931, %v929
      %v986 = vpack.c.b16 %v932, %v930
      %v987 = vpack.c.b16 %v935, %v933
      %v988 = vpack.c.b16 %v936, %v934
      %v989 = vpack.c.b16 %v939, %v937
      %v990 = vpack.c.b16 %v940, %v938
      %v991 = vpack.c.b16 %v943, %v941
      %v992 = vpack.c.b16 %v944, %v942
      %v993 = vpack.c.b16 %v947, %v945
      %v994 = vpack.c.b16 %v948, %v946
      %v995 = vpack.c.b16 %v951, %v949
      %v996 = vpack.c.b16 %v952, %v950
      %v997 = vpack.c.b16 %v955, %v953
      %v998 = vpack.c.b16 %v956, %v954
      %v999 = vpack.c.b16 %v959, %v957
      %v1000 = vpack.c.b16 %v960, %v958
      %v1001 = vpack.c.b16 %v963, %v961
      %v1002 = vpack.c.b16 %v964, %v962
      %v1003 = vpack.c.b16 %v967, %v965
      %v1004 = vpack.c.b16 %v968, %v966
      %v1005 = vpack.c.b16 %v971, %v969
      %v1006 = vpack.c.b16 %v972, %v970
      %v1007 = vpack.c.b16 %v975, %v973
      %v1008 = vpack.c.b16 %v976, %v974
      %1041 = vmatprep.subr.bf16.mxu0 %v978
      %1042 = vmatpush1.bf16.msra.mxu0 %v977
      %1043 = vmatprep.subr.bf16.mxu0 %v980
      %1044 = vmatpush1.bf16.msra.mxu0 %v979
      %1045 = vmatprep.subr.bf16.mxu0 %v982
      %1046 = vmatpush1.bf16.msra.mxu0 %v981
      %1047 = vmatprep.subr.bf16.mxu0 %v984
      %1048 = vmatpush1.bf16.msra.mxu0 %v983
      %1049 = vmatprep.subr.bf16.mxu0 %v986
      %1050 = vmatpush1.bf16.msra.mxu0 %v985
      %1051 = vmatprep.subr.bf16.mxu0 %v988
      %1052 = vmatpush1.bf16.msra.mxu0 %v987
      %1053 = vmatprep.subr.bf16.mxu0 %v990
      %1054 = vmatpush1.bf16.msra.mxu0 %v989
      %1055 = vmatprep.subr.bf16.mxu0 %v992
      %1056 = vmatpush1.bf16.msra.mxu0 %v991
      %1057 = vmatprep.subr.bf16.mxu0 %v994
      %1058 = vmatpush1.bf16.msra.mxu0 %v993
      %1059 = vmatprep.subr.bf16.mxu0 %v996
      %1060 = vmatpush1.bf16.msra.mxu0 %v995
      %1061 = vmatprep.subr.bf16.mxu0 %v998
      %1062 = vmatpush1.bf16.msra.mxu0 %v997
      %1063 = vmatprep.subr.bf16.mxu0 %v1000
      %1064 = vmatpush1.bf16.msra.mxu0 %v999
      %1065 = vmatprep.subr.bf16.mxu0 %v1002
      %1066 = vmatpush1.bf16.msra.mxu0 %v1001
      %1067 = vmatprep.subr.bf16.mxu0 %v1004
      %1068 = vmatpush1.bf16.msra.mxu0 %v1003
      %1069 = vmatprep.subr.bf16.mxu0 %v1006
      %1070 = vmatpush1.bf16.msra.mxu0 %v1005
      %1071 = vmatprep.subr.bf16.mxu0 %v1008
      %1072 = vmatpush1.bf16.msra.mxu0 %v1007
      %1073 = vmatprep.mubr.bf16.mxu0 %v866
      %1074 = vmatmul.mubr.bf16.gmra.mrb[0].mxu0 %v865
      %v1075 = vpop.f32.mrb[0].mxu0
      %v1076 = vadd.f32 %v683, %v1075
      %v1077 = vpop.f32.mrb[0].mxu0
      %v1078 = vadd.f32 %v685, %v1077
      %v1079 = vpop.f32.mrb[0].mxu0
      %v1080 = vadd.f32 %v687, %v1079
      %v1081 = vpop.f32.mrb[0].mxu0
      %v1082 = vadd.f32 %v689, %v1081
      %1083 = vmatprep.mubr.bf16.mxu0 %v868
      %1084 = vmatmul.mubr.bf16.gmra.mrb[0].mxu0 %v867
      %v1085 = vpop.f32.mrb[0].mxu0
      %v1086 = vadd.f32 %v693, %v1085
      %v1087 = vpop.f32.mrb[0].mxu0
      %v1088 = vadd.f32 %v695, %v1087
      %v1089 = vpop.f32.mrb[0].mxu0
      %v1090 = vadd.f32 %v697, %v1089
      %v1091 = vpop.f32.mrb[0].mxu0
      %v1092 = vadd.f32 %v699, %v1091
      %1093 = vmatprep.mubr.bf16.mxu0 %v870
      %1094 = vmatmul.mubr.bf16.gmra.mrb[0].mxu0 %v869
      %v1095 = vpop.f32.mrb[0].mxu0
      %v1096 = vadd.f32 %v703, %v1095
      %v1097 = vpop.f32.mrb[0].mxu0
      %v1098 = vadd.f32 %v705, %v1097
      %v1099 = vpop.f32.mrb[0].mxu0
      %v1100 = vadd.f32 %v707, %v1099
      %v1101 = vpop.f32.mrb[0].mxu0
      %v1102 = vadd.f32 %v709, %v1101
      %1103 = vmatprep.mubr.bf16.mxu0 %v872
      %1104 = vmatmul.mubr.bf16.gmra.mrb[0].mxu0 %v871
      %v1105 = vpop.f32.mrb[0].mxu0
      %v1106 = vadd.f32 %v713, %v1105
      %v1107 = vpop.f32.mrb[0].mxu0
      %v1108 = vadd.f32 %v715, %v1107
      %v1109 = vpop.f32.mrb[0].mxu0
      %v1110 = vadd.f32 %v717, %v1109
      %v1111 = vpop.f32.mrb[0].mxu0
      %v1112 = vadd.f32 %v719, %v1111
      %1113 = vmatprep.mubr.bf16.mxu0 %v425
      %1114 = vmatmul.mubr.bf16.gmra.mrb[0].mxu0 %v424
      %v1115 = vpop.f32.mrb[0].mxu0
      %v1116 = vadd.f32 %v723, %v1115
      %v1117 = vpop.f32.mrb[0].mxu0
      %v1118 = vadd.f32 %v725, %v1117
      %v1119 = vpop.f32.mrb[0].mxu0
      %v1120 = vadd.f32 %v727, %v1119
      %v1121 = vpop.f32.mrb[0].mxu0
      %v1122 = vadd.f32 %v729, %v1121
      %1123 = vmatprep.mubr.bf16.mxu0 %v427
      %1124 = vmatmul.mubr.bf16.gmra.mrb[0].mxu0 %v426
      %v1125 = vpop.f32.mrb[0].mxu0
      %v1126 = vadd.f32 %v733, %v1125
      %v1127 = vpop.f32.mrb[0].mxu0
      %v1128 = vadd.f32 %v735, %v1127
      %v1129 = vpop.f32.mrb[0].mxu0
      %v1130 = vadd.f32 %v737, %v1129
      %v1131 = vpop.f32.mrb[0].mxu0
      %v1132 = vadd.f32 %v739, %v1131
      %1133 = vmatprep.mubr.bf16.mxu0 %v429
      %1134 = vmatmul.mubr.bf16.gmra.mrb[0].mxu0 %v428
      %v1135 = vpop.f32.mrb[0].mxu0
      %v1136 = vadd.f32 %v743, %v1135
      %v1137 = vpop.f32.mrb[0].mxu0
      %v1138 = vadd.f32 %v745, %v1137
      %v1139 = vpop.f32.mrb[0].mxu0
      %v1140 = vadd.f32 %v747, %v1139
      %v1141 = vpop.f32.mrb[0].mxu0
      %v1142 = vadd.f32 %v749, %v1141
      %1143 = vmatprep.mubr.bf16.mxu0 %v431
      %1144 = vmatmul.mubr.bf16.gmra.mrb[0].mxu0 %v430
      %v1145 = vpop.f32.mrb[0].mxu0
      %v1146 = vadd.f32 %v753, %v1145
      %v1147 = vpop.f32.mrb[0].mxu0
      %v1148 = vadd.f32 %v755, %v1147
      %v1149 = vpop.f32.mrb[0].mxu0
      %v1150 = vadd.f32 %v757, %v1149
      %v1151 = vpop.f32.mrb[0].mxu0
      %v1152 = vadd.f32 %v759, %v1151
      %1153 = vmatprep.mubr.bf16.mxu0 %v433
      %1154 = vmatmul.mubr.bf16.gmra.mrb[0].mxu0 %v432
      %v1155 = vpop.f32.mrb[0].mxu0
      %v1156 = vadd.f32 %v763, %v1155
      %v1157 = vpop.f32.mrb[0].mxu0
      %v1158 = vadd.f32 %v765, %v1157
      %v1159 = vpop.f32.mrb[0].mxu0
      %v1160 = vadd.f32 %v767, %v1159
      %v1161 = vpop.f32.mrb[0].mxu0
      %v1162 = vadd.f32 %v769, %v1161
      %1163 = vmatprep.mubr.bf16.mxu0 %v435
      %1164 = vmatmul.mubr.bf16.gmra.mrb[0].mxu0 %v434
      %v1165 = vpop.f32.mrb[0].mxu0
      %v1166 = vadd.f32 %v773, %v1165
      %v1167 = vpop.f32.mrb[0].mxu0
      %v1168 = vadd.f32 %v775, %v1167
      %v1169 = vpop.f32.mrb[0].mxu0
      %v1170 = vadd.f32 %v777, %v1169
      %v1171 = vpop.f32.mrb[0].mxu0
      %v1172 = vadd.f32 %v779, %v1171
      %1173 = vmatprep.mubr.bf16.mxu0 %v437
      %1174 = vmatmul.mubr.bf16.gmra.mrb[0].mxu0 %v436
      %v1175 = vpop.f32.mrb[0].mxu0
      %v1176 = vadd.f32 %v783, %v1175
      %v1177 = vpop.f32.mrb[0].mxu0
      %v1178 = vadd.f32 %v785, %v1177
      %v1179 = vpop.f32.mrb[0].mxu0
      %v1180 = vadd.f32 %v787, %v1179
      %v1181 = vpop.f32.mrb[0].mxu0
      %v1182 = vadd.f32 %v789, %v1181
      %1183 = vmatprep.mubr.bf16.mxu0 %v439
      %1184 = vmatmul.mubr.bf16.gmra.mrb[0].mxu0 %v438
      %v1185 = vpop.f32.mrb[0].mxu0
      %v1186 = vadd.f32 %v793, %v1185
      %v1187 = vpop.f32.mrb[0].mxu0
      %v1188 = vadd.f32 %v795, %v1187
      %v1189 = vpop.f32.mrb[0].mxu0
      %v1190 = vadd.f32 %v797, %v1189
      %v1191 = vpop.f32.mrb[0].mxu0
      %v1192 = vadd.f32 %v799, %v1191
      %1193 = vmatprep.mubr.bf16.mxu0 %v441
      %1194 = vmatmul.mubr.bf16.gmra.mrb[0].mxu0 %v440
      %v1195 = vpop.f32.mrb[0].mxu0
      %v1196 = vadd.f32 %v803, %v1195
      %v1197 = vpop.f32.mrb[0].mxu0
      %v1198 = vadd.f32 %v805, %v1197
      %v1199 = vpop.f32.mrb[0].mxu0
      %v1200 = vadd.f32 %v807, %v1199
      %v1201 = vpop.f32.mrb[0].mxu0
      %v1202 = vadd.f32 %v809, %v1201
      %1203 = vmatprep.mubr.bf16.mxu0 %v443
      %1204 = vmatmul.mubr.bf16.gmra.mrb[0].mxu0 %v442
      %v1205 = vpop.f32.mrb[0].mxu0
      %v1206 = vadd.f32 %v813, %v1205
      %v1207 = vpop.f32.mrb[0].mxu0
      %v1208 = vadd.f32 %v815, %v1207
      %v1209 = vpop.f32.mrb[0].mxu0
      %v1210 = vadd.f32 %v817, %v1209
      %v1211 = vpop.f32.mrb[0].mxu0
      %v1212 = vadd.f32 %v819, %v1211
      %1213 = vmatprep.mubr.bf16.mxu0 %v445
      %1214 = vmatmul.mubr.bf16.gmra.mrb[0].mxu0 %v444
      %v1215 = vpop.f32.mrb[0].mxu0
      %v1216 = vadd.f32 %v823, %v1215
      %v1217 = vpop.f32.mrb[0].mxu0
      %v1218 = vadd.f32 %v825, %v1217
      %v1219 = vpop.f32.mrb[0].mxu0
      %v1220 = vadd.f32 %v827, %v1219
      %v1221 = vpop.f32.mrb[0].mxu0
      %v1222 = vadd.f32 %v829, %v1221
      %1223 = vmatprep.mubr.bf16.mxu0 %v447
      %1224 = vmatmul.mubr.bf16.gmra.mrb[0].mxu0 %v446
      %v1225 = vpop.f32.mrb[0].mxu0
      %v1226 = vadd.f32 %v833, %v1225
      %v1227 = vpop.f32.mrb[0].mxu0
      %v1228 = vadd.f32 %v835, %v1227
      %v1229 = vpop.f32.mrb[0].mxu0
      %v1230 = vadd.f32 %v837, %v1229
      %v1231 = vpop.f32.mrb[0].mxu0
      %v1232 = vadd.f32 %v839, %v1231
      %1233 = vdwg.mxu0
      %s1234 = scalar_lea.vmem %s1, 512
      %v1235 = vld [vmem:[%s1234] sm:$0xff]
      %v1236 = vld [vmem:[%s1234 + $0x8] sm:$0xff]
      %v1237 = vld [vmem:[%s1234 + $0x10] sm:$0xff]
      %v1238 = vld [vmem:[%s1234 + $0x18] sm:$0xff]
      %v1239 = vld [vmem:[%s1234 + $0x20] sm:$0xff]
      %v1240 = vld [vmem:[%s1234 + $0x28] sm:$0xff]
      %v1241 = vld [vmem:[%s1234 + $0x30] sm:$0xff]
      %v1242 = vld [vmem:[%s1234 + $0x38] sm:$0xff]
      %v1243 = vld [vmem:[%s1234 + $0x40] sm:$0xff]
      %v1244 = vld [vmem:[%s1234 + $0x48] sm:$0xff]
      %v1245 = vld [vmem:[%s1234 + $0x50] sm:$0xff]
      %v1246 = vld [vmem:[%s1234 + $0x58] sm:$0xff]
      %v1247 = vld [vmem:[%s1234 + $0x60] sm:$0xff]
      %v1248 = vld [vmem:[%s1234 + $0x68] sm:$0xff]
      %v1249 = vld [vmem:[%s1234 + $0x70] sm:$0xff]
      %v1250 = vld [vmem:[%s1234 + $0x78] sm:$0xff]
      %v1251 = vld [vmem:[%s1234 + $0x80] sm:$0xff]
      %v1252 = vld [vmem:[%s1234 + $0x88] sm:$0xff]
      %v1253 = vld [vmem:[%s1234 + $0x90] sm:$0xff]
      %v1254 = vld [vmem:[%s1234 + $0x98] sm:$0xff]
      %v1255 = vld [vmem:[%s1234 + $0xa0] sm:$0xff]
      %v1256 = vld [vmem:[%s1234 + $0xa8] sm:$0xff]
      %v1257 = vld [vmem:[%s1234 + $0xb0] sm:$0xff]
      %v1258 = vld [vmem:[%s1234 + $0xb8] sm:$0xff]
      %v1259 = vld [vmem:[%s1234 + $0xc0] sm:$0xff]
      %v1260 = vld [vmem:[%s1234 + $0xc8] sm:$0xff]
      %v1261 = vld [vmem:[%s1234 + $0xd0] sm:$0xff]
      %v1262 = vld [vmem:[%s1234 + $0xd8] sm:$0xff]
      %v1263 = vld [vmem:[%s1234 + $0xe0] sm:$0xff]
      %v1264 = vld [vmem:[%s1234 + $0xe8] sm:$0xff]
      %v1265 = vld [vmem:[%s1234 + $0xf0] sm:$0xff]
      %v1266 = vld [vmem:[%s1234 + $0xf8] sm:$0xff]
      %v1275 = vunpack.c.l.b16 %v255
      %v1276 = vunpack.c.h.b16 %v255
      %v1277 = vunpack.c.l.b16 %v256
      %v1278 = vunpack.c.h.b16 %v256
      %v1279 = vunpack.c.l.b16 %v257
      %v1280 = vunpack.c.h.b16 %v257
      %v1281 = vunpack.c.l.b16 %v258
      %v1282 = vunpack.c.h.b16 %v258
      %v1283 = vunpack.c.l.b16 %v259
      %v1284 = vunpack.c.h.b16 %v259
      %v1285 = vunpack.c.l.b16 %v260
      %v1286 = vunpack.c.h.b16 %v260
      %v1287 = vunpack.c.l.b16 %v261
      %v1288 = vunpack.c.h.b16 %v261
      %v1289 = vunpack.c.l.b16 %v262
      %v1290 = vunpack.c.h.b16 %v262
      %v1291 = vpack.c.b16 %v1277, %v1275
      %v1292 = vpack.c.b16 %v1278, %v1276
      %v1293 = vpack.c.b16 %v1281, %v1279
      %v1294 = vpack.c.b16 %v1282, %v1280
      %v1295 = vpack.c.b16 %v1285, %v1283
      %v1296 = vpack.c.b16 %v1286, %v1284
      %v1297 = vpack.c.b16 %v1289, %v1287
      %v1298 = vpack.c.b16 %v1290, %v1288
      %v1339 = vunpack.c.l.b16 %v1235
      %v1340 = vunpack.c.h.b16 %v1235
      %v1341 = vunpack.c.l.b16 %v1236
      %v1342 = vunpack.c.h.b16 %v1236
      %v1343 = vunpack.c.l.b16 %v1237
      %v1344 = vunpack.c.h.b16 %v1237
      %v1345 = vunpack.c.l.b16 %v1238
      %v1346 = vunpack.c.h.b16 %v1238
      %v1347 = vunpack.c.l.b16 %v1239
      %v1348 = vunpack.c.h.b16 %v1239
      %v1349 = vunpack.c.l.b16 %v1240
      %v1350 = vunpack.c.h.b16 %v1240
      %v1351 = vunpack.c.l.b16 %v1241
      %v1352 = vunpack.c.h.b16 %v1241
      %v1353 = vunpack.c.l.b16 %v1242
      %v1354 = vunpack.c.h.b16 %v1242
      %v1355 = vunpack.c.l.b16 %v1243
      %v1356 = vunpack.c.h.b16 %v1243
      %v1357 = vunpack.c.l.b16 %v1244
      %v1358 = vunpack.c.h.b16 %v1244
      %v1359 = vunpack.c.l.b16 %v1245
      %v1360 = vunpack.c.h.b16 %v1245
      %v1361 = vunpack.c.l.b16 %v1246
      %v1362 = vunpack.c.h.b16 %v1246
      %v1363 = vunpack.c.l.b16 %v1247
      %v1364 = vunpack.c.h.b16 %v1247
      %v1365 = vunpack.c.l.b16 %v1248
      %v1366 = vunpack.c.h.b16 %v1248
      %v1367 = vunpack.c.l.b16 %v1249
      %v1368 = vunpack.c.h.b16 %v1249
      %v1369 = vunpack.c.l.b16 %v1250
      %v1370 = vunpack.c.h.b16 %v1250
      %v1371 = vunpack.c.l.b16 %v1251
      %v1372 = vunpack.c.h.b16 %v1251
      %v1373 = vunpack.c.l.b16 %v1252
      %v1374 = vunpack.c.h.b16 %v1252
      %v1375 = vunpack.c.l.b16 %v1253
      %v1376 = vunpack.c.h.b16 %v1253
      %v1377 = vunpack.c.l.b16 %v1254
      %v1378 = vunpack.c.h.b16 %v1254
      %v1379 = vunpack.c.l.b16 %v1255
      %v1380 = vunpack.c.h.b16 %v1255
      %v1381 = vunpack.c.l.b16 %v1256
      %v1382 = vunpack.c.h.b16 %v1256
      %v1383 = vunpack.c.l.b16 %v1257
      %v1384 = vunpack.c.h.b16 %v1257
      %v1385 = vunpack.c.l.b16 %v1258
      %v1386 = vunpack.c.h.b16 %v1258
      %v1387 = vunpack.c.l.b16 %v1259
      %v1388 = vunpack.c.h.b16 %v1259
      %v1389 = vunpack.c.l.b16 %v1260
      %v1390 = vunpack.c.h.b16 %v1260
      %v1391 = vunpack.c.l.b16 %v1261
      %v1392 = vunpack.c.h.b16 %v1261
      %v1393 = vunpack.c.l.b16 %v1262
      %v1394 = vunpack.c.h.b16 %v1262
      %v1395 = vunpack.c.l.b16 %v1263
      %v1396 = vunpack.c.h.b16 %v1263
      %v1397 = vunpack.c.l.b16 %v1264
      %v1398 = vunpack.c.h.b16 %v1264
      %v1399 = vunpack.c.l.b16 %v1265
      %v1400 = vunpack.c.h.b16 %v1265
      %v1401 = vunpack.c.l.b16 %v1266
      %v1402 = vunpack.c.h.b16 %v1266
      %v1403 = vpack.c.b16 %v1341, %v1339
      %v1404 = vpack.c.b16 %v1342, %v1340
      %v1405 = vpack.c.b16 %v1345, %v1343
      %v1406 = vpack.c.b16 %v1346, %v1344
      %v1407 = vpack.c.b16 %v1349, %v1347
      %v1408 = vpack.c.b16 %v1350, %v1348
      %v1409 = vpack.c.b16 %v1353, %v1351
      %v1410 = vpack.c.b16 %v1354, %v1352
      %v1411 = vpack.c.b16 %v1357, %v1355
      %v1412 = vpack.c.b16 %v1358, %v1356
      %v1413 = vpack.c.b16 %v1361, %v1359
      %v1414 = vpack.c.b16 %v1362, %v1360
      %v1415 = vpack.c.b16 %v1365, %v1363
      %v1416 = vpack.c.b16 %v1366, %v1364
      %v1417 = vpack.c.b16 %v1369, %v1367
      %v1418 = vpack.c.b16 %v1370, %v1368
      %v1419 = vpack.c.b16 %v1373, %v1371
      %v1420 = vpack.c.b16 %v1374, %v1372
      %v1421 = vpack.c.b16 %v1377, %v1375
      %v1422 = vpack.c.b16 %v1378, %v1376
      %v1423 = vpack.c.b16 %v1381, %v1379
      %v1424 = vpack.c.b16 %v1382, %v1380
      %v1425 = vpack.c.b16 %v1385, %v1383
      %v1426 = vpack.c.b16 %v1386, %v1384
      %v1427 = vpack.c.b16 %v1389, %v1387
      %v1428 = vpack.c.b16 %v1390, %v1388
      %v1429 = vpack.c.b16 %v1393, %v1391
      %v1430 = vpack.c.b16 %v1394, %v1392
      %v1431 = vpack.c.b16 %v1397, %v1395
      %v1432 = vpack.c.b16 %v1398, %v1396
      %v1433 = vpack.c.b16 %v1401, %v1399
      %v1434 = vpack.c.b16 %v1402, %v1400
      %1467 = vmatprep.subr.bf16.mxu0 %v1404
      %1468 = vmatpush1.bf16.msra.mxu0 %v1403
      %1469 = vmatprep.subr.bf16.mxu0 %v1406
      %1470 = vmatpush1.bf16.msra.mxu0 %v1405
      %1471 = vmatprep.subr.bf16.mxu0 %v1408
      %1472 = vmatpush1.bf16.msra.mxu0 %v1407
      %1473 = vmatprep.subr.bf16.mxu0 %v1410
      %1474 = vmatpush1.bf16.msra.mxu0 %v1409
      %1475 = vmatprep.subr.bf16.mxu0 %v1412
      %1476 = vmatpush1.bf16.msra.mxu0 %v1411
      %1477 = vmatprep.subr.bf16.mxu0 %v1414
      %1478 = vmatpush1.bf16.msra.mxu0 %v1413
      %1479 = vmatprep.subr.bf16.mxu0 %v1416
      %1480 = vmatpush1.bf16.msra.mxu0 %v1415
      %1481 = vmatprep.subr.bf16.mxu0 %v1418
      %1482 = vmatpush1.bf16.msra.mxu0 %v1417
      %1483 = vmatprep.subr.bf16.mxu0 %v1420
      %1484 = vmatpush1.bf16.msra.mxu0 %v1419
      %1485 = vmatprep.subr.bf16.mxu0 %v1422
      %1486 = vmatpush1.bf16.msra.mxu0 %v1421
      %1487 = vmatprep.subr.bf16.mxu0 %v1424
      %1488 = vmatpush1.bf16.msra.mxu0 %v1423
      %1489 = vmatprep.subr.bf16.mxu0 %v1426
      %1490 = vmatpush1.bf16.msra.mxu0 %v1425
      %1491 = vmatprep.subr.bf16.mxu0 %v1428
      %1492 = vmatpush1.bf16.msra.mxu0 %v1427
      %1493 = vmatprep.subr.bf16.mxu0 %v1430
      %1494 = vmatpush1.bf16.msra.mxu0 %v1429
      %1495 = vmatprep.subr.bf16.mxu0 %v1432
      %1496 = vmatpush1.bf16.msra.mxu0 %v1431
      %1497 = vmatprep.subr.bf16.mxu0 %v1434
      %1498 = vmatpush1.bf16.msra.mxu0 %v1433
      %1499 = vmatprep.mubr.bf16.mxu0 %v433
      %1500 = vmatmul.mubr.bf16.gmra.mrb[0].mxu0 %v432
      %v1501 = vpop.f32.mrb[0].mxu0
      %v1502 = vadd.f32 0.0, %v1501
      %v1503 = vpop.f32.mrb[0].mxu0
      %v1504 = vadd.f32 0.0, %v1503
      %v1505 = vpop.f32.mrb[0].mxu0
      %v1506 = vadd.f32 0.0, %v1505
      %v1507 = vpop.f32.mrb[0].mxu0
      %v1508 = vadd.f32 0.0, %v1507
      %1509 = vmatprep.mubr.bf16.mxu0 %v435
      %1510 = vmatmul.mubr.bf16.gmra.mrb[0].mxu0 %v434
      %v1511 = vpop.f32.mrb[0].mxu0
      %v1512 = vadd.f32 0.0, %v1511
      %v1513 = vpop.f32.mrb[0].mxu0
      %v1514 = vadd.f32 0.0, %v1513
      %v1515 = vpop.f32.mrb[0].mxu0
      %v1516 = vadd.f32 0.0, %v1515
      %v1517 = vpop.f32.mrb[0].mxu0
      %v1518 = vadd.f32 0.0, %v1517
      %1519 = vmatprep.mubr.bf16.mxu0 %v437
      %1520 = vmatmul.mubr.bf16.gmra.mrb[0].mxu0 %v436
      %v1521 = vpop.f32.mrb[0].mxu0
      %v1522 = vadd.f32 0.0, %v1521
      %v1523 = vpop.f32.mrb[0].mxu0
      %v1524 = vadd.f32 0.0, %v1523
      %v1525 = vpop.f32.mrb[0].mxu0
      %v1526 = vadd.f32 0.0, %v1525
      %v1527 = vpop.f32.mrb[0].mxu0
      %v1528 = vadd.f32 0.0, %v1527
      %1529 = vmatprep.mubr.bf16.mxu0 %v439
      %1530 = vmatmul.mubr.bf16.gmra.mrb[0].mxu0 %v438
      %v1531 = vpop.f32.mrb[0].mxu0
      %v1532 = vadd.f32 0.0, %v1531
      %v1533 = vpop.f32.mrb[0].mxu0
      %v1534 = vadd.f32 0.0, %v1533
      %v1535 = vpop.f32.mrb[0].mxu0
      %v1536 = vadd.f32 0.0, %v1535
      %v1537 = vpop.f32.mrb[0].mxu0
      %v1538 = vadd.f32 0.0, %v1537
      %1539 = vmatprep.mubr.bf16.mxu0 %v441
      %1540 = vmatmul.mubr.bf16.gmra.mrb[0].mxu0 %v440
      %v1541 = vpop.f32.mrb[0].mxu0
      %v1542 = vadd.f32 0.0, %v1541
      %v1543 = vpop.f32.mrb[0].mxu0
      %v1544 = vadd.f32 0.0, %v1543
      %v1545 = vpop.f32.mrb[0].mxu0
      %v1546 = vadd.f32 0.0, %v1545
      %v1547 = vpop.f32.mrb[0].mxu0
      %v1548 = vadd.f32 0.0, %v1547
      %1549 = vmatprep.mubr.bf16.mxu0 %v443
      %1550 = vmatmul.mubr.bf16.gmra.mrb[0].mxu0 %v442
      %v1551 = vpop.f32.mrb[0].mxu0
      %v1552 = vadd.f32 0.0, %v1551
      %v1553 = vpop.f32.mrb[0].mxu0
      %v1554 = vadd.f32 0.0, %v1553
      %v1555 = vpop.f32.mrb[0].mxu0
      %v1556 = vadd.f32 0.0, %v1555
      %v1557 = vpop.f32.mrb[0].mxu0
      %v1558 = vadd.f32 0.0, %v1557
      %1559 = vmatprep.mubr.bf16.mxu0 %v445
      %1560 = vmatmul.mubr.bf16.gmra.mrb[0].mxu0 %v444
      %v1561 = vpop.f32.mrb[0].mxu0
      %v1562 = vadd.f32 0.0, %v1561
      %v1563 = vpop.f32.mrb[0].mxu0
      %v1564 = vadd.f32 0.0, %v1563
      %v1565 = vpop.f32.mrb[0].mxu0
      %v1566 = vadd.f32 0.0, %v1565
      %v1567 = vpop.f32.mrb[0].mxu0
      %v1568 = vadd.f32 0.0, %v1567
      %1569 = vmatprep.mubr.bf16.mxu0 %v447
      %1570 = vmatmul.mubr.bf16.gmra.mrb[0].mxu0 %v446
      %v1571 = vpop.f32.mrb[0].mxu0
      %v1572 = vadd.f32 0.0, %v1571
      %v1573 = vpop.f32.mrb[0].mxu0
      %v1574 = vadd.f32 0.0, %v1573
      %v1575 = vpop.f32.mrb[0].mxu0
      %v1576 = vadd.f32 0.0, %v1575
      %v1577 = vpop.f32.mrb[0].mxu0
      %v1578 = vadd.f32 0.0, %v1577
      %1579 = vmatprep.mubr.bf16.mxu0 %v449
      %1580 = vmatmul.mubr.bf16.gmra.mrb[0].mxu0 %v448
      %v1581 = vpop.f32.mrb[0].mxu0
      %v1582 = vadd.f32 0.0, %v1581
      %v1583 = vpop.f32.mrb[0].mxu0
      %v1584 = vadd.f32 0.0, %v1583
      %v1585 = vpop.f32.mrb[0].mxu0
      %v1586 = vadd.f32 0.0, %v1585
      %v1587 = vpop.f32.mrb[0].mxu0
      %v1588 = vadd.f32 0.0, %v1587
      %1589 = vmatprep.mubr.bf16.mxu0 %v451
      %1590 = vmatmul.mubr.bf16.gmra.mrb[0].mxu0 %v450
      %v1591 = vpop.f32.mrb[0].mxu0
      %v1592 = vadd.f32 0.0, %v1591
      %v1593 = vpop.f32.mrb[0].mxu0
      %v1594 = vadd.f32 0.0, %v1593
      %v1595 = vpop.f32.mrb[0].mxu0
      %v1596 = vadd.f32 0.0, %v1595
      %v1597 = vpop.f32.mrb[0].mxu0
      %v1598 = vadd.f32 0.0, %v1597
      %1599 = vmatprep.mubr.bf16.mxu0 %v453
      %1600 = vmatmul.mubr.bf16.gmra.mrb[0].mxu0 %v452
      %v1601 = vpop.f32.mrb[0].mxu0
      %v1602 = vadd.f32 0.0, %v1601
      %v1603 = vpop.f32.mrb[0].mxu0
      %v1604 = vadd.f32 0.0, %v1603
      %v1605 = vpop.f32.mrb[0].mxu0
      %v1606 = vadd.f32 0.0, %v1605
      %v1607 = vpop.f32.mrb[0].mxu0
      %v1608 = vadd.f32 0.0, %v1607
      %1609 = vmatprep.mubr.bf16.mxu0 %v455
      %1610 = vmatmul.mubr.bf16.gmra.mrb[0].mxu0 %v454
      %v1611 = vpop.f32.mrb[0].mxu0
      %v1612 = vadd.f32 0.0, %v1611
      %v1613 = vpop.f32.mrb[0].mxu0
      %v1614 = vadd.f32 0.0, %v1613
      %v1615 = vpop.f32.mrb[0].mxu0
      %v1616 = vadd.f32 0.0, %v1615
      %v1617 = vpop.f32.mrb[0].mxu0
      %v1618 = vadd.f32 0.0, %v1617
      %1619 = vmatprep.mubr.bf16.mxu0 %v1292
      %1620 = vmatmul.mubr.bf16.gmra.mrb[0].mxu0 %v1291
      %v1621 = vpop.f32.mrb[0].mxu0
      %v1622 = vadd.f32 0.0, %v1621
      %v1623 = vpop.f32.mrb[0].mxu0
      %v1624 = vadd.f32 0.0, %v1623
      %v1625 = vpop.f32.mrb[0].mxu0
      %v1626 = vadd.f32 0.0, %v1625
      %v1627 = vpop.f32.mrb[0].mxu0
      %v1628 = vadd.f32 0.0, %v1627
      %1629 = vmatprep.mubr.bf16.mxu0 %v1294
      %1630 = vmatmul.mubr.bf16.gmra.mrb[0].mxu0 %v1293
      %v1631 = vpop.f32.mrb[0].mxu0
      %v1632 = vadd.f32 0.0, %v1631
      %v1633 = vpop.f32.mrb[0].mxu0
      %v1634 = vadd.f32 0.0, %v1633
      %v1635 = vpop.f32.mrb[0].mxu0
      %v1636 = vadd.f32 0.0, %v1635
      %v1637 = vpop.f32.mrb[0].mxu0
      %v1638 = vadd.f32 0.0, %v1637
      %1639 = vmatprep.mubr.bf16.mxu0 %v1296
      %1640 = vmatmul.mubr.bf16.gmra.mrb[0].mxu0 %v1295
      %v1641 = vpop.f32.mrb[0].mxu0
      %v1642 = vadd.f32 0.0, %v1641
      %v1643 = vpop.f32.mrb[0].mxu0
      %v1644 = vadd.f32 0.0, %v1643
      %v1645 = vpop.f32.mrb[0].mxu0
      %v1646 = vadd.f32 0.0, %v1645
      %v1647 = vpop.f32.mrb[0].mxu0
      %v1648 = vadd.f32 0.0, %v1647
      %1649 = vmatprep.mubr.bf16.mxu0 %v1298
      %1650 = vmatmul.mubr.bf16.gmra.mrb[0].mxu0 %v1297
      %v1651 = vpop.f32.mrb[0].mxu0
      %v1652 = vadd.f32 0.0, %v1651
      %v1653 = vpop.f32.mrb[0].mxu0
      %v1654 = vadd.f32 0.0, %v1653
      %v1655 = vpop.f32.mrb[0].mxu0
      %v1656 = vadd.f32 0.0, %v1655
      %v1657 = vpop.f32.mrb[0].mxu0
      %v1658 = vadd.f32 0.0, %v1657
      %1659 = vdwg.mxu0
      %v1660 = vadd.f32 %v1076, %v1502
      %v1661 = vadd.f32 %v1078, %v1504
      %v1662 = vadd.f32 %v1080, %v1506
      %v1663 = vadd.f32 %v1082, %v1508
      %v1664 = vadd.f32 %v1086, %v1512
      %v1665 = vadd.f32 %v1088, %v1514
      %v1666 = vadd.f32 %v1090, %v1516
      %v1667 = vadd.f32 %v1092, %v1518
      %v1668 = vadd.f32 %v1096, %v1522
      %v1669 = vadd.f32 %v1098, %v1524
      %v1670 = vadd.f32 %v1100, %v1526
      %v1671 = vadd.f32 %v1102, %v1528
      %v1672 = vadd.f32 %v1106, %v1532
      %v1673 = vadd.f32 %v1108, %v1534
      %v1674 = vadd.f32 %v1110, %v1536
      %v1675 = vadd.f32 %v1112, %v1538
      %v1676 = vadd.f32 %v1116, %v1542
      %v1677 = vadd.f32 %v1118, %v1544
      %v1678 = vadd.f32 %v1120, %v1546
      %v1679 = vadd.f32 %v1122, %v1548
      %v1680 = vadd.f32 %v1126, %v1552
      %v1681 = vadd.f32 %v1128, %v1554
      %v1682 = vadd.f32 %v1130, %v1556
      %v1683 = vadd.f32 %v1132, %v1558
      %v1684 = vadd.f32 %v1136, %v1562
      %v1685 = vadd.f32 %v1138, %v1564
      %v1686 = vadd.f32 %v1140, %v1566
      %v1687 = vadd.f32 %v1142, %v1568
      %v1688 = vadd.f32 %v1146, %v1572
      %v1689 = vadd.f32 %v1148, %v1574
      %v1690 = vadd.f32 %v1150, %v1576
      %v1691 = vadd.f32 %v1152, %v1578
      %v1692 = vadd.f32 %v1156, %v1582
      %v1693 = vadd.f32 %v1158, %v1584
      %v1694 = vadd.f32 %v1160, %v1586
      %v1695 = vadd.f32 %v1162, %v1588
      %v1696 = vadd.f32 %v1166, %v1592
      %v1697 = vadd.f32 %v1168, %v1594
      %v1698 = vadd.f32 %v1170, %v1596
      %v1699 = vadd.f32 %v1172, %v1598
      %v1700 = vadd.f32 %v1176, %v1602
      %v1701 = vadd.f32 %v1178, %v1604
      %v1702 = vadd.f32 %v1180, %v1606
      %v1703 = vadd.f32 %v1182, %v1608
      %v1704 = vadd.f32 %v1186, %v1612
      %v1705 = vadd.f32 %v1188, %v1614
      %v1706 = vadd.f32 %v1190, %v1616
      %v1707 = vadd.f32 %v1192, %v1618
      %v1708 = vadd.f32 %v1196, %v1622
      %v1709 = vadd.f32 %v1198, %v1624
      %v1710 = vadd.f32 %v1200, %v1626
      %v1711 = vadd.f32 %v1202, %v1628
      %v1712 = vadd.f32 %v1206, %v1632
      %v1713 = vadd.f32 %v1208, %v1634
      %v1714 = vadd.f32 %v1210, %v1636
      %v1715 = vadd.f32 %v1212, %v1638
      %v1716 = vadd.f32 %v1216, %v1642
      %v1717 = vadd.f32 %v1218, %v1644
      %v1718 = vadd.f32 %v1220, %v1646
      %v1719 = vadd.f32 %v1222, %v1648
      %v1720 = vadd.f32 %v1226, %v1652
      %v1721 = vadd.f32 %v1228, %v1654
      %v1722 = vadd.f32 %v1230, %v1656
      %v1723 = vadd.f32 %v1232, %v1658
      %v1724 = vld [vmem:[%s2] sm:$0x3]
      %v1726 = vlaneseq
      %v1727 = vshrl.u32 %v1726, 7
      %v1728 = vsub.s32 0, %v1727
      %v1729 = vrot.slane %v1724, %v1728
      %v1730 = vlaneseq
      %v1731 = vshrl.u32 %v1730, 7
      %v1732 = vsub.s32 1, %v1731
      %v1733 = vrot.slane %v1724, %v1732
      %v1736 = vadd.f32 %v1660, %v1729
      %v1737 = vadd.f32 %v1661, %v1733
      %v1738 = vadd.f32 %v1662, %v1729
      %v1739 = vadd.f32 %v1663, %v1733
      %v1740 = vadd.f32 %v1664, %v1729
      %v1741 = vadd.f32 %v1665, %v1733
      %v1742 = vadd.f32 %v1666, %v1729
      %v1743 = vadd.f32 %v1667, %v1733
      %v1744 = vadd.f32 %v1668, %v1729
      %v1745 = vadd.f32 %v1669, %v1733
      %v1746 = vadd.f32 %v1670, %v1729
      %v1747 = vadd.f32 %v1671, %v1733
      %v1748 = vadd.f32 %v1672, %v1729
      %v1749 = vadd.f32 %v1673, %v1733
      %v1750 = vadd.f32 %v1674, %v1729
      %v1751 = vadd.f32 %v1675, %v1733
      %v1752 = vadd.f32 %v1676, %v1729
      %v1753 = vadd.f32 %v1677, %v1733
      %v1754 = vadd.f32 %v1678, %v1729
      %v1755 = vadd.f32 %v1679, %v1733
      %v1756 = vadd.f32 %v1680, %v1729
      %v1757 = vadd.f32 %v1681, %v1733
      %v1758 = vadd.f32 %v1682, %v1729
      %v1759 = vadd.f32 %v1683, %v1733
      %v1760 = vadd.f32 %v1684, %v1729
      %v1761 = vadd.f32 %v1685, %v1733
      %v1762 = vadd.f32 %v1686, %v1729
      %v1763 = vadd.f32 %v1687, %v1733
      %v1764 = vadd.f32 %v1688, %v1729
      %v1765 = vadd.f32 %v1689, %v1733
      %v1766 = vadd.f32 %v1690, %v1729
      %v1767 = vadd.f32 %v1691, %v1733
      %v1768 = vadd.f32 %v1692, %v1729
      %v1769 = vadd.f32 %v1693, %v1733
      %v1770 = vadd.f32 %v1694, %v1729
      %v1771 = vadd.f32 %v1695, %v1733
      %v1772 = vadd.f32 %v1696, %v1729
      %v1773 = vadd.f32 %v1697, %v1733
      %v1774 = vadd.f32 %v1698, %v1729
      %v1775 = vadd.f32 %v1699, %v1733
      %v1776 = vadd.f32 %v1700, %v1729
      %v1777 = vadd.f32 %v1701, %v1733
      %v1778 = vadd.f32 %v1702, %v1729
      %v1779 = vadd.f32 %v1703, %v1733
      %v1780 = vadd.f32 %v1704, %v1729
      %v1781 = vadd.f32 %v1705, %v1733
      %v1782 = vadd.f32 %v1706, %v1729
      %v1783 = vadd.f32 %v1707, %v1733
      %v1784 = vadd.f32 %v1708, %v1729
      %v1785 = vadd.f32 %v1709, %v1733
      %v1786 = vadd.f32 %v1710, %v1729
      %v1787 = vadd.f32 %v1711, %v1733
      %v1788 = vadd.f32 %v1712, %v1729
      %v1789 = vadd.f32 %v1713, %v1733
      %v1790 = vadd.f32 %v1714, %v1729
      %v1791 = vadd.f32 %v1715, %v1733
      %v1792 = vadd.f32 %v1716, %v1729
      %v1793 = vadd.f32 %v1717, %v1733
      %v1794 = vadd.f32 %v1718, %v1729
      %v1795 = vadd.f32 %v1719, %v1733
      %v1796 = vadd.f32 %v1720, %v1729
      %v1797 = vadd.f32 %v1721, %v1733
      %v1798 = vadd.f32 %v1722, %v1729
      %v1799 = vadd.f32 %v1723, %v1733
      %v1800 = vmax.f32 %v1736, 0.0
      %v1801 = vmax.f32 %v1737, 0.0
      %v1802 = vmax.f32 %v1738, 0.0
      %v1803 = vmax.f32 %v1739, 0.0
      %v1804 = vmax.f32 %v1740, 0.0
      %v1805 = vmax.f32 %v1741, 0.0
      %v1806 = vmax.f32 %v1742, 0.0
      %v1807 = vmax.f32 %v1743, 0.0
      %v1808 = vmax.f32 %v1744, 0.0
      %v1809 = vmax.f32 %v1745, 0.0
      %v1810 = vmax.f32 %v1746, 0.0
      %v1811 = vmax.f32 %v1747, 0.0
      %v1812 = vmax.f32 %v1748, 0.0
      %v1813 = vmax.f32 %v1749, 0.0
      %v1814 = vmax.f32 %v1750, 0.0
      %v1815 = vmax.f32 %v1751, 0.0
      %v1816 = vmax.f32 %v1752, 0.0
      %v1817 = vmax.f32 %v1753, 0.0
      %v1818 = vmax.f32 %v1754, 0.0
      %v1819 = vmax.f32 %v1755, 0.0
      %v1820 = vmax.f32 %v1756, 0.0
      %v1821 = vmax.f32 %v1757, 0.0
      %v1822 = vmax.f32 %v1758, 0.0
      %v1823 = vmax.f32 %v1759, 0.0
      %v1824 = vmax.f32 %v1760, 0.0
      %v1825 = vmax.f32 %v1761, 0.0
      %v1826 = vmax.f32 %v1762, 0.0
      %v1827 = vmax.f32 %v1763, 0.0
      %v1828 = vmax.f32 %v1764, 0.0
      %v1829 = vmax.f32 %v1765, 0.0
      %v1830 = vmax.f32 %v1766, 0.0
      %v1831 = vmax.f32 %v1767, 0.0
      %v1832 = vmax.f32 %v1768, 0.0
      %v1833 = vmax.f32 %v1769, 0.0
      %v1834 = vmax.f32 %v1770, 0.0
      %v1835 = vmax.f32 %v1771, 0.0
      %v1836 = vmax.f32 %v1772, 0.0
      %v1837 = vmax.f32 %v1773, 0.0
      %v1838 = vmax.f32 %v1774, 0.0
      %v1839 = vmax.f32 %v1775, 0.0
      %v1840 = vmax.f32 %v1776, 0.0
      %v1841 = vmax.f32 %v1777, 0.0
      %v1842 = vmax.f32 %v1778, 0.0
      %v1843 = vmax.f32 %v1779, 0.0
      %v1844 = vmax.f32 %v1780, 0.0
      %v1845 = vmax.f32 %v1781, 0.0
      %v1846 = vmax.f32 %v1782, 0.0
      %v1847 = vmax.f32 %v1783, 0.0
      %v1848 = vmax.f32 %v1784, 0.0
      %v1849 = vmax.f32 %v1785, 0.0
      %v1850 = vmax.f32 %v1786, 0.0
      %v1851 = vmax.f32 %v1787, 0.0
      %v1852 = vmax.f32 %v1788, 0.0
      %v1853 = vmax.f32 %v1789, 0.0
      %v1854 = vmax.f32 %v1790, 0.0
      %v1855 = vmax.f32 %v1791, 0.0
      %v1856 = vmax.f32 %v1792, 0.0
      %v1857 = vmax.f32 %v1793, 0.0
      %v1858 = vmax.f32 %v1794, 0.0
      %v1859 = vmax.f32 %v1795, 0.0
      %v1860 = vmax.f32 %v1796, 0.0
      %v1861 = vmax.f32 %v1797, 0.0
      %v1862 = vmax.f32 %v1798, 0.0
      %v1863 = vmax.f32 %v1799, 0.0
      %v1864 = vpack.c.bf16 %v1802, %v1800
      %v1865 = vpack.c.bf16 %v1803, %v1801
      %v1866 = vpack.c.bf16 %v1806, %v1804
      %v1867 = vpack.c.bf16 %v1807, %v1805
      %v1868 = vpack.c.bf16 %v1810, %v1808
      %v1869 = vpack.c.bf16 %v1811, %v1809
      %v1870 = vpack.c.bf16 %v1814, %v1812
      %v1871 = vpack.c.bf16 %v1815, %v1813
      %v1872 = vpack.c.bf16 %v1818, %v1816
      %v1873 = vpack.c.bf16 %v1819, %v1817
      %v1874 = vpack.c.bf16 %v1822, %v1820
      %v1875 = vpack.c.bf16 %v1823, %v1821
      %v1876 = vpack.c.bf16 %v1826, %v1824
      %v1877 = vpack.c.bf16 %v1827, %v1825
      %v1878 = vpack.c.bf16 %v1830, %v1828
      %v1879 = vpack.c.bf16 %v1831, %v1829
      %v1880 = vpack.c.bf16 %v1834, %v1832
      %v1881 = vpack.c.bf16 %v1835, %v1833
      %v1882 = vpack.c.bf16 %v1838, %v1836
      %v1883 = vpack.c.bf16 %v1839, %v1837
      %v1884 = vpack.c.bf16 %v1842, %v1840
      %v1885 = vpack.c.bf16 %v1843, %v1841
      %v1886 = vpack.c.bf16 %v1846, %v1844
      %v1887 = vpack.c.bf16 %v1847, %v1845
      %v1888 = vpack.c.bf16 %v1850, %v1848
      %v1889 = vpack.c.bf16 %v1851, %v1849
      %v1890 = vpack.c.bf16 %v1854, %v1852
      %v1891 = vpack.c.bf16 %v1855, %v1853
      %v1892 = vpack.c.bf16 %v1858, %v1856
      %v1893 = vpack.c.bf16 %v1859, %v1857
      %v1894 = vpack.c.bf16 %v1862, %v1860
      %v1895 = vpack.c.bf16 %v1863, %v1861
      %v1928 = vunpack.c.l.b16 %v1864
      %v1929 = vunpack.c.l.b16 %v1865
      %v1930 = vunpack.c.h.b16 %v1864
      %v1931 = vunpack.c.h.b16 %v1865
      %v1932 = vunpack.c.l.b16 %v1866
      %v1933 = vunpack.c.l.b16 %v1867
      %v1934 = vunpack.c.h.b16 %v1866
      %v1935 = vunpack.c.h.b16 %v1867
      %v1936 = vunpack.c.l.b16 %v1868
      %v1937 = vunpack.c.l.b16 %v1869
      %v1938 = vunpack.c.h.b16 %v1868
      %v1939 = vunpack.c.h.b16 %v1869
      %v1940 = vunpack.c.l.b16 %v1870
      %v1941 = vunpack.c.l.b16 %v1871
      %v1942 = vunpack.c.h.b16 %v1870
      %v1943 = vunpack.c.h.b16 %v1871
      %v1944 = vunpack.c.l.b16 %v1872
      %v1945 = vunpack.c.l.b16 %v1873
      %v1946 = vunpack.c.h.b16 %v1872
      %v1947 = vunpack.c.h.b16 %v1873
      %v1948 = vunpack.c.l.b16 %v1874
      %v1949 = vunpack.c.l.b16 %v1875
      %v1950 = vunpack.c.h.b16 %v1874
      %v1951 = vunpack.c.h.b16 %v1875
      %v1952 = vunpack.c.l.b16 %v1876
      %v1953 = vunpack.c.l.b16 %v1877
      %v1954 = vunpack.c.h.b16 %v1876
      %v1955 = vunpack.c.h.b16 %v1877
      %v1956 = vunpack.c.l.b16 %v1878
      %v1957 = vunpack.c.l.b16 %v1879
      %v1958 = vunpack.c.h.b16 %v1878
      %v1959 = vunpack.c.h.b16 %v1879
      %v1960 = vunpack.c.l.b16 %v1880
      %v1961 = vunpack.c.l.b16 %v1881
      %v1962 = vunpack.c.h.b16 %v1880
      %v1963 = vunpack.c.h.b16 %v1881
      %v1964 = vunpack.c.l.b16 %v1882
      %v1965 = vunpack.c.l.b16 %v1883
      %v1966 = vunpack.c.h.b16 %v1882
      %v1967 = vunpack.c.h.b16 %v1883
      %v1968 = vunpack.c.l.b16 %v1884
      %v1969 = vunpack.c.l.b16 %v1885
      %v1970 = vunpack.c.h.b16 %v1884
      %v1971 = vunpack.c.h.b16 %v1885
      %v1972 = vunpack.c.l.b16 %v1886
      %v1973 = vunpack.c.l.b16 %v1887
      %v1974 = vunpack.c.h.b16 %v1886
      %v1975 = vunpack.c.h.b16 %v1887
      %v1976 = vunpack.c.l.b16 %v1888
      %v1977 = vunpack.c.l.b16 %v1889
      %v1978 = vunpack.c.h.b16 %v1888
      %v1979 = vunpack.c.h.b16 %v1889
      %v1980 = vunpack.c.l.b16 %v1890
      %v1981 = vunpack.c.l.b16 %v1891
      %v1982 = vunpack.c.h.b16 %v1890
      %v1983 = vunpack.c.h.b16 %v1891
      %v1984 = vunpack.c.l.b16 %v1892
      %v1985 = vunpack.c.l.b16 %v1893
      %v1986 = vunpack.c.h.b16 %v1892
      %v1987 = vunpack.c.h.b16 %v1893
      %v1988 = vunpack.c.l.b16 %v1894
      %v1989 = vunpack.c.l.b16 %v1895
      %v1990 = vunpack.c.h.b16 %v1894
      %v1991 = vunpack.c.h.b16 %v1895
      %v1992 = vpack.c.b16 %v1929, %v1928
      %v1993 = vpack.c.b16 %v1931, %v1930
      %v1994 = vpack.c.b16 %v1933, %v1932
      %v1995 = vpack.c.b16 %v1935, %v1934
      %v1996 = vpack.c.b16 %v1937, %v1936
      %v1997 = vpack.c.b16 %v1939, %v1938
      %v1998 = vpack.c.b16 %v1941, %v1940
      %v1999 = vpack.c.b16 %v1943, %v1942
      %v2000 = vpack.c.b16 %v1945, %v1944
      %v2001 = vpack.c.b16 %v1947, %v1946
      %v2002 = vpack.c.b16 %v1949, %v1948
      %v2003 = vpack.c.b16 %v1951, %v1950
      %v2004 = vpack.c.b16 %v1953, %v1952
      %v2005 = vpack.c.b16 %v1955, %v1954
      %v2006 = vpack.c.b16 %v1957, %v1956
      %v2007 = vpack.c.b16 %v1959, %v1958
      %v2008 = vpack.c.b16 %v1961, %v1960
      %v2009 = vpack.c.b16 %v1963, %v1962
      %v2010 = vpack.c.b16 %v1965, %v1964
      %v2011 = vpack.c.b16 %v1967, %v1966
      %v2012 = vpack.c.b16 %v1969, %v1968
      %v2013 = vpack.c.b16 %v1971, %v1970
      %v2014 = vpack.c.b16 %v1973, %v1972
      %v2015 = vpack.c.b16 %v1975, %v1974
      %v2016 = vpack.c.b16 %v1977, %v1976
      %v2017 = vpack.c.b16 %v1979, %v1978
      %v2018 = vpack.c.b16 %v1981, %v1980
      %v2019 = vpack.c.b16 %v1983, %v1982
      %v2020 = vpack.c.b16 %v1985, %v1984
      %v2021 = vpack.c.b16 %v1987, %v1986
      %v2022 = vpack.c.b16 %v1989, %v1988
      %v2023 = vpack.c.b16 %v1991, %v1990
      %2056 = vst [vmem:[%s213] sm:$0xff] %v1992
      %2057 = vst [vmem:[%s213 + $0x8] sm:$0xff] %v1993
      %2058 = vst [vmem:[%s213 + $0x10] sm:$0xff] %v1994
      %2059 = vst [vmem:[%s213 + $0x18] sm:$0xff] %v1995
      %2060 = vst [vmem:[%s213 + $0x20] sm:$0xff] %v1996
      %2061 = vst [vmem:[%s213 + $0x28] sm:$0xff] %v1997
      %2062 = vst [vmem:[%s213 + $0x30] sm:$0xff] %v1998
      %2063 = vst [vmem:[%s213 + $0x38] sm:$0xff] %v1999
      %2064 = vst [vmem:[%s213 + $0x40] sm:$0xff] %v2000
      %2065 = vst [vmem:[%s213 + $0x48] sm:$0xff] %v2001
      %2066 = vst [vmem:[%s213 + $0x50] sm:$0xff] %v2002
      %2067 = vst [vmem:[%s213 + $0x58] sm:$0xff] %v2003
      %2068 = vst [vmem:[%s213 + $0x60] sm:$0xff] %v2004
      %2069 = vst [vmem:[%s213 + $0x68] sm:$0xff] %v2005
      %2070 = vst [vmem:[%s213 + $0x70] sm:$0xff] %v2006
      %2071 = vst [vmem:[%s213 + $0x78] sm:$0xff] %v2007
      %2072 = vst [vmem:[%s213 + $0x80] sm:$0xff] %v2008
      %2073 = vst [vmem:[%s213 + $0x88] sm:$0xff] %v2009
      %2074 = vst [vmem:[%s213 + $0x90] sm:$0xff] %v2010
      %2075 = vst [vmem:[%s213 + $0x98] sm:$0xff] %v2011
      %2076 = vst [vmem:[%s213 + $0xa0] sm:$0xff] %v2012
      %2077 = vst [vmem:[%s213 + $0xa8] sm:$0xff] %v2013
      %2078 = vst [vmem:[%s213 + $0xb0] sm:$0xff] %v2014
      %2079 = vst [vmem:[%s213 + $0xb8] sm:$0xff] %v2015
      %2080 = vst [vmem:[%s213 + $0xc0] sm:$0xff] %v2016
      %2081 = vst [vmem:[%s213 + $0xc8] sm:$0xff] %v2017
      %2082 = vst [vmem:[%s213 + $0xd0] sm:$0xff] %v2018
      %2083 = vst [vmem:[%s213 + $0xd8] sm:$0xff] %v2019
      %2084 = vst [vmem:[%s213 + $0xe0] sm:$0xff] %v2020
      %2085 = vst [vmem:[%s213 + $0xe8] sm:$0xff] %v2021
      %2086 = vst [vmem:[%s213 + $0xf0] sm:$0xff] %v2022
      %2087 = vst [vmem:[%s213 + $0xf8] sm:$0xff] %v2023
      %s2088 = smul.u32 8, %s19
      %p2089 = scmp.lt.s32.totalorder %s18, 1
      %s2090 = scalar_select %p2089, %s18, 1
      %p2091 = scmp.lt.s32.totalorder %s2088, 7
      %s2092 = scalar_select %p2091, %s2088, 7
      %s2093 = smul.addr %s2092, 2
      %s2094 = smul.addr %s2090, 64
      %s2095 = sadd.s32 %s2093, %s2094
      %s2096 = smul.addr %s2095, 4
      %s2097 = scalar_lea.vmem %s3, %s2096
      // Predicated region
      $region33: #{mixed_4b.6} parent=31 // pred_check
        %p2098 = pneg %p116
      $region34: #{mixed_4b.6} parent=31 // pred_check_branch
        %2100 = sbr.rel (%p2098) target = $region36
      $region35: #{mixed_4b.6} parent=31 // pred_region
        %s2101 = smul.u32 8, %s19
      $region36: #{mixed_4b.6} parent=31 // pred_fallthru
        _
    $region32: #{mixed_4b.6} parent=5 // pred_fallthru
      _
    %p2102 = scmp.le.s32.totalorder 2, %s9
    // Predicated region
    $region37: #{mixed_4b.6} parent=5 // pred_check
      %p2103 = pneg %p2102
    $region38: #{mixed_4b.6} parent=5 // pred_check_branch
      %2105 = sbr.rel (%p2103) target = $region40
    $region39: #{mixed_4b.6} parent=5 // pred_region
      %s2106 = ssub.s32 %s9, 2
      // Predicated region
      $region41: #{mixed_4b.6} parent=39 // pred_check
        %p2107 = pneg %p122
      $region42: #{mixed_4b.6} parent=39 // pred_check_branch
        %2109 = sbr.rel (%p2107) target = $region44
      $region43: #{mixed_4b.6} parent=39 // pred_region
        %s2110 = smul.u32 8, %s21
        %p2111 = scmp.lt.s32.totalorder %s20, 1
        %s2112 = scalar_select %p2111, %s20, 1
        %p2113 = scmp.lt.s32.totalorder %s2110, 7
        %s2114 = scalar_select %p2113, %s2110, 7
        %s2115 = smul.addr %s2114, 2
        %s2116 = smul.addr %s2112, 64
        %s2117 = sadd.s32 %s2115, %s2116
        %s2118 = smul.addr %s2117, 4
        %s2119 = scalar_lea.vmem %s3, %s2118
      $region44: #{mixed_4b.6} parent=39 // pred_fallthru
        _
    $region40: #{mixed_4b.6} parent=5 // pred_fallthru
      _
  $region6: #{mixed_4b.6} parent=0 // loop_footer
    %s13 = sadd.s32 1, %s9
  $region7: #{mixed_4b.6} parent=0 // loop_footer_branch
    %8 = sbr.rel target = $region3
  $region8: #{mixed_4b.6} parent=0 // loop_exit
    _

// kernel: mixed_4b.5
$region0: #{mixed_4b.5}
  #allocation0 [shape = 'u32[]', space=smem, size = 0x4, offset = 0x4, fixed_abs, tag = 'smem constant byte address 0x4 - core index']
  #allocation1 [shape = 'u32[144,128]{1,0:T(1,128)}', space=vmem, size = 0x12000, scoped, tag = 'internal scratch']
  %s0 = inlined_call_operand.vmem [shape: bf16[8,10,10,128], index: 0, kind: input, shape index: {}]
  %s1 = inlined_call_operand.vmem [shape: bf16[3,384,256], index: 1, kind: input, shape index: {}]
  %s2 = inlined_call_operand.vmem [shape: f32[1,256], index: 2, kind: input, shape index: {}]
  %s3 = inlined_call_operand.vmem [shape: bf16[8,64,256], index: 3, kind: output, shape index: {}]
  %s4 = sld [smem:[#allocation0]]
  $region45: #{mixed_4b.5} parent=0
    _
  %s6 = ssub.s32 1, %s4
  %s7 = scalar_select 0, %s6, %s4
  loop: start=0, step=1, limit=4
  $region2: #{mixed_4b.5} parent=0 // loop_pre_header
    _
  $region3: #{mixed_4b.5} parent=0 // loop_header
    %s9 = sphi 0, %s13
    %p10 = scmp.ge.s32.totalorder %s9, 4
    %s19 = sphi 0, %s21
    %s22 = sphi 0, %s19
    %s23 = sphi 0, %s22
    %s39 = sphi 0, %s23
    %s43 = sphi 0, %s43
    %s45 = sphi 0, %s43
    %s46 = sphi 0, %s45
    %s60 = sphi 0, %s46
    %s64 = sphi 0, %s64
    %s66 = sphi 0, %s64
    %s67 = sphi 0, %s66
    %s81 = sphi 0, %s67
    %s87 = sphi 0, %s89
    %s90 = sphi 0, %s87
    %s91 = sphi 0, %s90
    %s107 = sphi 0, %s91
  $region4: #{mixed_4b.5} parent=0 // loop_header_branch
    %12 = sbr.rel (%p10) target = $region8
  $region5: #{mixed_4b.5} parent=0 // loop_body
    %s14 = ssub.s32 %s9, 1
    %s15 = ssub.s32 %s9, 2
    %s16 = sadd.s32 %s9, 1
    %s17 = ssub.s32 %s9, %s16
    %p18 = scmp.eq.s32.totalorder %s17, 0
    %s20 = sadd.s32 %s19, 1
    %s21 = scalar_select %p18, %s19, %s20
    %p24 = pneg %p18
    %p25 = scmp.eq.s32.totalorder %s9, 1
    %p26 = por %p24, %p25
    %p27 = scmp.ne.s32.totalorder %s19, %s22
    %p28 = scmp.eq.s32.totalorder %s9, 0
    %p29 = por %p27, %p28
    %p30 = scmp.ne.s32.totalorder %s19, %s22
    %p31 = scmp.eq.s32.totalorder %s14, 1
    %p32 = por %p30, %p31
    %p33 = scmp.ne.s32.totalorder %s22, %s23
    %p34 = scmp.eq.s32.totalorder %s14, 0
    %p35 = por %p33, %p34
    %p36 = scmp.ne.s32.totalorder %s22, %s23
    %p37 = scmp.eq.s32.totalorder %s15, 1
    %p38 = por %p36, %p37
    %p40 = scmp.ne.s32.totalorder %s23, %s39
    %p41 = scmp.eq.s32.totalorder %s15, 0
    %p42 = por %p40, %p41
    %s44 = sadd.s32 %s43, 1
    %p47 = scmp.eq.s32.totalorder %s9, 1
    %p48 = scmp.ne.s32.totalorder %s43, %s45
    %p49 = scmp.eq.s32.totalorder %s9, 0
    %p50 = por %p48, %p49
    %p51 = scmp.ne.s32.totalorder %s43, %s45
    %p52 = scmp.eq.s32.totalorder %s14, 1
    %p53 = por %p51, %p52
    %p54 = scmp.ne.s32.totalorder %s45, %s46
    %p55 = scmp.eq.s32.totalorder %s14, 0
    %p56 = por %p54, %p55
    %p57 = scmp.ne.s32.totalorder %s45, %s46
    %p58 = scmp.eq.s32.totalorder %s15, 1
    %p59 = por %p57, %p58
    %p61 = scmp.ne.s32.totalorder %s46, %s60
    %p62 = scmp.eq.s32.totalorder %s15, 0
    %p63 = por %p61, %p62
    %s65 = sadd.s32 %s64, 1
    %p68 = scmp.eq.s32.totalorder %s9, 1
    %p69 = scmp.ne.s32.totalorder %s64, %s66
    %p70 = scmp.eq.s32.totalorder %s9, 0
    %p71 = por %p69, %p70
    %p72 = scmp.ne.s32.totalorder %s64, %s66
    %p73 = scmp.eq.s32.totalorder %s14, 1
    %p74 = por %p72, %p73
    %p75 = scmp.ne.s32.totalorder %s66, %s67
    %p76 = scmp.eq.s32.totalorder %s14, 0
    %p77 = por %p75, %p76
    %p78 = scmp.ne.s32.totalorder %s66, %s67
    %p79 = scmp.eq.s32.totalorder %s15, 1
    %p80 = por %p78, %p79
    %p82 = scmp.ne.s32.totalorder %s67, %s81
    %p83 = scmp.eq.s32.totalorder %s15, 0
    %p84 = por %p82, %p83
    %s85 = ssub.s32 %s9, %s16
    %p86 = scmp.eq.s32.totalorder %s85, 0
    %s88 = sadd.s32 %s87, 1
    %s89 = scalar_select %p86, %s87, %s88
    %p92 = pneg %p86
    %p93 = scmp.eq.s32.totalorder %s9, 1
    %p94 = por %p92, %p93
    %p95 = scmp.ne.s32.totalorder %s87, %s90
    %p96 = scmp.eq.s32.totalorder %s9, 0
    %p97 = por %p95, %p96
    %p98 = scmp.ne.s32.totalorder %s87, %s90
    %p99 = scmp.eq.s32.totalorder %s14, 1
    %p100 = por %p98, %p99
    %p101 = scmp.ne.s32.totalorder %s90, %s91
    %p102 = scmp.eq.s32.totalorder %s14, 0
    %p103 = por %p101, %p102
    %p104 = scmp.ne.s32.totalorder %s90, %s91
    %p105 = scmp.eq.s32.totalorder %s15, 1
    %p106 = por %p104, %p105
    %p108 = scmp.ne.s32.totalorder %s91, %s107
    %p109 = scmp.eq.s32.totalorder %s15, 0
    %p110 = por %p108, %p109
    %p111 = scmp.le.s32.totalorder 1, %s9
    %p112 = scmp.lt.s32.totalorder %s9, 3
    %p113 = pnand %p111, %p112
    %p114 = pneg %p113
    // Predicated region
    $region9: #{mixed_4b.5} parent=5 // pred_check
      _
    $region10: #{mixed_4b.5} parent=5 // pred_check_branch
      %116 = sbr.rel (%p113) target = $region12
    $region11: #{mixed_4b.5} parent=5 // pred_region
      %s117 = ssub.s32 %s9, 1
      // Predicated region
      $region13: #{mixed_4b.5} parent=11 // pred_check
        %p118 = pneg %p56
      $region14: #{mixed_4b.5} parent=11 // pred_check_branch
        %120 = sbr.rel (%p118) target = $region16
      $region15: #{mixed_4b.5} parent=11 // pred_region
        _
      $region16: #{mixed_4b.5} parent=11 // pred_fallthru
        _
      // Predicated region
      $region17: #{mixed_4b.5} parent=11 // pred_check
        %p121 = pneg %p77
      $region18: #{mixed_4b.5} parent=11 // pred_check_branch
        %123 = sbr.rel (%p121) target = $region20
      $region19: #{mixed_4b.5} parent=11 // pred_region
        _
      $region20: #{mixed_4b.5} parent=11 // pred_fallthru
        _
    $region12: #{mixed_4b.5} parent=5 // pred_fallthru
      _
    %p124 = scmp.lt.s32.totalorder %s9, 2
    // Predicated region
    $region21: #{mixed_4b.5} parent=5 // pred_check
      %p125 = pneg %p124
    $region22: #{mixed_4b.5} parent=5 // pred_check_branch
      %127 = sbr.rel (%p125) target = $region24
    $region23: #{mixed_4b.5} parent=5 // pred_region
      // Predicated region
      $region25: #{mixed_4b.5} parent=23 // pred_check
        %p128 = pneg %p29
      $region26: #{mixed_4b.5} parent=23 // pred_check_branch
        %130 = sbr.rel (%p128) target = $region28
      $region27: #{mixed_4b.5} parent=23 // pred_region
        %s131 = smul.u32 4, %s9
        %p132 = scmp.lt.s32.totalorder %s131, 7
        %s133 = scalar_select %p132, %s131, 7
        %s134 = smul.addr %s133, 20
        %s135 = smul.addr %s134, 4
        %s136 = scalar_lea.vmem %s0, %s135
        %s137 = smul.u32 4, %s9
      $region28: #{mixed_4b.5} parent=23 // pred_fallthru
        _
    $region24: #{mixed_4b.5} parent=5 // pred_fallthru
      _
    %p138 = scmp.le.s32.totalorder 1, %s9
    %p139 = scmp.lt.s32.totalorder %s9, 3
    %p140 = pnand %p138, %p139
    %p141 = pneg %p140
    // Predicated region
    $region29: #{mixed_4b.5} parent=5 // pred_check
      _
    $region30: #{mixed_4b.5} parent=5 // pred_check_branch
      %143 = sbr.rel (%p140) target = $region32
    $region31: #{mixed_4b.5} parent=5 // pred_region
      %s144 = ssub.s32 %s9, 1
      %s145 = smul.u32 4, %s14
      %p146 = scmp.lt.s32.totalorder %s145, 7
      %s147 = scalar_select %p146, %s145, 7
      %s148 = smul.addr %s147, 20
      %s149 = smul.addr %s148, 4
      %s150 = scalar_lea.vmem %s0, %s149
      %p151 = pneg %p35
      %p152 = pneg %p32
      %p153 = pneg %p56
      %p154 = pneg %p53
      %p155 = pneg %p77
      %p156 = pneg %p74
      %p157 = pneg %p103
      %p158 = pneg %p100
      %s159 = smul.u32 4, %s14
      %p160 = scmp.lt.s32.totalorder %s159, 7
      %s161 = scalar_select %p160, %s159, 7
      %s162 = smul.addr %s161, 16
      %s163 = smul.addr %s162, 4
      %s164 = scalar_lea.vmem %s3, %s163
      %s165 = smul.u32 4, %s14
      %p166 = scmp.lt.s32.totalorder %s165, 7
      %s167 = scalar_select %p166, %s165, 7
      %s168 = smul.addr %s167, 20
      %s169 = smul.addr %s168, 4
      %s170 = scalar_lea.vmem %s0, %s169
      %s171 = smul.u32 4, %s14
      %s172 = smul.u32 4, %s14
      %p173 = scmp.lt.s32.totalorder %s172, 7
      %s174 = scalar_select %p173, %s172, 7
      %s175 = smul.addr %s174, 16
      %s176 = smul.addr %s175, 4
      %s177 = scalar_lea.vmem %s3, %s176
      %s178 = smul.u32 4, %s14
      %v180 = vld [vmem:[%s170] sm:$0xf]
      %v181 = vld [vmem:[%s170 + $0x4] sm:$0x1]
      %v182 = vld [vmem:[%s170 + $0x8] sm:$0xf]
      %v183 = vld [vmem:[%s170 + $0xc] sm:$0x1]
      %v184 = vld [vmem:[%s170 + $0x10] sm:$0xf]
      %v185 = vld [vmem:[%s170 + $0x14] sm:$0x1]
      %v186 = vld [vmem:[%s170 + $0x18] sm:$0xf]
      %v187 = vld [vmem:[%s170 + $0x1c] sm:$0x1]
      %v188 = vld [vmem:[%s170 + $0x20] sm:$0xf]
      %v189 = vld [vmem:[%s170 + $0x24] sm:$0x1]
      %v190 = vld [vmem:[%s170 + $0x28] sm:$0xf]
      %v191 = vld [vmem:[%s170 + $0x2c] sm:$0x1]
      %v192 = vld [vmem:[%s170 + $0x30] sm:$0xf]
      %v193 = vld [vmem:[%s170 + $0x34] sm:$0x1]
      %v194 = vld [vmem:[%s170 + $0x38] sm:$0xf]
      %v195 = vld [vmem:[%s170 + $0x3c] sm:$0x1]
      %v196 = vld [vmem:[%s170 + $0x40] sm:$0xf]
      %v197 = vld [vmem:[%s170 + $0x44] sm:$0x1]
      %v198 = vld [vmem:[%s170 + $0x48] sm:$0xf]
      %v199 = vld [vmem:[%s170 + $0x4c] sm:$0x1]
      %v200 = vld [vmem:[%s170 + $0x50] sm:$0xf]
      %v201 = vld [vmem:[%s170 + $0x54] sm:$0x1]
      %v202 = vld [vmem:[%s170 + $0x58] sm:$0xf]
      %v203 = vld [vmem:[%s170 + $0x5c] sm:$0x1]
      %v204 = vld [vmem:[%s170 + $0x60] sm:$0xf]
      %v205 = vld [vmem:[%s170 + $0x64] sm:$0x1]
      %v206 = vld [vmem:[%s170 + $0x68] sm:$0xf]
      %v207 = vld [vmem:[%s170 + $0x6c] sm:$0x1]
      %v208 = vld [vmem:[%s170 + $0x70] sm:$0xf]
      %v209 = vld [vmem:[%s170 + $0x74] sm:$0x1]
      %v210 = vld [vmem:[%s170 + $0x78] sm:$0xf]
      %v211 = vld [vmem:[%s170 + $0x7c] sm:$0x1]
      %v212 = vld [vmem:[%s170 + $0x80] sm:$0xf]
      %v213 = vld [vmem:[%s170 + $0x84] sm:$0x1]
      %v214 = vld [vmem:[%s170 + $0x88] sm:$0xf]
      %v215 = vld [vmem:[%s170 + $0x8c] sm:$0x1]
      %v216 = vld [vmem:[%s170 + $0x90] sm:$0xf]
      %v217 = vld [vmem:[%s170 + $0x94] sm:$0x1]
      %v218 = vld [vmem:[%s170 + $0x98] sm:$0xf]
      %v219 = vld [vmem:[%s170 + $0x9c] sm:$0x1]
      %v220 = vld [vmem:[%s170 + $0xa0] sm:$0xf]
      %v221 = vld [vmem:[%s170 + $0xa4] sm:$0x1]
      %v222 = vld [vmem:[%s170 + $0xa8] sm:$0xf]
      %v223 = vld [vmem:[%s170 + $0xac] sm:$0x1]
      %v224 = vld [vmem:[%s170 + $0xb0] sm:$0xf]
      %v225 = vld [vmem:[%s170 + $0xb4] sm:$0x1]
      %v226 = vld [vmem:[%s170 + $0xb8] sm:$0xf]
      %v227 = vld [vmem:[%s170 + $0xbc] sm:$0x1]
      %v228 = vld [vmem:[%s170 + $0xc0] sm:$0xf]
      %v229 = vld [vmem:[%s170 + $0xc4] sm:$0x1]
      %v230 = vld [vmem:[%s170 + $0xc8] sm:$0xf]
      %v231 = vld [vmem:[%s170 + $0xcc] sm:$0x1]
      %v232 = vld [vmem:[%s170 + $0xd0] sm:$0xf]
      %v233 = vld [vmem:[%s170 + $0xd4] sm:$0x1]
      %v234 = vld [vmem:[%s170 + $0xd8] sm:$0xf]
      %v235 = vld [vmem:[%s170 + $0xdc] sm:$0x1]
      %v236 = vld [vmem:[%s170 + $0xe0] sm:$0xf]
      %v237 = vld [vmem:[%s170 + $0xe4] sm:$0x1]
      %v238 = vld [vmem:[%s170 + $0xe8] sm:$0xf]
      %v239 = vld [vmem:[%s170 + $0xec] sm:$0x1]
      %v240 = vld [vmem:[%s170 + $0xf0] sm:$0xf]
      %v241 = vld [vmem:[%s170 + $0xf4] sm:$0x1]
      %v242 = vld [vmem:[%s170 + $0xf8] sm:$0xf]
      %v243 = vld [vmem:[%s170 + $0xfc] sm:$0x1]
      %v244 = vld [vmem:[%s170 + $0x100] sm:$0xf]
      %v245 = vld [vmem:[%s170 + $0x104] sm:$0x1]
      %v246 = vld [vmem:[%s170 + $0x108] sm:$0xf]
      %v247 = vld [vmem:[%s170 + $0x10c] sm:$0x1]
      %v248 = vld [vmem:[%s170 + $0x110] sm:$0xf]
      %v249 = vld [vmem:[%s170 + $0x114] sm:$0x1]
      %v250 = vld [vmem:[%s170 + $0x118] sm:$0xf]
      %v251 = vld [vmem:[%s170 + $0x11c] sm:$0x1]
      %v252 = vld [vmem:[%s170 + $0x120] sm:$0xf]
      %v253 = vld [vmem:[%s170 + $0x124] sm:$0x1]
      %v254 = vld [vmem:[%s170 + $0x128] sm:$0xf]
      %v255 = vld [vmem:[%s170 + $0x12c] sm:$0x1]
      %v256 = vld [vmem:[%s170 + $0x130] sm:$0xf]
      %v257 = vld [vmem:[%s170 + $0x134] sm:$0x1]
      %v258 = vld [vmem:[%s170 + $0x138] sm:$0xf]
      %v259 = vld [vmem:[%s170 + $0x13c] sm:$0x1]
      %v340 = vunpack.c.l.b16 %v180
      %v341 = vunpack.c.l.b16 %v181
      %v342 = vunpack.c.l.b16 %v182
      %v343 = vunpack.c.l.b16 %v183
      %v344 = vunpack.c.l.b16 %v184
      %v345 = vunpack.c.l.b16 %v185
      %v346 = vunpack.c.l.b16 %v186
      %v347 = vunpack.c.l.b16 %v187
      %v348 = vunpack.c.l.b16 %v188
      %v349 = vunpack.c.l.b16 %v189
      %v350 = vunpack.c.l.b16 %v190
      %v351 = vunpack.c.l.b16 %v191
      %v352 = vunpack.c.l.b16 %v192
      %v353 = vunpack.c.l.b16 %v193
      %v354 = vunpack.c.l.b16 %v194
      %v355 = vunpack.c.l.b16 %v195
      %v356 = vunpack.c.l.b16 %v196
      %v357 = vunpack.c.l.b16 %v197
      %v358 = vunpack.c.l.b16 %v198
      %v359 = vunpack.c.l.b16 %v199
      %v360 = vunpack.c.l.b16 %v200
      %v361 = vunpack.c.l.b16 %v201
      %v362 = vunpack.c.l.b16 %v202
      %v363 = vunpack.c.l.b16 %v203
      %v364 = vunpack.c.l.b16 %v204
      %v365 = vunpack.c.l.b16 %v205
      %v366 = vunpack.c.l.b16 %v206
      %v367 = vunpack.c.l.b16 %v207
      %v368 = vunpack.c.l.b16 %v208
      %v369 = vunpack.c.l.b16 %v209
      %v370 = vunpack.c.l.b16 %v210
      %v371 = vunpack.c.l.b16 %v211
      %v372 = vunpack.c.l.b16 %v212
      %v373 = vunpack.c.l.b16 %v213
      %v374 = vunpack.c.l.b16 %v214
      %v375 = vunpack.c.l.b16 %v215
      %v376 = vunpack.c.l.b16 %v216
      %v377 = vunpack.c.l.b16 %v217
      %v378 = vunpack.c.l.b16 %v218
      %v379 = vunpack.c.l.b16 %v219
      %v380 = vunpack.c.l.b16 %v220
      %v381 = vunpack.c.l.b16 %v221
      %v382 = vunpack.c.l.b16 %v222
      %v383 = vunpack.c.l.b16 %v223
      %v384 = vunpack.c.l.b16 %v224
      %v385 = vunpack.c.l.b16 %v225
      %v386 = vunpack.c.l.b16 %v226
      %v387 = vunpack.c.l.b16 %v227
      %v388 = vunpack.c.l.b16 %v228
      %v389 = vunpack.c.l.b16 %v229
      %v390 = vunpack.c.l.b16 %v230
      %v391 = vunpack.c.l.b16 %v231
      %v392 = vunpack.c.l.b16 %v232
      %v393 = vunpack.c.l.b16 %v233
      %v394 = vunpack.c.l.b16 %v234
      %v395 = vunpack.c.l.b16 %v235
      %v396 = vunpack.c.l.b16 %v236
      %v397 = vunpack.c.l.b16 %v237
      %v398 = vunpack.c.l.b16 %v238
      %v399 = vunpack.c.l.b16 %v239
      %v400 = vunpack.c.l.b16 %v240
      %v401 = vunpack.c.l.b16 %v241
      %v402 = vunpack.c.l.b16 %v242
      %v403 = vunpack.c.l.b16 %v243
      %v404 = vunpack.c.l.b16 %v244
      %v405 = vunpack.c.l.b16 %v245
      %v406 = vunpack.c.l.b16 %v246
      %v407 = vunpack.c.l.b16 %v247
      %v408 = vunpack.c.l.b16 %v248
      %v409 = vunpack.c.l.b16 %v249
      %v410 = vunpack.c.l.b16 %v250
      %v411 = vunpack.c.l.b16 %v251
      %v412 = vunpack.c.l.b16 %v252
      %v413 = vunpack.c.l.b16 %v253
      %v414 = vunpack.c.l.b16 %v254
      %v415 = vunpack.c.l.b16 %v255
      %v416 = vunpack.c.l.b16 %v256
      %v417 = vunpack.c.l.b16 %v257
      %v418 = vunpack.c.l.b16 %v258
      %v419 = vunpack.c.l.b16 %v259
      %v420 = vpack.c.b16 %v341, %v340
      %v421 = vpack.c.b16 %v343, %v342
      %v422 = vpack.c.b16 %v345, %v344
      %v423 = vpack.c.b16 %v347, %v346
      %v424 = vpack.c.b16 %v349, %v348
      %v425 = vpack.c.b16 %v351, %v350
      %v426 = vpack.c.b16 %v353, %v352
      %v427 = vpack.c.b16 %v355, %v354
      %v428 = vpack.c.b16 %v357, %v356
      %v429 = vpack.c.b16 %v359, %v358
      %v430 = vpack.c.b16 %v361, %v360
      %v431 = vpack.c.b16 %v363, %v362
      %v432 = vpack.c.b16 %v365, %v364
      %v433 = vpack.c.b16 %v367, %v366
      %v434 = vpack.c.b16 %v369, %v368
      %v435 = vpack.c.b16 %v371, %v370
      %v436 = vpack.c.b16 %v373, %v372
      %v437 = vpack.c.b16 %v375, %v374
      %v438 = vpack.c.b16 %v377, %v376
      %v439 = vpack.c.b16 %v379, %v378
      %v440 = vpack.c.b16 %v381, %v380
      %v441 = vpack.c.b16 %v383, %v382
      %v442 = vpack.c.b16 %v385, %v384
      %v443 = vpack.c.b16 %v387, %v386
      %v444 = vpack.c.b16 %v389, %v388
      %v445 = vpack.c.b16 %v391, %v390
      %v446 = vpack.c.b16 %v393, %v392
      %v447 = vpack.c.b16 %v395, %v394
      %v448 = vpack.c.b16 %v397, %v396
      %v449 = vpack.c.b16 %v399, %v398
      %v450 = vpack.c.b16 %v401, %v400
      %v451 = vpack.c.b16 %v403, %v402
      %v452 = vpack.c.b16 %v405, %v404
      %v453 = vpack.c.b16 %v407, %v406
      %v454 = vpack.c.b16 %v409, %v408
      %v455 = vpack.c.b16 %v411, %v410
      %v456 = vpack.c.b16 %v413, %v412
      %v457 = vpack.c.b16 %v415, %v414
      %v458 = vpack.c.b16 %v417, %v416
      %v459 = vpack.c.b16 %v419, %v418
      %v461 = vshrl.u32 %v420, 16
      %v463 = vshll.u32 %v420, 16
      %v465 = vrot.slane %v463, 1
      %v466 = vor.u32 %v461, %v465
      %v468 = vshrl.u32 %v421, 16
      %v470 = vshll.u32 %v421, 16
      %v472 = vrot.slane %v470, 1
      %v473 = vor.u32 %v468, %v472
      %v475 = vshrl.u32 %v422, 16
      %v477 = vshll.u32 %v422, 16
      %v479 = vrot.slane %v477, 1
      %v480 = vor.u32 %v475, %v479
      %v482 = vshrl.u32 %v423, 16
      %v484 = vshll.u32 %v423, 16
      %v486 = vrot.slane %v484, 1
      %v487 = vor.u32 %v482, %v486
      %v489 = vshrl.u32 %v424, 16
      %v491 = vshll.u32 %v424, 16
      %v493 = vrot.slane %v491, 1
      %v494 = vor.u32 %v489, %v493
      %v496 = vshrl.u32 %v425, 16
      %v498 = vshll.u32 %v425, 16
      %v500 = vrot.slane %v498, 1
      %v501 = vor.u32 %v496, %v500
      %v503 = vshrl.u32 %v426, 16
      %v505 = vshll.u32 %v426, 16
      %v507 = vrot.slane %v505, 1
      %v508 = vor.u32 %v503, %v507
      %v510 = vshrl.u32 %v427, 16
      %v512 = vshll.u32 %v427, 16
      %v514 = vrot.slane %v512, 1
      %v515 = vor.u32 %v510, %v514
      %v517 = vshrl.u32 %v428, 16
      %v519 = vshll.u32 %v428, 16
      %v521 = vrot.slane %v519, 1
      %v522 = vor.u32 %v517, %v521
      %v524 = vshrl.u32 %v429, 16
      %v526 = vshll.u32 %v429, 16
      %v528 = vrot.slane %v526, 1
      %v529 = vor.u32 %v524, %v528
      %v531 = vshrl.u32 %v430, 16
      %v533 = vshll.u32 %v430, 16
      %v535 = vrot.slane %v533, 1
      %v536 = vor.u32 %v531, %v535
      %v538 = vshrl.u32 %v431, 16
      %v540 = vshll.u32 %v431, 16
      %v542 = vrot.slane %v540, 1
      %v543 = vor.u32 %v538, %v542
      %v545 = vshrl.u32 %v432, 16
      %v547 = vshll.u32 %v432, 16
      %v549 = vrot.slane %v547, 1
      %v550 = vor.u32 %v545, %v549
      %v552 = vshrl.u32 %v433, 16
      %v554 = vshll.u32 %v433, 16
      %v556 = vrot.slane %v554, 1
      %v557 = vor.u32 %v552, %v556
      %v559 = vshrl.u32 %v434, 16
      %v561 = vshll.u32 %v434, 16
      %v563 = vrot.slane %v561, 1
      %v564 = vor.u32 %v559, %v563
      %v566 = vshrl.u32 %v435, 16
      %v568 = vshll.u32 %v435, 16
      %v570 = vrot.slane %v568, 1
      %v571 = vor.u32 %v566, %v570
      %v573 = vshrl.u32 %v436, 16
      %v575 = vshll.u32 %v436, 16
      %v577 = vrot.slane %v575, 1
      %v578 = vor.u32 %v573, %v577
      %v580 = vshrl.u32 %v437, 16
      %v582 = vshll.u32 %v437, 16
      %v584 = vrot.slane %v582, 1
      %v585 = vor.u32 %v580, %v584
      %v587 = vshrl.u32 %v438, 16
      %v589 = vshll.u32 %v438, 16
      %v591 = vrot.slane %v589, 1
      %v592 = vor.u32 %v587, %v591
      %v594 = vshrl.u32 %v439, 16
      %v596 = vshll.u32 %v439, 16
      %v598 = vrot.slane %v596, 1
      %v599 = vor.u32 %v594, %v598
      %v601 = vshrl.u32 %v440, 16
      %v603 = vshll.u32 %v440, 16
      %v605 = vrot.slane %v603, 1
      %v606 = vor.u32 %v601, %v605
      %v608 = vshrl.u32 %v441, 16
      %v610 = vshll.u32 %v441, 16
      %v612 = vrot.slane %v610, 1
      %v613 = vor.u32 %v608, %v612
      %v615 = vshrl.u32 %v442, 16
      %v617 = vshll.u32 %v442, 16
      %v619 = vrot.slane %v617, 1
      %v620 = vor.u32 %v615, %v619
      %v622 = vshrl.u32 %v443, 16
      %v624 = vshll.u32 %v443, 16
      %v626 = vrot.slane %v624, 1
      %v627 = vor.u32 %v622, %v626
      %v629 = vshrl.u32 %v444, 16
      %v631 = vshll.u32 %v444, 16
      %v633 = vrot.slane %v631, 1
      %v634 = vor.u32 %v629, %v633
      %v636 = vshrl.u32 %v445, 16
      %v638 = vshll.u32 %v445, 16
      %v640 = vrot.slane %v638, 1
      %v641 = vor.u32 %v636, %v640
      %v643 = vshrl.u32 %v446, 16
      %v645 = vshll.u32 %v446, 16
      %v647 = vrot.slane %v645, 1
      %v648 = vor.u32 %v643, %v647
      %v650 = vshrl.u32 %v447, 16
      %v652 = vshll.u32 %v447, 16
      %v654 = vrot.slane %v652, 1
      %v655 = vor.u32 %v650, %v654
      %v657 = vshrl.u32 %v448, 16
      %v659 = vshll.u32 %v448, 16
      %v661 = vrot.slane %v659, 1
      %v662 = vor.u32 %v657, %v661
      %v664 = vshrl.u32 %v449, 16
      %v666 = vshll.u32 %v449, 16
      %v668 = vrot.slane %v666, 1
      %v669 = vor.u32 %v664, %v668
      %v671 = vshrl.u32 %v450, 16
      %v673 = vshll.u32 %v450, 16
      %v675 = vrot.slane %v673, 1
      %v676 = vor.u32 %v671, %v675
      %v678 = vshrl.u32 %v451, 16
      %v680 = vshll.u32 %v451, 16
      %v682 = vrot.slane %v680, 1
      %v683 = vor.u32 %v678, %v682
      %v685 = vshrl.u32 %v452, 16
      %v687 = vshll.u32 %v452, 16
      %v689 = vrot.slane %v687, 1
      %v690 = vor.u32 %v685, %v689
      %v692 = vshrl.u32 %v453, 16
      %v694 = vshll.u32 %v453, 16
      %v696 = vrot.slane %v694, 1
      %v697 = vor.u32 %v692, %v696
      %v699 = vshrl.u32 %v454, 16
      %v701 = vshll.u32 %v454, 16
      %v703 = vrot.slane %v701, 1
      %v704 = vor.u32 %v699, %v703
      %v706 = vshrl.u32 %v455, 16
      %v708 = vshll.u32 %v455, 16
      %v710 = vrot.slane %v708, 1
      %v711 = vor.u32 %v706, %v710
      %v713 = vshrl.u32 %v456, 16
      %v715 = vshll.u32 %v456, 16
      %v717 = vrot.slane %v715, 1
      %v718 = vor.u32 %v713, %v717
      %v720 = vshrl.u32 %v457, 16
      %v722 = vshll.u32 %v457, 16
      %v724 = vrot.slane %v722, 1
      %v725 = vor.u32 %v720, %v724
      %v727 = vshrl.u32 %v458, 16
      %v729 = vshll.u32 %v458, 16
      %v731 = vrot.slane %v729, 1
      %v732 = vor.u32 %v727, %v731
      %v734 = vshrl.u32 %v459, 16
      %v736 = vshll.u32 %v459, 16
      %v738 = vrot.slane %v736, 1
      %v739 = vor.u32 %v734, %v738
      %v740 = vrot.slane %v420, 1
      %v741 = vrot.slane %v421, 1
      %v742 = vrot.slane %v422, 1
      %v743 = vrot.slane %v423, 1
      %v744 = vrot.slane %v424, 1
      %v745 = vrot.slane %v425, 1
      %v746 = vrot.slane %v426, 1
      %v747 = vrot.slane %v427, 1
      %v748 = vrot.slane %v428, 1
      %v749 = vrot.slane %v429, 1
      %v750 = vrot.slane %v430, 1
      %v751 = vrot.slane %v431, 1
      %v752 = vrot.slane %v432, 1
      %v753 = vrot.slane %v433, 1
      %v754 = vrot.slane %v434, 1
      %v755 = vrot.slane %v435, 1
      %v756 = vrot.slane %v436, 1
      %v757 = vrot.slane %v437, 1
      %v758 = vrot.slane %v438, 1
      %v759 = vrot.slane %v439, 1
      %v760 = vrot.slane %v440, 1
      %v761 = vrot.slane %v441, 1
      %v762 = vrot.slane %v442, 1
      %v763 = vrot.slane %v443, 1
      %v764 = vrot.slane %v444, 1
      %v765 = vrot.slane %v445, 1
      %v766 = vrot.slane %v446, 1
      %v767 = vrot.slane %v447, 1
      %v768 = vrot.slane %v448, 1
      %v769 = vrot.slane %v449, 1
      %v770 = vrot.slane %v450, 1
      %v771 = vrot.slane %v451, 1
      %v772 = vrot.slane %v452, 1
      %v773 = vrot.slane %v453, 1
      %v774 = vrot.slane %v454, 1
      %v775 = vrot.slane %v455, 1
      %v776 = vrot.slane %v456, 1
      %v777 = vrot.slane %v457, 1
      %v778 = vrot.slane %v458, 1
      %v779 = vrot.slane %v459, 1
      %v780 = vunpack.c.l.b16 %v466
      %v781 = vunpack.c.l.b16 %v740
      %v782 = vunpack.c.l.b16 %v473
      %v783 = vunpack.c.l.b16 %v741
      %v784 = vunpack.c.l.b16 %v480
      %v785 = vunpack.c.l.b16 %v742
      %v786 = vunpack.c.l.b16 %v487
      %v787 = vunpack.c.l.b16 %v743
      %v788 = vunpack.c.l.b16 %v494
      %v789 = vunpack.c.l.b16 %v744
      %v790 = vunpack.c.l.b16 %v501
      %v791 = vunpack.c.l.b16 %v745
      %v792 = vunpack.c.l.b16 %v508
      %v793 = vunpack.c.l.b16 %v746
      %v794 = vunpack.c.l.b16 %v515
      %v795 = vunpack.c.l.b16 %v747
      %v796 = vunpack.c.l.b16 %v522
      %v797 = vunpack.c.l.b16 %v748
      %v798 = vunpack.c.l.b16 %v529
      %v799 = vunpack.c.l.b16 %v749
      %v800 = vunpack.c.l.b16 %v536
      %v801 = vunpack.c.l.b16 %v750
      %v802 = vunpack.c.l.b16 %v543
      %v803 = vunpack.c.l.b16 %v751
      %v804 = vunpack.c.l.b16 %v550
      %v805 = vunpack.c.l.b16 %v752
      %v806 = vunpack.c.l.b16 %v557
      %v807 = vunpack.c.l.b16 %v753
      %v808 = vunpack.c.l.b16 %v564
      %v809 = vunpack.c.l.b16 %v754
      %v810 = vunpack.c.l.b16 %v571
      %v811 = vunpack.c.l.b16 %v755
      %v812 = vunpack.c.l.b16 %v578
      %v813 = vunpack.c.l.b16 %v756
      %v814 = vunpack.c.l.b16 %v585
      %v815 = vunpack.c.l.b16 %v757
      %v816 = vunpack.c.l.b16 %v592
      %v817 = vunpack.c.l.b16 %v758
      %v818 = vunpack.c.l.b16 %v599
      %v819 = vunpack.c.l.b16 %v759
      %v820 = vunpack.c.l.b16 %v606
      %v821 = vunpack.c.l.b16 %v760
      %v822 = vunpack.c.l.b16 %v613
      %v823 = vunpack.c.l.b16 %v761
      %v824 = vunpack.c.l.b16 %v620
      %v825 = vunpack.c.l.b16 %v762
      %v826 = vunpack.c.l.b16 %v627
      %v827 = vunpack.c.l.b16 %v763
      %v828 = vunpack.c.l.b16 %v634
      %v829 = vunpack.c.l.b16 %v764
      %v830 = vunpack.c.l.b16 %v641
      %v831 = vunpack.c.l.b16 %v765
      %v832 = vunpack.c.l.b16 %v648
      %v833 = vunpack.c.l.b16 %v766
      %v834 = vunpack.c.l.b16 %v655
      %v835 = vunpack.c.l.b16 %v767
      %v836 = vunpack.c.l.b16 %v662
      %v837 = vunpack.c.l.b16 %v768
      %v838 = vunpack.c.l.b16 %v669
      %v839 = vunpack.c.l.b16 %v769
      %v840 = vunpack.c.l.b16 %v676
      %v841 = vunpack.c.l.b16 %v770
      %v842 = vunpack.c.l.b16 %v683
      %v843 = vunpack.c.l.b16 %v771
      %v844 = vunpack.c.l.b16 %v690
      %v845 = vunpack.c.l.b16 %v772
      %v846 = vunpack.c.l.b16 %v697
      %v847 = vunpack.c.l.b16 %v773
      %v848 = vunpack.c.l.b16 %v704
      %v849 = vunpack.c.l.b16 %v774
      %v850 = vunpack.c.l.b16 %v711
      %v851 = vunpack.c.l.b16 %v775
      %v852 = vunpack.c.l.b16 %v718
      %v853 = vunpack.c.l.b16 %v776
      %v854 = vunpack.c.l.b16 %v725
      %v855 = vunpack.c.l.b16 %v777
      %v856 = vunpack.c.l.b16 %v732
      %v857 = vunpack.c.l.b16 %v778
      %v858 = vunpack.c.l.b16 %v739
      %v859 = vunpack.c.l.b16 %v779
      %v860 = vld [vmem:[%s1] sm:$0xff]
      %v861 = vld [vmem:[%s1 + $0x8] sm:$0xff]
      %v862 = vld [vmem:[%s1 + $0x10] sm:$0xff]
      %v863 = vld [vmem:[%s1 + $0x18] sm:$0xff]
      %v864 = vld [vmem:[%s1 + $0x20] sm:$0xff]
      %v865 = vld [vmem:[%s1 + $0x28] sm:$0xff]
      %v866 = vld [vmem:[%s1 + $0x30] sm:$0xff]
      %v867 = vld [vmem:[%s1 + $0x38] sm:$0xff]
      %v868 = vld [vmem:[%s1 + $0x40] sm:$0xff]
      %v869 = vld [vmem:[%s1 + $0x48] sm:$0xff]
      %v870 = vld [vmem:[%s1 + $0x50] sm:$0xff]
      %v871 = vld [vmem:[%s1 + $0x58] sm:$0xff]
      %v872 = vld [vmem:[%s1 + $0x60] sm:$0xff]
      %v873 = vld [vmem:[%s1 + $0x68] sm:$0xff]
      %v874 = vld [vmem:[%s1 + $0x70] sm:$0xff]
      %v875 = vld [vmem:[%s1 + $0x78] sm:$0xff]
      %v876 = vld [vmem:[%s1 + $0x80] sm:$0xff]
      %v877 = vld [vmem:[%s1 + $0x88] sm:$0xff]
      %v878 = vld [vmem:[%s1 + $0x90] sm:$0xff]
      %v879 = vld [vmem:[%s1 + $0x98] sm:$0xff]
      %v880 = vld [vmem:[%s1 + $0xa0] sm:$0xff]
      %v881 = vld [vmem:[%s1 + $0xa8] sm:$0xff]
      %v882 = vld [vmem:[%s1 + $0xb0] sm:$0xff]
      %v883 = vld [vmem:[%s1 + $0xb8] sm:$0xff]
      %v884 = vld [vmem:[%s1 + $0xc0] sm:$0xff]
      %v885 = vld [vmem:[%s1 + $0xc8] sm:$0xff]
      %v886 = vld [vmem:[%s1 + $0xd0] sm:$0xff]
      %v887 = vld [vmem:[%s1 + $0xd8] sm:$0xff]
      %v888 = vld [vmem:[%s1 + $0xe0] sm:$0xff]
      %v889 = vld [vmem:[%s1 + $0xe8] sm:$0xff]
      %v890 = vld [vmem:[%s1 + $0xf0] sm:$0xff]
      %v891 = vld [vmem:[%s1 + $0xf8] sm:$0xff]
      %v892 = vld [vmem:[%s1 + $0x100] sm:$0xff]
      %v893 = vld [vmem:[%s1 + $0x108] sm:$0xff]
      %v894 = vld [vmem:[%s1 + $0x110] sm:$0xff]
      %v895 = vld [vmem:[%s1 + $0x118] sm:$0xff]
      %v896 = vld [vmem:[%s1 + $0x120] sm:$0xff]
      %v897 = vld [vmem:[%s1 + $0x128] sm:$0xff]
      %v898 = vld [vmem:[%s1 + $0x130] sm:$0xff]
      %v899 = vld [vmem:[%s1 + $0x138] sm:$0xff]
      %v900 = vld [vmem:[%s1 + $0x140] sm:$0xff]
      %v901 = vld [vmem:[%s1 + $0x148] sm:$0xff]
      %v902 = vld [vmem:[%s1 + $0x150] sm:$0xff]
      %v903 = vld [vmem:[%s1 + $0x158] sm:$0xff]
      %v904 = vld [vmem:[%s1 + $0x160] sm:$0xff]
      %v905 = vld [vmem:[%s1 + $0x168] sm:$0xff]
      %v906 = vld [vmem:[%s1 + $0x170] sm:$0xff]
      %v907 = vld [vmem:[%s1 + $0x178] sm:$0xff]
      %s908 = scalar_lea.vmem %s1, 384
      %v909 = vld [vmem:[%s908] sm:$0xff]
      %v910 = vld [vmem:[%s908 + $0x8] sm:$0xff]
      %v911 = vld [vmem:[%s908 + $0x10] sm:$0xff]
      %v912 = vld [vmem:[%s908 + $0x18] sm:$0xff]
      %v913 = vld [vmem:[%s908 + $0x20] sm:$0xff]
      %v914 = vld [vmem:[%s908 + $0x28] sm:$0xff]
      %v915 = vld [vmem:[%s908 + $0x30] sm:$0xff]
      %v916 = vld [vmem:[%s908 + $0x38] sm:$0xff]
      %v917 = vld [vmem:[%s908 + $0x40] sm:$0xff]
      %v918 = vld [vmem:[%s908 + $0x48] sm:$0xff]
      %v919 = vld [vmem:[%s908 + $0x50] sm:$0xff]
      %v920 = vld [vmem:[%s908 + $0x58] sm:$0xff]
      %v921 = vld [vmem:[%s908 + $0x60] sm:$0xff]
      %v922 = vld [vmem:[%s908 + $0x68] sm:$0xff]
      %v923 = vld [vmem:[%s908 + $0x70] sm:$0xff]
      %v924 = vld [vmem:[%s908 + $0x78] sm:$0xff]
      %v925 = vld [vmem:[%s908 + $0x80] sm:$0xff]
      %v926 = vld [vmem:[%s908 + $0x88] sm:$0xff]
      %v927 = vld [vmem:[%s908 + $0x90] sm:$0xff]
      %v928 = vld [vmem:[%s908 + $0x98] sm:$0xff]
      %v929 = vld [vmem:[%s908 + $0xa0] sm:$0xff]
      %v930 = vld [vmem:[%s908 + $0xa8] sm:$0xff]
      %v931 = vld [vmem:[%s908 + $0xb0] sm:$0xff]
      %v932 = vld [vmem:[%s908 + $0xb8] sm:$0xff]
      %v933 = vld [vmem:[%s908 + $0xc0] sm:$0xff]
      %v934 = vld [vmem:[%s908 + $0xc8] sm:$0xff]
      %v935 = vld [vmem:[%s908 + $0xd0] sm:$0xff]
      %v936 = vld [vmem:[%s908 + $0xd8] sm:$0xff]
      %v937 = vld [vmem:[%s908 + $0xe0] sm:$0xff]
      %v938 = vld [vmem:[%s908 + $0xe8] sm:$0xff]
      %v939 = vld [vmem:[%s908 + $0xf0] sm:$0xff]
      %v940 = vld [vmem:[%s908 + $0xf8] sm:$0xff]
      %v941 = vld [vmem:[%s908 + $0x100] sm:$0xff]
      %v942 = vld [vmem:[%s908 + $0x108] sm:$0xff]
      %v943 = vld [vmem:[%s908 + $0x110] sm:$0xff]
      %v944 = vld [vmem:[%s908 + $0x118] sm:$0xff]
      %v945 = vld [vmem:[%s908 + $0x120] sm:$0xff]
      %v946 = vld [vmem:[%s908 + $0x128] sm:$0xff]
      %v947 = vld [vmem:[%s908 + $0x130] sm:$0xff]
      %v948 = vld [vmem:[%s908 + $0x138] sm:$0xff]
      %v949 = vld [vmem:[%s908 + $0x140] sm:$0xff]
      %v950 = vld [vmem:[%s908 + $0x148] sm:$0xff]
      %v951 = vld [vmem:[%s908 + $0x150] sm:$0xff]
      %v952 = vld [vmem:[%s908 + $0x158] sm:$0xff]
      %v953 = vld [vmem:[%s908 + $0x160] sm:$0xff]
      %v954 = vld [vmem:[%s908 + $0x168] sm:$0xff]
      %v955 = vld [vmem:[%s908 + $0x170] sm:$0xff]
      %v956 = vld [vmem:[%s908 + $0x178] sm:$0xff]
      %v957 = vpack.c.b16 %v344, %v342
      %v958 = vpack.c.b16 %v784, %v782
      %v959 = vpack.c.b16 %v785, %v783
      %v960 = vpack.c.b16 %v348, %v346
      %v961 = vpack.c.b16 %v788, %v786
      %v962 = vpack.c.b16 %v789, %v787
      %v963 = vpack.c.b16 %v352, %v350
      %v964 = vpack.c.b16 %v792, %v790
      %v965 = vpack.c.b16 %v793, %v791
      %v966 = vpack.c.b16 %v356, %v354
      %v967 = vpack.c.b16 %v796, %v794
      %v968 = vpack.c.b16 %v797, %v795
      %v969 = vpack.c.b16 %v364, %v362
      %v970 = vpack.c.b16 %v804, %v802
      %v971 = vpack.c.b16 %v805, %v803
      %v972 = vpack.c.b16 %v368, %v366
      %v973 = vpack.c.b16 %v808, %v806
      %v974 = vpack.c.b16 %v809, %v807
      %v975 = vpack.c.b16 %v372, %v370
      %v976 = vpack.c.b16 %v812, %v810
      %v977 = vpack.c.b16 %v813, %v811
      %v978 = vpack.c.b16 %v376, %v374
      %v979 = vpack.c.b16 %v816, %v814
      %v980 = vpack.c.b16 %v817, %v815
      %v981 = vpack.c.b16 %v384, %v382
      %v982 = vpack.c.b16 %v824, %v822
      %v983 = vpack.c.b16 %v825, %v823
      %v984 = vpack.c.b16 %v388, %v386
      %v985 = vpack.c.b16 %v828, %v826
      %v986 = vpack.c.b16 %v829, %v827
      %v987 = vpack.c.b16 %v392, %v390
      %v988 = vpack.c.b16 %v832, %v830
      %v989 = vpack.c.b16 %v833, %v831
      %v990 = vpack.c.b16 %v396, %v394
      %v991 = vpack.c.b16 %v836, %v834
      %v992 = vpack.c.b16 %v837, %v835
      %v993 = vpack.c.b16 %v404, %v402
      %v994 = vpack.c.b16 %v844, %v842
      %v995 = vpack.c.b16 %v845, %v843
      %v996 = vpack.c.b16 %v408, %v406
      %v997 = vpack.c.b16 %v848, %v846
      %v998 = vpack.c.b16 %v849, %v847
      %v999 = vpack.c.b16 %v412, %v410
      %v1000 = vpack.c.b16 %v852, %v850
      %v1001 = vpack.c.b16 %v853, %v851
      %v1002 = vpack.c.b16 %v416, %v414
      %v1003 = vpack.c.b16 %v856, %v854
      %v1004 = vpack.c.b16 %v857, %v855
      %v1101 = vunpack.c.l.b16 %v909
      %v1102 = vunpack.c.h.b16 %v909
      %v1103 = vunpack.c.l.b16 %v910
      %v1104 = vunpack.c.h.b16 %v910
      %v1105 = vunpack.c.l.b16 %v911
      %v1106 = vunpack.c.h.b16 %v911
      %v1107 = vunpack.c.l.b16 %v912
      %v1108 = vunpack.c.h.b16 %v912
      %v1109 = vunpack.c.l.b16 %v913
      %v1110 = vunpack.c.h.b16 %v913
      %v1111 = vunpack.c.l.b16 %v914
      %v1112 = vunpack.c.h.b16 %v914
      %v1113 = vunpack.c.l.b16 %v915
      %v1114 = vunpack.c.h.b16 %v915
      %v1115 = vunpack.c.l.b16 %v916
      %v1116 = vunpack.c.h.b16 %v916
      %v1117 = vunpack.c.l.b16 %v917
      %v1118 = vunpack.c.h.b16 %v917
      %v1119 = vunpack.c.l.b16 %v918
      %v1120 = vunpack.c.h.b16 %v918
      %v1121 = vunpack.c.l.b16 %v919
      %v1122 = vunpack.c.h.b16 %v919
      %v1123 = vunpack.c.l.b16 %v920
      %v1124 = vunpack.c.h.b16 %v920
      %v1125 = vunpack.c.l.b16 %v921
      %v1126 = vunpack.c.h.b16 %v921
      %v1127 = vunpack.c.l.b16 %v922
      %v1128 = vunpack.c.h.b16 %v922
      %v1129 = vunpack.c.l.b16 %v923
      %v1130 = vunpack.c.h.b16 %v923
      %v1131 = vunpack.c.l.b16 %v924
      %v1132 = vunpack.c.h.b16 %v924
      %v1133 = vunpack.c.l.b16 %v925
      %v1134 = vunpack.c.h.b16 %v925
      %v1135 = vunpack.c.l.b16 %v926
      %v1136 = vunpack.c.h.b16 %v926
      %v1137 = vunpack.c.l.b16 %v927
      %v1138 = vunpack.c.h.b16 %v927
      %v1139 = vunpack.c.l.b16 %v928
      %v1140 = vunpack.c.h.b16 %v928
      %v1141 = vunpack.c.l.b16 %v929
      %v1142 = vunpack.c.h.b16 %v929
      %v1143 = vunpack.c.l.b16 %v930
      %v1144 = vunpack.c.h.b16 %v930
      %v1145 = vunpack.c.l.b16 %v931
      %v1146 = vunpack.c.h.b16 %v931
      %v1147 = vunpack.c.l.b16 %v932
      %v1148 = vunpack.c.h.b16 %v932
      %v1149 = vunpack.c.l.b16 %v933
      %v1150 = vunpack.c.h.b16 %v933
      %v1151 = vunpack.c.l.b16 %v934
      %v1152 = vunpack.c.h.b16 %v934
      %v1153 = vunpack.c.l.b16 %v935
      %v1154 = vunpack.c.h.b16 %v935
      %v1155 = vunpack.c.l.b16 %v936
      %v1156 = vunpack.c.h.b16 %v936
      %v1157 = vunpack.c.l.b16 %v937
      %v1158 = vunpack.c.h.b16 %v937
      %v1159 = vunpack.c.l.b16 %v938
      %v1160 = vunpack.c.h.b16 %v938
      %v1161 = vunpack.c.l.b16 %v939
      %v1162 = vunpack.c.h.b16 %v939
      %v1163 = vunpack.c.l.b16 %v940
      %v1164 = vunpack.c.h.b16 %v940
      %v1165 = vunpack.c.l.b16 %v941
      %v1166 = vunpack.c.h.b16 %v941
      %v1167 = vunpack.c.l.b16 %v942
      %v1168 = vunpack.c.h.b16 %v942
      %v1169 = vunpack.c.l.b16 %v943
      %v1170 = vunpack.c.h.b16 %v943
      %v1171 = vunpack.c.l.b16 %v944
      %v1172 = vunpack.c.h.b16 %v944
      %v1173 = vunpack.c.l.b16 %v945
      %v1174 = vunpack.c.h.b16 %v945
      %v1175 = vunpack.c.l.b16 %v946
      %v1176 = vunpack.c.h.b16 %v946
      %v1177 = vunpack.c.l.b16 %v947
      %v1178 = vunpack.c.h.b16 %v947
      %v1179 = vunpack.c.l.b16 %v948
      %v1180 = vunpack.c.h.b16 %v948
      %v1181 = vunpack.c.l.b16 %v949
      %v1182 = vunpack.c.h.b16 %v949
      %v1183 = vunpack.c.l.b16 %v950
      %v1184 = vunpack.c.h.b16 %v950
      %v1185 = vunpack.c.l.b16 %v951
      %v1186 = vunpack.c.h.b16 %v951
      %v1187 = vunpack.c.l.b16 %v952
      %v1188 = vunpack.c.h.b16 %v952
      %v1189 = vunpack.c.l.b16 %v953
      %v1190 = vunpack.c.h.b16 %v953
      %v1191 = vunpack.c.l.b16 %v954
      %v1192 = vunpack.c.h.b16 %v954
      %v1193 = vunpack.c.l.b16 %v955
      %v1194 = vunpack.c.h.b16 %v955
      %v1195 = vunpack.c.l.b16 %v956
      %v1196 = vunpack.c.h.b16 %v956
      %v1197 = vpack.c.b16 %v1103, %v1101
      %v1198 = vpack.c.b16 %v1104, %v1102
      %v1199 = vpack.c.b16 %v1107, %v1105
      %v1200 = vpack.c.b16 %v1108, %v1106
      %v1201 = vpack.c.b16 %v1111, %v1109
      %v1202 = vpack.c.b16 %v1112, %v1110
      %v1203 = vpack.c.b16 %v1115, %v1113
      %v1204 = vpack.c.b16 %v1116, %v1114
      %v1205 = vpack.c.b16 %v1119, %v1117
      %v1206 = vpack.c.b16 %v1120, %v1118
      %v1207 = vpack.c.b16 %v1123, %v1121
      %v1208 = vpack.c.b16 %v1124, %v1122
      %v1209 = vpack.c.b16 %v1127, %v1125
      %v1210 = vpack.c.b16 %v1128, %v1126
      %v1211 = vpack.c.b16 %v1131, %v1129
      %v1212 = vpack.c.b16 %v1132, %v1130
      %v1213 = vpack.c.b16 %v1135, %v1133
      %v1214 = vpack.c.b16 %v1136, %v1134
      %v1215 = vpack.c.b16 %v1139, %v1137
      %v1216 = vpack.c.b16 %v1140, %v1138
      %v1217 = vpack.c.b16 %v1143, %v1141
      %v1218 = vpack.c.b16 %v1144, %v1142
      %v1219 = vpack.c.b16 %v1147, %v1145
      %v1220 = vpack.c.b16 %v1148, %v1146
      %v1221 = vpack.c.b16 %v1151, %v1149
      %v1222 = vpack.c.b16 %v1152, %v1150
      %v1223 = vpack.c.b16 %v1155, %v1153
      %v1224 = vpack.c.b16 %v1156, %v1154
      %v1225 = vpack.c.b16 %v1159, %v1157
      %v1226 = vpack.c.b16 %v1160, %v1158
      %v1227 = vpack.c.b16 %v1163, %v1161
      %v1228 = vpack.c.b16 %v1164, %v1162
      %v1229 = vpack.c.b16 %v1167, %v1165
      %v1230 = vpack.c.b16 %v1168, %v1166
      %v1231 = vpack.c.b16 %v1171, %v1169
      %v1232 = vpack.c.b16 %v1172, %v1170
      %v1233 = vpack.c.b16 %v1175, %v1173
      %v1234 = vpack.c.b16 %v1176, %v1174
      %v1235 = vpack.c.b16 %v1179, %v1177
      %v1236 = vpack.c.b16 %v1180, %v1178
      %v1237 = vpack.c.b16 %v1183, %v1181
      %v1238 = vpack.c.b16 %v1184, %v1182
      %v1239 = vpack.c.b16 %v1187, %v1185
      %v1240 = vpack.c.b16 %v1188, %v1186
      %v1241 = vpack.c.b16 %v1191, %v1189
      %v1242 = vpack.c.b16 %v1192, %v1190
      %v1243 = vpack.c.b16 %v1195, %v1193
      %v1244 = vpack.c.b16 %v1196, %v1194
      %1293 = vmatprep.subr.bf16.mxu0 %v1198
      %1294 = vmatpush1.bf16.msra.mxu0 %v1197
      %1295 = vmatprep.subr.bf16.mxu0 %v1200
      %1296 = vmatpush1.bf16.msra.mxu0 %v1199
      %1297 = vmatprep.subr.bf16.mxu0 %v1202
      %1298 = vmatpush1.bf16.msra.mxu0 %v1201
      %1299 = vmatprep.subr.bf16.mxu0 %v1204
      %1300 = vmatpush1.bf16.msra.mxu0 %v1203
      %1301 = vmatprep.subr.bf16.mxu0 %v1206
      %1302 = vmatpush1.bf16.msra.mxu0 %v1205
      %1303 = vmatprep.subr.bf16.mxu0 %v1208
      %1304 = vmatpush1.bf16.msra.mxu0 %v1207
      %1305 = vmatprep.subr.bf16.mxu0 %v1210
      %1306 = vmatpush1.bf16.msra.mxu0 %v1209
      %1307 = vmatprep.subr.bf16.mxu0 %v1212
      %1308 = vmatpush1.bf16.msra.mxu0 %v1211
      %1309 = vmatprep.subr.bf16.mxu0 %v1214
      %1310 = vmatpush1.bf16.msra.mxu0 %v1213
      %1311 = vmatprep.subr.bf16.mxu0 %v1216
      %1312 = vmatpush1.bf16.msra.mxu0 %v1215
      %1313 = vmatprep.subr.bf16.mxu0 %v1218
      %1314 = vmatpush1.bf16.msra.mxu0 %v1217
      %1315 = vmatprep.subr.bf16.mxu0 %v1220
      %1316 = vmatpush1.bf16.msra.mxu0 %v1219
      %1317 = vmatprep.subr.bf16.mxu0 %v1222
      %1318 = vmatpush1.bf16.msra.mxu0 %v1221
      %1319 = vmatprep.subr.bf16.mxu0 %v1224
      %1320 = vmatpush1.bf16.msra.mxu0 %v1223
      %1321 = vmatprep.subr.bf16.mxu0 %v1226
      %1322 = vmatpush1.bf16.msra.mxu0 %v1225
      %1323 = vmatprep.subr.bf16.mxu0 %v1228
      %1324 = vmatpush1.bf16.msra.mxu0 %v1227
      %1325 = vmatprep.mubr.bf16.mxu0 %v958
      %1326 = vmatmul.mubr.bf16.gmra.mrb[0].mxu0 %v957
      %v1327 = vpop.f32.mrb[0].mxu0
      %v1328 = vadd.f32 0.0, %v1327
      %v1329 = vpop.f32.mrb[0].mxu0
      %v1330 = vadd.f32 0.0, %v1329
      %v1331 = vpop.f32.mrb[0].mxu0
      %v1332 = vadd.f32 0.0, %v1331
      %v1333 = vpop.f32.mrb[0].mxu0
      %v1334 = vadd.f32 0.0, %v1333
      %1335 = vmatprep.mubr.bf16.mxu0 %v961
      %1336 = vmatmul.mubr.bf16.gmra.mrb[0].mxu0 %v960
      %v1337 = vpop.f32.mrb[0].mxu0
      %v1338 = vadd.f32 0.0, %v1337
      %v1339 = vpop.f32.mrb[0].mxu0
      %v1340 = vadd.f32 0.0, %v1339
      %v1341 = vpop.f32.mrb[0].mxu0
      %v1342 = vadd.f32 0.0, %v1341
      %v1343 = vpop.f32.mrb[0].mxu0
      %v1344 = vadd.f32 0.0, %v1343
      %1345 = vmatprep.mubr.bf16.mxu0 %v964
      %1346 = vmatmul.mubr.bf16.gmra.mrb[0].mxu0 %v963
      %v1347 = vpop.f32.mrb[0].mxu0
      %v1348 = vadd.f32 0.0, %v1347
      %v1349 = vpop.f32.mrb[0].mxu0
      %v1350 = vadd.f32 0.0, %v1349
      %v1351 = vpop.f32.mrb[0].mxu0
      %v1352 = vadd.f32 0.0, %v1351
      %v1353 = vpop.f32.mrb[0].mxu0
      %v1354 = vadd.f32 0.0, %v1353
      %1355 = vmatprep.mubr.bf16.mxu0 %v967
      %1356 = vmatmul.mubr.bf16.gmra.mrb[0].mxu0 %v966
      %v1357 = vpop.f32.mrb[0].mxu0
      %v1358 = vadd.f32 0.0, %v1357
      %v1359 = vpop.f32.mrb[0].mxu0
      %v1360 = vadd.f32 0.0, %v1359
      %v1361 = vpop.f32.mrb[0].mxu0
      %v1362 = vadd.f32 0.0, %v1361
      %v1363 = vpop.f32.mrb[0].mxu0
      %v1364 = vadd.f32 0.0, %v1363
      %1365 = vmatprep.mubr.bf16.mxu0 %v970
      %1366 = vmatmul.mubr.bf16.gmra.mrb[0].mxu0 %v969
      %v1367 = vpop.f32.mrb[0].mxu0
      %v1368 = vadd.f32 0.0, %v1367
      %v1369 = vpop.f32.mrb[0].mxu0
      %v1370 = vadd.f32 0.0, %v1369
      %v1371 = vpop.f32.mrb[0].mxu0
      %v1372 = vadd.f32 0.0, %v1371
      %v1373 = vpop.f32.mrb[0].mxu0
      %v1374 = vadd.f32 0.0, %v1373
      %1375 = vmatprep.mubr.bf16.mxu0 %v973
      %1376 = vmatmul.mubr.bf16.gmra.mrb[0].mxu0 %v972
      %v1377 = vpop.f32.mrb[0].mxu0
      %v1378 = vadd.f32 0.0, %v1377
      %v1379 = vpop.f32.mrb[0].mxu0
      %v1380 = vadd.f32 0.0, %v1379
      %v1381 = vpop.f32.mrb[0].mxu0
      %v1382 = vadd.f32 0.0, %v1381
      %v1383 = vpop.f32.mrb[0].mxu0
      %v1384 = vadd.f32 0.0, %v1383
      %1385 = vmatprep.mubr.bf16.mxu0 %v976
      %1386 = vmatmul.mubr.bf16.gmra.mrb[0].mxu0 %v975
      %v1387 = vpop.f32.mrb[0].mxu0
      %v1388 = vadd.f32 0.0, %v1387
      %v1389 = vpop.f32.mrb[0].mxu0
      %v1390 = vadd.f32 0.0, %v1389
      %v1391 = vpop.f32.mrb[0].mxu0
      %v1392 = vadd.f32 0.0, %v1391
      %v1393 = vpop.f32.mrb[0].mxu0
      %v1394 = vadd.f32 0.0, %v1393
      %1395 = vmatprep.mubr.bf16.mxu0 %v979
      %1396 = vmatmul.mubr.bf16.gmra.mrb[0].mxu0 %v978
      %v1397 = vpop.f32.mrb[0].mxu0
      %v1398 = vadd.f32 0.0, %v1397
      %v1399 = vpop.f32.mrb[0].mxu0
      %v1400 = vadd.f32 0.0, %v1399
      %v1401 = vpop.f32.mrb[0].mxu0
      %v1402 = vadd.f32 0.0, %v1401
      %v1403 = vpop.f32.mrb[0].mxu0
      %v1404 = vadd.f32 0.0, %v1403
      %1405 = vmatprep.mubr.bf16.mxu0 %v982
      %1406 = vmatmul.mubr.bf16.gmra.mrb[0].mxu0 %v981
      %v1407 = vpop.f32.mrb[0].mxu0
      %v1408 = vadd.f32 0.0, %v1407
      %v1409 = vpop.f32.mrb[0].mxu0
      %v1410 = vadd.f32 0.0, %v1409
      %v1411 = vpop.f32.mrb[0].mxu0
      %v1412 = vadd.f32 0.0, %v1411
      %v1413 = vpop.f32.mrb[0].mxu0
      %v1414 = vadd.f32 0.0, %v1413
      %1415 = vmatprep.mubr.bf16.mxu0 %v985
      %1416 = vmatmul.mubr.bf16.gmra.mrb[0].mxu0 %v984
      %v1417 = vpop.f32.mrb[0].mxu0
      %v1418 = vadd.f32 0.0, %v1417
      %v1419 = vpop.f32.mrb[0].mxu0
      %v1420 = vadd.f32 0.0, %v1419
      %v1421 = vpop.f32.mrb[0].mxu0
      %v1422 = vadd.f32 0.0, %v1421
      %v1423 = vpop.f32.mrb[0].mxu0
      %v1424 = vadd.f32 0.0, %v1423
      %1425 = vmatprep.mubr.bf16.mxu0 %v988
      %1426 = vmatmul.mubr.bf16.gmra.mrb[0].mxu0 %v987
      %v1427 = vpop.f32.mrb[0].mxu0
      %v1428 = vadd.f32 0.0, %v1427
      %v1429 = vpop.f32.mrb[0].mxu0
      %v1430 = vadd.f32 0.0, %v1429
      %v1431 = vpop.f32.mrb[0].mxu0
      %v1432 = vadd.f32 0.0, %v1431
      %v1433 = vpop.f32.mrb[0].mxu0
      %v1434 = vadd.f32 0.0, %v1433
      %1435 = vmatprep.mubr.bf16.mxu0 %v991
      %1436 = vmatmul.mubr.bf16.gmra.mrb[0].mxu0 %v990
      %v1437 = vpop.f32.mrb[0].mxu0
      %v1438 = vadd.f32 0.0, %v1437
      %v1439 = vpop.f32.mrb[0].mxu0
      %v1440 = vadd.f32 0.0, %v1439
      %v1441 = vpop.f32.mrb[0].mxu0
      %v1442 = vadd.f32 0.0, %v1441
      %v1443 = vpop.f32.mrb[0].mxu0
      %v1444 = vadd.f32 0.0, %v1443
      %1445 = vmatprep.mubr.bf16.mxu0 %v994
      %1446 = vmatmul.mubr.bf16.gmra.mrb[0].mxu0 %v993
      %v1447 = vpop.f32.mrb[0].mxu0
      %v1448 = vadd.f32 0.0, %v1447
      %v1449 = vpop.f32.mrb[0].mxu0
      %v1450 = vadd.f32 0.0, %v1449
      %v1451 = vpop.f32.mrb[0].mxu0
      %v1452 = vadd.f32 0.0, %v1451
      %v1453 = vpop.f32.mrb[0].mxu0
      %v1454 = vadd.f32 0.0, %v1453
      %1455 = vmatprep.mubr.bf16.mxu0 %v997
      %1456 = vmatmul.mubr.bf16.gmra.mrb[0].mxu0 %v996
      %v1457 = vpop.f32.mrb[0].mxu0
      %v1458 = vadd.f32 0.0, %v1457
      %v1459 = vpop.f32.mrb[0].mxu0
      %v1460 = vadd.f32 0.0, %v1459
      %v1461 = vpop.f32.mrb[0].mxu0
      %v1462 = vadd.f32 0.0, %v1461
      %v1463 = vpop.f32.mrb[0].mxu0
      %v1464 = vadd.f32 0.0, %v1463
      %1465 = vmatprep.mubr.bf16.mxu0 %v1000
      %1466 = vmatmul.mubr.bf16.gmra.mrb[0].mxu0 %v999
      %v1467 = vpop.f32.mrb[0].mxu0
      %v1468 = vadd.f32 0.0, %v1467
      %v1469 = vpop.f32.mrb[0].mxu0
      %v1470 = vadd.f32 0.0, %v1469
      %v1471 = vpop.f32.mrb[0].mxu0
      %v1472 = vadd.f32 0.0, %v1471
      %v1473 = vpop.f32.mrb[0].mxu0
      %v1474 = vadd.f32 0.0, %v1473
      %1475 = vmatprep.mubr.bf16.mxu0 %v1003
      %1476 = vmatmul.mubr.bf16.gmra.mrb[0].mxu0 %v1002
      %v1477 = vpop.f32.mrb[0].mxu0
      %v1478 = vadd.f32 0.0, %v1477
      %v1479 = vpop.f32.mrb[0].mxu0
      %v1480 = vadd.f32 0.0, %v1479
      %v1481 = vpop.f32.mrb[0].mxu0
      %v1482 = vadd.f32 0.0, %v1481
      %v1483 = vpop.f32.mrb[0].mxu0
      %v1484 = vadd.f32 0.0, %v1483
      %1485 = vdwg.mxu0
      %1486 = vmatprep.subr.bf16.mxu0 %v1230
      %1487 = vmatpush1.bf16.msra.mxu0 %v1229
      %1488 = vmatprep.subr.bf16.mxu0 %v1232
      %1489 = vmatpush1.bf16.msra.mxu0 %v1231
      %1490 = vmatprep.subr.bf16.mxu0 %v1234
      %1491 = vmatpush1.bf16.msra.mxu0 %v1233
      %1492 = vmatprep.subr.bf16.mxu0 %v1236
      %1493 = vmatpush1.bf16.msra.mxu0 %v1235
      %1494 = vmatprep.subr.bf16.mxu0 %v1238
      %1495 = vmatpush1.bf16.msra.mxu0 %v1237
      %1496 = vmatprep.subr.bf16.mxu0 %v1240
      %1497 = vmatpush1.bf16.msra.mxu0 %v1239
      %1498 = vmatprep.subr.bf16.mxu0 %v1242
      %1499 = vmatpush1.bf16.msra.mxu0 %v1241
      %1500 = vmatprep.subr.bf16.mxu0 %v1244
      %1501 = vmatpush1.bf16.msra.mxu0 %v1243
      %1502 = vmatprep.subr.bf16.mxu0 0
      %1503 = vmatpush1.bf16.msra.mxu0 0
      %1504 = vmatprep.subr.bf16.mxu0 0
      %1505 = vmatpush1.bf16.msra.mxu0 0
      %1506 = vmatprep.subr.bf16.mxu0 0
      %1507 = vmatpush1.bf16.msra.mxu0 0
      %1508 = vmatprep.subr.bf16.mxu0 0
      %1509 = vmatpush1.bf16.msra.mxu0 0
      %1510 = vmatprep.subr.bf16.mxu0 0
      %1511 = vmatpush1.bf16.msra.mxu0 0
      %1512 = vmatprep.subr.bf16.mxu0 0
      %1513 = vmatpush1.bf16.msra.mxu0 0
      %1514 = vmatprep.subr.bf16.mxu0 0
      %1515 = vmatpush1.bf16.msra.mxu0 0
      %1516 = vmatprep.subr.bf16.mxu0 0
      %1517 = vmatpush1.bf16.msra.mxu0 0
      %1518 = vmatprep.mubr.bf16.mxu0 0
      %1519 = vmatmul.mubr.bf16.gmra.mrb[0].mxu0 %v959
      %v1520 = vpop.f32.mrb[0].mxu0
      %v1521 = vadd.f32 %v1328, %v1520
      %v1522 = vpop.f32.mrb[0].mxu0
      %v1523 = vadd.f32 %v1330, %v1522
      %v1524 = vpop.f32.mrb[0].mxu0
      %v1525 = vadd.f32 %v1332, %v1524
      %v1526 = vpop.f32.mrb[0].mxu0
      %v1527 = vadd.f32 %v1334, %v1526
      %1528 = vmatprep.mubr.bf16.mxu0 0
      %1529 = vmatmul.mubr.bf16.gmra.mrb[0].mxu0 %v962
      %v1530 = vpop.f32.mrb[0].mxu0
      %v1531 = vadd.f32 %v1338, %v1530
      %v1532 = vpop.f32.mrb[0].mxu0
      %v1533 = vadd.f32 %v1340, %v1532
      %v1534 = vpop.f32.mrb[0].mxu0
      %v1535 = vadd.f32 %v1342, %v1534
      %v1536 = vpop.f32.mrb[0].mxu0
      %v1537 = vadd.f32 %v1344, %v1536
      %1538 = vmatprep.mubr.bf16.mxu0 0
      %1539 = vmatmul.mubr.bf16.gmra.mrb[0].mxu0 %v965
      %v1540 = vpop.f32.mrb[0].mxu0
      %v1541 = vadd.f32 %v1348, %v1540
      %v1542 = vpop.f32.mrb[0].mxu0
      %v1543 = vadd.f32 %v1350, %v1542
      %v1544 = vpop.f32.mrb[0].mxu0
      %v1545 = vadd.f32 %v1352, %v1544
      %v1546 = vpop.f32.mrb[0].mxu0
      %v1547 = vadd.f32 %v1354, %v1546
      %1548 = vmatprep.mubr.bf16.mxu0 0
      %1549 = vmatmul.mubr.bf16.gmra.mrb[0].mxu0 %v968
      %v1550 = vpop.f32.mrb[0].mxu0
      %v1551 = vadd.f32 %v1358, %v1550
      %v1552 = vpop.f32.mrb[0].mxu0
      %v1553 = vadd.f32 %v1360, %v1552
      %v1554 = vpop.f32.mrb[0].mxu0
      %v1555 = vadd.f32 %v1362, %v1554
      %v1556 = vpop.f32.mrb[0].mxu0
      %v1557 = vadd.f32 %v1364, %v1556
      %1558 = vmatprep.mubr.bf16.mxu0 0
      %1559 = vmatmul.mubr.bf16.gmra.mrb[0].mxu0 %v971
      %v1560 = vpop.f32.mrb[0].mxu0
      %v1561 = vadd.f32 %v1368, %v1560
      %v1562 = vpop.f32.mrb[0].mxu0
      %v1563 = vadd.f32 %v1370, %v1562
      %v1564 = vpop.f32.mrb[0].mxu0
      %v1565 = vadd.f32 %v1372, %v1564
      %v1566 = vpop.f32.mrb[0].mxu0
      %v1567 = vadd.f32 %v1374, %v1566
      %1568 = vmatprep.mubr.bf16.mxu0 0
      %1569 = vmatmul.mubr.bf16.gmra.mrb[0].mxu0 %v974
      %v1570 = vpop.f32.mrb[0].mxu0
      %v1571 = vadd.f32 %v1378, %v1570
      %v1572 = vpop.f32.mrb[0].mxu0
      %v1573 = vadd.f32 %v1380, %v1572
      %v1574 = vpop.f32.mrb[0].mxu0
      %v1575 = vadd.f32 %v1382, %v1574
      %v1576 = vpop.f32.mrb[0].mxu0
      %v1577 = vadd.f32 %v1384, %v1576
      %1578 = vmatprep.mubr.bf16.mxu0 0
      %1579 = vmatmul.mubr.bf16.gmra.mrb[0].mxu0 %v977
      %v1580 = vpop.f32.mrb[0].mxu0
      %v1581 = vadd.f32 %v1388, %v1580
      %v1582 = vpop.f32.mrb[0].mxu0
      %v1583 = vadd.f32 %v1390, %v1582
      %v1584 = vpop.f32.mrb[0].mxu0
      %v1585 = vadd.f32 %v1392, %v1584
      %v1586 = vpop.f32.mrb[0].mxu0
      %v1587 = vadd.f32 %v1394, %v1586
      %1588 = vmatprep.mubr.bf16.mxu0 0
      %1589 = vmatmul.mubr.bf16.gmra.mrb[0].mxu0 %v980
      %v1590 = vpop.f32.mrb[0].mxu0
      %v1591 = vadd.f32 %v1398, %v1590
      %v1592 = vpop.f32.mrb[0].mxu0
      %v1593 = vadd.f32 %v1400, %v1592
      %v1594 = vpop.f32.mrb[0].mxu0
      %v1595 = vadd.f32 %v1402, %v1594
      %v1596 = vpop.f32.mrb[0].mxu0
      %v1597 = vadd.f32 %v1404, %v1596
      %1598 = vmatprep.mubr.bf16.mxu0 0
      %1599 = vmatmul.mubr.bf16.gmra.mrb[0].mxu0 %v983
      %v1600 = vpop.f32.mrb[0].mxu0
      %v1601 = vadd.f32 %v1408, %v1600
      %v1602 = vpop.f32.mrb[0].mxu0
      %v1603 = vadd.f32 %v1410, %v1602
      %v1604 = vpop.f32.mrb[0].mxu0
      %v1605 = vadd.f32 %v1412, %v1604
      %v1606 = vpop.f32.mrb[0].mxu0
      %v1607 = vadd.f32 %v1414, %v1606
      %1608 = vmatprep.mubr.bf16.mxu0 0
      %1609 = vmatmul.mubr.bf16.gmra.mrb[0].mxu0 %v986
      %v1610 = vpop.f32.mrb[0].mxu0
      %v1611 = vadd.f32 %v1418, %v1610
      %v1612 = vpop.f32.mrb[0].mxu0
      %v1613 = vadd.f32 %v1420, %v1612
      %v1614 = vpop.f32.mrb[0].mxu0
      %v1615 = vadd.f32 %v1422, %v1614
      %v1616 = vpop.f32.mrb[0].mxu0
      %v1617 = vadd.f32 %v1424, %v1616
      %1618 = vmatprep.mubr.bf16.mxu0 0
      %1619 = vmatmul.mubr.bf16.gmra.mrb[0].mxu0 %v989
      %v1620 = vpop.f32.mrb[0].mxu0
      %v1621 = vadd.f32 %v1428, %v1620
      %v1622 = vpop.f32.mrb[0].mxu0
      %v1623 = vadd.f32 %v1430, %v1622
      %v1624 = vpop.f32.mrb[0].mxu0
      %v1625 = vadd.f32 %v1432, %v1624
      %v1626 = vpop.f32.mrb[0].mxu0
      %v1627 = vadd.f32 %v1434, %v1626
      %1628 = vmatprep.mubr.bf16.mxu0 0
      %1629 = vmatmul.mubr.bf16.gmra.mrb[0].mxu0 %v992
      %v1630 = vpop.f32.mrb[0].mxu0
      %v1631 = vadd.f32 %v1438, %v1630
      %v1632 = vpop.f32.mrb[0].mxu0
      %v1633 = vadd.f32 %v1440, %v1632
      %v1634 = vpop.f32.mrb[0].mxu0
      %v1635 = vadd.f32 %v1442, %v1634
      %v1636 = vpop.f32.mrb[0].mxu0
      %v1637 = vadd.f32 %v1444, %v1636
      %1638 = vmatprep.mubr.bf16.mxu0 0
      %1639 = vmatmul.mubr.bf16.gmra.mrb[0].mxu0 %v995
      %v1640 = vpop.f32.mrb[0].mxu0
      %v1641 = vadd.f32 %v1448, %v1640
      %v1642 = vpop.f32.mrb[0].mxu0
      %v1643 = vadd.f32 %v1450, %v1642
      %v1644 = vpop.f32.mrb[0].mxu0
      %v1645 = vadd.f32 %v1452, %v1644
      %v1646 = vpop.f32.mrb[0].mxu0
      %v1647 = vadd.f32 %v1454, %v1646
      %1648 = vmatprep.mubr.bf16.mxu0 0
      %1649 = vmatmul.mubr.bf16.gmra.mrb[0].mxu0 %v998
      %v1650 = vpop.f32.mrb[0].mxu0
      %v1651 = vadd.f32 %v1458, %v1650
      %v1652 = vpop.f32.mrb[0].mxu0
      %v1653 = vadd.f32 %v1460, %v1652
      %v1654 = vpop.f32.mrb[0].mxu0
      %v1655 = vadd.f32 %v1462, %v1654
      %v1656 = vpop.f32.mrb[0].mxu0
      %v1657 = vadd.f32 %v1464, %v1656
      %1658 = vmatprep.mubr.bf16.mxu0 0
      %1659 = vmatmul.mubr.bf16.gmra.mrb[0].mxu0 %v1001
      %v1660 = vpop.f32.mrb[0].mxu0
      %v1661 = vadd.f32 %v1468, %v1660
      %v1662 = vpop.f32.mrb[0].mxu0
      %v1663 = vadd.f32 %v1470, %v1662
      %v1664 = vpop.f32.mrb[0].mxu0
      %v1665 = vadd.f32 %v1472, %v1664
      %v1666 = vpop.f32.mrb[0].mxu0
      %v1667 = vadd.f32 %v1474, %v1666
      %1668 = vmatprep.mubr.bf16.mxu0 0
      %1669 = vmatmul.mubr.bf16.gmra.mrb[0].mxu0 %v1004
      %v1670 = vpop.f32.mrb[0].mxu0
      %v1671 = vadd.f32 %v1478, %v1670
      %v1672 = vpop.f32.mrb[0].mxu0
      %v1673 = vadd.f32 %v1480, %v1672
      %v1674 = vpop.f32.mrb[0].mxu0
      %v1675 = vadd.f32 %v1482, %v1674
      %v1676 = vpop.f32.mrb[0].mxu0
      %v1677 = vadd.f32 %v1484, %v1676
      %1678 = vdwg.mxu0
      %v1679 = vpack.c.b16 %v342, %v340
      %v1680 = vpack.c.b16 %v782, %v780
      %v1681 = vpack.c.b16 %v783, %v781
      %v1682 = vpack.c.b16 %v346, %v344
      %v1683 = vpack.c.b16 %v786, %v784
      %v1684 = vpack.c.b16 %v787, %v785
      %v1685 = vpack.c.b16 %v350, %v348
      %v1686 = vpack.c.b16 %v790, %v788
      %v1687 = vpack.c.b16 %v791, %v789
      %v1688 = vpack.c.b16 %v354, %v352
      %v1689 = vpack.c.b16 %v794, %v792
      %v1690 = vpack.c.b16 %v795, %v793
      %v1691 = vpack.c.b16 %v362, %v360
      %v1692 = vpack.c.b16 %v802, %v800
      %v1693 = vpack.c.b16 %v803, %v801
      %v1694 = vpack.c.b16 %v366, %v364
      %v1695 = vpack.c.b16 %v806, %v804
      %v1696 = vpack.c.b16 %v807, %v805
      %v1697 = vpack.c.b16 %v370, %v368
      %v1698 = vpack.c.b16 %v810, %v808
      %v1699 = vpack.c.b16 %v811, %v809
      %v1700 = vpack.c.b16 %v374, %v372
      %v1701 = vpack.c.b16 %v814, %v812
      %v1702 = vpack.c.b16 %v815, %v813
      %v1703 = vpack.c.b16 %v382, %v380
      %v1704 = vpack.c.b16 %v822, %v820
      %v1705 = vpack.c.b16 %v823, %v821
      %v1706 = vpack.c.b16 %v386, %v384
      %v1707 = vpack.c.b16 %v826, %v824
      %v1708 = vpack.c.b16 %v827, %v825
      %v1709 = vpack.c.b16 %v390, %v388
      %v1710 = vpack.c.b16 %v830, %v828
      %v1711 = vpack.c.b16 %v831, %v829
      %v1712 = vpack.c.b16 %v394, %v392
      %v1713 = vpack.c.b16 %v834, %v832
      %v1714 = vpack.c.b16 %v835, %v833
      %v1715 = vpack.c.b16 %v402, %v400
      %v1716 = vpack.c.b16 %v842, %v840
      %v1717 = vpack.c.b16 %v843, %v841
      %v1718 = vpack.c.b16 %v406, %v404
      %v1719 = vpack.c.b16 %v846, %v844
      %v1720 = vpack.c.b16 %v847, %v845
      %v1721 = vpack.c.b16 %v410, %v408
      %v1722 = vpack.c.b16 %v850, %v848
      %v1723 = vpack.c.b16 %v851, %v849
      %v1724 = vpack.c.b16 %v414, %v412
      %v1725 = vpack.c.b16 %v854, %v852
      %v1726 = vpack.c.b16 %v855, %v853
      %v1823 = vunpack.c.l.b16 %v860
      %v1824 = vunpack.c.h.b16 %v860
      %v1825 = vunpack.c.l.b16 %v861
      %v1826 = vunpack.c.h.b16 %v861
      %v1827 = vunpack.c.l.b16 %v862
      %v1828 = vunpack.c.h.b16 %v862
      %v1829 = vunpack.c.l.b16 %v863
      %v1830 = vunpack.c.h.b16 %v863
      %v1831 = vunpack.c.l.b16 %v864
      %v1832 = vunpack.c.h.b16 %v864
      %v1833 = vunpack.c.l.b16 %v865
      %v1834 = vunpack.c.h.b16 %v865
      %v1835 = vunpack.c.l.b16 %v866
      %v1836 = vunpack.c.h.b16 %v866
      %v1837 = vunpack.c.l.b16 %v867
      %v1838 = vunpack.c.h.b16 %v867
      %v1839 = vunpack.c.l.b16 %v868
      %v1840 = vunpack.c.h.b16 %v868
      %v1841 = vunpack.c.l.b16 %v869
      %v1842 = vunpack.c.h.b16 %v869
      %v1843 = vunpack.c.l.b16 %v870
      %v1844 = vunpack.c.h.b16 %v870
      %v1845 = vunpack.c.l.b16 %v871
      %v1846 = vunpack.c.h.b16 %v871
      %v1847 = vunpack.c.l.b16 %v872
      %v1848 = vunpack.c.h.b16 %v872
      %v1849 = vunpack.c.l.b16 %v873
      %v1850 = vunpack.c.h.b16 %v873
      %v1851 = vunpack.c.l.b16 %v874
      %v1852 = vunpack.c.h.b16 %v874
      %v1853 = vunpack.c.l.b16 %v875
      %v1854 = vunpack.c.h.b16 %v875
      %v1855 = vunpack.c.l.b16 %v876
      %v1856 = vunpack.c.h.b16 %v876
      %v1857 = vunpack.c.l.b16 %v877
      %v1858 = vunpack.c.h.b16 %v877
      %v1859 = vunpack.c.l.b16 %v878
      %v1860 = vunpack.c.h.b16 %v878
      %v1861 = vunpack.c.l.b16 %v879
      %v1862 = vunpack.c.h.b16 %v879
      %v1863 = vunpack.c.l.b16 %v880
      %v1864 = vunpack.c.h.b16 %v880
      %v1865 = vunpack.c.l.b16 %v881
      %v1866 = vunpack.c.h.b16 %v881
      %v1867 = vunpack.c.l.b16 %v882
      %v1868 = vunpack.c.h.b16 %v882
      %v1869 = vunpack.c.l.b16 %v883
      %v1870 = vunpack.c.h.b16 %v883
      %v1871 = vunpack.c.l.b16 %v884
      %v1872 = vunpack.c.h.b16 %v884
      %v1873 = vunpack.c.l.b16 %v885
      %v1874 = vunpack.c.h.b16 %v885
      %v1875 = vunpack.c.l.b16 %v886
      %v1876 = vunpack.c.h.b16 %v886
      %v1877 = vunpack.c.l.b16 %v887
      %v1878 = vunpack.c.h.b16 %v887
      %v1879 = vunpack.c.l.b16 %v888
      %v1880 = vunpack.c.h.b16 %v888
      %v1881 = vunpack.c.l.b16 %v889
      %v1882 = vunpack.c.h.b16 %v889
      %v1883 = vunpack.c.l.b16 %v890
      %v1884 = vunpack.c.h.b16 %v890
      %v1885 = vunpack.c.l.b16 %v891
      %v1886 = vunpack.c.h.b16 %v891
      %v1887 = vunpack.c.l.b16 %v892
      %v1888 = vunpack.c.h.b16 %v892
      %v1889 = vunpack.c.l.b16 %v893
      %v1890 = vunpack.c.h.b16 %v893
      %v1891 = vunpack.c.l.b16 %v894
      %v1892 = vunpack.c.h.b16 %v894
      %v1893 = vunpack.c.l.b16 %v895
      %v1894 = vunpack.c.h.b16 %v895
      %v1895 = vunpack.c.l.b16 %v896
      %v1896 = vunpack.c.h.b16 %v896
      %v1897 = vunpack.c.l.b16 %v897
      %v1898 = vunpack.c.h.b16 %v897
      %v1899 = vunpack.c.l.b16 %v898
      %v1900 = vunpack.c.h.b16 %v898
      %v1901 = vunpack.c.l.b16 %v899
      %v1902 = vunpack.c.h.b16 %v899
      %v1903 = vunpack.c.l.b16 %v900
      %v1904 = vunpack.c.h.b16 %v900
      %v1905 = vunpack.c.l.b16 %v901
      %v1906 = vunpack.c.h.b16 %v901
      %v1907 = vunpack.c.l.b16 %v902
      %v1908 = vunpack.c.h.b16 %v902
      %v1909 = vunpack.c.l.b16 %v903
      %v1910 = vunpack.c.h.b16 %v903
      %v1911 = vunpack.c.l.b16 %v904
      %v1912 = vunpack.c.h.b16 %v904
      %v1913 = vunpack.c.l.b16 %v905
      %v1914 = vunpack.c.h.b16 %v905
      %v1915 = vunpack.c.l.b16 %v906
      %v1916 = vunpack.c.h.b16 %v906
      %v1917 = vunpack.c.l.b16 %v907
      %v1918 = vunpack.c.h.b16 %v907
      %v1919 = vpack.c.b16 %v1825, %v1823
      %v1920 = vpack.c.b16 %v1826, %v1824
      %v1921 = vpack.c.b16 %v1829, %v1827
      %v1922 = vpack.c.b16 %v1830, %v1828
      %v1923 = vpack.c.b16 %v1833, %v1831
      %v1924 = vpack.c.b16 %v1834, %v1832
      %v1925 = vpack.c.b16 %v1837, %v1835
      %v1926 = vpack.c.b16 %v1838, %v1836
      %v1927 = vpack.c.b16 %v1841, %v1839
      %v1928 = vpack.c.b16 %v1842, %v1840
      %v1929 = vpack.c.b16 %v1845, %v1843
      %v1930 = vpack.c.b16 %v1846, %v1844
      %v1931 = vpack.c.b16 %v1849, %v1847
      %v1932 = vpack.c.b16 %v1850, %v1848
      %v1933 = vpack.c.b16 %v1853, %v1851
      %v1934 = vpack.c.b16 %v1854, %v1852
      %v1935 = vpack.c.b16 %v1857, %v1855
      %v1936 = vpack.c.b16 %v1858, %v1856
      %v1937 = vpack.c.b16 %v1861, %v1859
      %v1938 = vpack.c.b16 %v1862, %v1860
      %v1939 = vpack.c.b16 %v1865, %v1863
      %v1940 = vpack.c.b16 %v1866, %v1864
      %v1941 = vpack.c.b16 %v1869, %v1867
      %v1942 = vpack.c.b16 %v1870, %v1868
      %v1943 = vpack.c.b16 %v1873, %v1871
      %v1944 = vpack.c.b16 %v1874, %v1872
      %v1945 = vpack.c.b16 %v1877, %v1875
      %v1946 = vpack.c.b16 %v1878, %v1876
      %v1947 = vpack.c.b16 %v1881, %v1879
      %v1948 = vpack.c.b16 %v1882, %v1880
      %v1949 = vpack.c.b16 %v1885, %v1883
      %v1950 = vpack.c.b16 %v1886, %v1884
      %v1951 = vpack.c.b16 %v1889, %v1887
      %v1952 = vpack.c.b16 %v1890, %v1888
      %v1953 = vpack.c.b16 %v1893, %v1891
      %v1954 = vpack.c.b16 %v1894, %v1892
      %v1955 = vpack.c.b16 %v1897, %v1895
      %v1956 = vpack.c.b16 %v1898, %v1896
      %v1957 = vpack.c.b16 %v1901, %v1899
      %v1958 = vpack.c.b16 %v1902, %v1900
      %v1959 = vpack.c.b16 %v1905, %v1903
      %v1960 = vpack.c.b16 %v1906, %v1904
      %v1961 = vpack.c.b16 %v1909, %v1907
      %v1962 = vpack.c.b16 %v1910, %v1908
      %v1963 = vpack.c.b16 %v1913, %v1911
      %v1964 = vpack.c.b16 %v1914, %v1912
      %v1965 = vpack.c.b16 %v1917, %v1915
      %v1966 = vpack.c.b16 %v1918, %v1916
      %2015 = vmatprep.subr.bf16.mxu0 %v1920
      %2016 = vmatpush1.bf16.msra.mxu0 %v1919
      %2017 = vmatprep.subr.bf16.mxu0 %v1922
      %2018 = vmatpush1.bf16.msra.mxu0 %v1921
      %2019 = vmatprep.subr.bf16.mxu0 %v1924
      %2020 = vmatpush1.bf16.msra.mxu0 %v1923
      %2021 = vmatprep.subr.bf16.mxu0 %v1926
      %2022 = vmatpush1.bf16.msra.mxu0 %v1925
      %2023 = vmatprep.subr.bf16.mxu0 %v1928
      %2024 = vmatpush1.bf16.msra.mxu0 %v1927
      %2025 = vmatprep.subr.bf16.mxu0 %v1930
      %2026 = vmatpush1.bf16.msra.mxu0 %v1929
      %2027 = vmatprep.subr.bf16.mxu0 %v1932
      %2028 = vmatpush1.bf16.msra.mxu0 %v1931
      %2029 = vmatprep.subr.bf16.mxu0 %v1934
      %2030 = vmatpush1.bf16.msra.mxu0 %v1933
      %2031 = vmatprep.subr.bf16.mxu0 %v1936
      %2032 = vmatpush1.bf16.msra.mxu0 %v1935
      %2033 = vmatprep.subr.bf16.mxu0 %v1938
      %2034 = vmatpush1.bf16.msra.mxu0 %v1937
      %2035 = vmatprep.subr.bf16.mxu0 %v1940
      %2036 = vmatpush1.bf16.msra.mxu0 %v1939
      %2037 = vmatprep.subr.bf16.mxu0 %v1942
      %2038 = vmatpush1.bf16.msra.mxu0 %v1941
      %2039 = vmatprep.subr.bf16.mxu0 %v1944
      %2040 = vmatpush1.bf16.msra.mxu0 %v1943
      %2041 = vmatprep.subr.bf16.mxu0 %v1946
      %2042 = vmatpush1.bf16.msra.mxu0 %v1945
      %2043 = vmatprep.subr.bf16.mxu0 %v1948
      %2044 = vmatpush1.bf16.msra.mxu0 %v1947
      %2045 = vmatprep.subr.bf16.mxu0 %v1950
      %2046 = vmatpush1.bf16.msra.mxu0 %v1949
      %2047 = vmatprep.mubr.bf16.mxu0 %v1680
      %2048 = vmatmul.mubr.bf16.gmra.mrb[0].mxu0 %v1679
      %v2049 = vpop.f32.mrb[0].mxu0
      %v2050 = vadd.f32 %v1521, %v2049
      %v2051 = vpop.f32.mrb[0].mxu0
      %v2052 = vadd.f32 %v1523, %v2051
      %v2053 = vpop.f32.mrb[0].mxu0
      %v2054 = vadd.f32 %v1525, %v2053
      %v2055 = vpop.f32.mrb[0].mxu0
      %v2056 = vadd.f32 %v1527, %v2055
      %2057 = vmatprep.mubr.bf16.mxu0 %v1683
      %2058 = vmatmul.mubr.bf16.gmra.mrb[0].mxu0 %v1682
      %v2059 = vpop.f32.mrb[0].mxu0
      %v2060 = vadd.f32 %v1531, %v2059
      %v2061 = vpop.f32.mrb[0].mxu0
      %v2062 = vadd.f32 %v1533, %v2061
      %v2063 = vpop.f32.mrb[0].mxu0
      %v2064 = vadd.f32 %v1535, %v2063
      %v2065 = vpop.f32.mrb[0].mxu0
      %v2066 = vadd.f32 %v1537, %v2065
      %2067 = vmatprep.mubr.bf16.mxu0 %v1686
      %2068 = vmatmul.mubr.bf16.gmra.mrb[0].mxu0 %v1685
      %v2069 = vpop.f32.mrb[0].mxu0
      %v2070 = vadd.f32 %v1541, %v2069
      %v2071 = vpop.f32.mrb[0].mxu0
      %v2072 = vadd.f32 %v1543, %v2071
      %v2073 = vpop.f32.mrb[0].mxu0
      %v2074 = vadd.f32 %v1545, %v2073
      %v2075 = vpop.f32.mrb[0].mxu0
      %v2076 = vadd.f32 %v1547, %v2075
      %2077 = vmatprep.mubr.bf16.mxu0 %v1689
      %2078 = vmatmul.mubr.bf16.gmra.mrb[0].mxu0 %v1688
      %v2079 = vpop.f32.mrb[0].mxu0
      %v2080 = vadd.f32 %v1551, %v2079
      %v2081 = vpop.f32.mrb[0].mxu0
      %v2082 = vadd.f32 %v1553, %v2081
      %v2083 = vpop.f32.mrb[0].mxu0
      %v2084 = vadd.f32 %v1555, %v2083
      %v2085 = vpop.f32.mrb[0].mxu0
      %v2086 = vadd.f32 %v1557, %v2085
      %2087 = vmatprep.mubr.bf16.mxu0 %v1692
      %2088 = vmatmul.mubr.bf16.gmra.mrb[0].mxu0 %v1691
      %v2089 = vpop.f32.mrb[0].mxu0
      %v2090 = vadd.f32 %v1561, %v2089
      %v2091 = vpop.f32.mrb[0].mxu0
      %v2092 = vadd.f32 %v1563, %v2091
      %v2093 = vpop.f32.mrb[0].mxu0
      %v2094 = vadd.f32 %v1565, %v2093
      %v2095 = vpop.f32.mrb[0].mxu0
      %v2096 = vadd.f32 %v1567, %v2095
      %2097 = vmatprep.mubr.bf16.mxu0 %v1695
      %2098 = vmatmul.mubr.bf16.gmra.mrb[0].mxu0 %v1694
      %v2099 = vpop.f32.mrb[0].mxu0
      %v2100 = vadd.f32 %v1571, %v2099
      %v2101 = vpop.f32.mrb[0].mxu0
      %v2102 = vadd.f32 %v1573, %v2101
      %v2103 = vpop.f32.mrb[0].mxu0
      %v2104 = vadd.f32 %v1575, %v2103
      %v2105 = vpop.f32.mrb[0].mxu0
      %v2106 = vadd.f32 %v1577, %v2105
      %2107 = vmatprep.mubr.bf16.mxu0 %v1698
      %2108 = vmatmul.mubr.bf16.gmra.mrb[0].mxu0 %v1697
      %v2109 = vpop.f32.mrb[0].mxu0
      %v2110 = vadd.f32 %v1581, %v2109
      %v2111 = vpop.f32.mrb[0].mxu0
      %v2112 = vadd.f32 %v1583, %v2111
      %v2113 = vpop.f32.mrb[0].mxu0
      %v2114 = vadd.f32 %v1585, %v2113
      %v2115 = vpop.f32.mrb[0].mxu0
      %v2116 = vadd.f32 %v1587, %v2115
      %2117 = vmatprep.mubr.bf16.mxu0 %v1701
      %2118 = vmatmul.mubr.bf16.gmra.mrb[0].mxu0 %v1700
      %v2119 = vpop.f32.mrb[0].mxu0
      %v2120 = vadd.f32 %v1591, %v2119
      %v2121 = vpop.f32.mrb[0].mxu0
      %v2122 = vadd.f32 %v1593, %v2121
      %v2123 = vpop.f32.mrb[0].mxu0
      %v2124 = vadd.f32 %v1595, %v2123
      %v2125 = vpop.f32.mrb[0].mxu0
      %v2126 = vadd.f32 %v1597, %v2125
      %2127 = vmatprep.mubr.bf16.mxu0 %v1704
      %2128 = vmatmul.mubr.bf16.gmra.mrb[0].mxu0 %v1703
      %v2129 = vpop.f32.mrb[0].mxu0
      %v2130 = vadd.f32 %v1601, %v2129
      %v2131 = vpop.f32.mrb[0].mxu0
      %v2132 = vadd.f32 %v1603, %v2131
      %v2133 = vpop.f32.mrb[0].mxu0
      %v2134 = vadd.f32 %v1605, %v2133
      %v2135 = vpop.f32.mrb[0].mxu0
      %v2136 = vadd.f32 %v1607, %v2135
      %2137 = vmatprep.mubr.bf16.mxu0 %v1707
      %2138 = vmatmul.mubr.bf16.gmra.mrb[0].mxu0 %v1706
      %v2139 = vpop.f32.mrb[0].mxu0
      %v2140 = vadd.f32 %v1611, %v2139
      %v2141 = vpop.f32.mrb[0].mxu0
      %v2142 = vadd.f32 %v1613, %v2141
      %v2143 = vpop.f32.mrb[0].mxu0
      %v2144 = vadd.f32 %v1615, %v2143
      %v2145 = vpop.f32.mrb[0].mxu0
      %v2146 = vadd.f32 %v1617, %v2145
      %2147 = vmatprep.mubr.bf16.mxu0 %v1710
      %2148 = vmatmul.mubr.bf16.gmra.mrb[0].mxu0 %v1709
      %v2149 = vpop.f32.mrb[0].mxu0
      %v2150 = vadd.f32 %v1621, %v2149
      %v2151 = vpop.f32.mrb[0].mxu0
      %v2152 = vadd.f32 %v1623, %v2151
      %v2153 = vpop.f32.mrb[0].mxu0
      %v2154 = vadd.f32 %v1625, %v2153
      %v2155 = vpop.f32.mrb[0].mxu0
      %v2156 = vadd.f32 %v1627, %v2155
      %2157 = vmatprep.mubr.bf16.mxu0 %v1713
      %2158 = vmatmul.mubr.bf16.gmra.mrb[0].mxu0 %v1712
      %v2159 = vpop.f32.mrb[0].mxu0
      %v2160 = vadd.f32 %v1631, %v2159
      %v2161 = vpop.f32.mrb[0].mxu0
      %v2162 = vadd.f32 %v1633, %v2161
      %v2163 = vpop.f32.mrb[0].mxu0
      %v2164 = vadd.f32 %v1635, %v2163
      %v2165 = vpop.f32.mrb[0].mxu0
      %v2166 = vadd.f32 %v1637, %v2165
      %2167 = vmatprep.mubr.bf16.mxu0 %v1716
      %2168 = vmatmul.mubr.bf16.gmra.mrb[0].mxu0 %v1715
      %v2169 = vpop.f32.mrb[0].mxu0
      %v2170 = vadd.f32 %v1641, %v2169
      %v2171 = vpop.f32.mrb[0].mxu0
      %v2172 = vadd.f32 %v1643, %v2171
      %v2173 = vpop.f32.mrb[0].mxu0
      %v2174 = vadd.f32 %v1645, %v2173
      %v2175 = vpop.f32.mrb[0].mxu0
      %v2176 = vadd.f32 %v1647, %v2175
      %2177 = vmatprep.mubr.bf16.mxu0 %v1719
      %2178 = vmatmul.mubr.bf16.gmra.mrb[0].mxu0 %v1718
      %v2179 = vpop.f32.mrb[0].mxu0
      %v2180 = vadd.f32 %v1651, %v2179
      %v2181 = vpop.f32.mrb[0].mxu0
      %v2182 = vadd.f32 %v1653, %v2181
      %v2183 = vpop.f32.mrb[0].mxu0
      %v2184 = vadd.f32 %v1655, %v2183
      %v2185 = vpop.f32.mrb[0].mxu0
      %v2186 = vadd.f32 %v1657, %v2185
      %2187 = vmatprep.mubr.bf16.mxu0 %v1722
      %2188 = vmatmul.mubr.bf16.gmra.mrb[0].mxu0 %v1721
      %v2189 = vpop.f32.mrb[0].mxu0
      %v2190 = vadd.f32 %v1661, %v2189
      %v2191 = vpop.f32.mrb[0].mxu0
      %v2192 = vadd.f32 %v1663, %v2191
      %v2193 = vpop.f32.mrb[0].mxu0
      %v2194 = vadd.f32 %v1665, %v2193
      %v2195 = vpop.f32.mrb[0].mxu0
      %v2196 = vadd.f32 %v1667, %v2195
      %2197 = vmatprep.mubr.bf16.mxu0 %v1725
      %2198 = vmatmul.mubr.bf16.gmra.mrb[0].mxu0 %v1724
      %v2199 = vpop.f32.mrb[0].mxu0
      %v2200 = vadd.f32 %v1671, %v2199
      %v2201 = vpop.f32.mrb[0].mxu0
      %v2202 = vadd.f32 %v1673, %v2201
      %v2203 = vpop.f32.mrb[0].mxu0
      %v2204 = vadd.f32 %v1675, %v2203
      %v2205 = vpop.f32.mrb[0].mxu0
      %v2206 = vadd.f32 %v1677, %v2205
      %2207 = vdwg.mxu0
      %2208 = vmatprep.subr.bf16.mxu0 %v1952
      %2209 = vmatpush1.bf16.msra.mxu0 %v1951
      %2210 = vmatprep.subr.bf16.mxu0 %v1954
      %2211 = vmatpush1.bf16.msra.mxu0 %v1953
      %2212 = vmatprep.subr.bf16.mxu0 %v1956
      %2213 = vmatpush1.bf16.msra.mxu0 %v1955
      %2214 = vmatprep.subr.bf16.mxu0 %v1958
      %2215 = vmatpush1.bf16.msra.mxu0 %v1957
      %2216 = vmatprep.subr.bf16.mxu0 %v1960
      %2217 = vmatpush1.bf16.msra.mxu0 %v1959
      %2218 = vmatprep.subr.bf16.mxu0 %v1962
      %2219 = vmatpush1.bf16.msra.mxu0 %v1961
      %2220 = vmatprep.subr.bf16.mxu0 %v1964
      %2221 = vmatpush1.bf16.msra.mxu0 %v1963
      %2222 = vmatprep.subr.bf16.mxu0 %v1966
      %2223 = vmatpush1.bf16.msra.mxu0 %v1965
      %2224 = vmatprep.subr.bf16.mxu0 0
      %2225 = vmatpush1.bf16.msra.mxu0 0
      %2226 = vmatprep.subr.bf16.mxu0 0
      %2227 = vmatpush1.bf16.msra.mxu0 0
      %2228 = vmatprep.subr.bf16.mxu0 0
      %2229 = vmatpush1.bf16.msra.mxu0 0
      %2230 = vmatprep.subr.bf16.mxu0 0
      %2231 = vmatpush1.bf16.msra.mxu0 0
      %2232 = vmatprep.subr.bf16.mxu0 0
      %2233 = vmatpush1.bf16.msra.mxu0 0
      %2234 = vmatprep.subr.bf16.mxu0 0
      %2235 = vmatpush1.bf16.msra.mxu0 0
      %2236 = vmatprep.subr.bf16.mxu0 0
      %2237 = vmatpush1.bf16.msra.mxu0 0
      %2238 = vmatprep.subr.bf16.mxu0 0
      %2239 = vmatpush1.bf16.msra.mxu0 0
      %2240 = vmatprep.mubr.bf16.mxu0 0
      %2241 = vmatmul.mubr.bf16.gmra.mrb[0].mxu0 %v1681
      %v2242 = vpop.f32.mrb[0].mxu0
      %v2243 = vadd.f32 %v2050, %v2242
      %v2244 = vpop.f32.mrb[0].mxu0
      %v2245 = vadd.f32 %v2052, %v2244
      %v2246 = vpop.f32.mrb[0].mxu0
      %v2247 = vadd.f32 %v2054, %v2246
      %v2248 = vpop.f32.mrb[0].mxu0
      %v2249 = vadd.f32 %v2056, %v2248
      %2250 = vmatprep.mubr.bf16.mxu0 0
      %2251 = vmatmul.mubr.bf16.gmra.mrb[0].mxu0 %v1684
      %v2252 = vpop.f32.mrb[0].mxu0
      %v2253 = vadd.f32 %v2060, %v2252
      %v2254 = vpop.f32.mrb[0].mxu0
      %v2255 = vadd.f32 %v2062, %v2254
      %v2256 = vpop.f32.mrb[0].mxu0
      %v2257 = vadd.f32 %v2064, %v2256
      %v2258 = vpop.f32.mrb[0].mxu0
      %v2259 = vadd.f32 %v2066, %v2258
      %2260 = vmatprep.mubr.bf16.mxu0 0
      %2261 = vmatmul.mubr.bf16.gmra.mrb[0].mxu0 %v1687
      %v2262 = vpop.f32.mrb[0].mxu0
      %v2263 = vadd.f32 %v2070, %v2262
      %v2264 = vpop.f32.mrb[0].mxu0
      %v2265 = vadd.f32 %v2072, %v2264
      %v2266 = vpop.f32.mrb[0].mxu0
      %v2267 = vadd.f32 %v2074, %v2266
      %v2268 = vpop.f32.mrb[0].mxu0
      %v2269 = vadd.f32 %v2076, %v2268
      %2270 = vmatprep.mubr.bf16.mxu0 0
      %2271 = vmatmul.mubr.bf16.gmra.mrb[0].mxu0 %v1690
      %v2272 = vpop.f32.mrb[0].mxu0
      %v2273 = vadd.f32 %v2080, %v2272
      %v2274 = vpop.f32.mrb[0].mxu0
      %v2275 = vadd.f32 %v2082, %v2274
      %v2276 = vpop.f32.mrb[0].mxu0
      %v2277 = vadd.f32 %v2084, %v2276
      %v2278 = vpop.f32.mrb[0].mxu0
      %v2279 = vadd.f32 %v2086, %v2278
      %2280 = vmatprep.mubr.bf16.mxu0 0
      %2281 = vmatmul.mubr.bf16.gmra.mrb[0].mxu0 %v1693
      %v2282 = vpop.f32.mrb[0].mxu0
      %v2283 = vadd.f32 %v2090, %v2282
      %v2284 = vpop.f32.mrb[0].mxu0
      %v2285 = vadd.f32 %v2092, %v2284
      %v2286 = vpop.f32.mrb[0].mxu0
      %v2287 = vadd.f32 %v2094, %v2286
      %v2288 = vpop.f32.mrb[0].mxu0
      %v2289 = vadd.f32 %v2096, %v2288
      %2290 = vmatprep.mubr.bf16.mxu0 0
      %2291 = vmatmul.mubr.bf16.gmra.mrb[0].mxu0 %v1696
      %v2292 = vpop.f32.mrb[0].mxu0
      %v2293 = vadd.f32 %v2100, %v2292
      %v2294 = vpop.f32.mrb[0].mxu0
      %v2295 = vadd.f32 %v2102, %v2294
      %v2296 = vpop.f32.mrb[0].mxu0
      %v2297 = vadd.f32 %v2104, %v2296
      %v2298 = vpop.f32.mrb[0].mxu0
      %v2299 = vadd.f32 %v2106, %v2298
      %2300 = vmatprep.mubr.bf16.mxu0 0
      %2301 = vmatmul.mubr.bf16.gmra.mrb[0].mxu0 %v1699
      %v2302 = vpop.f32.mrb[0].mxu0
      %v2303 = vadd.f32 %v2110, %v2302
      %v2304 = vpop.f32.mrb[0].mxu0
      %v2305 = vadd.f32 %v2112, %v2304
      %v2306 = vpop.f32.mrb[0].mxu0
      %v2307 = vadd.f32 %v2114, %v2306
      %v2308 = vpop.f32.mrb[0].mxu0
      %v2309 = vadd.f32 %v2116, %v2308
      %2310 = vmatprep.mubr.bf16.mxu0 0
      %2311 = vmatmul.mubr.bf16.gmra.mrb[0].mxu0 %v1702
      %v2312 = vpop.f32.mrb[0].mxu0
      %v2313 = vadd.f32 %v2120, %v2312
      %v2314 = vpop.f32.mrb[0].mxu0
      %v2315 = vadd.f32 %v2122, %v2314
      %v2316 = vpop.f32.mrb[0].mxu0
      %v2317 = vadd.f32 %v2124, %v2316
      %v2318 = vpop.f32.mrb[0].mxu0
      %v2319 = vadd.f32 %v2126, %v2318
      %2320 = vmatprep.mubr.bf16.mxu0 0
      %2321 = vmatmul.mubr.bf16.gmra.mrb[0].mxu0 %v1705
      %v2322 = vpop.f32.mrb[0].mxu0
      %v2323 = vadd.f32 %v2130, %v2322
      %v2324 = vpop.f32.mrb[0].mxu0
      %v2325 = vadd.f32 %v2132, %v2324
      %v2326 = vpop.f32.mrb[0].mxu0
      %v2327 = vadd.f32 %v2134, %v2326
      %v2328 = vpop.f32.mrb[0].mxu0
      %v2329 = vadd.f32 %v2136, %v2328
      %2330 = vmatprep.mubr.bf16.mxu0 0
      %2331 = vmatmul.mubr.bf16.gmra.mrb[0].mxu0 %v1708
      %v2332 = vpop.f32.mrb[0].mxu0
      %v2333 = vadd.f32 %v2140, %v2332
      %v2334 = vpop.f32.mrb[0].mxu0
      %v2335 = vadd.f32 %v2142, %v2334
      %v2336 = vpop.f32.mrb[0].mxu0
      %v2337 = vadd.f32 %v2144, %v2336
      %v2338 = vpop.f32.mrb[0].mxu0
      %v2339 = vadd.f32 %v2146, %v2338
      %2340 = vmatprep.mubr.bf16.mxu0 0
      %2341 = vmatmul.mubr.bf16.gmra.mrb[0].mxu0 %v1711
      %v2342 = vpop.f32.mrb[0].mxu0
      %v2343 = vadd.f32 %v2150, %v2342
      %v2344 = vpop.f32.mrb[0].mxu0
      %v2345 = vadd.f32 %v2152, %v2344
      %v2346 = vpop.f32.mrb[0].mxu0
      %v2347 = vadd.f32 %v2154, %v2346
      %v2348 = vpop.f32.mrb[0].mxu0
      %v2349 = vadd.f32 %v2156, %v2348
      %2350 = vmatprep.mubr.bf16.mxu0 0
      %2351 = vmatmul.mubr.bf16.gmra.mrb[0].mxu0 %v1714
      %v2352 = vpop.f32.mrb[0].mxu0
      %v2353 = vadd.f32 %v2160, %v2352
      %v2354 = vpop.f32.mrb[0].mxu0
      %v2355 = vadd.f32 %v2162, %v2354
      %v2356 = vpop.f32.mrb[0].mxu0
      %v2357 = vadd.f32 %v2164, %v2356
      %v2358 = vpop.f32.mrb[0].mxu0
      %v2359 = vadd.f32 %v2166, %v2358
      %2360 = vmatprep.mubr.bf16.mxu0 0
      %2361 = vmatmul.mubr.bf16.gmra.mrb[0].mxu0 %v1717
      %v2362 = vpop.f32.mrb[0].mxu0
      %v2363 = vadd.f32 %v2170, %v2362
      %v2364 = vpop.f32.mrb[0].mxu0
      %v2365 = vadd.f32 %v2172, %v2364
      %v2366 = vpop.f32.mrb[0].mxu0
      %v2367 = vadd.f32 %v2174, %v2366
      %v2368 = vpop.f32.mrb[0].mxu0
      %v2369 = vadd.f32 %v2176, %v2368
      %2370 = vmatprep.mubr.bf16.mxu0 0
      %2371 = vmatmul.mubr.bf16.gmra.mrb[0].mxu0 %v1720
      %v2372 = vpop.f32.mrb[0].mxu0
      %v2373 = vadd.f32 %v2180, %v2372
      %v2374 = vpop.f32.mrb[0].mxu0
      %v2375 = vadd.f32 %v2182, %v2374
      %v2376 = vpop.f32.mrb[0].mxu0
      %v2377 = vadd.f32 %v2184, %v2376
      %v2378 = vpop.f32.mrb[0].mxu0
      %v2379 = vadd.f32 %v2186, %v2378
      %2380 = vmatprep.mubr.bf16.mxu0 0
      %2381 = vmatmul.mubr.bf16.gmra.mrb[0].mxu0 %v1723
      %v2382 = vpop.f32.mrb[0].mxu0
      %v2383 = vadd.f32 %v2190, %v2382
      %v2384 = vpop.f32.mrb[0].mxu0
      %v2385 = vadd.f32 %v2192, %v2384
      %v2386 = vpop.f32.mrb[0].mxu0
      %v2387 = vadd.f32 %v2194, %v2386
      %v2388 = vpop.f32.mrb[0].mxu0
      %v2389 = vadd.f32 %v2196, %v2388
      %2390 = vmatprep.mubr.bf16.mxu0 0
      %2391 = vmatmul.mubr.bf16.gmra.mrb[0].mxu0 %v1726
      %v2392 = vpop.f32.mrb[0].mxu0
      %v2393 = vadd.f32 %v2200, %v2392
      %v2394 = vpop.f32.mrb[0].mxu0
      %v2395 = vadd.f32 %v2202, %v2394
      %v2396 = vpop.f32.mrb[0].mxu0
      %v2397 = vadd.f32 %v2204, %v2396
      %v2398 = vpop.f32.mrb[0].mxu0
      %v2399 = vadd.f32 %v2206, %v2398
      %2400 = vdwg.mxu0
      %s2401 = scalar_lea.vmem %s1, 768
      %v2402 = vld [vmem:[%s2401] sm:$0xff]
      %v2403 = vld [vmem:[%s2401 + $0x8] sm:$0xff]
      %v2404 = vld [vmem:[%s2401 + $0x10] sm:$0xff]
      %v2405 = vld [vmem:[%s2401 + $0x18] sm:$0xff]
      %v2406 = vld [vmem:[%s2401 + $0x20] sm:$0xff]
      %v2407 = vld [vmem:[%s2401 + $0x28] sm:$0xff]
      %v2408 = vld [vmem:[%s2401 + $0x30] sm:$0xff]
      %v2409 = vld [vmem:[%s2401 + $0x38] sm:$0xff]
      %v2410 = vld [vmem:[%s2401 + $0x40] sm:$0xff]
      %v2411 = vld [vmem:[%s2401 + $0x48] sm:$0xff]
      %v2412 = vld [vmem:[%s2401 + $0x50] sm:$0xff]
      %v2413 = vld [vmem:[%s2401 + $0x58] sm:$0xff]
      %v2414 = vld [vmem:[%s2401 + $0x60] sm:$0xff]
      %v2415 = vld [vmem:[%s2401 + $0x68] sm:$0xff]
      %v2416 = vld [vmem:[%s2401 + $0x70] sm:$0xff]
      %v2417 = vld [vmem:[%s2401 + $0x78] sm:$0xff]
      %v2418 = vld [vmem:[%s2401 + $0x80] sm:$0xff]
      %v2419 = vld [vmem:[%s2401 + $0x88] sm:$0xff]
      %v2420 = vld [vmem:[%s2401 + $0x90] sm:$0xff]
      %v2421 = vld [vmem:[%s2401 + $0x98] sm:$0xff]
      %v2422 = vld [vmem:[%s2401 + $0xa0] sm:$0xff]
      %v2423 = vld [vmem:[%s2401 + $0xa8] sm:$0xff]
      %v2424 = vld [vmem:[%s2401 + $0xb0] sm:$0xff]
      %v2425 = vld [vmem:[%s2401 + $0xb8] sm:$0xff]
      %v2426 = vld [vmem:[%s2401 + $0xc0] sm:$0xff]
      %v2427 = vld [vmem:[%s2401 + $0xc8] sm:$0xff]
      %v2428 = vld [vmem:[%s2401 + $0xd0] sm:$0xff]
      %v2429 = vld [vmem:[%s2401 + $0xd8] sm:$0xff]
      %v2430 = vld [vmem:[%s2401 + $0xe0] sm:$0xff]
      %v2431 = vld [vmem:[%s2401 + $0xe8] sm:$0xff]
      %v2432 = vld [vmem:[%s2401 + $0xf0] sm:$0xff]
      %v2433 = vld [vmem:[%s2401 + $0xf8] sm:$0xff]
      %v2434 = vld [vmem:[%s2401 + $0x100] sm:$0xff]
      %v2435 = vld [vmem:[%s2401 + $0x108] sm:$0xff]
      %v2436 = vld [vmem:[%s2401 + $0x110] sm:$0xff]
      %v2437 = vld [vmem:[%s2401 + $0x118] sm:$0xff]
      %v2438 = vld [vmem:[%s2401 + $0x120] sm:$0xff]
      %v2439 = vld [vmem:[%s2401 + $0x128] sm:$0xff]
      %v2440 = vld [vmem:[%s2401 + $0x130] sm:$0xff]
      %v2441 = vld [vmem:[%s2401 + $0x138] sm:$0xff]
      %v2442 = vld [vmem:[%s2401 + $0x140] sm:$0xff]
      %v2443 = vld [vmem:[%s2401 + $0x148] sm:$0xff]
      %v2444 = vld [vmem:[%s2401 + $0x150] sm:$0xff]
      %v2445 = vld [vmem:[%s2401 + $0x158] sm:$0xff]
      %v2446 = vld [vmem:[%s2401 + $0x160] sm:$0xff]
      %v2447 = vld [vmem:[%s2401 + $0x168] sm:$0xff]
      %v2448 = vld [vmem:[%s2401 + $0x170] sm:$0xff]
      %v2449 = vld [vmem:[%s2401 + $0x178] sm:$0xff]
      %v2450 = vpack.c.b16 %v358, %v356
      %v2451 = vpack.c.b16 %v798, %v796
      %v2452 = vpack.c.b16 %v799, %v797
      %v2453 = vpack.c.b16 %v378, %v376
      %v2454 = vpack.c.b16 %v818, %v816
      %v2455 = vpack.c.b16 %v819, %v817
      %v2456 = vpack.c.b16 %v398, %v396
      %v2457 = vpack.c.b16 %v838, %v836
      %v2458 = vpack.c.b16 %v839, %v837
      %v2459 = vpack.c.b16 %v418, %v416
      %v2460 = vpack.c.b16 %v858, %v856
      %v2461 = vpack.c.b16 %v859, %v857
      %v2522 = vunpack.c.l.b16 %v2402
      %v2523 = vunpack.c.h.b16 %v2402
      %v2524 = vunpack.c.l.b16 %v2403
      %v2525 = vunpack.c.h.b16 %v2403
      %v2526 = vunpack.c.l.b16 %v2404
      %v2527 = vunpack.c.h.b16 %v2404
      %v2528 = vunpack.c.l.b16 %v2405
      %v2529 = vunpack.c.h.b16 %v2405
      %v2530 = vunpack.c.l.b16 %v2406
      %v2531 = vunpack.c.h.b16 %v2406
      %v2532 = vunpack.c.l.b16 %v2407
      %v2533 = vunpack.c.h.b16 %v2407
      %v2534 = vunpack.c.l.b16 %v2408
      %v2535 = vunpack.c.h.b16 %v2408
      %v2536 = vunpack.c.l.b16 %v2409
      %v2537 = vunpack.c.h.b16 %v2409
      %v2538 = vunpack.c.l.b16 %v2410
      %v2539 = vunpack.c.h.b16 %v2410
      %v2540 = vunpack.c.l.b16 %v2411
      %v2541 = vunpack.c.h.b16 %v2411
      %v2542 = vunpack.c.l.b16 %v2412
      %v2543 = vunpack.c.h.b16 %v2412
      %v2544 = vunpack.c.l.b16 %v2413
      %v2545 = vunpack.c.h.b16 %v2413
      %v2546 = vunpack.c.l.b16 %v2414
      %v2547 = vunpack.c.h.b16 %v2414
      %v2548 = vunpack.c.l.b16 %v2415
      %v2549 = vunpack.c.h.b16 %v2415
      %v2550 = vunpack.c.l.b16 %v2416
      %v2551 = vunpack.c.h.b16 %v2416
      %v2552 = vunpack.c.l.b16 %v2417
      %v2553 = vunpack.c.h.b16 %v2417
      %v2554 = vunpack.c.l.b16 %v2418
      %v2555 = vunpack.c.h.b16 %v2418
      %v2556 = vunpack.c.l.b16 %v2419
      %v2557 = vunpack.c.h.b16 %v2419
      %v2558 = vunpack.c.l.b16 %v2420
      %v2559 = vunpack.c.h.b16 %v2420
      %v2560 = vunpack.c.l.b16 %v2421
      %v2561 = vunpack.c.h.b16 %v2421
      %v2562 = vunpack.c.l.b16 %v2422
      %v2563 = vunpack.c.h.b16 %v2422
      %v2564 = vunpack.c.l.b16 %v2423
      %v2565 = vunpack.c.h.b16 %v2423
      %v2566 = vunpack.c.l.b16 %v2424
      %v2567 = vunpack.c.h.b16 %v2424
      %v2568 = vunpack.c.l.b16 %v2425
      %v2569 = vunpack.c.h.b16 %v2425
      %v2570 = vunpack.c.l.b16 %v2426
      %v2571 = vunpack.c.h.b16 %v2426
      %v2572 = vunpack.c.l.b16 %v2427
      %v2573 = vunpack.c.h.b16 %v2427
      %v2574 = vunpack.c.l.b16 %v2428
      %v2575 = vunpack.c.h.b16 %v2428
      %v2576 = vunpack.c.l.b16 %v2429
      %v2577 = vunpack.c.h.b16 %v2429
      %v2578 = vunpack.c.l.b16 %v2430
      %v2579 = vunpack.c.h.b16 %v2430
      %v2580 = vunpack.c.l.b16 %v2431
      %v2581 = vunpack.c.h.b16 %v2431
      %v2582 = vunpack.c.l.b16 %v2432
      %v2583 = vunpack.c.h.b16 %v2432
      %v2584 = vunpack.c.l.b16 %v2433
      %v2585 = vunpack.c.h.b16 %v2433
      %v2586 = vunpack.c.l.b16 %v2434
      %v2587 = vunpack.c.h.b16 %v2434
      %v2588 = vunpack.c.l.b16 %v2435
      %v2589 = vunpack.c.h.b16 %v2435
      %v2590 = vunpack.c.l.b16 %v2436
      %v2591 = vunpack.c.h.b16 %v2436
      %v2592 = vunpack.c.l.b16 %v2437
      %v2593 = vunpack.c.h.b16 %v2437
      %v2594 = vunpack.c.l.b16 %v2438
      %v2595 = vunpack.c.h.b16 %v2438
      %v2596 = vunpack.c.l.b16 %v2439
      %v2597 = vunpack.c.h.b16 %v2439
      %v2598 = vunpack.c.l.b16 %v2440
      %v2599 = vunpack.c.h.b16 %v2440
      %v2600 = vunpack.c.l.b16 %v2441
      %v2601 = vunpack.c.h.b16 %v2441
      %v2602 = vunpack.c.l.b16 %v2442
      %v2603 = vunpack.c.h.b16 %v2442
      %v2604 = vunpack.c.l.b16 %v2443
      %v2605 = vunpack.c.h.b16 %v2443
      %v2606 = vunpack.c.l.b16 %v2444
      %v2607 = vunpack.c.h.b16 %v2444
      %v2608 = vunpack.c.l.b16 %v2445
      %v2609 = vunpack.c.h.b16 %v2445
      %v2610 = vunpack.c.l.b16 %v2446
      %v2611 = vunpack.c.h.b16 %v2446
      %v2612 = vunpack.c.l.b16 %v2447
      %v2613 = vunpack.c.h.b16 %v2447
      %v2614 = vunpack.c.l.b16 %v2448
      %v2615 = vunpack.c.h.b16 %v2448
      %v2616 = vunpack.c.l.b16 %v2449
      %v2617 = vunpack.c.h.b16 %v2449
      %v2618 = vpack.c.b16 %v2524, %v2522
      %v2619 = vpack.c.b16 %v2525, %v2523
      %v2620 = vpack.c.b16 %v2528, %v2526
      %v2621 = vpack.c.b16 %v2529, %v2527
      %v2622 = vpack.c.b16 %v2532, %v2530
      %v2623 = vpack.c.b16 %v2533, %v2531
      %v2624 = vpack.c.b16 %v2536, %v2534
      %v2625 = vpack.c.b16 %v2537, %v2535
      %v2626 = vpack.c.b16 %v2540, %v2538
      %v2627 = vpack.c.b16 %v2541, %v2539
      %v2628 = vpack.c.b16 %v2544, %v2542
      %v2629 = vpack.c.b16 %v2545, %v2543
      %v2630 = vpack.c.b16 %v2548, %v2546
      %v2631 = vpack.c.b16 %v2549, %v2547
      %v2632 = vpack.c.b16 %v2552, %v2550
      %v2633 = vpack.c.b16 %v2553, %v2551
      %v2634 = vpack.c.b16 %v2556, %v2554
      %v2635 = vpack.c.b16 %v2557, %v2555
      %v2636 = vpack.c.b16 %v2560, %v2558
      %v2637 = vpack.c.b16 %v2561, %v2559
      %v2638 = vpack.c.b16 %v2564, %v2562
      %v2639 = vpack.c.b16 %v2565, %v2563
      %v2640 = vpack.c.b16 %v2568, %v2566
      %v2641 = vpack.c.b16 %v2569, %v2567
      %v2642 = vpack.c.b16 %v2572, %v2570
      %v2643 = vpack.c.b16 %v2573, %v2571
      %v2644 = vpack.c.b16 %v2576, %v2574
      %v2645 = vpack.c.b16 %v2577, %v2575
      %v2646 = vpack.c.b16 %v2580, %v2578
      %v2647 = vpack.c.b16 %v2581, %v2579
      %v2648 = vpack.c.b16 %v2584, %v2582
      %v2649 = vpack.c.b16 %v2585, %v2583
      %v2650 = vpack.c.b16 %v2588, %v2586
      %v2651 = vpack.c.b16 %v2589, %v2587
      %v2652 = vpack.c.b16 %v2592, %v2590
      %v2653 = vpack.c.b16 %v2593, %v2591
      %v2654 = vpack.c.b16 %v2596, %v2594
      %v2655 = vpack.c.b16 %v2597, %v2595
      %v2656 = vpack.c.b16 %v2600, %v2598
      %v2657 = vpack.c.b16 %v2601, %v2599
      %v2658 = vpack.c.b16 %v2604, %v2602
      %v2659 = vpack.c.b16 %v2605, %v2603
      %v2660 = vpack.c.b16 %v2608, %v2606
      %v2661 = vpack.c.b16 %v2609, %v2607
      %v2662 = vpack.c.b16 %v2612, %v2610
      %v2663 = vpack.c.b16 %v2613, %v2611
      %v2664 = vpack.c.b16 %v2616, %v2614
      %v2665 = vpack.c.b16 %v2617, %v2615
      %2714 = vmatprep.subr.bf16.mxu0 %v2619
      %2715 = vmatpush1.bf16.msra.mxu0 %v2618
      %2716 = vmatprep.subr.bf16.mxu0 %v2621
      %2717 = vmatpush1.bf16.msra.mxu0 %v2620
      %2718 = vmatprep.subr.bf16.mxu0 %v2623
      %2719 = vmatpush1.bf16.msra.mxu0 %v2622
      %2720 = vmatprep.subr.bf16.mxu0 %v2625
      %2721 = vmatpush1.bf16.msra.mxu0 %v2624
      %2722 = vmatprep.subr.bf16.mxu0 %v2627
      %2723 = vmatpush1.bf16.msra.mxu0 %v2626
      %2724 = vmatprep.subr.bf16.mxu0 %v2629
      %2725 = vmatpush1.bf16.msra.mxu0 %v2628
      %2726 = vmatprep.subr.bf16.mxu0 %v2631
      %2727 = vmatpush1.bf16.msra.mxu0 %v2630
      %2728 = vmatprep.subr.bf16.mxu0 %v2633
      %2729 = vmatpush1.bf16.msra.mxu0 %v2632
      %2730 = vmatprep.subr.bf16.mxu0 %v2635
      %2731 = vmatpush1.bf16.msra.mxu0 %v2634
      %2732 = vmatprep.subr.bf16.mxu0 %v2637
      %2733 = vmatpush1.bf16.msra.mxu0 %v2636
      %2734 = vmatprep.subr.bf16.mxu0 %v2639
      %2735 = vmatpush1.bf16.msra.mxu0 %v2638
      %2736 = vmatprep.subr.bf16.mxu0 %v2641
      %2737 = vmatpush1.bf16.msra.mxu0 %v2640
      %2738 = vmatprep.subr.bf16.mxu0 %v2643
      %2739 = vmatpush1.bf16.msra.mxu0 %v2642
      %2740 = vmatprep.subr.bf16.mxu0 %v2645
      %2741 = vmatpush1.bf16.msra.mxu0 %v2644
      %2742 = vmatprep.subr.bf16.mxu0 %v2647
      %2743 = vmatpush1.bf16.msra.mxu0 %v2646
      %2744 = vmatprep.subr.bf16.mxu0 %v2649
      %2745 = vmatpush1.bf16.msra.mxu0 %v2648
      %2746 = vmatprep.mubr.bf16.mxu0 %v1683
      %2747 = vmatmul.mubr.bf16.gmra.mrb[0].mxu0 %v1682
      %v2748 = vpop.f32.mrb[0].mxu0
      %v2749 = vadd.f32 0.0, %v2748
      %v2750 = vpop.f32.mrb[0].mxu0
      %v2751 = vadd.f32 0.0, %v2750
      %v2752 = vpop.f32.mrb[0].mxu0
      %v2753 = vadd.f32 0.0, %v2752
      %v2754 = vpop.f32.mrb[0].mxu0
      %v2755 = vadd.f32 0.0, %v2754
      %2756 = vmatprep.mubr.bf16.mxu0 %v1686
      %2757 = vmatmul.mubr.bf16.gmra.mrb[0].mxu0 %v1685
      %v2758 = vpop.f32.mrb[0].mxu0
      %v2759 = vadd.f32 0.0, %v2758
      %v2760 = vpop.f32.mrb[0].mxu0
      %v2761 = vadd.f32 0.0, %v2760
      %v2762 = vpop.f32.mrb[0].mxu0
      %v2763 = vadd.f32 0.0, %v2762
      %v2764 = vpop.f32.mrb[0].mxu0
      %v2765 = vadd.f32 0.0, %v2764
      %2766 = vmatprep.mubr.bf16.mxu0 %v1689
      %2767 = vmatmul.mubr.bf16.gmra.mrb[0].mxu0 %v1688
      %v2768 = vpop.f32.mrb[0].mxu0
      %v2769 = vadd.f32 0.0, %v2768
      %v2770 = vpop.f32.mrb[0].mxu0
      %v2771 = vadd.f32 0.0, %v2770
      %v2772 = vpop.f32.mrb[0].mxu0
      %v2773 = vadd.f32 0.0, %v2772
      %v2774 = vpop.f32.mrb[0].mxu0
      %v2775 = vadd.f32 0.0, %v2774
      %2776 = vmatprep.mubr.bf16.mxu0 %v2451
      %2777 = vmatmul.mubr.bf16.gmra.mrb[0].mxu0 %v2450
      %v2778 = vpop.f32.mrb[0].mxu0
      %v2779 = vadd.f32 0.0, %v2778
      %v2780 = vpop.f32.mrb[0].mxu0
      %v2781 = vadd.f32 0.0, %v2780
      %v2782 = vpop.f32.mrb[0].mxu0
      %v2783 = vadd.f32 0.0, %v2782
      %v2784 = vpop.f32.mrb[0].mxu0
      %v2785 = vadd.f32 0.0, %v2784
      %2786 = vmatprep.mubr.bf16.mxu0 %v1695
      %2787 = vmatmul.mubr.bf16.gmra.mrb[0].mxu0 %v1694
      %v2788 = vpop.f32.mrb[0].mxu0
      %v2789 = vadd.f32 0.0, %v2788
      %v2790 = vpop.f32.mrb[0].mxu0
      %v2791 = vadd.f32 0.0, %v2790
      %v2792 = vpop.f32.mrb[0].mxu0
      %v2793 = vadd.f32 0.0, %v2792
      %v2794 = vpop.f32.mrb[0].mxu0
      %v2795 = vadd.f32 0.0, %v2794
      %2796 = vmatprep.mubr.bf16.mxu0 %v1698
      %2797 = vmatmul.mubr.bf16.gmra.mrb[0].mxu0 %v1697
      %v2798 = vpop.f32.mrb[0].mxu0
      %v2799 = vadd.f32 0.0, %v2798
      %v2800 = vpop.f32.mrb[0].mxu0
      %v2801 = vadd.f32 0.0, %v2800
      %v2802 = vpop.f32.mrb[0].mxu0
      %v2803 = vadd.f32 0.0, %v2802
      %v2804 = vpop.f32.mrb[0].mxu0
      %v2805 = vadd.f32 0.0, %v2804
      %2806 = vmatprep.mubr.bf16.mxu0 %v1701
      %2807 = vmatmul.mubr.bf16.gmra.mrb[0].mxu0 %v1700
      %v2808 = vpop.f32.mrb[0].mxu0
      %v2809 = vadd.f32 0.0, %v2808
      %v2810 = vpop.f32.mrb[0].mxu0
      %v2811 = vadd.f32 0.0, %v2810
      %v2812 = vpop.f32.mrb[0].mxu0
      %v2813 = vadd.f32 0.0, %v2812
      %v2814 = vpop.f32.mrb[0].mxu0
      %v2815 = vadd.f32 0.0, %v2814
      %2816 = vmatprep.mubr.bf16.mxu0 %v2454
      %2817 = vmatmul.mubr.bf16.gmra.mrb[0].mxu0 %v2453
      %v2818 = vpop.f32.mrb[0].mxu0
      %v2819 = vadd.f32 0.0, %v2818
      %v2820 = vpop.f32.mrb[0].mxu0
      %v2821 = vadd.f32 0.0, %v2820
      %v2822 = vpop.f32.mrb[0].mxu0
      %v2823 = vadd.f32 0.0, %v2822
      %v2824 = vpop.f32.mrb[0].mxu0
      %v2825 = vadd.f32 0.0, %v2824
      %2826 = vmatprep.mubr.bf16.mxu0 %v1707
      %2827 = vmatmul.mubr.bf16.gmra.mrb[0].mxu0 %v1706
      %v2828 = vpop.f32.mrb[0].mxu0
      %v2829 = vadd.f32 0.0, %v2828
      %v2830 = vpop.f32.mrb[0].mxu0
      %v2831 = vadd.f32 0.0, %v2830
      %v2832 = vpop.f32.mrb[0].mxu0
      %v2833 = vadd.f32 0.0, %v2832
      %v2834 = vpop.f32.mrb[0].mxu0
      %v2835 = vadd.f32 0.0, %v2834
      %2836 = vmatprep.mubr.bf16.mxu0 %v1710
      %2837 = vmatmul.mubr.bf16.gmra.mrb[0].mxu0 %v1709
      %v2838 = vpop.f32.mrb[0].mxu0
      %v2839 = vadd.f32 0.0, %v2838
      %v2840 = vpop.f32.mrb[0].mxu0
      %v2841 = vadd.f32 0.0, %v2840
      %v2842 = vpop.f32.mrb[0].mxu0
      %v2843 = vadd.f32 0.0, %v2842
      %v2844 = vpop.f32.mrb[0].mxu0
      %v2845 = vadd.f32 0.0, %v2844
      %2846 = vmatprep.mubr.bf16.mxu0 %v1713
      %2847 = vmatmul.mubr.bf16.gmra.mrb[0].mxu0 %v1712
      %v2848 = vpop.f32.mrb[0].mxu0
      %v2849 = vadd.f32 0.0, %v2848
      %v2850 = vpop.f32.mrb[0].mxu0
      %v2851 = vadd.f32 0.0, %v2850
      %v2852 = vpop.f32.mrb[0].mxu0
      %v2853 = vadd.f32 0.0, %v2852
      %v2854 = vpop.f32.mrb[0].mxu0
      %v2855 = vadd.f32 0.0, %v2854
      %2856 = vmatprep.mubr.bf16.mxu0 %v2457
      %2857 = vmatmul.mubr.bf16.gmra.mrb[0].mxu0 %v2456
      %v2858 = vpop.f32.mrb[0].mxu0
      %v2859 = vadd.f32 0.0, %v2858
      %v2860 = vpop.f32.mrb[0].mxu0
      %v2861 = vadd.f32 0.0, %v2860
      %v2862 = vpop.f32.mrb[0].mxu0
      %v2863 = vadd.f32 0.0, %v2862
      %v2864 = vpop.f32.mrb[0].mxu0
      %v2865 = vadd.f32 0.0, %v2864
      %2866 = vmatprep.mubr.bf16.mxu0 %v1719
      %2867 = vmatmul.mubr.bf16.gmra.mrb[0].mxu0 %v1718
      %v2868 = vpop.f32.mrb[0].mxu0
      %v2869 = vadd.f32 0.0, %v2868
      %v2870 = vpop.f32.mrb[0].mxu0
      %v2871 = vadd.f32 0.0, %v2870
      %v2872 = vpop.f32.mrb[0].mxu0
      %v2873 = vadd.f32 0.0, %v2872
      %v2874 = vpop.f32.mrb[0].mxu0
      %v2875 = vadd.f32 0.0, %v2874
      %2876 = vmatprep.mubr.bf16.mxu0 %v1722
      %2877 = vmatmul.mubr.bf16.gmra.mrb[0].mxu0 %v1721
      %v2878 = vpop.f32.mrb[0].mxu0
      %v2879 = vadd.f32 0.0, %v2878
      %v2880 = vpop.f32.mrb[0].mxu0
      %v2881 = vadd.f32 0.0, %v2880
      %v2882 = vpop.f32.mrb[0].mxu0
      %v2883 = vadd.f32 0.0, %v2882
      %v2884 = vpop.f32.mrb[0].mxu0
      %v2885 = vadd.f32 0.0, %v2884
      %2886 = vmatprep.mubr.bf16.mxu0 %v1725
      %2887 = vmatmul.mubr.bf16.gmra.mrb[0].mxu0 %v1724
      %v2888 = vpop.f32.mrb[0].mxu0
      %v2889 = vadd.f32 0.0, %v2888
      %v2890 = vpop.f32.mrb[0].mxu0
      %v2891 = vadd.f32 0.0, %v2890
      %v2892 = vpop.f32.mrb[0].mxu0
      %v2893 = vadd.f32 0.0, %v2892
      %v2894 = vpop.f32.mrb[0].mxu0
      %v2895 = vadd.f32 0.0, %v2894
      %2896 = vmatprep.mubr.bf16.mxu0 %v2460
      %2897 = vmatmul.mubr.bf16.gmra.mrb[0].mxu0 %v2459
      %v2898 = vpop.f32.mrb[0].mxu0
      %v2899 = vadd.f32 0.0, %v2898
      %v2900 = vpop.f32.mrb[0].mxu0
      %v2901 = vadd.f32 0.0, %v2900
      %v2902 = vpop.f32.mrb[0].mxu0
      %v2903 = vadd.f32 0.0, %v2902
      %v2904 = vpop.f32.mrb[0].mxu0
      %v2905 = vadd.f32 0.0, %v2904
      %2906 = vdwg.mxu0
      %2907 = vmatprep.subr.bf16.mxu0 %v2651
      %2908 = vmatpush1.bf16.msra.mxu0 %v2650
      %2909 = vmatprep.subr.bf16.mxu0 %v2653
      %2910 = vmatpush1.bf16.msra.mxu0 %v2652
      %2911 = vmatprep.subr.bf16.mxu0 %v2655
      %2912 = vmatpush1.bf16.msra.mxu0 %v2654
      %2913 = vmatprep.subr.bf16.mxu0 %v2657
      %2914 = vmatpush1.bf16.msra.mxu0 %v2656
      %2915 = vmatprep.subr.bf16.mxu0 %v2659
      %2916 = vmatpush1.bf16.msra.mxu0 %v2658
      %2917 = vmatprep.subr.bf16.mxu0 %v2661
      %2918 = vmatpush1.bf16.msra.mxu0 %v2660
      %2919 = vmatprep.subr.bf16.mxu0 %v2663
      %2920 = vmatpush1.bf16.msra.mxu0 %v2662
      %2921 = vmatprep.subr.bf16.mxu0 %v2665
      %2922 = vmatpush1.bf16.msra.mxu0 %v2664
      %2923 = vmatprep.subr.bf16.mxu0 0
      %2924 = vmatpush1.bf16.msra.mxu0 0
      %2925 = vmatprep.subr.bf16.mxu0 0
      %2926 = vmatpush1.bf16.msra.mxu0 0
      %2927 = vmatprep.subr.bf16.mxu0 0
      %2928 = vmatpush1.bf16.msra.mxu0 0
      %2929 = vmatprep.subr.bf16.mxu0 0
      %2930 = vmatpush1.bf16.msra.mxu0 0
      %2931 = vmatprep.subr.bf16.mxu0 0
      %2932 = vmatpush1.bf16.msra.mxu0 0
      %2933 = vmatprep.subr.bf16.mxu0 0
      %2934 = vmatpush1.bf16.msra.mxu0 0
      %2935 = vmatprep.subr.bf16.mxu0 0
      %2936 = vmatpush1.bf16.msra.mxu0 0
      %2937 = vmatprep.subr.bf16.mxu0 0
      %2938 = vmatpush1.bf16.msra.mxu0 0
      %2939 = vmatprep.mubr.bf16.mxu0 0
      %2940 = vmatmul.mubr.bf16.gmra.mrb[0].mxu0 %v1684
      %v2941 = vpop.f32.mrb[0].mxu0
      %v2942 = vadd.f32 %v2749, %v2941
      %v2943 = vpop.f32.mrb[0].mxu0
      %v2944 = vadd.f32 %v2751, %v2943
      %v2945 = vpop.f32.mrb[0].mxu0
      %v2946 = vadd.f32 %v2753, %v2945
      %v2947 = vpop.f32.mrb[0].mxu0
      %v2948 = vadd.f32 %v2755, %v2947
      %2949 = vmatprep.mubr.bf16.mxu0 0
      %2950 = vmatmul.mubr.bf16.gmra.mrb[0].mxu0 %v1687
      %v2951 = vpop.f32.mrb[0].mxu0
      %v2952 = vadd.f32 %v2759, %v2951
      %v2953 = vpop.f32.mrb[0].mxu0
      %v2954 = vadd.f32 %v2761, %v2953
      %v2955 = vpop.f32.mrb[0].mxu0
      %v2956 = vadd.f32 %v2763, %v2955
      %v2957 = vpop.f32.mrb[0].mxu0
      %v2958 = vadd.f32 %v2765, %v2957
      %2959 = vmatprep.mubr.bf16.mxu0 0
      %2960 = vmatmul.mubr.bf16.gmra.mrb[0].mxu0 %v1690
      %v2961 = vpop.f32.mrb[0].mxu0
      %v2962 = vadd.f32 %v2769, %v2961
      %v2963 = vpop.f32.mrb[0].mxu0
      %v2964 = vadd.f32 %v2771, %v2963
      %v2965 = vpop.f32.mrb[0].mxu0
      %v2966 = vadd.f32 %v2773, %v2965
      %v2967 = vpop.f32.mrb[0].mxu0
      %v2968 = vadd.f32 %v2775, %v2967
      %2969 = vmatprep.mubr.bf16.mxu0 0
      %2970 = vmatmul.mubr.bf16.gmra.mrb[0].mxu0 %v2452
      %v2971 = vpop.f32.mrb[0].mxu0
      %v2972 = vadd.f32 %v2779, %v2971
      %v2973 = vpop.f32.mrb[0].mxu0
      %v2974 = vadd.f32 %v2781, %v2973
      %v2975 = vpop.f32.mrb[0].mxu0
      %v2976 = vadd.f32 %v2783, %v2975
      %v2977 = vpop.f32.mrb[0].mxu0
      %v2978 = vadd.f32 %v2785, %v2977
      %2979 = vmatprep.mubr.bf16.mxu0 0
      %2980 = vmatmul.mubr.bf16.gmra.mrb[0].mxu0 %v1696
      %v2981 = vpop.f32.mrb[0].mxu0
      %v2982 = vadd.f32 %v2789, %v2981
      %v2983 = vpop.f32.mrb[0].mxu0
      %v2984 = vadd.f32 %v2791, %v2983
      %v2985 = vpop.f32.mrb[0].mxu0
      %v2986 = vadd.f32 %v2793, %v2985
      %v2987 = vpop.f32.mrb[0].mxu0
      %v2988 = vadd.f32 %v2795, %v2987
      %2989 = vmatprep.mubr.bf16.mxu0 0
      %2990 = vmatmul.mubr.bf16.gmra.mrb[0].mxu0 %v1699
      %v2991 = vpop.f32.mrb[0].mxu0
      %v2992 = vadd.f32 %v2799, %v2991
      %v2993 = vpop.f32.mrb[0].mxu0
      %v2994 = vadd.f32 %v2801, %v2993
      %v2995 = vpop.f32.mrb[0].mxu0
      %v2996 = vadd.f32 %v2803, %v2995
      %v2997 = vpop.f32.mrb[0].mxu0
      %v2998 = vadd.f32 %v2805, %v2997
      %2999 = vmatprep.mubr.bf16.mxu0 0
      %3000 = vmatmul.mubr.bf16.gmra.mrb[0].mxu0 %v1702
      %v3001 = vpop.f32.mrb[0].mxu0
      %v3002 = vadd.f32 %v2809, %v3001
      %v3003 = vpop.f32.mrb[0].mxu0
      %v3004 = vadd.f32 %v2811, %v3003
      %v3005 = vpop.f32.mrb[0].mxu0
      %v3006 = vadd.f32 %v2813, %v3005
      %v3007 = vpop.f32.mrb[0].mxu0
      %v3008 = vadd.f32 %v2815, %v3007
      %3009 = vmatprep.mubr.bf16.mxu0 0
      %3010 = vmatmul.mubr.bf16.gmra.mrb[0].mxu0 %v2455
      %v3011 = vpop.f32.mrb[0].mxu0
      %v3012 = vadd.f32 %v2819, %v3011
      %v3013 = vpop.f32.mrb[0].mxu0
      %v3014 = vadd.f32 %v2821, %v3013
      %v3015 = vpop.f32.mrb[0].mxu0
      %v3016 = vadd.f32 %v2823, %v3015
      %v3017 = vpop.f32.mrb[0].mxu0
      %v3018 = vadd.f32 %v2825, %v3017
      %3019 = vmatprep.mubr.bf16.mxu0 0
      %3020 = vmatmul.mubr.bf16.gmra.mrb[0].mxu0 %v1708
      %v3021 = vpop.f32.mrb[0].mxu0
      %v3022 = vadd.f32 %v2829, %v3021
      %v3023 = vpop.f32.mrb[0].mxu0
      %v3024 = vadd.f32 %v2831, %v3023
      %v3025 = vpop.f32.mrb[0].mxu0
      %v3026 = vadd.f32 %v2833, %v3025
      %v3027 = vpop.f32.mrb[0].mxu0
      %v3028 = vadd.f32 %v2835, %v3027
      %3029 = vmatprep.mubr.bf16.mxu0 0
      %3030 = vmatmul.mubr.bf16.gmra.mrb[0].mxu0 %v1711
      %v3031 = vpop.f32.mrb[0].mxu0
      %v3032 = vadd.f32 %v2839, %v3031
      %v3033 = vpop.f32.mrb[0].mxu0
      %v3034 = vadd.f32 %v2841, %v3033
      %v3035 = vpop.f32.mrb[0].mxu0
      %v3036 = vadd.f32 %v2843, %v3035
      %v3037 = vpop.f32.mrb[0].mxu0
      %v3038 = vadd.f32 %v2845, %v3037
      %3039 = vmatprep.mubr.bf16.mxu0 0
      %3040 = vmatmul.mubr.bf16.gmra.mrb[0].mxu0 %v1714
      %v3041 = vpop.f32.mrb[0].mxu0
      %v3042 = vadd.f32 %v2849, %v3041
      %v3043 = vpop.f32.mrb[0].mxu0
      %v3044 = vadd.f32 %v2851, %v3043
      %v3045 = vpop.f32.mrb[0].mxu0
      %v3046 = vadd.f32 %v2853, %v3045
      %v3047 = vpop.f32.mrb[0].mxu0
      %v3048 = vadd.f32 %v2855, %v3047
      %3049 = vmatprep.mubr.bf16.mxu0 0
      %3050 = vmatmul.mubr.bf16.gmra.mrb[0].mxu0 %v2458
      %v3051 = vpop.f32.mrb[0].mxu0
      %v3052 = vadd.f32 %v2859, %v3051
      %v3053 = vpop.f32.mrb[0].mxu0
      %v3054 = vadd.f32 %v2861, %v3053
      %v3055 = vpop.f32.mrb[0].mxu0
      %v3056 = vadd.f32 %v2863, %v3055
      %v3057 = vpop.f32.mrb[0].mxu0
      %v3058 = vadd.f32 %v2865, %v3057
      %3059 = vmatprep.mubr.bf16.mxu0 0
      %3060 = vmatmul.mubr.bf16.gmra.mrb[0].mxu0 %v1720
      %v3061 = vpop.f32.mrb[0].mxu0
      %v3062 = vadd.f32 %v2869, %v3061
      %v3063 = vpop.f32.mrb[0].mxu0
      %v3064 = vadd.f32 %v2871, %v3063
      %v3065 = vpop.f32.mrb[0].mxu0
      %v3066 = vadd.f32 %v2873, %v3065
      %v3067 = vpop.f32.mrb[0].mxu0
      %v3068 = vadd.f32 %v2875, %v3067
      %3069 = vmatprep.mubr.bf16.mxu0 0
      %3070 = vmatmul.mubr.bf16.gmra.mrb[0].mxu0 %v1723
      %v3071 = vpop.f32.mrb[0].mxu0
      %v3072 = vadd.f32 %v2879, %v3071
      %v3073 = vpop.f32.mrb[0].mxu0
      %v3074 = vadd.f32 %v2881, %v3073
      %v3075 = vpop.f32.mrb[0].mxu0
      %v3076 = vadd.f32 %v2883, %v3075
      %v3077 = vpop.f32.mrb[0].mxu0
      %v3078 = vadd.f32 %v2885, %v3077
      %3079 = vmatprep.mubr.bf16.mxu0 0
      %3080 = vmatmul.mubr.bf16.gmra.mrb[0].mxu0 %v1726
      %v3081 = vpop.f32.mrb[0].mxu0
      %v3082 = vadd.f32 %v2889, %v3081
      %v3083 = vpop.f32.mrb[0].mxu0
      %v3084 = vadd.f32 %v2891, %v3083
      %v3085 = vpop.f32.mrb[0].mxu0
      %v3086 = vadd.f32 %v2893, %v3085
      %v3087 = vpop.f32.mrb[0].mxu0
      %v3088 = vadd.f32 %v2895, %v3087
      %3089 = vmatprep.mubr.bf16.mxu0 0
      %3090 = vmatmul.mubr.bf16.gmra.mrb[0].mxu0 %v2461
      %v3091 = vpop.f32.mrb[0].mxu0
      %v3092 = vadd.f32 %v2899, %v3091
      %v3093 = vpop.f32.mrb[0].mxu0
      %v3094 = vadd.f32 %v2901, %v3093
      %v3095 = vpop.f32.mrb[0].mxu0
      %v3096 = vadd.f32 %v2903, %v3095
      %v3097 = vpop.f32.mrb[0].mxu0
      %v3098 = vadd.f32 %v2905, %v3097
      %3099 = vdwg.mxu0
      %v3100 = vadd.f32 %v2243, %v2942
      %v3101 = vadd.f32 %v2245, %v2944
      %v3102 = vadd.f32 %v2247, %v2946
      %v3103 = vadd.f32 %v2249, %v2948
      %v3104 = vadd.f32 %v2253, %v2952
      %v3105 = vadd.f32 %v2255, %v2954
      %v3106 = vadd.f32 %v2257, %v2956
      %v3107 = vadd.f32 %v2259, %v2958
      %v3108 = vadd.f32 %v2263, %v2962
      %v3109 = vadd.f32 %v2265, %v2964
      %v3110 = vadd.f32 %v2267, %v2966
      %v3111 = vadd.f32 %v2269, %v2968
      %v3112 = vadd.f32 %v2273, %v2972
      %v3113 = vadd.f32 %v2275, %v2974
      %v3114 = vadd.f32 %v2277, %v2976
      %v3115 = vadd.f32 %v2279, %v2978
      %v3116 = vadd.f32 %v2283, %v2982
      %v3117 = vadd.f32 %v2285, %v2984
      %v3118 = vadd.f32 %v2287, %v2986
      %v3119 = vadd.f32 %v2289, %v2988
      %v3120 = vadd.f32 %v2293, %v2992
      %v3121 = vadd.f32 %v2295, %v2994
      %v3122 = vadd.f32 %v2297, %v2996
      %v3123 = vadd.f32 %v2299, %v2998
      %v3124 = vadd.f32 %v2303, %v3002
      %v3125 = vadd.f32 %v2305, %v3004
      %v3126 = vadd.f32 %v2307, %v3006
      %v3127 = vadd.f32 %v2309, %v3008
      %v3128 = vadd.f32 %v2313, %v3012
      %v3129 = vadd.f32 %v2315, %v3014
      %v3130 = vadd.f32 %v2317, %v3016
      %v3131 = vadd.f32 %v2319, %v3018
      %v3132 = vadd.f32 %v2323, %v3022
      %v3133 = vadd.f32 %v2325, %v3024
      %v3134 = vadd.f32 %v2327, %v3026
      %v3135 = vadd.f32 %v2329, %v3028
      %v3136 = vadd.f32 %v2333, %v3032
      %v3137 = vadd.f32 %v2335, %v3034
      %v3138 = vadd.f32 %v2337, %v3036
      %v3139 = vadd.f32 %v2339, %v3038
      %v3140 = vadd.f32 %v2343, %v3042
      %v3141 = vadd.f32 %v2345, %v3044
      %v3142 = vadd.f32 %v2347, %v3046
      %v3143 = vadd.f32 %v2349, %v3048
      %v3144 = vadd.f32 %v2353, %v3052
      %v3145 = vadd.f32 %v2355, %v3054
      %v3146 = vadd.f32 %v2357, %v3056
      %v3147 = vadd.f32 %v2359, %v3058
      %v3148 = vadd.f32 %v2363, %v3062
      %v3149 = vadd.f32 %v2365, %v3064
      %v3150 = vadd.f32 %v2367, %v3066
      %v3151 = vadd.f32 %v2369, %v3068
      %v3152 = vadd.f32 %v2373, %v3072
      %v3153 = vadd.f32 %v2375, %v3074
      %v3154 = vadd.f32 %v2377, %v3076
      %v3155 = vadd.f32 %v2379, %v3078
      %v3156 = vadd.f32 %v2383, %v3082
      %v3157 = vadd.f32 %v2385, %v3084
      %v3158 = vadd.f32 %v2387, %v3086
      %v3159 = vadd.f32 %v2389, %v3088
      %v3160 = vadd.f32 %v2393, %v3092
      %v3161 = vadd.f32 %v2395, %v3094
      %v3162 = vadd.f32 %v2397, %v3096
      %v3163 = vadd.f32 %v2399, %v3098
      %v3164 = vld [vmem:[%s2] sm:$0x3]
      %v3166 = vlaneseq
      %v3167 = vshrl.u32 %v3166, 7
      %v3168 = vsub.s32 0, %v3167
      %v3169 = vrot.slane %v3164, %v3168
      %v3170 = vlaneseq
      %v3171 = vshrl.u32 %v3170, 7
      %v3172 = vsub.s32 1, %v3171
      %v3173 = vrot.slane %v3164, %v3172
      %v3176 = vadd.f32 %v3100, %v3169
      %v3177 = vadd.f32 %v3101, %v3173
      %v3178 = vadd.f32 %v3102, %v3169
      %v3179 = vadd.f32 %v3103, %v3173
      %v3180 = vadd.f32 %v3104, %v3169
      %v3181 = vadd.f32 %v3105, %v3173
      %v3182 = vadd.f32 %v3106, %v3169
      %v3183 = vadd.f32 %v3107, %v3173
      %v3184 = vadd.f32 %v3108, %v3169
      %v3185 = vadd.f32 %v3109, %v3173
      %v3186 = vadd.f32 %v3110, %v3169
      %v3187 = vadd.f32 %v3111, %v3173
      %v3188 = vadd.f32 %v3112, %v3169
      %v3189 = vadd.f32 %v3113, %v3173
      %v3190 = vadd.f32 %v3114, %v3169
      %v3191 = vadd.f32 %v3115, %v3173
      %v3192 = vadd.f32 %v3116, %v3169
      %v3193 = vadd.f32 %v3117, %v3173
      %v3194 = vadd.f32 %v3118, %v3169
      %v3195 = vadd.f32 %v3119, %v3173
      %v3196 = vadd.f32 %v3120, %v3169
      %v3197 = vadd.f32 %v3121, %v3173
      %v3198 = vadd.f32 %v3122, %v3169
      %v3199 = vadd.f32 %v3123, %v3173
      %v3200 = vadd.f32 %v3124, %v3169
      %v3201 = vadd.f32 %v3125, %v3173
      %v3202 = vadd.f32 %v3126, %v3169
      %v3203 = vadd.f32 %v3127, %v3173
      %v3204 = vadd.f32 %v3128, %v3169
      %v3205 = vadd.f32 %v3129, %v3173
      %v3206 = vadd.f32 %v3130, %v3169
      %v3207 = vadd.f32 %v3131, %v3173
      %v3208 = vadd.f32 %v3132, %v3169
      %v3209 = vadd.f32 %v3133, %v3173
      %v3210 = vadd.f32 %v3134, %v3169
      %v3211 = vadd.f32 %v3135, %v3173
      %v3212 = vadd.f32 %v3136, %v3169
      %v3213 = vadd.f32 %v3137, %v3173
      %v3214 = vadd.f32 %v3138, %v3169
      %v3215 = vadd.f32 %v3139, %v3173
      %v3216 = vadd.f32 %v3140, %v3169
      %v3217 = vadd.f32 %v3141, %v3173
      %v3218 = vadd.f32 %v3142, %v3169
      %v3219 = vadd.f32 %v3143, %v3173
      %v3220 = vadd.f32 %v3144, %v3169
      %v3221 = vadd.f32 %v3145, %v3173
      %v3222 = vadd.f32 %v3146, %v3169
      %v3223 = vadd.f32 %v3147, %v3173
      %v3224 = vadd.f32 %v3148, %v3169
      %v3225 = vadd.f32 %v3149, %v3173
      %v3226 = vadd.f32 %v3150, %v3169
      %v3227 = vadd.f32 %v3151, %v3173
      %v3228 = vadd.f32 %v3152, %v3169
      %v3229 = vadd.f32 %v3153, %v3173
      %v3230 = vadd.f32 %v3154, %v3169
      %v3231 = vadd.f32 %v3155, %v3173
      %v3232 = vadd.f32 %v3156, %v3169
      %v3233 = vadd.f32 %v3157, %v3173
      %v3234 = vadd.f32 %v3158, %v3169
      %v3235 = vadd.f32 %v3159, %v3173
      %v3236 = vadd.f32 %v3160, %v3169
      %v3237 = vadd.f32 %v3161, %v3173
      %v3238 = vadd.f32 %v3162, %v3169
      %v3239 = vadd.f32 %v3163, %v3173
      %v3240 = vmax.f32 %v3176, 0.0
      %v3241 = vmax.f32 %v3177, 0.0
      %v3242 = vmax.f32 %v3178, 0.0
      %v3243 = vmax.f32 %v3179, 0.0
      %v3244 = vmax.f32 %v3180, 0.0
      %v3245 = vmax.f32 %v3181, 0.0
      %v3246 = vmax.f32 %v3182, 0.0
      %v3247 = vmax.f32 %v3183, 0.0
      %v3248 = vmax.f32 %v3184, 0.0
      %v3249 = vmax.f32 %v3185, 0.0
      %v3250 = vmax.f32 %v3186, 0.0
      %v3251 = vmax.f32 %v3187, 0.0
      %v3252 = vmax.f32 %v3188, 0.0
      %v3253 = vmax.f32 %v3189, 0.0
      %v3254 = vmax.f32 %v3190, 0.0
      %v3255 = vmax.f32 %v3191, 0.0
      %v3256 = vmax.f32 %v3192, 0.0
      %v3257 = vmax.f32 %v3193, 0.0
      %v3258 = vmax.f32 %v3194, 0.0
      %v3259 = vmax.f32 %v3195, 0.0
      %v3260 = vmax.f32 %v3196, 0.0
      %v3261 = vmax.f32 %v3197, 0.0
      %v3262 = vmax.f32 %v3198, 0.0
      %v3263 = vmax.f32 %v3199, 0.0
      %v3264 = vmax.f32 %v3200, 0.0
      %v3265 = vmax.f32 %v3201, 0.0
      %v3266 = vmax.f32 %v3202, 0.0
      %v3267 = vmax.f32 %v3203, 0.0
      %v3268 = vmax.f32 %v3204, 0.0
      %v3269 = vmax.f32 %v3205, 0.0
      %v3270 = vmax.f32 %v3206, 0.0
      %v3271 = vmax.f32 %v3207, 0.0
      %v3272 = vmax.f32 %v3208, 0.0
      %v3273 = vmax.f32 %v3209, 0.0
      %v3274 = vmax.f32 %v3210, 0.0
      %v3275 = vmax.f32 %v3211, 0.0
      %v3276 = vmax.f32 %v3212, 0.0
      %v3277 = vmax.f32 %v3213, 0.0
      %v3278 = vmax.f32 %v3214, 0.0
      %v3279 = vmax.f32 %v3215, 0.0
      %v3280 = vmax.f32 %v3216, 0.0
      %v3281 = vmax.f32 %v3217, 0.0
      %v3282 = vmax.f32 %v3218, 0.0
      %v3283 = vmax.f32 %v3219, 0.0
      %v3284 = vmax.f32 %v3220, 0.0
      %v3285 = vmax.f32 %v3221, 0.0
      %v3286 = vmax.f32 %v3222, 0.0
      %v3287 = vmax.f32 %v3223, 0.0
      %v3288 = vmax.f32 %v3224, 0.0
      %v3289 = vmax.f32 %v3225, 0.0
      %v3290 = vmax.f32 %v3226, 0.0
      %v3291 = vmax.f32 %v3227, 0.0
      %v3292 = vmax.f32 %v3228, 0.0
      %v3293 = vmax.f32 %v3229, 0.0
      %v3294 = vmax.f32 %v3230, 0.0
      %v3295 = vmax.f32 %v3231, 0.0
      %v3296 = vmax.f32 %v3232, 0.0
      %v3297 = vmax.f32 %v3233, 0.0
      %v3298 = vmax.f32 %v3234, 0.0
      %v3299 = vmax.f32 %v3235, 0.0
      %v3300 = vmax.f32 %v3236, 0.0
      %v3301 = vmax.f32 %v3237, 0.0
      %v3302 = vmax.f32 %v3238, 0.0
      %v3303 = vmax.f32 %v3239, 0.0
      %v3304 = vpack.c.bf16 %v3242, %v3240
      %v3305 = vpack.c.bf16 %v3243, %v3241
      %v3306 = vpack.c.bf16 %v3246, %v3244
      %v3307 = vpack.c.bf16 %v3247, %v3245
      %v3308 = vpack.c.bf16 %v3250, %v3248
      %v3309 = vpack.c.bf16 %v3251, %v3249
      %v3310 = vpack.c.bf16 %v3254, %v3252
      %v3311 = vpack.c.bf16 %v3255, %v3253
      %v3312 = vpack.c.bf16 %v3258, %v3256
      %v3313 = vpack.c.bf16 %v3259, %v3257
      %v3314 = vpack.c.bf16 %v3262, %v3260
      %v3315 = vpack.c.bf16 %v3263, %v3261
      %v3316 = vpack.c.bf16 %v3266, %v3264
      %v3317 = vpack.c.bf16 %v3267, %v3265
      %v3318 = vpack.c.bf16 %v3270, %v3268
      %v3319 = vpack.c.bf16 %v3271, %v3269
      %v3320 = vpack.c.bf16 %v3274, %v3272
      %v3321 = vpack.c.bf16 %v3275, %v3273
      %v3322 = vpack.c.bf16 %v3278, %v3276
      %v3323 = vpack.c.bf16 %v3279, %v3277
      %v3324 = vpack.c.bf16 %v3282, %v3280
      %v3325 = vpack.c.bf16 %v3283, %v3281
      %v3326 = vpack.c.bf16 %v3286, %v3284
      %v3327 = vpack.c.bf16 %v3287, %v3285
      %v3328 = vpack.c.bf16 %v3290, %v3288
      %v3329 = vpack.c.bf16 %v3291, %v3289
      %v3330 = vpack.c.bf16 %v3294, %v3292
      %v3331 = vpack.c.bf16 %v3295, %v3293
      %v3332 = vpack.c.bf16 %v3298, %v3296
      %v3333 = vpack.c.bf16 %v3299, %v3297
      %v3334 = vpack.c.bf16 %v3302, %v3300
      %v3335 = vpack.c.bf16 %v3303, %v3301
      %v3368 = vunpack.c.l.b16 %v3304
      %v3369 = vunpack.c.l.b16 %v3305
      %v3370 = vunpack.c.h.b16 %v3304
      %v3371 = vunpack.c.h.b16 %v3305
      %v3372 = vunpack.c.l.b16 %v3306
      %v3373 = vunpack.c.l.b16 %v3307
      %v3374 = vunpack.c.h.b16 %v3306
      %v3375 = vunpack.c.h.b16 %v3307
      %v3376 = vunpack.c.l.b16 %v3308
      %v3377 = vunpack.c.l.b16 %v3309
      %v3378 = vunpack.c.h.b16 %v3308
      %v3379 = vunpack.c.h.b16 %v3309
      %v3380 = vunpack.c.l.b16 %v3310
      %v3381 = vunpack.c.l.b16 %v3311
      %v3382 = vunpack.c.h.b16 %v3310
      %v3383 = vunpack.c.h.b16 %v3311
      %v3384 = vunpack.c.l.b16 %v3312
      %v3385 = vunpack.c.l.b16 %v3313
      %v3386 = vunpack.c.h.b16 %v3312
      %v3387 = vunpack.c.h.b16 %v3313
      %v3388 = vunpack.c.l.b16 %v3314
      %v3389 = vunpack.c.l.b16 %v3315
      %v3390 = vunpack.c.h.b16 %v3314
      %v3391 = vunpack.c.h.b16 %v3315
      %v3392 = vunpack.c.l.b16 %v3316
      %v3393 = vunpack.c.l.b16 %v3317
      %v3394 = vunpack.c.h.b16 %v3316
      %v3395 = vunpack.c.h.b16 %v3317
      %v3396 = vunpack.c.l.b16 %v3318
      %v3397 = vunpack.c.l.b16 %v3319
      %v3398 = vunpack.c.h.b16 %v3318
      %v3399 = vunpack.c.h.b16 %v3319
      %v3400 = vunpack.c.l.b16 %v3320
      %v3401 = vunpack.c.l.b16 %v3321
      %v3402 = vunpack.c.h.b16 %v3320
      %v3403 = vunpack.c.h.b16 %v3321
      %v3404 = vunpack.c.l.b16 %v3322
      %v3405 = vunpack.c.l.b16 %v3323
      %v3406 = vunpack.c.h.b16 %v3322
      %v3407 = vunpack.c.h.b16 %v3323
      %v3408 = vunpack.c.l.b16 %v3324
      %v3409 = vunpack.c.l.b16 %v3325
      %v3410 = vunpack.c.h.b16 %v3324
      %v3411 = vunpack.c.h.b16 %v3325
      %v3412 = vunpack.c.l.b16 %v3326
      %v3413 = vunpack.c.l.b16 %v3327
      %v3414 = vunpack.c.h.b16 %v3326
      %v3415 = vunpack.c.h.b16 %v3327
      %v3416 = vunpack.c.l.b16 %v3328
      %v3417 = vunpack.c.l.b16 %v3329
      %v3418 = vunpack.c.h.b16 %v3328
      %v3419 = vunpack.c.h.b16 %v3329
      %v3420 = vunpack.c.l.b16 %v3330
      %v3421 = vunpack.c.l.b16 %v3331
      %v3422 = vunpack.c.h.b16 %v3330
      %v3423 = vunpack.c.h.b16 %v3331
      %v3424 = vunpack.c.l.b16 %v3332
      %v3425 = vunpack.c.l.b16 %v3333
      %v3426 = vunpack.c.h.b16 %v3332
      %v3427 = vunpack.c.h.b16 %v3333
      %v3428 = vunpack.c.l.b16 %v3334
      %v3429 = vunpack.c.l.b16 %v3335
      %v3430 = vunpack.c.h.b16 %v3334
      %v3431 = vunpack.c.h.b16 %v3335
      %v3432 = vpack.c.b16 %v3369, %v3368
      %v3433 = vpack.c.b16 %v3371, %v3370
      %v3434 = vpack.c.b16 %v3373, %v3372
      %v3435 = vpack.c.b16 %v3375, %v3374
      %v3436 = vpack.c.b16 %v3377, %v3376
      %v3437 = vpack.c.b16 %v3379, %v3378
      %v3438 = vpack.c.b16 %v3381, %v3380
      %v3439 = vpack.c.b16 %v3383, %v3382
      %v3440 = vpack.c.b16 %v3385, %v3384
      %v3441 = vpack.c.b16 %v3387, %v3386
      %v3442 = vpack.c.b16 %v3389, %v3388
      %v3443 = vpack.c.b16 %v3391, %v3390
      %v3444 = vpack.c.b16 %v3393, %v3392
      %v3445 = vpack.c.b16 %v3395, %v3394
      %v3446 = vpack.c.b16 %v3397, %v3396
      %v3447 = vpack.c.b16 %v3399, %v3398
      %v3448 = vpack.c.b16 %v3401, %v3400
      %v3449 = vpack.c.b16 %v3403, %v3402
      %v3450 = vpack.c.b16 %v3405, %v3404
      %v3451 = vpack.c.b16 %v3407, %v3406
      %v3452 = vpack.c.b16 %v3409, %v3408
      %v3453 = vpack.c.b16 %v3411, %v3410
      %v3454 = vpack.c.b16 %v3413, %v3412
      %v3455 = vpack.c.b16 %v3415, %v3414
      %v3456 = vpack.c.b16 %v3417, %v3416
      %v3457 = vpack.c.b16 %v3419, %v3418
      %v3458 = vpack.c.b16 %v3421, %v3420
      %v3459 = vpack.c.b16 %v3423, %v3422
      %v3460 = vpack.c.b16 %v3425, %v3424
      %v3461 = vpack.c.b16 %v3427, %v3426
      %v3462 = vpack.c.b16 %v3429, %v3428
      %v3463 = vpack.c.b16 %v3431, %v3430
      %3496 = vst [vmem:[%s177] sm:$0xff] %v3432
      %3497 = vst [vmem:[%s177 + $0x8] sm:$0xff] %v3433
      %3498 = vst [vmem:[%s177 + $0x10] sm:$0xff] %v3434
      %3499 = vst [vmem:[%s177 + $0x18] sm:$0xff] %v3435
      %3500 = vst [vmem:[%s177 + $0x20] sm:$0xff] %v3436
      %3501 = vst [vmem:[%s177 + $0x28] sm:$0xff] %v3437
      %3502 = vst [vmem:[%s177 + $0x30] sm:$0xff] %v3438
      %3503 = vst [vmem:[%s177 + $0x38] sm:$0xff] %v3439
      %3504 = vst [vmem:[%s177 + $0x40] sm:$0xff] %v3440
      %3505 = vst [vmem:[%s177 + $0x48] sm:$0xff] %v3441
      %3506 = vst [vmem:[%s177 + $0x50] sm:$0xff] %v3442
      %3507 = vst [vmem:[%s177 + $0x58] sm:$0xff] %v3443
      %3508 = vst [vmem:[%s177 + $0x60] sm:$0xff] %v3444
      %3509 = vst [vmem:[%s177 + $0x68] sm:$0xff] %v3445
      %3510 = vst [vmem:[%s177 + $0x70] sm:$0xff] %v3446
      %3511 = vst [vmem:[%s177 + $0x78] sm:$0xff] %v3447
      %3512 = vst [vmem:[%s177 + $0x80] sm:$0xff] %v3448
      %3513 = vst [vmem:[%s177 + $0x88] sm:$0xff] %v3449
      %3514 = vst [vmem:[%s177 + $0x90] sm:$0xff] %v3450
      %3515 = vst [vmem:[%s177 + $0x98] sm:$0xff] %v3451
      %3516 = vst [vmem:[%s177 + $0xa0] sm:$0xff] %v3452
      %3517 = vst [vmem:[%s177 + $0xa8] sm:$0xff] %v3453
      %3518 = vst [vmem:[%s177 + $0xb0] sm:$0xff] %v3454
      %3519 = vst [vmem:[%s177 + $0xb8] sm:$0xff] %v3455
      %3520 = vst [vmem:[%s177 + $0xc0] sm:$0xff] %v3456
      %3521 = vst [vmem:[%s177 + $0xc8] sm:$0xff] %v3457
      %3522 = vst [vmem:[%s177 + $0xd0] sm:$0xff] %v3458
      %3523 = vst [vmem:[%s177 + $0xd8] sm:$0xff] %v3459
      %3524 = vst [vmem:[%s177 + $0xe0] sm:$0xff] %v3460
      %3525 = vst [vmem:[%s177 + $0xe8] sm:$0xff] %v3461
      %3526 = vst [vmem:[%s177 + $0xf0] sm:$0xff] %v3462
      %3527 = vst [vmem:[%s177 + $0xf8] sm:$0xff] %v3463
      %s3528 = smul.u32 4, %s14
      %p3529 = scmp.lt.s32.totalorder %s3528, 7
      %s3530 = scalar_select %p3529, %s3528, 7
      %s3531 = smul.addr %s3530, 16
      %s3532 = smul.addr %s3531, 4
      %s3533 = scalar_lea.vmem %s3, %s3532
      // Predicated region
      $region33: #{mixed_4b.5} parent=31 // pred_check
        %p3534 = pneg %p100
      $region34: #{mixed_4b.5} parent=31 // pred_check_branch
        %3536 = sbr.rel (%p3534) target = $region36
      $region35: #{mixed_4b.5} parent=31 // pred_region
        %s3537 = smul.u32 4, %s14
      $region36: #{mixed_4b.5} parent=31 // pred_fallthru
        _
    $region32: #{mixed_4b.5} parent=5 // pred_fallthru
      _
    %p3538 = scmp.le.s32.totalorder 2, %s9
    // Predicated region
    $region37: #{mixed_4b.5} parent=5 // pred_check
      %p3539 = pneg %p3538
    $region38: #{mixed_4b.5} parent=5 // pred_check_branch
      %3541 = sbr.rel (%p3539) target = $region40
    $region39: #{mixed_4b.5} parent=5 // pred_region
      %s3542 = ssub.s32 %s9, 2
      // Predicated region
      $region41: #{mixed_4b.5} parent=39 // pred_check
        %p3543 = pneg %p106
      $region42: #{mixed_4b.5} parent=39 // pred_check_branch
        %3545 = sbr.rel (%p3543) target = $region44
      $region43: #{mixed_4b.5} parent=39 // pred_region
        %s3546 = smul.u32 4, %s15
        %p3547 = scmp.lt.s32.totalorder %s3546, 7
        %s3548 = scalar_select %p3547, %s3546, 7
        %s3549 = smul.addr %s3548, 16
        %s3550 = smul.addr %s3549, 4
        %s3551 = scalar_lea.vmem %s3, %s3550
      $region44: #{mixed_4b.5} parent=39 // pred_fallthru
        _
    $region40: #{mixed_4b.5} parent=5 // pred_fallthru
      _
  $region6: #{mixed_4b.5} parent=0 // loop_footer
    %s13 = sadd.s32 1, %s9
  $region7: #{mixed_4b.5} parent=0 // loop_footer_branch
    %8 = sbr.rel target = $region3
  $region8: #{mixed_4b.5} parent=0 // loop_exit
    _

</llo_original>
